<compile_context>
chip_gen: v6e
topology: v6e:2x2x1
jax: 0.10.0
libtpu: 0.0.40
codegen_flags: <defaults>
</compile_context>

<pallas_src>
import functools

import numpy as np
import jax
import jax.numpy as jnp
from jax import lax
from jax.experimental import pallas as pl
from jax.experimental.pallas import tpu as pltpu


# ----------------------------------------------------------------------------
# Fused kernel: separation softmax -> group pooling -> fused dual-stream
# multi-layer LSTM -> bulk output store.  Single grid step.
# ----------------------------------------------------------------------------
def dual_lstm_kernel(feat_ref, wsep_ref, bsep_ref, wx_ref, wh_ref, bias_ref,
                     out_ref, seq_ref, xproj_ref,
                     *, T, Bp, M, D, H, NL, KP, training):
    G = 2 * H                        # fused hidden width  [stream0 | stream1]
    IN0 = 2 * D                      # fused layer-0 input width

    # Padded weight rows are zero, so zero-initialised padded input columns
    # keep the math exact.  (No-op at the demo sizes where KP == 2D == 2H.)
    if KP > IN0:
        seq_ref[...] = jnp.zeros_like(seq_ref)

    # ---- separation weights (softmax over masks) + group pooling, once ------
    # feat stays batch-major; only the pooled per-step slab goes time-major.
    wvec = wsep_ref[...].reshape(1, 1, D)
    for t in range(T):
        f_t = feat_ref[:, t, :, :]                                # (Bp, M, D)
        logits = jnp.sum(f_t * wvec, axis=-1, keepdims=True) + bsep_ref[...]
        mmax = jnp.max(logits, axis=1, keepdims=True)
        e = jnp.exp(logits - mmax)
        s = e / jnp.sum(e, axis=1, keepdims=True) - (1.0 / M)     # (Bp, M, 1)
        if training:
            s = 1.0 / (1.0 + jnp.exp(-10.0 * s))
        else:
            s = jnp.where(s > 0.0, 1.0, 0.0)
        w1 = 1.0 - s
        g0 = jnp.sum(s * f_t, axis=1) / (jnp.sum(s, axis=1) + 1e-8)    # (Bp,D)
        g1 = jnp.sum(w1 * f_t, axis=1) / (jnp.sum(w1, axis=1) + 1e-8)  # (Bp,D)
        seq_ref[t, :, 0:D] = g0
        seq_ref[t, :, D:IN0] = g1

    # ---- fused dual-stream multi-layer LSTM ----------------------------------
    for l in range(NL):
        # Batched input projection for ALL time steps: one MXU matmul.
        # Bp is a multiple of 8, so the reshapes are free views.
        x_flat = seq_ref[...].reshape(T * Bp, KP).astype(jnp.bfloat16)
        xp = jnp.dot(x_flat, wx_ref[l], preferred_element_type=jnp.float32)
        xproj_ref[...] = (xp + bias_ref[l]).reshape(T, Bp, 4 * G)

        # Layers > 0 read only the first G columns; clear any stale layer-0
        # tail once (no-op when 2D <= 2H).
        if l == 0 and NL > 1 and IN0 > G:
            seq_ref[:, :, G:] = jnp.zeros((T, Bp, KP - G), jnp.float32)

        w_hh = wh_ref[l]             # (G, 4G) bf16, loop-invariant RHS

        def step(t, carry, w_hh=w_hh):
            h, c = carry
            gates = xproj_ref[t] + jnp.dot(h.astype(jnp.bfloat16), w_hh,
                                           preferred_element_type=jnp.float32)
            # gate column layout: [ i | f | o | g ], each block G wide,
            # stream 0 in the first H lanes of each block, stream 1 in the next.
            sig = pl.reciprocal(1.0 + jnp.exp(-gates[:, 0:3 * G]), approx=True)
            i_t = sig[:, 0:G]
            f_t = sig[:, G:2 * G]
            o_t = sig[:, 2 * G:3 * G]
            g_t = jnp.tanh(gates[:, 3 * G:4 * G])
            c_n = f_t * c + i_t * g_t
            h_n = o_t * jnp.tanh(c_n)
            seq_ref[t, :, 0:G] = h_n
            return h_n, c_n

        zero = jnp.zeros((Bp, G), jnp.float32)
        lax.fori_loop(0, T, step, (zero, zero), unroll=min(T, 8))

    # Single bulk store of the last layer's hidden sequence (time-major).
    out_ref[...] = seq_ref[:, :, 0:G]


# ----------------------------------------------------------------------------
# Wrapper
# ----------------------------------------------------------------------------
def dual_lstm_forward(packed, feat, training):
    """feat: (B, T, num_mask, input_size) f32. Returns (B, T, 2*hidden)."""
    B, T, M, D = feat.shape
    NL, KP, _ = packed["wx"].shape
    G = packed["wh"].shape[1]
    H = G // 2

    Bp = ((B + 7) // 8) * 8                       # pad batch to 8 sublanes
    feat = feat.astype(jnp.float32)
    if Bp != B:
        feat = jnp.pad(feat, ((0, Bp - B), (0, 0), (0, 0), (0, 0)))

    kernel = functools.partial(dual_lstm_kernel, T=T, Bp=Bp, M=M, D=D, H=H,
                               NL=NL, KP=KP, training=training)

    out_tm = pl.pallas_call(
        kernel,
        out_shape=jax.ShapeDtypeStruct((T, Bp, G), jnp.float32),
        grid=(1,),
        in_specs=[
            pl.BlockSpec((Bp, T, M, D), lambda i: (0, 0, 0, 0)),      # feat (batch-major)
            pl.BlockSpec((1, D), lambda i: (0, 0)),                   # separation weight
            pl.BlockSpec((1, 1), lambda i: (0, 0)),                   # separation bias
            pl.BlockSpec((NL, KP, 4 * G), lambda i: (0, 0, 0)),       # fused W_ih (bf16)
            pl.BlockSpec((NL, G, 4 * G), lambda i: (0, 0, 0)),        # fused W_hh (bf16)
            pl.BlockSpec((NL, 1, 4 * G), lambda i: (0, 0, 0)),        # fused b_ih + b_hh
        ],
        out_specs=pl.BlockSpec((T, Bp, G), lambda i: (0, 0, 0)),
        scratch_shapes=[
            pltpu.VMEM((T, Bp, KP), jnp.float32),       # layer io sequence (time-major)
            pltpu.VMEM((T, Bp, 4 * G), jnp.float32),    # batched input projections
        ],
        compiler_params=pltpu.CompilerParams(
            dimension_semantics=("arbitrary",),
            vmem_limit_bytes=32 * 1024 * 1024,
        ),
    )(feat, packed["w_sep"], packed["b_sep"],
      packed["wx"], packed["wh"], packed["bias"])

    # (T, Bp, 2H) -> (B, T, 2H); stream 0 occupies the first H channels.
    return jnp.transpose(out_tm, (1, 0, 2))[:B]


# ----------------------------------------------------------------------------
# Parameters: natural PyTorch-style weights + packing into the fused layout.
# ----------------------------------------------------------------------------
def init_params(key, input_size, hidden_size, n_layer):
    D, H, NL = input_size, hidden_size, n_layer
    keys = jax.random.split(key, 1 + 2 * NL * 4)
    sep_b = 1.0 / (D ** 0.5)
    w_sep = jax.random.uniform(keys[0], (1, D), jnp.float32, -sep_b, sep_b)
    b_sep = jnp.zeros((1, 1), jnp.float32)

    bound = 1.0 / (H ** 0.5)
    lstm, idx = [], 1
    for _s in range(2):
        layers = []
        for l in range(NL):
            insz = D if l == 0 else H
            w_ih = jax.random.uniform(keys[idx], (4 * H, insz), jnp.float32,
                                      -bound, bound); idx += 1
            w_hh = jax.random.uniform(keys[idx], (4 * H, H), jnp.float32,
                                      -bound, bound); idx += 1
            b_ih = jax.random.uniform(keys[idx], (4 * H,), jnp.float32,
                                      -bound, bound); idx += 1
            b_hh = jax.random.uniform(keys[idx], (4 * H,), jnp.float32,
                                      -bound, bound); idx += 1
            layers.append(dict(w_ih=w_ih, w_hh=w_hh, b_ih=b_ih, b_hh=b_hh))
        lstm.append(layers)
    return dict(w_sep=w_sep, b_sep=b_sep, lstm=lstm)


# PyTorch gate order (i, f, g, o) -> kernel column-block order (i, f, o, g).
_GATE_DST = (0, 1, 3, 2)


def pack_params(params, input_size, hidden_size, n_layer):
    """Pack both streams' LSTM weights into fused block-diagonal slabs."""
    D, H, NL = input_size, hidden_size, n_layer
    G = 2 * H
    KP = ((max(2 * D, G) + 7) // 8) * 8

    wx = np.zeros((NL, KP, 4 * G), np.float32)
    wh = np.zeros((NL, G, 4 * G), np.float32)
    bias = np.zeros((NL, 1, 4 * G), np.float32)

    for s in range(2):
        for l in range(NL):
            p = params["lstm"][s][l]
            w_ih = np.asarray(p["w_ih"], np.float32)       # (4H, insz)
            w_hh = np.asarray(p["w_hh"], np.float32)       # (4H, H)
            b = np.asarray(p["b_ih"], np.float32) + np.asarray(p["b_hh"], np.float32)
            insz = D if l == 0 else H
            row0 = s * insz                                 # stream rows in fused input
            for gsrc in range(4):
                gdst = _GATE_DST[gsrc]
                cols = slice(gdst * G + s * H, gdst * G + (s + 1) * H)
                wx[l, row0:row0 + insz, cols] = w_ih[gsrc * H:(gsrc + 1) * H, :].T
                wh[l, s * H:(s + 1) * H, cols] = w_hh[gsrc * H:(gsrc + 1) * H, :].T
                bias[l, 0, cols] = b[gsrc * H:(gsrc + 1) * H]

    return dict(
        w_sep=params["w_sep"], b_sep=params["b_sep"],
        wx=jnp.asarray(wx, jnp.bfloat16),
        wh=jnp.asarray(wh, jnp.bfloat16),
        bias=jnp.asarray(bias, jnp.float32),
    )


# ----------------------------------------------------------------------------
# Pure-JAX reference (PyTorch semantics, mirrored bf16 matmul operands)
# ----------------------------------------------------------------------------
def _sigmoid(x):
    return 1.0 / (1.0 + jnp.exp(-x))


def _lstm_stream_ref(x, layers, H):
    for p in layers:
        B, T, insz = x.shape
        w_ih = p["w_ih"].astype(jnp.bfloat16)               # (4H, insz)
        w_hh = p["w_hh"].astype(jnp.bfloat16)               # (4H, H)
        b = (p["b_ih"] + p["b_hh"]).astype(jnp.float32)
        xp = jnp.dot(x.reshape(B * T, insz).astype(jnp.bfloat16), w_ih.T,
                     preferred_element_type=jnp.float32).reshape(B, T, 4 * H) + b

        def step(carry, xp_t, w_hh=w_hh):
            h, c = carry
            gates = xp_t + jnp.dot(h.astype(jnp.bfloat16), w_hh.T,
                                   preferred_element_type=jnp.float32)
            i = _sigmoid(gates[:, :H]); f = _sigmoid(gates[:, H:2 * H])
            g = jnp.tanh(gates[:, 2 * H:3 * H]); o = _sigmoid(gates[:, 3 * H:])
            c = f * c + i * g
            h = o * jnp.tanh(c)
            return (h, c), h

        init = (jnp.zeros((B, H), jnp.float32), jnp.zeros((B, H), jnp.float32))
        _, hs = lax.scan(step, init, jnp.swapaxes(xp, 0, 1))
        x = jnp.swapaxes(hs, 0, 1)
    return x


def dual_lstm_reference(params, feat, training):
    B, T, M, D = feat.shape
    H = params["lstm"][0][0]["w_hh"].shape[1]

    logits = jnp.einsum("btmd,kd->btmk", feat, params["w_sep"]) + params["b_sep"][0, 0]
    mmax = jnp.max(logits, axis=2, keepdims=True)
    e = jnp.exp(logits - mmax)
    s = e / jnp.sum(e, axis=2, keepdims=True) - 1.0 / M
    s = _sigmoid(10.0 * s) if training else (s > 0.0).astype(jnp.float32)

    outs = []
    for g in range(2):
        w = s if g == 0 else 1.0 - s
        x = (w * feat).sum(axis=2) / (w.sum(axis=2) + 1e-8)        # (B, T, D)
        outs.append(_lstm_stream_ref(x, params["lstm"][g], H))
    return jnp.concatenate(outs, axis=-1)


if __name__ == "__main__":
    B, T, M = 2, 8, 4            # batch, time_length, num_mask
    D, H, NL = 32, 32, 2         # input_size, hidden_size, n_layer (dropout=0.0)

    key = jax.random.PRNGKey(0)
    k_feat, k_par = jax.random.split(key)
    feat = jax.random.normal(k_feat, (B, T, M, D), jnp.float32)
    params = init_params(k_par, D, H, NL)
    packed = pack_params(params, D, H, NL)

    fwd = jax.jit(dual_lstm_forward, static_argnames="training")

    # training=True path (smooth sigmoid separation weights)
    out = jax.block_until_ready(fwd(packed, feat, training=True))
    assert out.shape == (B, T, 2 * H)
    assert bool(jnp.all(jnp.isfinite(out)))
    ref = dual_lstm_reference(params, feat, True)
    err = float(jnp.max(jnp.abs(out - ref)))
    assert bool(jnp.allclose(out, ref, atol=2e-2, rtol=2e-2)), f"train diff={err}"

    # eval path (hard 0/1 separation weights)
    out_e = jax.block_until_ready(fwd(packed, feat, training=False))
    assert out_e.shape == (B, T, 2 * H)
    assert bool(jnp.all(jnp.isfinite(out_e)))
    ref_e = dual_lstm_reference(params, feat, False)
    err_e = float(jnp.max(jnp.abs(out_e - ref_e)))
    assert bool(jnp.allclose(out_e, ref_e, atol=2e-2, rtol=2e-2)), f"eval diff={err_e}"

    print("KERNEL_OK")
</pallas_src>

<mosaic_0001>
module attributes {stable_mosaic.version = 11 : i64} {
  func.func @dual_lstm_kernel(%arg0: i32, %arg1: memref<8x8x4x32xf32, #tpu.memory_space<vmem>>, %arg2: memref<1x32xf32, #tpu.memory_space<vmem>>, %arg3: memref<1x1xf32, #tpu.memory_space<vmem>>, %arg4: memref<2x64x256xbf16, #tpu.memory_space<vmem>>, %arg5: memref<2x64x256xbf16, #tpu.memory_space<vmem>>, %arg6: memref<2x1x256xf32, #tpu.memory_space<vmem>>, %arg7: memref<8x8x64xf32, #tpu.memory_space<vmem>>, %arg8: memref<8x8x64xf32, #tpu.memory_space<vmem>>, %arg9: memref<8x8x256xf32, #tpu.memory_space<vmem>>) attributes {dimension_semantics = [#tpu.dimension_semantics<arbitrary>], iteration_bounds = array<i64: 1>, scalar_prefetch = 0 : i64, scratch_operands = 2 : i64, tpu.core_type = #tpu.core_type<tc>, window_params = [{pipeline_mode = #tpu.pipeline_mode<synchronous>, transform_indices = @transform_0, window_bounds = array<i64: 8, 8, 4, 32>}, {pipeline_mode = #tpu.pipeline_mode<synchronous>, transform_indices = @transform_1, window_bounds = array<i64: 1, 32>}, {pipeline_mode = #tpu.pipeline_mode<synchronous>, transform_indices = @transform_2, window_bounds = array<i64: 1, 1>}, {pipeline_mode = #tpu.pipeline_mode<synchronous>, transform_indices = @transform_3, window_bounds = array<i64: 2, 64, 256>}, {pipeline_mode = #tpu.pipeline_mode<synchronous>, transform_indices = @transform_4, window_bounds = array<i64: 2, 64, 256>}, {pipeline_mode = #tpu.pipeline_mode<synchronous>, transform_indices = @transform_5, window_bounds = array<i64: 2, 1, 256>}, {pipeline_mode = #tpu.pipeline_mode<synchronous>, transform_indices = @transform_6, window_bounds = array<i64: 8, 8, 64>}]} {
    %c0 = arith.constant 0 : index
    %c0_0 = arith.constant 0 : index
    %0 = vector.load %arg2[%c0, %c0_0] : memref<1x32xf32, #tpu.memory_space<vmem>>, vector<1x32xf32>
    %1 = vector.shape_cast %0 : vector<1x32xf32> to vector<1x1x32xf32>
    %c0_1 = arith.constant 0 : index
    %c0_2 = arith.constant 0 : index
    %c0_3 = arith.constant 0 : index
    %c0_4 = arith.constant 0 : index
    %2 = vector.load %arg1[%c0_1, %c0_2, %c0_3, %c0_4] : memref<8x8x4x32xf32, #tpu.memory_space<vmem>>, vector<8x1x4x32xf32>
    %3 = vector.shape_cast %2 : vector<8x1x4x32xf32> to vector<8x4x32xf32>
    %4 = vector.broadcast %1 : vector<1x1x32xf32> to vector<8x4x32xf32>
    %5 = arith.mulf %3, %4 : vector<8x4x32xf32>
    %cst = arith.constant dense<0.000000e+00> : vector<8x4xf32>
    %6 = vector.multi_reduction <add>, %5, %cst [2] : vector<8x4x32xf32> to vector<8x4xf32>
    %7 = vector.shape_cast %6 : vector<8x4xf32> to vector<8x4x1xf32>
    %c0_5 = arith.constant 0 : index
    %c0_6 = arith.constant 0 : index
    %8 = vector.load %arg3[%c0_5, %c0_6] : memref<1x1xf32, #tpu.memory_space<vmem>>, vector<1x1xf32>
    %9 = vector.shape_cast %8 : vector<1x1xf32> to vector<1x1x1xf32>
    %10 = vector.broadcast %9 : vector<1x1x1xf32> to vector<8x4x1xf32>
    %11 = arith.addf %7, %10 : vector<8x4x1xf32>
    %cst_7 = arith.constant dense<0xFF800000> : vector<8x1xf32>
    %12 = vector.multi_reduction <maximumf>, %11, %cst_7 [1] : vector<8x4x1xf32> to vector<8x1xf32>
    %13 = vector.shape_cast %12 : vector<8x1xf32> to vector<8x1x1xf32>
    %14 = vector.broadcast %13 : vector<8x1x1xf32> to vector<8x4x1xf32>
    %15 = arith.subf %11, %14 : vector<8x4x1xf32>
    %16 = math.exp %15 : vector<8x4x1xf32>
    %cst_8 = arith.constant dense<0.000000e+00> : vector<8x1xf32>
    %17 = vector.multi_reduction <add>, %16, %cst_8 [1] : vector<8x4x1xf32> to vector<8x1xf32>
    %18 = vector.shape_cast %17 : vector<8x1xf32> to vector<8x1x1xf32>
    %19 = vector.broadcast %18 : vector<8x1x1xf32> to vector<8x4x1xf32>
    %20 = arith.divf %16, %19 : vector<8x4x1xf32>
    %cst_9 = arith.constant 2.500000e-01 : f32
    %21 = vector.broadcast %cst_9 : f32 to vector<8x4x1xf32>
    %22 = arith.subf %20, %21 : vector<8x4x1xf32>
    %cst_10 = arith.constant -1.000000e+01 : f32
    %23 = vector.broadcast %cst_10 : f32 to vector<8x4x1xf32>
    %24 = arith.mulf %23, %22 : vector<8x4x1xf32>
    %25 = math.exp %24 : vector<8x4x1xf32>
    %cst_11 = arith.constant 1.000000e+00 : f32
    %26 = vector.broadcast %cst_11 : f32 to vector<8x4x1xf32>
    %27 = arith.addf %26, %25 : vector<8x4x1xf32>
    %cst_12 = arith.constant 1.000000e+00 : f32
    %28 = vector.broadcast %cst_12 : f32 to vector<8x4x1xf32>
    %29 = arith.divf %28, %27 : vector<8x4x1xf32>
    %cst_13 = arith.constant 1.000000e+00 : f32
    %30 = vector.broadcast %cst_13 : f32 to vector<8x4x1xf32>
    %31 = arith.subf %30, %29 : vector<8x4x1xf32>
    %32 = vector.broadcast %29 : vector<8x4x1xf32> to vector<8x4x32xf32>
    %33 = arith.mulf %32, %3 : vector<8x4x32xf32>
    %cst_14 = arith.constant dense<0.000000e+00> : vector<8x32xf32>
    %34 = vector.multi_reduction <add>, %33, %cst_14 [1] : vector<8x4x32xf32> to vector<8x32xf32>
    %cst_15 = arith.constant dense<0.000000e+00> : vector<8x1xf32>
    %35 = vector.multi_reduction <add>, %29, %cst_15 [1] : vector<8x4x1xf32> to vector<8x1xf32>
    %cst_16 = arith.constant 9.99999993E-9 : f32
    %36 = vector.broadcast %cst_16 : f32 to vector<8x1xf32>
    %37 = arith.addf %35, %36 : vector<8x1xf32>
    %38 = vector.broadcast %37 : vector<8x1xf32> to vector<8x32xf32>
    %39 = arith.divf %34, %38 : vector<8x32xf32>
    %40 = vector.broadcast %31 : vector<8x4x1xf32> to vector<8x4x32xf32>
    %41 = arith.mulf %40, %3 : vector<8x4x32xf32>
    %cst_17 = arith.constant dense<0.000000e+00> : vector<8x32xf32>
    %42 = vector.multi_reduction <add>, %41, %cst_17 [1] : vector<8x4x32xf32> to vector<8x32xf32>
    %cst_18 = arith.constant dense<0.000000e+00> : vector<8x1xf32>
    %43 = vector.multi_reduction <add>, %31, %cst_18 [1] : vector<8x4x1xf32> to vector<8x1xf32>
    %cst_19 = arith.constant 9.99999993E-9 : f32
    %44 = vector.broadcast %cst_19 : f32 to vector<8x1xf32>
    %45 = arith.addf %43, %44 : vector<8x1xf32>
    %46 = vector.broadcast %45 : vector<8x1xf32> to vector<8x32xf32>
    %47 = arith.divf %42, %46 : vector<8x32xf32>
    %c0_20 = arith.constant 0 : index
    %c0_21 = arith.constant 0 : index
    %c0_22 = arith.constant 0 : index
    %48 = vector.load %arg8[%c0_20, %c0_21, %c0_22] : memref<8x8x64xf32, #tpu.memory_space<vmem>>, vector<1x8x32xf32>
    %49 = vector.shape_cast %48 : vector<1x8x32xf32> to vector<8x32xf32>
    %50 = vector.shape_cast %39 : vector<8x32xf32> to vector<1x8x32xf32>
    tpu.vector_store %arg8[%c0_20, %c0_21, %c0_22], %50 {strides = array<i32>} : memref<8x8x64xf32, #tpu.memory_space<vmem>>, vector<1x8x32xf32>,
    %c0_23 = arith.constant 0 : index
    %c0_24 = arith.constant 0 : index
    %c32 = arith.constant 32 : index
    %51 = vector.load %arg8[%c0_23, %c0_24, %c32] : memref<8x8x64xf32, #tpu.memory_space<vmem>>, vector<1x8x32xf32>
    %52 = vector.shape_cast %51 : vector<1x8x32xf32> to vector<8x32xf32>
    %53 = vector.shape_cast %47 : vector<8x32xf32> to vector<1x8x32xf32>
    tpu.vector_store %arg8[%c0_23, %c0_24, %c32], %53 {strides = array<i32>} : memref<8x8x64xf32, #tpu.memory_space<vmem>>, vector<1x8x32xf32>,
    %c0_25 = arith.constant 0 : index
    %c1 = arith.constant 1 : index
    %c0_26 = arith.constant 0 : index
    %c0_27 = arith.constant 0 : index
    %54 = vector.load %arg1[%c0_25, %c1, %c0_26, %c0_27] : memref<8x8x4x32xf32, #tpu.memory_space<vmem>>, vector<8x1x4x32xf32>
    %55 = vector.shape_cast %54 : vector<8x1x4x32xf32> to vector<8x4x32xf32>
    %56 = vector.broadcast %1 : vector<1x1x32xf32> to vector<8x4x32xf32>
    %57 = arith.mulf %55, %56 : vector<8x4x32xf32>
    %cst_28 = arith.constant dense<0.000000e+00> : vector<8x4xf32>
    %58 = vector.multi_reduction <add>, %57, %cst_28 [2] : vector<8x4x32xf32> to vector<8x4xf32>
    %59 = vector.shape_cast %58 : vector<8x4xf32> to vector<8x4x1xf32>
    %c0_29 = arith.constant 0 : index
    %c0_30 = arith.constant 0 : index
    %60 = vector.load %arg3[%c0_29, %c0_30] : memref<1x1xf32, #tpu.memory_space<vmem>>, vector<1x1xf32>
    %61 = vector.shape_cast %60 : vector<1x1xf32> to vector<1x1x1xf32>
    %62 = vector.broadcast %61 : vector<1x1x1xf32> to vector<8x4x1xf32>
    %63 = arith.addf %59, %62 : vector<8x4x1xf32>
    %cst_31 = arith.constant dense<0xFF800000> : vector<8x1xf32>
    %64 = vector.multi_reduction <maximumf>, %63, %cst_31 [1] : vector<8x4x1xf32> to vector<8x1xf32>
    %65 = vector.shape_cast %64 : vector<8x1xf32> to vector<8x1x1xf32>
    %66 = vector.broadcast %65 : vector<8x1x1xf32> to vector<8x4x1xf32>
    %67 = arith.subf %63, %66 : vector<8x4x1xf32>
    %68 = math.exp %67 : vector<8x4x1xf32>
    %cst_32 = arith.constant dense<0.000000e+00> : vector<8x1xf32>
    %69 = vector.multi_reduction <add>, %68, %cst_32 [1] : vector<8x4x1xf32> to vector<8x1xf32>
    %70 = vector.shape_cast %69 : vector<8x1xf32> to vector<8x1x1xf32>
    %71 = vector.broadcast %70 : vector<8x1x1xf32> to vector<8x4x1xf32>
    %72 = arith.divf %68, %71 : vector<8x4x1xf32>
    %cst_33 = arith.constant 2.500000e-01 : f32
    %73 = vector.broadcast %cst_33 : f32 to vector<8x4x1xf32>
    %74 = arith.subf %72, %73 : vector<8x4x1xf32>
    %cst_34 = arith.constant -1.000000e+01 : f32
    %75 = vector.broadcast %cst_34 : f32 to vector<8x4x1xf32>
    %76 = arith.mulf %75, %74 : vector<8x4x1xf32>
    %77 = math.exp %76 : vector<8x4x1xf32>
    %cst_35 = arith.constant 1.000000e+00 : f32
    %78 = vector.broadcast %cst_35 : f32 to vector<8x4x1xf32>
    %79 = arith.addf %78, %77 : vector<8x4x1xf32>
    %cst_36 = arith.constant 1.000000e+00 : f32
    %80 = vector.broadcast %cst_36 : f32 to vector<8x4x1xf32>
    %81 = arith.divf %80, %79 : vector<8x4x1xf32>
    %cst_37 = arith.constant 1.000000e+00 : f32
    %82 = vector.broadcast %cst_37 : f32 to vector<8x4x1xf32>
    %83 = arith.subf %82, %81 : vector<8x4x1xf32>
    %84 = vector.broadcast %81 : vector<8x4x1xf32> to vector<8x4x32xf32>
    %85 = arith.mulf %84, %55 : vector<8x4x32xf32>
    %cst_38 = arith.constant dense<0.000000e+00> : vector<8x32xf32>
    %86 = vector.multi_reduction <add>, %85, %cst_38 [1] : vector<8x4x32xf32> to vector<8x32xf32>
    %cst_39 = arith.constant dense<0.000000e+00> : vector<8x1xf32>
    %87 = vector.multi_reduction <add>, %81, %cst_39 [1] : vector<8x4x1xf32> to vector<8x1xf32>
    %cst_40 = arith.constant 9.99999993E-9 : f32
    %88 = vector.broadcast %cst_40 : f32 to vector<8x1xf32>
    %89 = arith.addf %87, %88 : vector<8x1xf32>
    %90 = vector.broadcast %89 : vector<8x1xf32> to vector<8x32xf32>
    %91 = arith.divf %86, %90 : vector<8x32xf32>
    %92 = vector.broadcast %83 : vector<8x4x1xf32> to vector<8x4x32xf32>
    %93 = arith.mulf %92, %55 : vector<8x4x32xf32>
    %cst_41 = arith.constant dense<0.000000e+00> : vector<8x32xf32>
    %94 = vector.multi_reduction <add>, %93, %cst_41 [1] : vector<8x4x32xf32> to vector<8x32xf32>
    %cst_42 = arith.constant dense<0.000000e+00> : vector<8x1xf32>
    %95 = vector.multi_reduction <add>, %83, %cst_42 [1] : vector<8x4x1xf32> to vector<8x1xf32>
    %cst_43 = arith.constant 9.99999993E-9 : f32
    %96 = vector.broadcast %cst_43 : f32 to vector<8x1xf32>
    %97 = arith.addf %95, %96 : vector<8x1xf32>
    %98 = vector.broadcast %97 : vector<8x1xf32> to vector<8x32xf32>
    %99 = arith.divf %94, %98 : vector<8x32xf32>
    %c1_44 = arith.constant 1 : index
    %c0_45 = arith.constant 0 : index
    %c0_46 = arith.constant 0 : index
    %100 = vector.load %arg8[%c1_44, %c0_45, %c0_46] : memref<8x8x64xf32, #tpu.memory_space<vmem>>, vector<1x8x32xf32>
    %101 = vector.shape_cast %100 : vector<1x8x32xf32> to vector<8x32xf32>
    %102 = vector.shape_cast %91 : vector<8x32xf32> to vector<1x8x32xf32>
    tpu.vector_store %arg8[%c1_44, %c0_45, %c0_46], %102 {strides = array<i32>} : memref<8x8x64xf32, #tpu.memory_space<vmem>>, vector<1x8x32xf32>,
    %c1_47 = arith.constant 1 : index
    %c0_48 = arith.constant 0 : index
    %c32_49 = arith.constant 32 : index
    %103 = vector.load %arg8[%c1_47, %c0_48, %c32_49] : memref<8x8x64xf32, #tpu.memory_space<vmem>>, vector<1x8x32xf32>
    %104 = vector.shape_cast %103 : vector<1x8x32xf32> to vector<8x32xf32>
    %105 = vector.shape_cast %99 : vector<8x32xf32> to vector<1x8x32xf32>
    tpu.vector_store %arg8[%c1_47, %c0_48, %c32_49], %105 {strides = array<i32>} : memref<8x8x64xf32, #tpu.memory_space<vmem>>, vector<1x8x32xf32>,
    %c0_50 = arith.constant 0 : index
    %c2 = arith.constant 2 : index
    %c0_51 = arith.constant 0 : index
    %c0_52 = arith.constant 0 : index
    %106 = vector.load %arg1[%c0_50, %c2, %c0_51, %c0_52] : memref<8x8x4x32xf32, #tpu.memory_space<vmem>>, vector<8x1x4x32xf32>
    %107 = vector.shape_cast %106 : vector<8x1x4x32xf32> to vector<8x4x32xf32>
    %108 = vector.broadcast %1 : vector<1x1x32xf32> to vector<8x4x32xf32>
    %109 = arith.mulf %107, %108 : vector<8x4x32xf32>
    %cst_53 = arith.constant dense<0.000000e+00> : vector<8x4xf32>
    %110 = vector.multi_reduction <add>, %109, %cst_53 [2] : vector<8x4x32xf32> to vector<8x4xf32>
    %111 = vector.shape_cast %110 : vector<8x4xf32> to vector<8x4x1xf32>
    %c0_54 = arith.constant 0 : index
    %c0_55 = arith.constant 0 : index
    %112 = vector.load %arg3[%c0_54, %c0_55] : memref<1x1xf32, #tpu.memory_space<vmem>>, vector<1x1xf32>
    %113 = vector.shape_cast %112 : vector<1x1xf32> to vector<1x1x1xf32>
    %114 = vector.broadcast %113 : vector<1x1x1xf32> to vector<8x4x1xf32>
    %115 = arith.addf %111, %114 : vector<8x4x1xf32>
    %cst_56 = arith.constant dense<0xFF800000> : vector<8x1xf32>
    %116 = vector.multi_reduction <maximumf>, %115, %cst_56 [1] : vector<8x4x1xf32> to vector<8x1xf32>
    %117 = vector.shape_cast %116 : vector<8x1xf32> to vector<8x1x1xf32>
    %118 = vector.broadcast %117 : vector<8x1x1xf32> to vector<8x4x1xf32>
    %119 = arith.subf %115, %118 : vector<8x4x1xf32>
    %120 = math.exp %119 : vector<8x4x1xf32>
    %cst_57 = arith.constant dense<0.000000e+00> : vector<8x1xf32>
    %121 = vector.multi_reduction <add>, %120, %cst_57 [1] : vector<8x4x1xf32> to vector<8x1xf32>
    %122 = vector.shape_cast %121 : vector<8x1xf32> to vector<8x1x1xf32>
    %123 = vector.broadcast %122 : vector<8x1x1xf32> to vector<8x4x1xf32>
    %124 = arith.divf %120, %123 : vector<8x4x1xf32>
    %cst_58 = arith.constant 2.500000e-01 : f32
    %125 = vector.broadcast %cst_58 : f32 to vector<8x4x1xf32>
    %126 = arith.subf %124, %125 : vector<8x4x1xf32>
    %cst_59 = arith.constant -1.000000e+01 : f32
    %127 = vector.broadcast %cst_59 : f32 to vector<8x4x1xf32>
    %128 = arith.mulf %127, %126 : vector<8x4x1xf32>
    %129 = math.exp %128 : vector<8x4x1xf32>
    %cst_60 = arith.constant 1.000000e+00 : f32
    %130 = vector.broadcast %cst_60 : f32 to vector<8x4x1xf32>
    %131 = arith.addf %130, %129 : vector<8x4x1xf32>
    %cst_61 = arith.constant 1.000000e+00 : f32
    %132 = vector.broadcast %cst_61 : f32 to vector<8x4x1xf32>
    %133 = arith.divf %132, %131 : vector<8x4x1xf32>
    %cst_62 = arith.constant 1.000000e+00 : f32
    %134 = vector.broadcast %cst_62 : f32 to vector<8x4x1xf32>
    %135 = arith.subf %134, %133 : vector<8x4x1xf32>
    %136 = vector.broadcast %133 : vector<8x4x1xf32> to vector<8x4x32xf32>
    %137 = arith.mulf %136, %107 : vector<8x4x32xf32>
    %cst_63 = arith.constant dense<0.000000e+00> : vector<8x32xf32>
    %138 = vector.multi_reduction <add>, %137, %cst_63 [1] : vector<8x4x32xf32> to vector<8x32xf32>
    %cst_64 = arith.constant dense<0.000000e+00> : vector<8x1xf32>
    %139 = vector.multi_reduction <add>, %133, %cst_64 [1] : vector<8x4x1xf32> to vector<8x1xf32>
    %cst_65 = arith.constant 9.99999993E-9 : f32
    %140 = vector.broadcast %cst_65 : f32 to vector<8x1xf32>
    %141 = arith.addf %139, %140 : vector<8x1xf32>
    %142 = vector.broadcast %141 : vector<8x1xf32> to vector<8x32xf32>
    %143 = arith.divf %138, %142 : vector<8x32xf32>
    %144 = vector.broadcast %135 : vector<8x4x1xf32> to vector<8x4x32xf32>
    %145 = arith.mulf %144, %107 : vector<8x4x32xf32>
    %cst_66 = arith.constant dense<0.000000e+00> : vector<8x32xf32>
    %146 = vector.multi_reduction <add>, %145, %cst_66 [1] : vector<8x4x32xf32> to vector<8x32xf32>
    %cst_67 = arith.constant dense<0.000000e+00> : vector<8x1xf32>
    %147 = vector.multi_reduction <add>, %135, %cst_67 [1] : vector<8x4x1xf32> to vector<8x1xf32>
    %cst_68 = arith.constant 9.99999993E-9 : f32
    %148 = vector.broadcast %cst_68 : f32 to vector<8x1xf32>
    %149 = arith.addf %147, %148 : vector<8x1xf32>
    %150 = vector.broadcast %149 : vector<8x1xf32> to vector<8x32xf32>
    %151 = arith.divf %146, %150 : vector<8x32xf32>
    %c2_69 = arith.constant 2 : index
    %c0_70 = arith.constant 0 : index
    %c0_71 = arith.constant 0 : index
    %152 = vector.load %arg8[%c2_69, %c0_70, %c0_71] : memref<8x8x64xf32, #tpu.memory_space<vmem>>, vector<1x8x32xf32>
    %153 = vector.shape_cast %152 : vector<1x8x32xf32> to vector<8x32xf32>
    %154 = vector.shape_cast %143 : vector<8x32xf32> to vector<1x8x32xf32>
    tpu.vector_store %arg8[%c2_69, %c0_70, %c0_71], %154 {strides = array<i32>} : memref<8x8x64xf32, #tpu.memory_space<vmem>>, vector<1x8x32xf32>,
    %c2_72 = arith.constant 2 : index
    %c0_73 = arith.constant 0 : index
    %c32_74 = arith.constant 32 : index
    %155 = vector.load %arg8[%c2_72, %c0_73, %c32_74] : memref<8x8x64xf32, #tpu.memory_space<vmem>>, vector<1x8x32xf32>
    %156 = vector.shape_cast %155 : vector<1x8x32xf32> to vector<8x32xf32>
    %157 = vector.shape_cast %151 : vector<8x32xf32> to vector<1x8x32xf32>
    tpu.vector_store %arg8[%c2_72, %c0_73, %c32_74], %157 {strides = array<i32>} : memref<8x8x64xf32, #tpu.memory_space<vmem>>, vector<1x8x32xf32>,
    %c0_75 = arith.constant 0 : index
    %c3 = arith.constant 3 : index
    %c0_76 = arith.constant 0 : index
    %c0_77 = arith.constant 0 : index
    %158 = vector.load %arg1[%c0_75, %c3, %c0_76, %c0_77] : memref<8x8x4x32xf32, #tpu.memory_space<vmem>>, vector<8x1x4x32xf32>
    %159 = vector.shape_cast %158 : vector<8x1x4x32xf32> to vector<8x4x32xf32>
    %160 = vector.broadcast %1 : vector<1x1x32xf32> to vector<8x4x32xf32>
    %161 = arith.mulf %159, %160 : vector<8x4x32xf32>
    %cst_78 = arith.constant dense<0.000000e+00> : vector<8x4xf32>
    %162 = vector.multi_reduction <add>, %161, %cst_78 [2] : vector<8x4x32xf32> to vector<8x4xf32>
    %163 = vector.shape_cast %162 : vector<8x4xf32> to vector<8x4x1xf32>
    %c0_79 = arith.constant 0 : index
    %c0_80 = arith.constant 0 : index
    %164 = vector.load %arg3[%c0_79, %c0_80] : memref<1x1xf32, #tpu.memory_space<vmem>>, vector<1x1xf32>
    %165 = vector.shape_cast %164 : vector<1x1xf32> to vector<1x1x1xf32>
    %166 = vector.broadcast %165 : vector<1x1x1xf32> to vector<8x4x1xf32>
    %167 = arith.addf %163, %166 : vector<8x4x1xf32>
    %cst_81 = arith.constant dense<0xFF800000> : vector<8x1xf32>
    %168 = vector.multi_reduction <maximumf>, %167, %cst_81 [1] : vector<8x4x1xf32> to vector<8x1xf32>
    %169 = vector.shape_cast %168 : vector<8x1xf32> to vector<8x1x1xf32>
    %170 = vector.broadcast %169 : vector<8x1x1xf32> to vector<8x4x1xf32>
    %171 = arith.subf %167, %170 : vector<8x4x1xf32>
    %172 = math.exp %171 : vector<8x4x1xf32>
    %cst_82 = arith.constant dense<0.000000e+00> : vector<8x1xf32>
    %173 = vector.multi_reduction <add>, %172, %cst_82 [1] : vector<8x4x1xf32> to vector<8x1xf32>
    %174 = vector.shape_cast %173 : vector<8x1xf32> to vector<8x1x1xf32>
    %175 = vector.broadcast %174 : vector<8x1x1xf32> to vector<8x4x1xf32>
    %176 = arith.divf %172, %175 : vector<8x4x1xf32>
    %cst_83 = arith.constant 2.500000e-01 : f32
    %177 = vector.broadcast %cst_83 : f32 to vector<8x4x1xf32>
    %178 = arith.subf %176, %177 : vector<8x4x1xf32>
    %cst_84 = arith.constant -1.000000e+01 : f32
    %179 = vector.broadcast %cst_84 : f32 to vector<8x4x1xf32>
    %180 = arith.mulf %179, %178 : vector<8x4x1xf32>
    %181 = math.exp %180 : vector<8x4x1xf32>
    %cst_85 = arith.constant 1.000000e+00 : f32
    %182 = vector.broadcast %cst_85 : f32 to vector<8x4x1xf32>
    %183 = arith.addf %182, %181 : vector<8x4x1xf32>
    %cst_86 = arith.constant 1.000000e+00 : f32
    %184 = vector.broadcast %cst_86 : f32 to vector<8x4x1xf32>
    %185 = arith.divf %184, %183 : vector<8x4x1xf32>
    %cst_87 = arith.constant 1.000000e+00 : f32
    %186 = vector.broadcast %cst_87 : f32 to vector<8x4x1xf32>
    %187 = arith.subf %186, %185 : vector<8x4x1xf32>
    %188 = vector.broadcast %185 : vector<8x4x1xf32> to vector<8x4x32xf32>
    %189 = arith.mulf %188, %159 : vector<8x4x32xf32>
    %cst_88 = arith.constant dense<0.000000e+00> : vector<8x32xf32>
    %190 = vector.multi_reduction <add>, %189, %cst_88 [1] : vector<8x4x32xf32> to vector<8x32xf32>
    %cst_89 = arith.constant dense<0.000000e+00> : vector<8x1xf32>
    %191 = vector.multi_reduction <add>, %185, %cst_89 [1] : vector<8x4x1xf32> to vector<8x1xf32>
    %cst_90 = arith.constant 9.99999993E-9 : f32
    %192 = vector.broadcast %cst_90 : f32 to vector<8x1xf32>
    %193 = arith.addf %191, %192 : vector<8x1xf32>
    %194 = vector.broadcast %193 : vector<8x1xf32> to vector<8x32xf32>
    %195 = arith.divf %190, %194 : vector<8x32xf32>
    %196 = vector.broadcast %187 : vector<8x4x1xf32> to vector<8x4x32xf32>
    %197 = arith.mulf %196, %159 : vector<8x4x32xf32>
    %cst_91 = arith.constant dense<0.000000e+00> : vector<8x32xf32>
    %198 = vector.multi_reduction <add>, %197, %cst_91 [1] : vector<8x4x32xf32> to vector<8x32xf32>
    %cst_92 = arith.constant dense<0.000000e+00> : vector<8x1xf32>
    %199 = vector.multi_reduction <add>, %187, %cst_92 [1] : vector<8x4x1xf32> to vector<8x1xf32>
    %cst_93 = arith.constant 9.99999993E-9 : f32
    %200 = vector.broadcast %cst_93 : f32 to vector<8x1xf32>
    %201 = arith.addf %199, %200 : vector<8x1xf32>
    %202 = vector.broadcast %201 : vector<8x1xf32> to vector<8x32xf32>
    %203 = arith.divf %198, %202 : vector<8x32xf32>
    %c3_94 = arith.constant 3 : index
    %c0_95 = arith.constant 0 : index
    %c0_96 = arith.constant 0 : index
    %204 = vector.load %arg8[%c3_94, %c0_95, %c0_96] : memref<8x8x64xf32, #tpu.memory_space<vmem>>, vector<1x8x32xf32>
    %205 = vector.shape_cast %204 : vector<1x8x32xf32> to vector<8x32xf32>
    %206 = vector.shape_cast %195 : vector<8x32xf32> to vector<1x8x32xf32>
    tpu.vector_store %arg8[%c3_94, %c0_95, %c0_96], %206 {strides = array<i32>} : memref<8x8x64xf32, #tpu.memory_space<vmem>>, vector<1x8x32xf32>,
    %c3_97 = arith.constant 3 : index
    %c0_98 = arith.constant 0 : index
    %c32_99 = arith.constant 32 : index
    %207 = vector.load %arg8[%c3_97, %c0_98, %c32_99] : memref<8x8x64xf32, #tpu.memory_space<vmem>>, vector<1x8x32xf32>
    %208 = vector.shape_cast %207 : vector<1x8x32xf32> to vector<8x32xf32>
    %209 = vector.shape_cast %203 : vector<8x32xf32> to vector<1x8x32xf32>
    tpu.vector_store %arg8[%c3_97, %c0_98, %c32_99], %209 {strides = array<i32>} : memref<8x8x64xf32, #tpu.memory_space<vmem>>, vector<1x8x32xf32>,
    %c0_100 = arith.constant 0 : index
    %c4 = arith.constant 4 : index
    %c0_101 = arith.constant 0 : index
    %c0_102 = arith.constant 0 : index
    %210 = vector.load %arg1[%c0_100, %c4, %c0_101, %c0_102] : memref<8x8x4x32xf32, #tpu.memory_space<vmem>>, vector<8x1x4x32xf32>
    %211 = vector.shape_cast %210 : vector<8x1x4x32xf32> to vector<8x4x32xf32>
    %212 = vector.broadcast %1 : vector<1x1x32xf32> to vector<8x4x32xf32>
    %213 = arith.mulf %211, %212 : vector<8x4x32xf32>
    %cst_103 = arith.constant dense<0.000000e+00> : vector<8x4xf32>
    %214 = vector.multi_reduction <add>, %213, %cst_103 [2] : vector<8x4x32xf32> to vector<8x4xf32>
    %215 = vector.shape_cast %214 : vector<8x4xf32> to vector<8x4x1xf32>
    %c0_104 = arith.constant 0 : index
    %c0_105 = arith.constant 0 : index
    %216 = vector.load %arg3[%c0_104, %c0_105] : memref<1x1xf32, #tpu.memory_space<vmem>>, vector<1x1xf32>
    %217 = vector.shape_cast %216 : vector<1x1xf32> to vector<1x1x1xf32>
    %218 = vector.broadcast %217 : vector<1x1x1xf32> to vector<8x4x1xf32>
    %219 = arith.addf %215, %218 : vector<8x4x1xf32>
    %cst_106 = arith.constant dense<0xFF800000> : vector<8x1xf32>
    %220 = vector.multi_reduction <maximumf>, %219, %cst_106 [1] : vector<8x4x1xf32> to vector<8x1xf32>
    %221 = vector.shape_cast %220 : vector<8x1xf32> to vector<8x1x1xf32>
    %222 = vector.broadcast %221 : vector<8x1x1xf32> to vector<8x4x1xf32>
    %223 = arith.subf %219, %222 : vector<8x4x1xf32>
    %224 = math.exp %223 : vector<8x4x1xf32>
    %cst_107 = arith.constant dense<0.000000e+00> : vector<8x1xf32>
    %225 = vector.multi_reduction <add>, %224, %cst_107 [1] : vector<8x4x1xf32> to vector<8x1xf32>
    %226 = vector.shape_cast %225 : vector<8x1xf32> to vector<8x1x1xf32>
    %227 = vector.broadcast %226 : vector<8x1x1xf32> to vector<8x4x1xf32>
    %228 = arith.divf %224, %227 : vector<8x4x1xf32>
    %cst_108 = arith.constant 2.500000e-01 : f32
    %229 = vector.broadcast %cst_108 : f32 to vector<8x4x1xf32>
    %230 = arith.subf %228, %229 : vector<8x4x1xf32>
    %cst_109 = arith.constant -1.000000e+01 : f32
    %231 = vector.broadcast %cst_109 : f32 to vector<8x4x1xf32>
    %232 = arith.mulf %231, %230 : vector<8x4x1xf32>
    %233 = math.exp %232 : vector<8x4x1xf32>
    %cst_110 = arith.constant 1.000000e+00 : f32
    %234 = vector.broadcast %cst_110 : f32 to vector<8x4x1xf32>
    %235 = arith.addf %234, %233 : vector<8x4x1xf32>
    %cst_111 = arith.constant 1.000000e+00 : f32
    %236 = vector.broadcast %cst_111 : f32 to vector<8x4x1xf32>
    %237 = arith.divf %236, %235 : vector<8x4x1xf32>
    %cst_112 = arith.constant 1.000000e+00 : f32
    %238 = vector.broadcast %cst_112 : f32 to vector<8x4x1xf32>
    %239 = arith.subf %238, %237 : vector<8x4x1xf32>
    %240 = vector.broadcast %237 : vector<8x4x1xf32> to vector<8x4x32xf32>
    %241 = arith.mulf %240, %211 : vector<8x4x32xf32>
    %cst_113 = arith.constant dense<0.000000e+00> : vector<8x32xf32>
    %242 = vector.multi_reduction <add>, %241, %cst_113 [1] : vector<8x4x32xf32> to vector<8x32xf32>
    %cst_114 = arith.constant dense<0.000000e+00> : vector<8x1xf32>
    %243 = vector.multi_reduction <add>, %237, %cst_114 [1] : vector<8x4x1xf32> to vector<8x1xf32>
    %cst_115 = arith.constant 9.99999993E-9 : f32
    %244 = vector.broadcast %cst_115 : f32 to vector<8x1xf32>
    %245 = arith.addf %243, %244 : vector<8x1xf32>
    %246 = vector.broadcast %245 : vector<8x1xf32> to vector<8x32xf32>
    %247 = arith.divf %242, %246 : vector<8x32xf32>
    %248 = vector.broadcast %239 : vector<8x4x1xf32> to vector<8x4x32xf32>
    %249 = arith.mulf %248, %211 : vector<8x4x32xf32>
    %cst_116 = arith.constant dense<0.000000e+00> : vector<8x32xf32>
    %250 = vector.multi_reduction <add>, %249, %cst_116 [1] : vector<8x4x32xf32> to vector<8x32xf32>
    %cst_117 = arith.constant dense<0.000000e+00> : vector<8x1xf32>
    %251 = vector.multi_reduction <add>, %239, %cst_117 [1] : vector<8x4x1xf32> to vector<8x1xf32>
    %cst_118 = arith.constant 9.99999993E-9 : f32
    %252 = vector.broadcast %cst_118 : f32 to vector<8x1xf32>
    %253 = arith.addf %251, %252 : vector<8x1xf32>
    %254 = vector.broadcast %253 : vector<8x1xf32> to vector<8x32xf32>
    %255 = arith.divf %250, %254 : vector<8x32xf32>
    %c4_119 = arith.constant 4 : index
    %c0_120 = arith.constant 0 : index
    %c0_121 = arith.constant 0 : index
    %256 = vector.load %arg8[%c4_119, %c0_120, %c0_121] : memref<8x8x64xf32, #tpu.memory_space<vmem>>, vector<1x8x32xf32>
    %257 = vector.shape_cast %256 : vector<1x8x32xf32> to vector<8x32xf32>
    %258 = vector.shape_cast %247 : vector<8x32xf32> to vector<1x8x32xf32>
    tpu.vector_store %arg8[%c4_119, %c0_120, %c0_121], %258 {strides = array<i32>} : memref<8x8x64xf32, #tpu.memory_space<vmem>>, vector<1x8x32xf32>,
    %c4_122 = arith.constant 4 : index
    %c0_123 = arith.constant 0 : index
    %c32_124 = arith.constant 32 : index
    %259 = vector.load %arg8[%c4_122, %c0_123, %c32_124] : memref<8x8x64xf32, #tpu.memory_space<vmem>>, vector<1x8x32xf32>
    %260 = vector.shape_cast %259 : vector<1x8x32xf32> to vector<8x32xf32>
    %261 = vector.shape_cast %255 : vector<8x32xf32> to vector<1x8x32xf32>
    tpu.vector_store %arg8[%c4_122, %c0_123, %c32_124], %261 {strides = array<i32>} : memref<8x8x64xf32, #tpu.memory_space<vmem>>, vector<1x8x32xf32>,
    %c0_125 = arith.constant 0 : index
    %c5 = arith.constant 5 : index
    %c0_126 = arith.constant 0 : index
    %c0_127 = arith.constant 0 : index
    %262 = vector.load %arg1[%c0_125, %c5, %c0_126, %c0_127] : memref<8x8x4x32xf32, #tpu.memory_space<vmem>>, vector<8x1x4x32xf32>
    %263 = vector.shape_cast %262 : vector<8x1x4x32xf32> to vector<8x4x32xf32>
    %264 = vector.broadcast %1 : vector<1x1x32xf32> to vector<8x4x32xf32>
    %265 = arith.mulf %263, %264 : vector<8x4x32xf32>
    %cst_128 = arith.constant dense<0.000000e+00> : vector<8x4xf32>
    %266 = vector.multi_reduction <add>, %265, %cst_128 [2] : vector<8x4x32xf32> to vector<8x4xf32>
    %267 = vector.shape_cast %266 : vector<8x4xf32> to vector<8x4x1xf32>
    %c0_129 = arith.constant 0 : index
    %c0_130 = arith.constant 0 : index
    %268 = vector.load %arg3[%c0_129, %c0_130] : memref<1x1xf32, #tpu.memory_space<vmem>>, vector<1x1xf32>
    %269 = vector.shape_cast %268 : vector<1x1xf32> to vector<1x1x1xf32>
    %270 = vector.broadcast %269 : vector<1x1x1xf32> to vector<8x4x1xf32>
    %271 = arith.addf %267, %270 : vector<8x4x1xf32>
    %cst_131 = arith.constant dense<0xFF800000> : vector<8x1xf32>
    %272 = vector.multi_reduction <maximumf>, %271, %cst_131 [1] : vector<8x4x1xf32> to vector<8x1xf32>
    %273 = vector.shape_cast %272 : vector<8x1xf32> to vector<8x1x1xf32>
    %274 = vector.broadcast %273 : vector<8x1x1xf32> to vector<8x4x1xf32>
    %275 = arith.subf %271, %274 : vector<8x4x1xf32>
    %276 = math.exp %275 : vector<8x4x1xf32>
    %cst_132 = arith.constant dense<0.000000e+00> : vector<8x1xf32>
    %277 = vector.multi_reduction <add>, %276, %cst_132 [1] : vector<8x4x1xf32> to vector<8x1xf32>
    %278 = vector.shape_cast %277 : vector<8x1xf32> to vector<8x1x1xf32>
    %279 = vector.broadcast %278 : vector<8x1x1xf32> to vector<8x4x1xf32>
    %280 = arith.divf %276, %279 : vector<8x4x1xf32>
    %cst_133 = arith.constant 2.500000e-01 : f32
    %281 = vector.broadcast %cst_133 : f32 to vector<8x4x1xf32>
    %282 = arith.subf %280, %281 : vector<8x4x1xf32>
    %cst_134 = arith.constant -1.000000e+01 : f32
    %283 = vector.broadcast %cst_134 : f32 to vector<8x4x1xf32>
    %284 = arith.mulf %283, %282 : vector<8x4x1xf32>
    %285 = math.exp %284 : vector<8x4x1xf32>
    %cst_135 = arith.constant 1.000000e+00 : f32
    %286 = vector.broadcast %cst_135 : f32 to vector<8x4x1xf32>
    %287 = arith.addf %286, %285 : vector<8x4x1xf32>
    %cst_136 = arith.constant 1.000000e+00 : f32
    %288 = vector.broadcast %cst_136 : f32 to vector<8x4x1xf32>
    %289 = arith.divf %288, %287 : vector<8x4x1xf32>
    %cst_137 = arith.constant 1.000000e+00 : f32
    %290 = vector.broadcast %cst_137 : f32 to vector<8x4x1xf32>
    %291 = arith.subf %290, %289 : vector<8x4x1xf32>
    %292 = vector.broadcast %289 : vector<8x4x1xf32> to vector<8x4x32xf32>
    %293 = arith.mulf %292, %263 : vector<8x4x32xf32>
    %cst_138 = arith.constant dense<0.000000e+00> : vector<8x32xf32>
    %294 = vector.multi_reduction <add>, %293, %cst_138 [1] : vector<8x4x32xf32> to vector<8x32xf32>
    %cst_139 = arith.constant dense<0.000000e+00> : vector<8x1xf32>
    %295 = vector.multi_reduction <add>, %289, %cst_139 [1] : vector<8x4x1xf32> to vector<8x1xf32>
    %cst_140 = arith.constant 9.99999993E-9 : f32
    %296 = vector.broadcast %cst_140 : f32 to vector<8x1xf32>
    %297 = arith.addf %295, %296 : vector<8x1xf32>
    %298 = vector.broadcast %297 : vector<8x1xf32> to vector<8x32xf32>
    %299 = arith.divf %294, %298 : vector<8x32xf32>
    %300 = vector.broadcast %291 : vector<8x4x1xf32> to vector<8x4x32xf32>
    %301 = arith.mulf %300, %263 : vector<8x4x32xf32>
    %cst_141 = arith.constant dense<0.000000e+00> : vector<8x32xf32>
    %302 = vector.multi_reduction <add>, %301, %cst_141 [1] : vector<8x4x32xf32> to vector<8x32xf32>
    %cst_142 = arith.constant dense<0.000000e+00> : vector<8x1xf32>
    %303 = vector.multi_reduction <add>, %291, %cst_142 [1] : vector<8x4x1xf32> to vector<8x1xf32>
    %cst_143 = arith.constant 9.99999993E-9 : f32
    %304 = vector.broadcast %cst_143 : f32 to vector<8x1xf32>
    %305 = arith.addf %303, %304 : vector<8x1xf32>
    %306 = vector.broadcast %305 : vector<8x1xf32> to vector<8x32xf32>
    %307 = arith.divf %302, %306 : vector<8x32xf32>
    %c5_144 = arith.constant 5 : index
    %c0_145 = arith.constant 0 : index
    %c0_146 = arith.constant 0 : index
    %308 = vector.load %arg8[%c5_144, %c0_145, %c0_146] : memref<8x8x64xf32, #tpu.memory_space<vmem>>, vector<1x8x32xf32>
    %309 = vector.shape_cast %308 : vector<1x8x32xf32> to vector<8x32xf32>
    %310 = vector.shape_cast %299 : vector<8x32xf32> to vector<1x8x32xf32>
    tpu.vector_store %arg8[%c5_144, %c0_145, %c0_146], %310 {strides = array<i32>} : memref<8x8x64xf32, #tpu.memory_space<vmem>>, vector<1x8x32xf32>,
    %c5_147 = arith.constant 5 : index
    %c0_148 = arith.constant 0 : index
    %c32_149 = arith.constant 32 : index
    %311 = vector.load %arg8[%c5_147, %c0_148, %c32_149] : memref<8x8x64xf32, #tpu.memory_space<vmem>>, vector<1x8x32xf32>
    %312 = vector.shape_cast %311 : vector<1x8x32xf32> to vector<8x32xf32>
    %313 = vector.shape_cast %307 : vector<8x32xf32> to vector<1x8x32xf32>
    tpu.vector_store %arg8[%c5_147, %c0_148, %c32_149], %313 {strides = array<i32>} : memref<8x8x64xf32, #tpu.memory_space<vmem>>, vector<1x8x32xf32>,
    %c0_150 = arith.constant 0 : index
    %c6 = arith.constant 6 : index
    %c0_151 = arith.constant 0 : index
    %c0_152 = arith.constant 0 : index
    %314 = vector.load %arg1[%c0_150, %c6, %c0_151, %c0_152] : memref<8x8x4x32xf32, #tpu.memory_space<vmem>>, vector<8x1x4x32xf32>
    %315 = vector.shape_cast %314 : vector<8x1x4x32xf32> to vector<8x4x32xf32>
    %316 = vector.broadcast %1 : vector<1x1x32xf32> to vector<8x4x32xf32>
    %317 = arith.mulf %315, %316 : vector<8x4x32xf32>
    %cst_153 = arith.constant dense<0.000000e+00> : vector<8x4xf32>
    %318 = vector.multi_reduction <add>, %317, %cst_153 [2] : vector<8x4x32xf32> to vector<8x4xf32>
    %319 = vector.shape_cast %318 : vector<8x4xf32> to vector<8x4x1xf32>
    %c0_154 = arith.constant 0 : index
    %c0_155 = arith.constant 0 : index
    %320 = vector.load %arg3[%c0_154, %c0_155] : memref<1x1xf32, #tpu.memory_space<vmem>>, vector<1x1xf32>
    %321 = vector.shape_cast %320 : vector<1x1xf32> to vector<1x1x1xf32>
    %322 = vector.broadcast %321 : vector<1x1x1xf32> to vector<8x4x1xf32>
    %323 = arith.addf %319, %322 : vector<8x4x1xf32>
    %cst_156 = arith.constant dense<0xFF800000> : vector<8x1xf32>
    %324 = vector.multi_reduction <maximumf>, %323, %cst_156 [1] : vector<8x4x1xf32> to vector<8x1xf32>
    %325 = vector.shape_cast %324 : vector<8x1xf32> to vector<8x1x1xf32>
    %326 = vector.broadcast %325 : vector<8x1x1xf32> to vector<8x4x1xf32>
    %327 = arith.subf %323, %326 : vector<8x4x1xf32>
    %328 = math.exp %327 : vector<8x4x1xf32>
    %cst_157 = arith.constant dense<0.000000e+00> : vector<8x1xf32>
    %329 = vector.multi_reduction <add>, %328, %cst_157 [1] : vector<8x4x1xf32> to vector<8x1xf32>
    %330 = vector.shape_cast %329 : vector<8x1xf32> to vector<8x1x1xf32>
    %331 = vector.broadcast %330 : vector<8x1x1xf32> to vector<8x4x1xf32>
    %332 = arith.divf %328, %331 : vector<8x4x1xf32>
    %cst_158 = arith.constant 2.500000e-01 : f32
    %333 = vector.broadcast %cst_158 : f32 to vector<8x4x1xf32>
    %334 = arith.subf %332, %333 : vector<8x4x1xf32>
    %cst_159 = arith.constant -1.000000e+01 : f32
    %335 = vector.broadcast %cst_159 : f32 to vector<8x4x1xf32>
    %336 = arith.mulf %335, %334 : vector<8x4x1xf32>
    %337 = math.exp %336 : vector<8x4x1xf32>
    %cst_160 = arith.constant 1.000000e+00 : f32
    %338 = vector.broadcast %cst_160 : f32 to vector<8x4x1xf32>
    %339 = arith.addf %338, %337 : vector<8x4x1xf32>
    %cst_161 = arith.constant 1.000000e+00 : f32
    %340 = vector.broadcast %cst_161 : f32 to vector<8x4x1xf32>
    %341 = arith.divf %340, %339 : vector<8x4x1xf32>
    %cst_162 = arith.constant 1.000000e+00 : f32
    %342 = vector.broadcast %cst_162 : f32 to vector<8x4x1xf32>
    %343 = arith.subf %342, %341 : vector<8x4x1xf32>
    %344 = vector.broadcast %341 : vector<8x4x1xf32> to vector<8x4x32xf32>
    %345 = arith.mulf %344, %315 : vector<8x4x32xf32>
    %cst_163 = arith.constant dense<0.000000e+00> : vector<8x32xf32>
    %346 = vector.multi_reduction <add>, %345, %cst_163 [1] : vector<8x4x32xf32> to vector<8x32xf32>
    %cst_164 = arith.constant dense<0.000000e+00> : vector<8x1xf32>
    %347 = vector.multi_reduction <add>, %341, %cst_164 [1] : vector<8x4x1xf32> to vector<8x1xf32>
    %cst_165 = arith.constant 9.99999993E-9 : f32
    %348 = vector.broadcast %cst_165 : f32 to vector<8x1xf32>
    %349 = arith.addf %347, %348 : vector<8x1xf32>
    %350 = vector.broadcast %349 : vector<8x1xf32> to vector<8x32xf32>
    %351 = arith.divf %346, %350 : vector<8x32xf32>
    %352 = vector.broadcast %343 : vector<8x4x1xf32> to vector<8x4x32xf32>
    %353 = arith.mulf %352, %315 : vector<8x4x32xf32>
    %cst_166 = arith.constant dense<0.000000e+00> : vector<8x32xf32>
    %354 = vector.multi_reduction <add>, %353, %cst_166 [1] : vector<8x4x32xf32> to vector<8x32xf32>
    %cst_167 = arith.constant dense<0.000000e+00> : vector<8x1xf32>
    %355 = vector.multi_reduction <add>, %343, %cst_167 [1] : vector<8x4x1xf32> to vector<8x1xf32>
    %cst_168 = arith.constant 9.99999993E-9 : f32
    %356 = vector.broadcast %cst_168 : f32 to vector<8x1xf32>
    %357 = arith.addf %355, %356 : vector<8x1xf32>
    %358 = vector.broadcast %357 : vector<8x1xf32> to vector<8x32xf32>
    %359 = arith.divf %354, %358 : vector<8x32xf32>
    %c6_169 = arith.constant 6 : index
    %c0_170 = arith.constant 0 : index
    %c0_171 = arith.constant 0 : index
    %360 = vector.load %arg8[%c6_169, %c0_170, %c0_171] : memref<8x8x64xf32, #tpu.memory_space<vmem>>, vector<1x8x32xf32>
    %361 = vector.shape_cast %360 : vector<1x8x32xf32> to vector<8x32xf32>
    %362 = vector.shape_cast %351 : vector<8x32xf32> to vector<1x8x32xf32>
    tpu.vector_store %arg8[%c6_169, %c0_170, %c0_171], %362 {strides = array<i32>} : memref<8x8x64xf32, #tpu.memory_space<vmem>>, vector<1x8x32xf32>,
    %c6_172 = arith.constant 6 : index
    %c0_173 = arith.constant 0 : index
    %c32_174 = arith.constant 32 : index
    %363 = vector.load %arg8[%c6_172, %c0_173, %c32_174] : memref<8x8x64xf32, #tpu.memory_space<vmem>>, vector<1x8x32xf32>
    %364 = vector.shape_cast %363 : vector<1x8x32xf32> to vector<8x32xf32>
    %365 = vector.shape_cast %359 : vector<8x32xf32> to vector<1x8x32xf32>
    tpu.vector_store %arg8[%c6_172, %c0_173, %c32_174], %365 {strides = array<i32>} : memref<8x8x64xf32, #tpu.memory_space<vmem>>, vector<1x8x32xf32>,
    %c0_175 = arith.constant 0 : index
    %c7 = arith.constant 7 : index
    %c0_176 = arith.constant 0 : index
    %c0_177 = arith.constant 0 : index
    %366 = vector.load %arg1[%c0_175, %c7, %c0_176, %c0_177] : memref<8x8x4x32xf32, #tpu.memory_space<vmem>>, vector<8x1x4x32xf32>
    %367 = vector.shape_cast %366 : vector<8x1x4x32xf32> to vector<8x4x32xf32>
    %368 = vector.broadcast %1 : vector<1x1x32xf32> to vector<8x4x32xf32>
    %369 = arith.mulf %367, %368 : vector<8x4x32xf32>
    %cst_178 = arith.constant dense<0.000000e+00> : vector<8x4xf32>
    %370 = vector.multi_reduction <add>, %369, %cst_178 [2] : vector<8x4x32xf32> to vector<8x4xf32>
    %371 = vector.shape_cast %370 : vector<8x4xf32> to vector<8x4x1xf32>
    %c0_179 = arith.constant 0 : index
    %c0_180 = arith.constant 0 : index
    %372 = vector.load %arg3[%c0_179, %c0_180] : memref<1x1xf32, #tpu.memory_space<vmem>>, vector<1x1xf32>
    %373 = vector.shape_cast %372 : vector<1x1xf32> to vector<1x1x1xf32>
    %374 = vector.broadcast %373 : vector<1x1x1xf32> to vector<8x4x1xf32>
    %375 = arith.addf %371, %374 : vector<8x4x1xf32>
    %cst_181 = arith.constant dense<0xFF800000> : vector<8x1xf32>
    %376 = vector.multi_reduction <maximumf>, %375, %cst_181 [1] : vector<8x4x1xf32> to vector<8x1xf32>
    %377 = vector.shape_cast %376 : vector<8x1xf32> to vector<8x1x1xf32>
    %378 = vector.broadcast %377 : vector<8x1x1xf32> to vector<8x4x1xf32>
    %379 = arith.subf %375, %378 : vector<8x4x1xf32>
    %380 = math.exp %379 : vector<8x4x1xf32>
    %cst_182 = arith.constant dense<0.000000e+00> : vector<8x1xf32>
    %381 = vector.multi_reduction <add>, %380, %cst_182 [1] : vector<8x4x1xf32> to vector<8x1xf32>
    %382 = vector.shape_cast %381 : vector<8x1xf32> to vector<8x1x1xf32>
    %383 = vector.broadcast %382 : vector<8x1x1xf32> to vector<8x4x1xf32>
    %384 = arith.divf %380, %383 : vector<8x4x1xf32>
    %cst_183 = arith.constant 2.500000e-01 : f32
    %385 = vector.broadcast %cst_183 : f32 to vector<8x4x1xf32>
    %386 = arith.subf %384, %385 : vector<8x4x1xf32>
    %cst_184 = arith.constant -1.000000e+01 : f32
    %387 = vector.broadcast %cst_184 : f32 to vector<8x4x1xf32>
    %388 = arith.mulf %387, %386 : vector<8x4x1xf32>
    %389 = math.exp %388 : vector<8x4x1xf32>
    %cst_185 = arith.constant 1.000000e+00 : f32
    %390 = vector.broadcast %cst_185 : f32 to vector<8x4x1xf32>
    %391 = arith.addf %390, %389 : vector<8x4x1xf32>
    %cst_186 = arith.constant 1.000000e+00 : f32
    %392 = vector.broadcast %cst_186 : f32 to vector<8x4x1xf32>
    %393 = arith.divf %392, %391 : vector<8x4x1xf32>
    %cst_187 = arith.constant 1.000000e+00 : f32
    %394 = vector.broadcast %cst_187 : f32 to vector<8x4x1xf32>
    %395 = arith.subf %394, %393 : vector<8x4x1xf32>
    %396 = vector.broadcast %393 : vector<8x4x1xf32> to vector<8x4x32xf32>
    %397 = arith.mulf %396, %367 : vector<8x4x32xf32>
    %cst_188 = arith.constant dense<0.000000e+00> : vector<8x32xf32>
    %398 = vector.multi_reduction <add>, %397, %cst_188 [1] : vector<8x4x32xf32> to vector<8x32xf32>
    %cst_189 = arith.constant dense<0.000000e+00> : vector<8x1xf32>
    %399 = vector.multi_reduction <add>, %393, %cst_189 [1] : vector<8x4x1xf32> to vector<8x1xf32>
    %cst_190 = arith.constant 9.99999993E-9 : f32
    %400 = vector.broadcast %cst_190 : f32 to vector<8x1xf32>
    %401 = arith.addf %399, %400 : vector<8x1xf32>
    %402 = vector.broadcast %401 : vector<8x1xf32> to vector<8x32xf32>
    %403 = arith.divf %398, %402 : vector<8x32xf32>
    %404 = vector.broadcast %395 : vector<8x4x1xf32> to vector<8x4x32xf32>
    %405 = arith.mulf %404, %367 : vector<8x4x32xf32>
    %cst_191 = arith.constant dense<0.000000e+00> : vector<8x32xf32>
    %406 = vector.multi_reduction <add>, %405, %cst_191 [1] : vector<8x4x32xf32> to vector<8x32xf32>
    %cst_192 = arith.constant dense<0.000000e+00> : vector<8x1xf32>
    %407 = vector.multi_reduction <add>, %395, %cst_192 [1] : vector<8x4x1xf32> to vector<8x1xf32>
    %cst_193 = arith.constant 9.99999993E-9 : f32
    %408 = vector.broadcast %cst_193 : f32 to vector<8x1xf32>
    %409 = arith.addf %407, %408 : vector<8x1xf32>
    %410 = vector.broadcast %409 : vector<8x1xf32> to vector<8x32xf32>
    %411 = arith.divf %406, %410 : vector<8x32xf32>
    %c7_194 = arith.constant 7 : index
    %c0_195 = arith.constant 0 : index
    %c0_196 = arith.constant 0 : index
    %412 = vector.load %arg8[%c7_194, %c0_195, %c0_196] : memref<8x8x64xf32, #tpu.memory_space<vmem>>, vector<1x8x32xf32>
    %413 = vector.shape_cast %412 : vector<1x8x32xf32> to vector<8x32xf32>
    %414 = vector.shape_cast %403 : vector<8x32xf32> to vector<1x8x32xf32>
    tpu.vector_store %arg8[%c7_194, %c0_195, %c0_196], %414 {strides = array<i32>} : memref<8x8x64xf32, #tpu.memory_space<vmem>>, vector<1x8x32xf32>,
    %c7_197 = arith.constant 7 : index
    %c0_198 = arith.constant 0 : index
    %c32_199 = arith.constant 32 : index
    %415 = vector.load %arg8[%c7_197, %c0_198, %c32_199] : memref<8x8x64xf32, #tpu.memory_space<vmem>>, vector<1x8x32xf32>
    %416 = vector.shape_cast %415 : vector<1x8x32xf32> to vector<8x32xf32>
    %417 = vector.shape_cast %411 : vector<8x32xf32> to vector<1x8x32xf32>
    tpu.vector_store %arg8[%c7_197, %c0_198, %c32_199], %417 {strides = array<i32>} : memref<8x8x64xf32, #tpu.memory_space<vmem>>, vector<1x8x32xf32>,
    %c0_200 = arith.constant 0 : index
    %c0_201 = arith.constant 0 : index
    %c0_202 = arith.constant 0 : index
    %418 = vector.load %arg8[%c0_200, %c0_201, %c0_202] : memref<8x8x64xf32, #tpu.memory_space<vmem>>, vector<8x8x64xf32>
    %419 = vector.shape_cast %418 : vector<8x8x64xf32> to vector<64x64xf32>
    %420 = arith.truncf %419 : vector<64x64xf32> to vector<64x64xbf16>
    %c0_203 = arith.constant 0 : index
    %c0_204 = arith.constant 0 : index
    %c0_205 = arith.constant 0 : index
    %421 = vector.load %arg4[%c0_203, %c0_204, %c0_205] : memref<2x64x256xbf16, #tpu.memory_space<vmem>>, vector<1x64x256xbf16>
    %422 = vector.shape_cast %421 : vector<1x64x256xbf16> to vector<64x256xbf16>
    %cst_206 = arith.constant dense<0.000000e+00> : vector<64x256xf32>
    %423 = tpu.matmul %420, %422, %cst_206 {dimension_numbers = #tpu.dot_dimension_numbers<[1], [0], [0], [1], [0, 0, 1, 1], [], []>} : vector<64x64xbf16>, vector<64x256xbf16>, vector<64x256xf32> -> vector<64x256xf32>
    %c0_207 = arith.constant 0 : index
    %c0_208 = arith.constant 0 : index
    %c0_209 = arith.constant 0 : index
    %424 = vector.load %arg6[%c0_207, %c0_208, %c0_209] : memref<2x1x256xf32, #tpu.memory_space<vmem>>, vector<1x1x256xf32>
    %425 = vector.shape_cast %424 : vector<1x1x256xf32> to vector<1x256xf32>
    %426 = vector.broadcast %425 : vector<1x256xf32> to vector<64x256xf32>
    %427 = arith.addf %423, %426 : vector<64x256xf32>
    %428 = vector.shape_cast %427 : vector<64x256xf32> to vector<8x8x256xf32>
    %c0_210 = arith.constant 0 : index
    %c0_211 = arith.constant 0 : index
    %c0_212 = arith.constant 0 : index
    %429 = vector.load %arg9[%c0_210, %c0_211, %c0_212] : memref<8x8x256xf32, #tpu.memory_space<vmem>>, vector<8x8x256xf32>
    tpu.vector_store %arg9[%c0_210, %c0_211, %c0_212], %428 {strides = array<i32>} : memref<8x8x256xf32, #tpu.memory_space<vmem>>, vector<8x8x256xf32>,
    %c0_213 = arith.constant 0 : index
    %c0_214 = arith.constant 0 : index
    %c0_215 = arith.constant 0 : index
    %430 = vector.load %arg5[%c0_213, %c0_214, %c0_215] : memref<2x64x256xbf16, #tpu.memory_space<vmem>>, vector<1x64x256xbf16>
    %431 = vector.shape_cast %430 : vector<1x64x256xbf16> to vector<64x256xbf16>
    %cst_216 = arith.constant 0.000000e+00 : f32
    %432 = vector.broadcast %cst_216 : f32 to vector<8x64xf32>
    %c0_i32 = arith.constant 0 : i32
    %433 = arith.index_cast %c0_i32 : i32 to index
    %c0_217 = arith.constant 0 : index
    %c0_218 = arith.constant 0 : index
    %434 = vector.load %arg9[%433, %c0_217, %c0_218] : memref<8x8x256xf32, #tpu.memory_space<vmem>>, vector<1x8x256xf32>
    %435 = vector.shape_cast %434 : vector<1x8x256xf32> to vector<8x256xf32>
    %436 = arith.truncf %432 : vector<8x64xf32> to vector<8x64xbf16>
    %cst_219 = arith.constant dense<0.000000e+00> : vector<8x256xf32>
    %437 = tpu.matmul %436, %431, %cst_219 {dimension_numbers = #tpu.dot_dimension_numbers<[1], [0], [0], [1], [0, 0, 1, 1], [], []>} : vector<8x64xbf16>, vector<64x256xbf16>, vector<8x256xf32> -> vector<8x256xf32>
    %438 = arith.addf %435, %437 : vector<8x256xf32>
    %439 = vector.extract_strided_slice %438 {offsets = [0, 0], sizes = [8, 192], strides = [1, 1]} : vector<8x256xf32> to vector<8x192xf32>
    %cst_220 = arith.constant 0.000000e+00 : f32
    %440 = vector.broadcast %cst_220 : f32 to vector<8x192xf32>
    %441 = arith.subf %440, %439 : vector<8x192xf32>
    %442 = math.exp %441 : vector<8x192xf32>
    %cst_221 = arith.constant 1.000000e+00 : f32
    %443 = vector.broadcast %cst_221 : f32 to vector<8x192xf32>
    %444 = arith.addf %443, %442 : vector<8x192xf32>
    %445 = tpu.reciprocal %444 {approx = true} : vector<8x192xf32> -> vector<8x192xf32>
    %446 = vector.extract_strided_slice %445 {offsets = [0, 0], sizes = [8, 64], strides = [1, 1]} : vector<8x192xf32> to vector<8x64xf32>
    %447 = vector.extract_strided_slice %445 {offsets = [0, 64], sizes = [8, 64], strides = [1, 1]} : vector<8x192xf32> to vector<8x64xf32>
    %448 = vector.extract_strided_slice %445 {offsets = [0, 128], sizes = [8, 64], strides = [1, 1]} : vector<8x192xf32> to vector<8x64xf32>
    %449 = vector.extract_strided_slice %438 {offsets = [0, 192], sizes = [8, 64], strides = [1, 1]} : vector<8x256xf32> to vector<8x64xf32>
    %450 = math.tanh %449 : vector<8x64xf32>
    %451 = arith.mulf %447, %432 : vector<8x64xf32>
    %452 = arith.mulf %446, %450 : vector<8x64xf32>
    %453 = arith.addf %451, %452 : vector<8x64xf32>
    %454 = math.tanh %453 : vector<8x64xf32>
    %455 = arith.mulf %448, %454 : vector<8x64xf32>
    %456 = arith.index_cast %c0_i32 : i32 to index
    %c0_222 = arith.constant 0 : index
    %c0_223 = arith.constant 0 : index
    %457 = vector.load %arg8[%456, %c0_222, %c0_223] : memref<8x8x64xf32, #tpu.memory_space<vmem>>, vector<1x8x64xf32>
    %458 = vector.shape_cast %457 : vector<1x8x64xf32> to vector<8x64xf32>
    %459 = vector.shape_cast %455 : vector<8x64xf32> to vector<1x8x64xf32>
    tpu.vector_store %arg8[%456, %c0_222, %c0_223], %459 {strides = array<i32>} : memref<8x8x64xf32, #tpu.memory_space<vmem>>, vector<1x8x64xf32>,
    %c1_i32 = arith.constant 1 : i32
    %460 = arith.index_cast %c1_i32 : i32 to index
    %c0_224 = arith.constant 0 : index
    %c0_225 = arith.constant 0 : index
    %461 = vector.load %arg9[%460, %c0_224, %c0_225] : memref<8x8x256xf32, #tpu.memory_space<vmem>>, vector<1x8x256xf32>
    %462 = vector.shape_cast %461 : vector<1x8x256xf32> to vector<8x256xf32>
    %463 = arith.truncf %455 : vector<8x64xf32> to vector<8x64xbf16>
    %cst_226 = arith.constant dense<0.000000e+00> : vector<8x256xf32>
    %464 = tpu.matmul %463, %431, %cst_226 {dimension_numbers = #tpu.dot_dimension_numbers<[1], [0], [0], [1], [0, 0, 1, 1], [], []>} : vector<8x64xbf16>, vector<64x256xbf16>, vector<8x256xf32> -> vector<8x256xf32>
    %465 = arith.addf %462, %464 : vector<8x256xf32>
    %466 = vector.extract_strided_slice %465 {offsets = [0, 0], sizes = [8, 192], strides = [1, 1]} : vector<8x256xf32> to vector<8x192xf32>
    %cst_227 = arith.constant 0.000000e+00 : f32
    %467 = vector.broadcast %cst_227 : f32 to vector<8x192xf32>
    %468 = arith.subf %467, %466 : vector<8x192xf32>
    %469 = math.exp %468 : vector<8x192xf32>
    %cst_228 = arith.constant 1.000000e+00 : f32
    %470 = vector.broadcast %cst_228 : f32 to vector<8x192xf32>
    %471 = arith.addf %470, %469 : vector<8x192xf32>
    %472 = tpu.reciprocal %471 {approx = true} : vector<8x192xf32> -> vector<8x192xf32>
    %473 = vector.extract_strided_slice %472 {offsets = [0, 0], sizes = [8, 64], strides = [1, 1]} : vector<8x192xf32> to vector<8x64xf32>
    %474 = vector.extract_strided_slice %472 {offsets = [0, 64], sizes = [8, 64], strides = [1, 1]} : vector<8x192xf32> to vector<8x64xf32>
    %475 = vector.extract_strided_slice %472 {offsets = [0, 128], sizes = [8, 64], strides = [1, 1]} : vector<8x192xf32> to vector<8x64xf32>
    %476 = vector.extract_strided_slice %465 {offsets = [0, 192], sizes = [8, 64], strides = [1, 1]} : vector<8x256xf32> to vector<8x64xf32>
    %477 = math.tanh %476 : vector<8x64xf32>
    %478 = arith.mulf %474, %453 : vector<8x64xf32>
    %479 = arith.mulf %473, %477 : vector<8x64xf32>
    %480 = arith.addf %478, %479 : vector<8x64xf32>
    %481 = math.tanh %480 : vector<8x64xf32>
    %482 = arith.mulf %475, %481 : vector<8x64xf32>
    %483 = arith.index_cast %c1_i32 : i32 to index
    %c0_229 = arith.constant 0 : index
    %c0_230 = arith.constant 0 : index
    %484 = vector.load %arg8[%483, %c0_229, %c0_230] : memref<8x8x64xf32, #tpu.memory_space<vmem>>, vector<1x8x64xf32>
    %485 = vector.shape_cast %484 : vector<1x8x64xf32> to vector<8x64xf32>
    %486 = vector.shape_cast %482 : vector<8x64xf32> to vector<1x8x64xf32>
    tpu.vector_store %arg8[%483, %c0_229, %c0_230], %486 {strides = array<i32>} : memref<8x8x64xf32, #tpu.memory_space<vmem>>, vector<1x8x64xf32>,
    %c2_i32 = arith.constant 2 : i32
    %487 = arith.index_cast %c2_i32 : i32 to index
    %c0_231 = arith.constant 0 : index
    %c0_232 = arith.constant 0 : index
    %488 = vector.load %arg9[%487, %c0_231, %c0_232] : memref<8x8x256xf32, #tpu.memory_space<vmem>>, vector<1x8x256xf32>
    %489 = vector.shape_cast %488 : vector<1x8x256xf32> to vector<8x256xf32>
    %490 = arith.truncf %482 : vector<8x64xf32> to vector<8x64xbf16>
    %cst_233 = arith.constant dense<0.000000e+00> : vector<8x256xf32>
    %491 = tpu.matmul %490, %431, %cst_233 {dimension_numbers = #tpu.dot_dimension_numbers<[1], [0], [0], [1], [0, 0, 1, 1], [], []>} : vector<8x64xbf16>, vector<64x256xbf16>, vector<8x256xf32> -> vector<8x256xf32>
    %492 = arith.addf %489, %491 : vector<8x256xf32>
    %493 = vector.extract_strided_slice %492 {offsets = [0, 0], sizes = [8, 192], strides = [1, 1]} : vector<8x256xf32> to vector<8x192xf32>
    %cst_234 = arith.constant 0.000000e+00 : f32
    %494 = vector.broadcast %cst_234 : f32 to vector<8x192xf32>
    %495 = arith.subf %494, %493 : vector<8x192xf32>
    %496 = math.exp %495 : vector<8x192xf32>
    %cst_235 = arith.constant 1.000000e+00 : f32
    %497 = vector.broadcast %cst_235 : f32 to vector<8x192xf32>
    %498 = arith.addf %497, %496 : vector<8x192xf32>
    %499 = tpu.reciprocal %498 {approx = true} : vector<8x192xf32> -> vector<8x192xf32>
    %500 = vector.extract_strided_slice %499 {offsets = [0, 0], sizes = [8, 64], strides = [1, 1]} : vector<8x192xf32> to vector<8x64xf32>
    %501 = vector.extract_strided_slice %499 {offsets = [0, 64], sizes = [8, 64], strides = [1, 1]} : vector<8x192xf32> to vector<8x64xf32>
    %502 = vector.extract_strided_slice %499 {offsets = [0, 128], sizes = [8, 64], strides = [1, 1]} : vector<8x192xf32> to vector<8x64xf32>
    %503 = vector.extract_strided_slice %492 {offsets = [0, 192], sizes = [8, 64], strides = [1, 1]} : vector<8x256xf32> to vector<8x64xf32>
    %504 = math.tanh %503 : vector<8x64xf32>
    %505 = arith.mulf %501, %480 : vector<8x64xf32>
    %506 = arith.mulf %500, %504 : vector<8x64xf32>
    %507 = arith.addf %505, %506 : vector<8x64xf32>
    %508 = math.tanh %507 : vector<8x64xf32>
    %509 = arith.mulf %502, %508 : vector<8x64xf32>
    %510 = arith.index_cast %c2_i32 : i32 to index
    %c0_236 = arith.constant 0 : index
    %c0_237 = arith.constant 0 : index
    %511 = vector.load %arg8[%510, %c0_236, %c0_237] : memref<8x8x64xf32, #tpu.memory_space<vmem>>, vector<1x8x64xf32>
    %512 = vector.shape_cast %511 : vector<1x8x64xf32> to vector<8x64xf32>
    %513 = vector.shape_cast %509 : vector<8x64xf32> to vector<1x8x64xf32>
    tpu.vector_store %arg8[%510, %c0_236, %c0_237], %513 {strides = array<i32>} : memref<8x8x64xf32, #tpu.memory_space<vmem>>, vector<1x8x64xf32>,
    %c3_i32 = arith.constant 3 : i32
    %514 = arith.index_cast %c3_i32 : i32 to index
    %c0_238 = arith.constant 0 : index
    %c0_239 = arith.constant 0 : index
    %515 = vector.load %arg9[%514, %c0_238, %c0_239] : memref<8x8x256xf32, #tpu.memory_space<vmem>>, vector<1x8x256xf32>
    %516 = vector.shape_cast %515 : vector<1x8x256xf32> to vector<8x256xf32>
    %517 = arith.truncf %509 : vector<8x64xf32> to vector<8x64xbf16>
    %cst_240 = arith.constant dense<0.000000e+00> : vector<8x256xf32>
    %518 = tpu.matmul %517, %431, %cst_240 {dimension_numbers = #tpu.dot_dimension_numbers<[1], [0], [0], [1], [0, 0, 1, 1], [], []>} : vector<8x64xbf16>, vector<64x256xbf16>, vector<8x256xf32> -> vector<8x256xf32>
    %519 = arith.addf %516, %518 : vector<8x256xf32>
    %520 = vector.extract_strided_slice %519 {offsets = [0, 0], sizes = [8, 192], strides = [1, 1]} : vector<8x256xf32> to vector<8x192xf32>
    %cst_241 = arith.constant 0.000000e+00 : f32
    %521 = vector.broadcast %cst_241 : f32 to vector<8x192xf32>
    %522 = arith.subf %521, %520 : vector<8x192xf32>
    %523 = math.exp %522 : vector<8x192xf32>
    %cst_242 = arith.constant 1.000000e+00 : f32
    %524 = vector.broadcast %cst_242 : f32 to vector<8x192xf32>
    %525 = arith.addf %524, %523 : vector<8x192xf32>
    %526 = tpu.reciprocal %525 {approx = true} : vector<8x192xf32> -> vector<8x192xf32>
    %527 = vector.extract_strided_slice %526 {offsets = [0, 0], sizes = [8, 64], strides = [1, 1]} : vector<8x192xf32> to vector<8x64xf32>
    %528 = vector.extract_strided_slice %526 {offsets = [0, 64], sizes = [8, 64], strides = [1, 1]} : vector<8x192xf32> to vector<8x64xf32>
    %529 = vector.extract_strided_slice %526 {offsets = [0, 128], sizes = [8, 64], strides = [1, 1]} : vector<8x192xf32> to vector<8x64xf32>
    %530 = vector.extract_strided_slice %519 {offsets = [0, 192], sizes = [8, 64], strides = [1, 1]} : vector<8x256xf32> to vector<8x64xf32>
    %531 = math.tanh %530 : vector<8x64xf32>
    %532 = arith.mulf %528, %507 : vector<8x64xf32>
    %533 = arith.mulf %527, %531 : vector<8x64xf32>
    %534 = arith.addf %532, %533 : vector<8x64xf32>
    %535 = math.tanh %534 : vector<8x64xf32>
    %536 = arith.mulf %529, %535 : vector<8x64xf32>
    %537 = arith.index_cast %c3_i32 : i32 to index
    %c0_243 = arith.constant 0 : index
    %c0_244 = arith.constant 0 : index
    %538 = vector.load %arg8[%537, %c0_243, %c0_244] : memref<8x8x64xf32, #tpu.memory_space<vmem>>, vector<1x8x64xf32>
    %539 = vector.shape_cast %538 : vector<1x8x64xf32> to vector<8x64xf32>
    %540 = vector.shape_cast %536 : vector<8x64xf32> to vector<1x8x64xf32>
    tpu.vector_store %arg8[%537, %c0_243, %c0_244], %540 {strides = array<i32>} : memref<8x8x64xf32, #tpu.memory_space<vmem>>, vector<1x8x64xf32>,
    %c4_i32 = arith.constant 4 : i32
    %541 = arith.index_cast %c4_i32 : i32 to index
    %c0_245 = arith.constant 0 : index
    %c0_246 = arith.constant 0 : index
    %542 = vector.load %arg9[%541, %c0_245, %c0_246] : memref<8x8x256xf32, #tpu.memory_space<vmem>>, vector<1x8x256xf32>
    %543 = vector.shape_cast %542 : vector<1x8x256xf32> to vector<8x256xf32>
    %544 = arith.truncf %536 : vector<8x64xf32> to vector<8x64xbf16>
    %cst_247 = arith.constant dense<0.000000e+00> : vector<8x256xf32>
    %545 = tpu.matmul %544, %431, %cst_247 {dimension_numbers = #tpu.dot_dimension_numbers<[1], [0], [0], [1], [0, 0, 1, 1], [], []>} : vector<8x64xbf16>, vector<64x256xbf16>, vector<8x256xf32> -> vector<8x256xf32>
    %546 = arith.addf %543, %545 : vector<8x256xf32>
    %547 = vector.extract_strided_slice %546 {offsets = [0, 0], sizes = [8, 192], strides = [1, 1]} : vector<8x256xf32> to vector<8x192xf32>
    %cst_248 = arith.constant 0.000000e+00 : f32
    %548 = vector.broadcast %cst_248 : f32 to vector<8x192xf32>
    %549 = arith.subf %548, %547 : vector<8x192xf32>
    %550 = math.exp %549 : vector<8x192xf32>
    %cst_249 = arith.constant 1.000000e+00 : f32
    %551 = vector.broadcast %cst_249 : f32 to vector<8x192xf32>
    %552 = arith.addf %551, %550 : vector<8x192xf32>
    %553 = tpu.reciprocal %552 {approx = true} : vector<8x192xf32> -> vector<8x192xf32>
    %554 = vector.extract_strided_slice %553 {offsets = [0, 0], sizes = [8, 64], strides = [1, 1]} : vector<8x192xf32> to vector<8x64xf32>
    %555 = vector.extract_strided_slice %553 {offsets = [0, 64], sizes = [8, 64], strides = [1, 1]} : vector<8x192xf32> to vector<8x64xf32>
    %556 = vector.extract_strided_slice %553 {offsets = [0, 128], sizes = [8, 64], strides = [1, 1]} : vector<8x192xf32> to vector<8x64xf32>
    %557 = vector.extract_strided_slice %546 {offsets = [0, 192], sizes = [8, 64], strides = [1, 1]} : vector<8x256xf32> to vector<8x64xf32>
    %558 = math.tanh %557 : vector<8x64xf32>
    %559 = arith.mulf %555, %534 : vector<8x64xf32>
    %560 = arith.mulf %554, %558 : vector<8x64xf32>
    %561 = arith.addf %559, %560 : vector<8x64xf32>
    %562 = math.tanh %561 : vector<8x64xf32>
    %563 = arith.mulf %556, %562 : vector<8x64xf32>
    %564 = arith.index_cast %c4_i32 : i32 to index
    %c0_250 = arith.constant 0 : index
    %c0_251 = arith.constant 0 : index
    %565 = vector.load %arg8[%564, %c0_250, %c0_251] : memref<8x8x64xf32, #tpu.memory_space<vmem>>, vector<1x8x64xf32>
    %566 = vector.shape_cast %565 : vector<1x8x64xf32> to vector<8x64xf32>
    %567 = vector.shape_cast %563 : vector<8x64xf32> to vector<1x8x64xf32>
    tpu.vector_store %arg8[%564, %c0_250, %c0_251], %567 {strides = array<i32>} : memref<8x8x64xf32, #tpu.memory_space<vmem>>, vector<1x8x64xf32>,
    %c5_i32 = arith.constant 5 : i32
    %568 = arith.index_cast %c5_i32 : i32 to index
    %c0_252 = arith.constant 0 : index
    %c0_253 = arith.constant 0 : index
    %569 = vector.load %arg9[%568, %c0_252, %c0_253] : memref<8x8x256xf32, #tpu.memory_space<vmem>>, vector<1x8x256xf32>
    %570 = vector.shape_cast %569 : vector<1x8x256xf32> to vector<8x256xf32>
    %571 = arith.truncf %563 : vector<8x64xf32> to vector<8x64xbf16>
    %cst_254 = arith.constant dense<0.000000e+00> : vector<8x256xf32>
    %572 = tpu.matmul %571, %431, %cst_254 {dimension_numbers = #tpu.dot_dimension_numbers<[1], [0], [0], [1], [0, 0, 1, 1], [], []>} : vector<8x64xbf16>, vector<64x256xbf16>, vector<8x256xf32> -> vector<8x256xf32>
    %573 = arith.addf %570, %572 : vector<8x256xf32>
    %574 = vector.extract_strided_slice %573 {offsets = [0, 0], sizes = [8, 192], strides = [1, 1]} : vector<8x256xf32> to vector<8x192xf32>
    %cst_255 = arith.constant 0.000000e+00 : f32
    %575 = vector.broadcast %cst_255 : f32 to vector<8x192xf32>
    %576 = arith.subf %575, %574 : vector<8x192xf32>
    %577 = math.exp %576 : vector<8x192xf32>
    %cst_256 = arith.constant 1.000000e+00 : f32
    %578 = vector.broadcast %cst_256 : f32 to vector<8x192xf32>
    %579 = arith.addf %578, %577 : vector<8x192xf32>
    %580 = tpu.reciprocal %579 {approx = true} : vector<8x192xf32> -> vector<8x192xf32>
    %581 = vector.extract_strided_slice %580 {offsets = [0, 0], sizes = [8, 64], strides = [1, 1]} : vector<8x192xf32> to vector<8x64xf32>
    %582 = vector.extract_strided_slice %580 {offsets = [0, 64], sizes = [8, 64], strides = [1, 1]} : vector<8x192xf32> to vector<8x64xf32>
    %583 = vector.extract_strided_slice %580 {offsets = [0, 128], sizes = [8, 64], strides = [1, 1]} : vector<8x192xf32> to vector<8x64xf32>
    %584 = vector.extract_strided_slice %573 {offsets = [0, 192], sizes = [8, 64], strides = [1, 1]} : vector<8x256xf32> to vector<8x64xf32>
    %585 = math.tanh %584 : vector<8x64xf32>
    %586 = arith.mulf %582, %561 : vector<8x64xf32>
    %587 = arith.mulf %581, %585 : vector<8x64xf32>
    %588 = arith.addf %586, %587 : vector<8x64xf32>
    %589 = math.tanh %588 : vector<8x64xf32>
    %590 = arith.mulf %583, %589 : vector<8x64xf32>
    %591 = arith.index_cast %c5_i32 : i32 to index
    %c0_257 = arith.constant 0 : index
    %c0_258 = arith.constant 0 : index
    %592 = vector.load %arg8[%591, %c0_257, %c0_258] : memref<8x8x64xf32, #tpu.memory_space<vmem>>, vector<1x8x64xf32>
    %593 = vector.shape_cast %592 : vector<1x8x64xf32> to vector<8x64xf32>
    %594 = vector.shape_cast %590 : vector<8x64xf32> to vector<1x8x64xf32>
    tpu.vector_store %arg8[%591, %c0_257, %c0_258], %594 {strides = array<i32>} : memref<8x8x64xf32, #tpu.memory_space<vmem>>, vector<1x8x64xf32>,
    %c6_i32 = arith.constant 6 : i32
    %595 = arith.index_cast %c6_i32 : i32 to index
    %c0_259 = arith.constant 0 : index
    %c0_260 = arith.constant 0 : index
    %596 = vector.load %arg9[%595, %c0_259, %c0_260] : memref<8x8x256xf32, #tpu.memory_space<vmem>>, vector<1x8x256xf32>
    %597 = vector.shape_cast %596 : vector<1x8x256xf32> to vector<8x256xf32>
    %598 = arith.truncf %590 : vector<8x64xf32> to vector<8x64xbf16>
    %cst_261 = arith.constant dense<0.000000e+00> : vector<8x256xf32>
    %599 = tpu.matmul %598, %431, %cst_261 {dimension_numbers = #tpu.dot_dimension_numbers<[1], [0], [0], [1], [0, 0, 1, 1], [], []>} : vector<8x64xbf16>, vector<64x256xbf16>, vector<8x256xf32> -> vector<8x256xf32>
    %600 = arith.addf %597, %599 : vector<8x256xf32>
    %601 = vector.extract_strided_slice %600 {offsets = [0, 0], sizes = [8, 192], strides = [1, 1]} : vector<8x256xf32> to vector<8x192xf32>
    %cst_262 = arith.constant 0.000000e+00 : f32
    %602 = vector.broadcast %cst_262 : f32 to vector<8x192xf32>
    %603 = arith.subf %602, %601 : vector<8x192xf32>
    %604 = math.exp %603 : vector<8x192xf32>
    %cst_263 = arith.constant 1.000000e+00 : f32
    %605 = vector.broadcast %cst_263 : f32 to vector<8x192xf32>
    %606 = arith.addf %605, %604 : vector<8x192xf32>
    %607 = tpu.reciprocal %606 {approx = true} : vector<8x192xf32> -> vector<8x192xf32>
    %608 = vector.extract_strided_slice %607 {offsets = [0, 0], sizes = [8, 64], strides = [1, 1]} : vector<8x192xf32> to vector<8x64xf32>
    %609 = vector.extract_strided_slice %607 {offsets = [0, 64], sizes = [8, 64], strides = [1, 1]} : vector<8x192xf32> to vector<8x64xf32>
    %610 = vector.extract_strided_slice %607 {offsets = [0, 128], sizes = [8, 64], strides = [1, 1]} : vector<8x192xf32> to vector<8x64xf32>
    %611 = vector.extract_strided_slice %600 {offsets = [0, 192], sizes = [8, 64], strides = [1, 1]} : vector<8x256xf32> to vector<8x64xf32>
    %612 = math.tanh %611 : vector<8x64xf32>
    %613 = arith.mulf %609, %588 : vector<8x64xf32>
    %614 = arith.mulf %608, %612 : vector<8x64xf32>
    %615 = arith.addf %613, %614 : vector<8x64xf32>
    %616 = math.tanh %615 : vector<8x64xf32>
    %617 = arith.mulf %610, %616 : vector<8x64xf32>
    %618 = arith.index_cast %c6_i32 : i32 to index
    %c0_264 = arith.constant 0 : index
    %c0_265 = arith.constant 0 : index
    %619 = vector.load %arg8[%618, %c0_264, %c0_265] : memref<8x8x64xf32, #tpu.memory_space<vmem>>, vector<1x8x64xf32>
    %620 = vector.shape_cast %619 : vector<1x8x64xf32> to vector<8x64xf32>
    %621 = vector.shape_cast %617 : vector<8x64xf32> to vector<1x8x64xf32>
    tpu.vector_store %arg8[%618, %c0_264, %c0_265], %621 {strides = array<i32>} : memref<8x8x64xf32, #tpu.memory_space<vmem>>, vector<1x8x64xf32>,
    %c7_i32 = arith.constant 7 : i32
    %622 = arith.index_cast %c7_i32 : i32 to index
    %c0_266 = arith.constant 0 : index
    %c0_267 = arith.constant 0 : index
    %623 = vector.load %arg9[%622, %c0_266, %c0_267] : memref<8x8x256xf32, #tpu.memory_space<vmem>>, vector<1x8x256xf32>
    %624 = vector.shape_cast %623 : vector<1x8x256xf32> to vector<8x256xf32>
    %625 = arith.truncf %617 : vector<8x64xf32> to vector<8x64xbf16>
    %cst_268 = arith.constant dense<0.000000e+00> : vector<8x256xf32>
    %626 = tpu.matmul %625, %431, %cst_268 {dimension_numbers = #tpu.dot_dimension_numbers<[1], [0], [0], [1], [0, 0, 1, 1], [], []>} : vector<8x64xbf16>, vector<64x256xbf16>, vector<8x256xf32> -> vector<8x256xf32>
    %627 = arith.addf %624, %626 : vector<8x256xf32>
    %628 = vector.extract_strided_slice %627 {offsets = [0, 0], sizes = [8, 192], strides = [1, 1]} : vector<8x256xf32> to vector<8x192xf32>
    %cst_269 = arith.constant 0.000000e+00 : f32
    %629 = vector.broadcast %cst_269 : f32 to vector<8x192xf32>
    %630 = arith.subf %629, %628 : vector<8x192xf32>
    %631 = math.exp %630 : vector<8x192xf32>
    %cst_270 = arith.constant 1.000000e+00 : f32
    %632 = vector.broadcast %cst_270 : f32 to vector<8x192xf32>
    %633 = arith.addf %632, %631 : vector<8x192xf32>
    %634 = tpu.reciprocal %633 {approx = true} : vector<8x192xf32> -> vector<8x192xf32>
    %635 = vector.extract_strided_slice %634 {offsets = [0, 0], sizes = [8, 64], strides = [1, 1]} : vector<8x192xf32> to vector<8x64xf32>
    %636 = vector.extract_strided_slice %634 {offsets = [0, 64], sizes = [8, 64], strides = [1, 1]} : vector<8x192xf32> to vector<8x64xf32>
    %637 = vector.extract_strided_slice %634 {offsets = [0, 128], sizes = [8, 64], strides = [1, 1]} : vector<8x192xf32> to vector<8x64xf32>
    %638 = vector.extract_strided_slice %627 {offsets = [0, 192], sizes = [8, 64], strides = [1, 1]} : vector<8x256xf32> to vector<8x64xf32>
    %639 = math.tanh %638 : vector<8x64xf32>
    %640 = arith.mulf %636, %615 : vector<8x64xf32>
    %641 = arith.mulf %635, %639 : vector<8x64xf32>
    %642 = arith.addf %640, %641 : vector<8x64xf32>
    %643 = math.tanh %642 : vector<8x64xf32>
    %644 = arith.mulf %637, %643 : vector<8x64xf32>
    %645 = arith.index_cast %c7_i32 : i32 to index
    %c0_271 = arith.constant 0 : index
    %c0_272 = arith.constant 0 : index
    %646 = vector.load %arg8[%645, %c0_271, %c0_272] : memref<8x8x64xf32, #tpu.memory_space<vmem>>, vector<1x8x64xf32>
    %647 = vector.shape_cast %646 : vector<1x8x64xf32> to vector<8x64xf32>
    %648 = vector.shape_cast %644 : vector<8x64xf32> to vector<1x8x64xf32>
    tpu.vector_store %arg8[%645, %c0_271, %c0_272], %648 {strides = array<i32>} : memref<8x8x64xf32, #tpu.memory_space<vmem>>, vector<1x8x64xf32>,
    %c8_i32 = arith.constant 8 : i32
    %c0_273 = arith.constant 0 : index
    %c0_274 = arith.constant 0 : index
    %c0_275 = arith.constant 0 : index
    %649 = vector.load %arg8[%c0_273, %c0_274, %c0_275] : memref<8x8x64xf32, #tpu.memory_space<vmem>>, vector<8x8x64xf32>
    %650 = vector.shape_cast %649 : vector<8x8x64xf32> to vector<64x64xf32>
    %651 = arith.truncf %650 : vector<64x64xf32> to vector<64x64xbf16>
    %c1_276 = arith.constant 1 : index
    %c0_277 = arith.constant 0 : index
    %c0_278 = arith.constant 0 : index
    %652 = vector.load %arg4[%c1_276, %c0_277, %c0_278] : memref<2x64x256xbf16, #tpu.memory_space<vmem>>, vector<1x64x256xbf16>
    %653 = vector.shape_cast %652 : vector<1x64x256xbf16> to vector<64x256xbf16>
    %cst_279 = arith.constant dense<0.000000e+00> : vector<64x256xf32>
    %654 = tpu.matmul %651, %653, %cst_279 {dimension_numbers = #tpu.dot_dimension_numbers<[1], [0], [0], [1], [0, 0, 1, 1], [], []>} : vector<64x64xbf16>, vector<64x256xbf16>, vector<64x256xf32> -> vector<64x256xf32>
    %c1_280 = arith.constant 1 : index
    %c0_281 = arith.constant 0 : index
    %c0_282 = arith.constant 0 : index
    %655 = vector.load %arg6[%c1_280, %c0_281, %c0_282] : memref<2x1x256xf32, #tpu.memory_space<vmem>>, vector<1x1x256xf32>
    %656 = vector.shape_cast %655 : vector<1x1x256xf32> to vector<1x256xf32>
    %657 = vector.broadcast %656 : vector<1x256xf32> to vector<64x256xf32>
    %658 = arith.addf %654, %657 : vector<64x256xf32>
    %659 = vector.shape_cast %658 : vector<64x256xf32> to vector<8x8x256xf32>
    %c0_283 = arith.constant 0 : index
    %c0_284 = arith.constant 0 : index
    %c0_285 = arith.constant 0 : index
    %660 = vector.load %arg9[%c0_283, %c0_284, %c0_285] : memref<8x8x256xf32, #tpu.memory_space<vmem>>, vector<8x8x256xf32>
    tpu.vector_store %arg9[%c0_283, %c0_284, %c0_285], %659 {strides = array<i32>} : memref<8x8x256xf32, #tpu.memory_space<vmem>>, vector<8x8x256xf32>,
    %c1_286 = arith.constant 1 : index
    %c0_287 = arith.constant 0 : index
    %c0_288 = arith.constant 0 : index
    %661 = vector.load %arg5[%c1_286, %c0_287, %c0_288] : memref<2x64x256xbf16, #tpu.memory_space<vmem>>, vector<1x64x256xbf16>
    %662 = vector.shape_cast %661 : vector<1x64x256xbf16> to vector<64x256xbf16>
    %cst_289 = arith.constant 0.000000e+00 : f32
    %663 = vector.broadcast %cst_289 : f32 to vector<8x64xf32>
    %c0_i32_290 = arith.constant 0 : i32
    %664 = arith.index_cast %c0_i32_290 : i32 to index
    %c0_291 = arith.constant 0 : index
    %c0_292 = arith.constant 0 : index
    %665 = vector.load %arg9[%664, %c0_291, %c0_292] : memref<8x8x256xf32, #tpu.memory_space<vmem>>, vector<1x8x256xf32>
    %666 = vector.shape_cast %665 : vector<1x8x256xf32> to vector<8x256xf32>
    %667 = arith.truncf %663 : vector<8x64xf32> to vector<8x64xbf16>
    %cst_293 = arith.constant dense<0.000000e+00> : vector<8x256xf32>
    %668 = tpu.matmul %667, %662, %cst_293 {dimension_numbers = #tpu.dot_dimension_numbers<[1], [0], [0], [1], [0, 0, 1, 1], [], []>} : vector<8x64xbf16>, vector<64x256xbf16>, vector<8x256xf32> -> vector<8x256xf32>
    %669 = arith.addf %666, %668 : vector<8x256xf32>
    %670 = vector.extract_strided_slice %669 {offsets = [0, 0], sizes = [8, 192], strides = [1, 1]} : vector<8x256xf32> to vector<8x192xf32>
    %cst_294 = arith.constant 0.000000e+00 : f32
    %671 = vector.broadcast %cst_294 : f32 to vector<8x192xf32>
    %672 = arith.subf %671, %670 : vector<8x192xf32>
    %673 = math.exp %672 : vector<8x192xf32>
    %cst_295 = arith.constant 1.000000e+00 : f32
    %674 = vector.broadcast %cst_295 : f32 to vector<8x192xf32>
    %675 = arith.addf %674, %673 : vector<8x192xf32>
    %676 = tpu.reciprocal %675 {approx = true} : vector<8x192xf32> -> vector<8x192xf32>
    %677 = vector.extract_strided_slice %676 {offsets = [0, 0], sizes = [8, 64], strides = [1, 1]} : vector<8x192xf32> to vector<8x64xf32>
    %678 = vector.extract_strided_slice %676 {offsets = [0, 64], sizes = [8, 64], strides = [1, 1]} : vector<8x192xf32> to vector<8x64xf32>
    %679 = vector.extract_strided_slice %676 {offsets = [0, 128], sizes = [8, 64], strides = [1, 1]} : vector<8x192xf32> to vector<8x64xf32>
    %680 = vector.extract_strided_slice %669 {offsets = [0, 192], sizes = [8, 64], strides = [1, 1]} : vector<8x256xf32> to vector<8x64xf32>
    %681 = math.tanh %680 : vector<8x64xf32>
    %682 = arith.mulf %678, %663 : vector<8x64xf32>
    %683 = arith.mulf %677, %681 : vector<8x64xf32>
    %684 = arith.addf %682, %683 : vector<8x64xf32>
    %685 = math.tanh %684 : vector<8x64xf32>
    %686 = arith.mulf %679, %685 : vector<8x64xf32>
    %687 = arith.index_cast %c0_i32_290 : i32 to index
    %c0_296 = arith.constant 0 : index
    %c0_297 = arith.constant 0 : index
    %688 = vector.load %arg8[%687, %c0_296, %c0_297] : memref<8x8x64xf32, #tpu.memory_space<vmem>>, vector<1x8x64xf32>
    %689 = vector.shape_cast %688 : vector<1x8x64xf32> to vector<8x64xf32>
    %690 = vector.shape_cast %686 : vector<8x64xf32> to vector<1x8x64xf32>
    tpu.vector_store %arg8[%687, %c0_296, %c0_297], %690 {strides = array<i32>} : memref<8x8x64xf32, #tpu.memory_space<vmem>>, vector<1x8x64xf32>,
    %c1_i32_298 = arith.constant 1 : i32
    %691 = arith.index_cast %c1_i32_298 : i32 to index
    %c0_299 = arith.constant 0 : index
    %c0_300 = arith.constant 0 : index
    %692 = vector.load %arg9[%691, %c0_299, %c0_300] : memref<8x8x256xf32, #tpu.memory_space<vmem>>, vector<1x8x256xf32>
    %693 = vector.shape_cast %692 : vector<1x8x256xf32> to vector<8x256xf32>
    %694 = arith.truncf %686 : vector<8x64xf32> to vector<8x64xbf16>
    %cst_301 = arith.constant dense<0.000000e+00> : vector<8x256xf32>
    %695 = tpu.matmul %694, %662, %cst_301 {dimension_numbers = #tpu.dot_dimension_numbers<[1], [0], [0], [1], [0, 0, 1, 1], [], []>} : vector<8x64xbf16>, vector<64x256xbf16>, vector<8x256xf32> -> vector<8x256xf32>
    %696 = arith.addf %693, %695 : vector<8x256xf32>
    %697 = vector.extract_strided_slice %696 {offsets = [0, 0], sizes = [8, 192], strides = [1, 1]} : vector<8x256xf32> to vector<8x192xf32>
    %cst_302 = arith.constant 0.000000e+00 : f32
    %698 = vector.broadcast %cst_302 : f32 to vector<8x192xf32>
    %699 = arith.subf %698, %697 : vector<8x192xf32>
    %700 = math.exp %699 : vector<8x192xf32>
    %cst_303 = arith.constant 1.000000e+00 : f32
    %701 = vector.broadcast %cst_303 : f32 to vector<8x192xf32>
    %702 = arith.addf %701, %700 : vector<8x192xf32>
    %703 = tpu.reciprocal %702 {approx = true} : vector<8x192xf32> -> vector<8x192xf32>
    %704 = vector.extract_strided_slice %703 {offsets = [0, 0], sizes = [8, 64], strides = [1, 1]} : vector<8x192xf32> to vector<8x64xf32>
    %705 = vector.extract_strided_slice %703 {offsets = [0, 64], sizes = [8, 64], strides = [1, 1]} : vector<8x192xf32> to vector<8x64xf32>
    %706 = vector.extract_strided_slice %703 {offsets = [0, 128], sizes = [8, 64], strides = [1, 1]} : vector<8x192xf32> to vector<8x64xf32>
    %707 = vector.extract_strided_slice %696 {offsets = [0, 192], sizes = [8, 64], strides = [1, 1]} : vector<8x256xf32> to vector<8x64xf32>
    %708 = math.tanh %707 : vector<8x64xf32>
    %709 = arith.mulf %705, %684 : vector<8x64xf32>
    %710 = arith.mulf %704, %708 : vector<8x64xf32>
    %711 = arith.addf %709, %710 : vector<8x64xf32>
    %712 = math.tanh %711 : vector<8x64xf32>
    %713 = arith.mulf %706, %712 : vector<8x64xf32>
    %714 = arith.index_cast %c1_i32_298 : i32 to index
    %c0_304 = arith.constant 0 : index
    %c0_305 = arith.constant 0 : index
    %715 = vector.load %arg8[%714, %c0_304, %c0_305] : memref<8x8x64xf32, #tpu.memory_space<vmem>>, vector<1x8x64xf32>
    %716 = vector.shape_cast %715 : vector<1x8x64xf32> to vector<8x64xf32>
    %717 = vector.shape_cast %713 : vector<8x64xf32> to vector<1x8x64xf32>
    tpu.vector_store %arg8[%714, %c0_304, %c0_305], %717 {strides = array<i32>} : memref<8x8x64xf32, #tpu.memory_space<vmem>>, vector<1x8x64xf32>,
    %c2_i32_306 = arith.constant 2 : i32
    %718 = arith.index_cast %c2_i32_306 : i32 to index
    %c0_307 = arith.constant 0 : index
    %c0_308 = arith.constant 0 : index
    %719 = vector.load %arg9[%718, %c0_307, %c0_308] : memref<8x8x256xf32, #tpu.memory_space<vmem>>, vector<1x8x256xf32>
    %720 = vector.shape_cast %719 : vector<1x8x256xf32> to vector<8x256xf32>
    %721 = arith.truncf %713 : vector<8x64xf32> to vector<8x64xbf16>
    %cst_309 = arith.constant dense<0.000000e+00> : vector<8x256xf32>
    %722 = tpu.matmul %721, %662, %cst_309 {dimension_numbers = #tpu.dot_dimension_numbers<[1], [0], [0], [1], [0, 0, 1, 1], [], []>} : vector<8x64xbf16>, vector<64x256xbf16>, vector<8x256xf32> -> vector<8x256xf32>
    %723 = arith.addf %720, %722 : vector<8x256xf32>
    %724 = vector.extract_strided_slice %723 {offsets = [0, 0], sizes = [8, 192], strides = [1, 1]} : vector<8x256xf32> to vector<8x192xf32>
    %cst_310 = arith.constant 0.000000e+00 : f32
    %725 = vector.broadcast %cst_310 : f32 to vector<8x192xf32>
    %726 = arith.subf %725, %724 : vector<8x192xf32>
    %727 = math.exp %726 : vector<8x192xf32>
    %cst_311 = arith.constant 1.000000e+00 : f32
    %728 = vector.broadcast %cst_311 : f32 to vector<8x192xf32>
    %729 = arith.addf %728, %727 : vector<8x192xf32>
    %730 = tpu.reciprocal %729 {approx = true} : vector<8x192xf32> -> vector<8x192xf32>
    %731 = vector.extract_strided_slice %730 {offsets = [0, 0], sizes = [8, 64], strides = [1, 1]} : vector<8x192xf32> to vector<8x64xf32>
    %732 = vector.extract_strided_slice %730 {offsets = [0, 64], sizes = [8, 64], strides = [1, 1]} : vector<8x192xf32> to vector<8x64xf32>
    %733 = vector.extract_strided_slice %730 {offsets = [0, 128], sizes = [8, 64], strides = [1, 1]} : vector<8x192xf32> to vector<8x64xf32>
    %734 = vector.extract_strided_slice %723 {offsets = [0, 192], sizes = [8, 64], strides = [1, 1]} : vector<8x256xf32> to vector<8x64xf32>
    %735 = math.tanh %734 : vector<8x64xf32>
    %736 = arith.mulf %732, %711 : vector<8x64xf32>
    %737 = arith.mulf %731, %735 : vector<8x64xf32>
    %738 = arith.addf %736, %737 : vector<8x64xf32>
    %739 = math.tanh %738 : vector<8x64xf32>
    %740 = arith.mulf %733, %739 : vector<8x64xf32>
    %741 = arith.index_cast %c2_i32_306 : i32 to index
    %c0_312 = arith.constant 0 : index
    %c0_313 = arith.constant 0 : index
    %742 = vector.load %arg8[%741, %c0_312, %c0_313] : memref<8x8x64xf32, #tpu.memory_space<vmem>>, vector<1x8x64xf32>
    %743 = vector.shape_cast %742 : vector<1x8x64xf32> to vector<8x64xf32>
    %744 = vector.shape_cast %740 : vector<8x64xf32> to vector<1x8x64xf32>
    tpu.vector_store %arg8[%741, %c0_312, %c0_313], %744 {strides = array<i32>} : memref<8x8x64xf32, #tpu.memory_space<vmem>>, vector<1x8x64xf32>,
    %c3_i32_314 = arith.constant 3 : i32
    %745 = arith.index_cast %c3_i32_314 : i32 to index
    %c0_315 = arith.constant 0 : index
    %c0_316 = arith.constant 0 : index
    %746 = vector.load %arg9[%745, %c0_315, %c0_316] : memref<8x8x256xf32, #tpu.memory_space<vmem>>, vector<1x8x256xf32>
    %747 = vector.shape_cast %746 : vector<1x8x256xf32> to vector<8x256xf32>
    %748 = arith.truncf %740 : vector<8x64xf32> to vector<8x64xbf16>
    %cst_317 = arith.constant dense<0.000000e+00> : vector<8x256xf32>
    %749 = tpu.matmul %748, %662, %cst_317 {dimension_numbers = #tpu.dot_dimension_numbers<[1], [0], [0], [1], [0, 0, 1, 1], [], []>} : vector<8x64xbf16>, vector<64x256xbf16>, vector<8x256xf32> -> vector<8x256xf32>
    %750 = arith.addf %747, %749 : vector<8x256xf32>
    %751 = vector.extract_strided_slice %750 {offsets = [0, 0], sizes = [8, 192], strides = [1, 1]} : vector<8x256xf32> to vector<8x192xf32>
    %cst_318 = arith.constant 0.000000e+00 : f32
    %752 = vector.broadcast %cst_318 : f32 to vector<8x192xf32>
    %753 = arith.subf %752, %751 : vector<8x192xf32>
    %754 = math.exp %753 : vector<8x192xf32>
    %cst_319 = arith.constant 1.000000e+00 : f32
    %755 = vector.broadcast %cst_319 : f32 to vector<8x192xf32>
    %756 = arith.addf %755, %754 : vector<8x192xf32>
    %757 = tpu.reciprocal %756 {approx = true} : vector<8x192xf32> -> vector<8x192xf32>
    %758 = vector.extract_strided_slice %757 {offsets = [0, 0], sizes = [8, 64], strides = [1, 1]} : vector<8x192xf32> to vector<8x64xf32>
    %759 = vector.extract_strided_slice %757 {offsets = [0, 64], sizes = [8, 64], strides = [1, 1]} : vector<8x192xf32> to vector<8x64xf32>
    %760 = vector.extract_strided_slice %757 {offsets = [0, 128], sizes = [8, 64], strides = [1, 1]} : vector<8x192xf32> to vector<8x64xf32>
    %761 = vector.extract_strided_slice %750 {offsets = [0, 192], sizes = [8, 64], strides = [1, 1]} : vector<8x256xf32> to vector<8x64xf32>
    %762 = math.tanh %761 : vector<8x64xf32>
    %763 = arith.mulf %759, %738 : vector<8x64xf32>
    %764 = arith.mulf %758, %762 : vector<8x64xf32>
    %765 = arith.addf %763, %764 : vector<8x64xf32>
    %766 = math.tanh %765 : vector<8x64xf32>
    %767 = arith.mulf %760, %766 : vector<8x64xf32>
    %768 = arith.index_cast %c3_i32_314 : i32 to index
    %c0_320 = arith.constant 0 : index
    %c0_321 = arith.constant 0 : index
    %769 = vector.load %arg8[%768, %c0_320, %c0_321] : memref<8x8x64xf32, #tpu.memory_space<vmem>>, vector<1x8x64xf32>
    %770 = vector.shape_cast %769 : vector<1x8x64xf32> to vector<8x64xf32>
    %771 = vector.shape_cast %767 : vector<8x64xf32> to vector<1x8x64xf32>
    tpu.vector_store %arg8[%768, %c0_320, %c0_321], %771 {strides = array<i32>} : memref<8x8x64xf32, #tpu.memory_space<vmem>>, vector<1x8x64xf32>,
    %c4_i32_322 = arith.constant 4 : i32
    %772 = arith.index_cast %c4_i32_322 : i32 to index
    %c0_323 = arith.constant 0 : index
    %c0_324 = arith.constant 0 : index
    %773 = vector.load %arg9[%772, %c0_323, %c0_324] : memref<8x8x256xf32, #tpu.memory_space<vmem>>, vector<1x8x256xf32>
    %774 = vector.shape_cast %773 : vector<1x8x256xf32> to vector<8x256xf32>
    %775 = arith.truncf %767 : vector<8x64xf32> to vector<8x64xbf16>
    %cst_325 = arith.constant dense<0.000000e+00> : vector<8x256xf32>
    %776 = tpu.matmul %775, %662, %cst_325 {dimension_numbers = #tpu.dot_dimension_numbers<[1], [0], [0], [1], [0, 0, 1, 1], [], []>} : vector<8x64xbf16>, vector<64x256xbf16>, vector<8x256xf32> -> vector<8x256xf32>
    %777 = arith.addf %774, %776 : vector<8x256xf32>
    %778 = vector.extract_strided_slice %777 {offsets = [0, 0], sizes = [8, 192], strides = [1, 1]} : vector<8x256xf32> to vector<8x192xf32>
    %cst_326 = arith.constant 0.000000e+00 : f32
    %779 = vector.broadcast %cst_326 : f32 to vector<8x192xf32>
    %780 = arith.subf %779, %778 : vector<8x192xf32>
    %781 = math.exp %780 : vector<8x192xf32>
    %cst_327 = arith.constant 1.000000e+00 : f32
    %782 = vector.broadcast %cst_327 : f32 to vector<8x192xf32>
    %783 = arith.addf %782, %781 : vector<8x192xf32>
    %784 = tpu.reciprocal %783 {approx = true} : vector<8x192xf32> -> vector<8x192xf32>
    %785 = vector.extract_strided_slice %784 {offsets = [0, 0], sizes = [8, 64], strides = [1, 1]} : vector<8x192xf32> to vector<8x64xf32>
    %786 = vector.extract_strided_slice %784 {offsets = [0, 64], sizes = [8, 64], strides = [1, 1]} : vector<8x192xf32> to vector<8x64xf32>
    %787 = vector.extract_strided_slice %784 {offsets = [0, 128], sizes = [8, 64], strides = [1, 1]} : vector<8x192xf32> to vector<8x64xf32>
    %788 = vector.extract_strided_slice %777 {offsets = [0, 192], sizes = [8, 64], strides = [1, 1]} : vector<8x256xf32> to vector<8x64xf32>
    %789 = math.tanh %788 : vector<8x64xf32>
    %790 = arith.mulf %786, %765 : vector<8x64xf32>
    %791 = arith.mulf %785, %789 : vector<8x64xf32>
    %792 = arith.addf %790, %791 : vector<8x64xf32>
    %793 = math.tanh %792 : vector<8x64xf32>
    %794 = arith.mulf %787, %793 : vector<8x64xf32>
    %795 = arith.index_cast %c4_i32_322 : i32 to index
    %c0_328 = arith.constant 0 : index
    %c0_329 = arith.constant 0 : index
    %796 = vector.load %arg8[%795, %c0_328, %c0_329] : memref<8x8x64xf32, #tpu.memory_space<vmem>>, vector<1x8x64xf32>
    %797 = vector.shape_cast %796 : vector<1x8x64xf32> to vector<8x64xf32>
    %798 = vector.shape_cast %794 : vector<8x64xf32> to vector<1x8x64xf32>
    tpu.vector_store %arg8[%795, %c0_328, %c0_329], %798 {strides = array<i32>} : memref<8x8x64xf32, #tpu.memory_space<vmem>>, vector<1x8x64xf32>,
    %c5_i32_330 = arith.constant 5 : i32
    %799 = arith.index_cast %c5_i32_330 : i32 to index
    %c0_331 = arith.constant 0 : index
    %c0_332 = arith.constant 0 : index
    %800 = vector.load %arg9[%799, %c0_331, %c0_332] : memref<8x8x256xf32, #tpu.memory_space<vmem>>, vector<1x8x256xf32>
    %801 = vector.shape_cast %800 : vector<1x8x256xf32> to vector<8x256xf32>
    %802 = arith.truncf %794 : vector<8x64xf32> to vector<8x64xbf16>
    %cst_333 = arith.constant dense<0.000000e+00> : vector<8x256xf32>
    %803 = tpu.matmul %802, %662, %cst_333 {dimension_numbers = #tpu.dot_dimension_numbers<[1], [0], [0], [1], [0, 0, 1, 1], [], []>} : vector<8x64xbf16>, vector<64x256xbf16>, vector<8x256xf32> -> vector<8x256xf32>
    %804 = arith.addf %801, %803 : vector<8x256xf32>
    %805 = vector.extract_strided_slice %804 {offsets = [0, 0], sizes = [8, 192], strides = [1, 1]} : vector<8x256xf32> to vector<8x192xf32>
    %cst_334 = arith.constant 0.000000e+00 : f32
    %806 = vector.broadcast %cst_334 : f32 to vector<8x192xf32>
    %807 = arith.subf %806, %805 : vector<8x192xf32>
    %808 = math.exp %807 : vector<8x192xf32>
    %cst_335 = arith.constant 1.000000e+00 : f32
    %809 = vector.broadcast %cst_335 : f32 to vector<8x192xf32>
    %810 = arith.addf %809, %808 : vector<8x192xf32>
    %811 = tpu.reciprocal %810 {approx = true} : vector<8x192xf32> -> vector<8x192xf32>
    %812 = vector.extract_strided_slice %811 {offsets = [0, 0], sizes = [8, 64], strides = [1, 1]} : vector<8x192xf32> to vector<8x64xf32>
    %813 = vector.extract_strided_slice %811 {offsets = [0, 64], sizes = [8, 64], strides = [1, 1]} : vector<8x192xf32> to vector<8x64xf32>
    %814 = vector.extract_strided_slice %811 {offsets = [0, 128], sizes = [8, 64], strides = [1, 1]} : vector<8x192xf32> to vector<8x64xf32>
    %815 = vector.extract_strided_slice %804 {offsets = [0, 192], sizes = [8, 64], strides = [1, 1]} : vector<8x256xf32> to vector<8x64xf32>
    %816 = math.tanh %815 : vector<8x64xf32>
    %817 = arith.mulf %813, %792 : vector<8x64xf32>
    %818 = arith.mulf %812, %816 : vector<8x64xf32>
    %819 = arith.addf %817, %818 : vector<8x64xf32>
    %820 = math.tanh %819 : vector<8x64xf32>
    %821 = arith.mulf %814, %820 : vector<8x64xf32>
    %822 = arith.index_cast %c5_i32_330 : i32 to index
    %c0_336 = arith.constant 0 : index
    %c0_337 = arith.constant 0 : index
    %823 = vector.load %arg8[%822, %c0_336, %c0_337] : memref<8x8x64xf32, #tpu.memory_space<vmem>>, vector<1x8x64xf32>
    %824 = vector.shape_cast %823 : vector<1x8x64xf32> to vector<8x64xf32>
    %825 = vector.shape_cast %821 : vector<8x64xf32> to vector<1x8x64xf32>
    tpu.vector_store %arg8[%822, %c0_336, %c0_337], %825 {strides = array<i32>} : memref<8x8x64xf32, #tpu.memory_space<vmem>>, vector<1x8x64xf32>,
    %c6_i32_338 = arith.constant 6 : i32
    %826 = arith.index_cast %c6_i32_338 : i32 to index
    %c0_339 = arith.constant 0 : index
    %c0_340 = arith.constant 0 : index
    %827 = vector.load %arg9[%826, %c0_339, %c0_340] : memref<8x8x256xf32, #tpu.memory_space<vmem>>, vector<1x8x256xf32>
    %828 = vector.shape_cast %827 : vector<1x8x256xf32> to vector<8x256xf32>
    %829 = arith.truncf %821 : vector<8x64xf32> to vector<8x64xbf16>
    %cst_341 = arith.constant dense<0.000000e+00> : vector<8x256xf32>
    %830 = tpu.matmul %829, %662, %cst_341 {dimension_numbers = #tpu.dot_dimension_numbers<[1], [0], [0], [1], [0, 0, 1, 1], [], []>} : vector<8x64xbf16>, vector<64x256xbf16>, vector<8x256xf32> -> vector<8x256xf32>
    %831 = arith.addf %828, %830 : vector<8x256xf32>
    %832 = vector.extract_strided_slice %831 {offsets = [0, 0], sizes = [8, 192], strides = [1, 1]} : vector<8x256xf32> to vector<8x192xf32>
    %cst_342 = arith.constant 0.000000e+00 : f32
    %833 = vector.broadcast %cst_342 : f32 to vector<8x192xf32>
    %834 = arith.subf %833, %832 : vector<8x192xf32>
    %835 = math.exp %834 : vector<8x192xf32>
    %cst_343 = arith.constant 1.000000e+00 : f32
    %836 = vector.broadcast %cst_343 : f32 to vector<8x192xf32>
    %837 = arith.addf %836, %835 : vector<8x192xf32>
    %838 = tpu.reciprocal %837 {approx = true} : vector<8x192xf32> -> vector<8x192xf32>
    %839 = vector.extract_strided_slice %838 {offsets = [0, 0], sizes = [8, 64], strides = [1, 1]} : vector<8x192xf32> to vector<8x64xf32>
    %840 = vector.extract_strided_slice %838 {offsets = [0, 64], sizes = [8, 64], strides = [1, 1]} : vector<8x192xf32> to vector<8x64xf32>
    %841 = vector.extract_strided_slice %838 {offsets = [0, 128], sizes = [8, 64], strides = [1, 1]} : vector<8x192xf32> to vector<8x64xf32>
    %842 = vector.extract_strided_slice %831 {offsets = [0, 192], sizes = [8, 64], strides = [1, 1]} : vector<8x256xf32> to vector<8x64xf32>
    %843 = math.tanh %842 : vector<8x64xf32>
    %844 = arith.mulf %840, %819 : vector<8x64xf32>
    %845 = arith.mulf %839, %843 : vector<8x64xf32>
    %846 = arith.addf %844, %845 : vector<8x64xf32>
    %847 = math.tanh %846 : vector<8x64xf32>
    %848 = arith.mulf %841, %847 : vector<8x64xf32>
    %849 = arith.index_cast %c6_i32_338 : i32 to index
    %c0_344 = arith.constant 0 : index
    %c0_345 = arith.constant 0 : index
    %850 = vector.load %arg8[%849, %c0_344, %c0_345] : memref<8x8x64xf32, #tpu.memory_space<vmem>>, vector<1x8x64xf32>
    %851 = vector.shape_cast %850 : vector<1x8x64xf32> to vector<8x64xf32>
    %852 = vector.shape_cast %848 : vector<8x64xf32> to vector<1x8x64xf32>
    tpu.vector_store %arg8[%849, %c0_344, %c0_345], %852 {strides = array<i32>} : memref<8x8x64xf32, #tpu.memory_space<vmem>>, vector<1x8x64xf32>,
    %c7_i32_346 = arith.constant 7 : i32
    %853 = arith.index_cast %c7_i32_346 : i32 to index
    %c0_347 = arith.constant 0 : index
    %c0_348 = arith.constant 0 : index
    %854 = vector.load %arg9[%853, %c0_347, %c0_348] : memref<8x8x256xf32, #tpu.memory_space<vmem>>, vector<1x8x256xf32>
    %855 = vector.shape_cast %854 : vector<1x8x256xf32> to vector<8x256xf32>
    %856 = arith.truncf %848 : vector<8x64xf32> to vector<8x64xbf16>
    %cst_349 = arith.constant dense<0.000000e+00> : vector<8x256xf32>
    %857 = tpu.matmul %856, %662, %cst_349 {dimension_numbers = #tpu.dot_dimension_numbers<[1], [0], [0], [1], [0, 0, 1, 1], [], []>} : vector<8x64xbf16>, vector<64x256xbf16>, vector<8x256xf32> -> vector<8x256xf32>
    %858 = arith.addf %855, %857 : vector<8x256xf32>
    %859 = vector.extract_strided_slice %858 {offsets = [0, 0], sizes = [8, 192], strides = [1, 1]} : vector<8x256xf32> to vector<8x192xf32>
    %cst_350 = arith.constant 0.000000e+00 : f32
    %860 = vector.broadcast %cst_350 : f32 to vector<8x192xf32>
    %861 = arith.subf %860, %859 : vector<8x192xf32>
    %862 = math.exp %861 : vector<8x192xf32>
    %cst_351 = arith.constant 1.000000e+00 : f32
    %863 = vector.broadcast %cst_351 : f32 to vector<8x192xf32>
    %864 = arith.addf %863, %862 : vector<8x192xf32>
    %865 = tpu.reciprocal %864 {approx = true} : vector<8x192xf32> -> vector<8x192xf32>
    %866 = vector.extract_strided_slice %865 {offsets = [0, 0], sizes = [8, 64], strides = [1, 1]} : vector<8x192xf32> to vector<8x64xf32>
    %867 = vector.extract_strided_slice %865 {offsets = [0, 64], sizes = [8, 64], strides = [1, 1]} : vector<8x192xf32> to vector<8x64xf32>
    %868 = vector.extract_strided_slice %865 {offsets = [0, 128], sizes = [8, 64], strides = [1, 1]} : vector<8x192xf32> to vector<8x64xf32>
    %869 = vector.extract_strided_slice %858 {offsets = [0, 192], sizes = [8, 64], strides = [1, 1]} : vector<8x256xf32> to vector<8x64xf32>
    %870 = math.tanh %869 : vector<8x64xf32>
    %871 = arith.mulf %867, %846 : vector<8x64xf32>
    %872 = arith.mulf %866, %870 : vector<8x64xf32>
    %873 = arith.addf %871, %872 : vector<8x64xf32>
    %874 = math.tanh %873 : vector<8x64xf32>
    %875 = arith.mulf %868, %874 : vector<8x64xf32>
    %876 = arith.index_cast %c7_i32_346 : i32 to index
    %c0_352 = arith.constant 0 : index
    %c0_353 = arith.constant 0 : index
    %877 = vector.load %arg8[%876, %c0_352, %c0_353] : memref<8x8x64xf32, #tpu.memory_space<vmem>>, vector<1x8x64xf32>
    %878 = vector.shape_cast %877 : vector<1x8x64xf32> to vector<8x64xf32>
    %879 = vector.shape_cast %875 : vector<8x64xf32> to vector<1x8x64xf32>
    tpu.vector_store %arg8[%876, %c0_352, %c0_353], %879 {strides = array<i32>} : memref<8x8x64xf32, #tpu.memory_space<vmem>>, vector<1x8x64xf32>,
    %c8_i32_354 = arith.constant 8 : i32
    %c0_355 = arith.constant 0 : index
    %c0_356 = arith.constant 0 : index
    %c0_357 = arith.constant 0 : index
    %880 = vector.load %arg8[%c0_355, %c0_356, %c0_357] : memref<8x8x64xf32, #tpu.memory_space<vmem>>, vector<8x8x64xf32>
    %c0_358 = arith.constant 0 : index
    %c0_359 = arith.constant 0 : index
    %c0_360 = arith.constant 0 : index
    %881 = vector.load %arg7[%c0_358, %c0_359, %c0_360] : memref<8x8x64xf32, #tpu.memory_space<vmem>>, vector<8x8x64xf32>
    tpu.vector_store %arg7[%c0_358, %c0_359, %c0_360], %880 {strides = array<i32>} : memref<8x8x64xf32, #tpu.memory_space<vmem>>, vector<8x8x64xf32>,
    return
  }
  func.func @transform_0(%arg0: i32) -> (i32, i32, i32, i32) {
    %c0_i32 = arith.constant 0 : i32
    %c0_i32_0 = arith.constant 0 : i32
    %c0_i32_1 = arith.constant 0 : i32
    %c0_i32_2 = arith.constant 0 : i32
    %c0_i32_3 = arith.constant 0 : i32
    return %c0_i32, %c0_i32_0, %c0_i32_1, %c0_i32_2 : i32, i32, i32, i32
  }
  func.func @transform_1(%arg0: i32) -> (i32, i32) {
    %c0_i32 = arith.constant 0 : i32
    %c0_i32_0 = arith.constant 0 : i32
    %c0_i32_1 = arith.constant 0 : i32
    return %c0_i32, %c0_i32_0 : i32, i32
  }
  func.func @transform_2(%arg0: i32) -> (i32, i32) {
    %c0_i32 = arith.constant 0 : i32
    %c0_i32_0 = arith.constant 0 : i32
    %c0_i32_1 = arith.constant 0 : i32
    return %c0_i32, %c0_i32_0 : i32, i32
  }
  func.func @transform_3(%arg0: i32) -> (i32, i32, i32) {
    %c0_i32 = arith.constant 0 : i32
    %c0_i32_0 = arith.constant 0 : i32
    %c0_i32_1 = arith.constant 0 : i32
    %c0_i32_2 = arith.constant 0 : i32
    return %c0_i32, %c0_i32_0, %c0_i32_1 : i32, i32, i32
  }
  func.func @transform_4(%arg0: i32) -> (i32, i32, i32) {
    %c0_i32 = arith.constant 0 : i32
    %c0_i32_0 = arith.constant 0 : i32
    %c0_i32_1 = arith.constant 0 : i32
    %c0_i32_2 = arith.constant 0 : i32
    return %c0_i32, %c0_i32_0, %c0_i32_1 : i32, i32, i32
  }
  func.func @transform_5(%arg0: i32) -> (i32, i32, i32) {
    %c0_i32 = arith.constant 0 : i32
    %c0_i32_0 = arith.constant 0 : i32
    %c0_i32_1 = arith.constant 0 : i32
    %c0_i32_2 = arith.constant 0 : i32
    return %c0_i32, %c0_i32_0, %c0_i32_1 : i32, i32, i32
  }
  func.func @transform_6(%arg0: i32) -> (i32, i32, i32) {
    %c0_i32 = arith.constant 0 : i32
    %c0_i32_0 = arith.constant 0 : i32
    %c0_i32_1 = arith.constant 0 : i32
    %c0_i32_2 = arith.constant 0 : i32
    return %c0_i32, %c0_i32_0, %c0_i32_1 : i32, i32, i32
  }
}

</mosaic_0001>

<llo_original>
// kernel: dual_lstm_forward.1
$region0: #{dual_lstm_forward.1}
  #allocation0 [shape = 'u32[]', space=smem, size = 0x4, offset = 0x4, fixed_abs, tag = 'smem constant byte address 0x4 - core index']
  #allocation1 [shape = 'u32[144,128]{1,0:T(1,128)}', space=vmem, size = 0x12000, scoped, tag = 'internal scratch']
  #allocation2 [shape = 'f32[8,8,64]{2,1,0:T(8,128)}', space=vmem, size = 0x8000, scoped, tag = 'scratch operand']
  #allocation3 [shape = 'f32[8,8,256]{2,1,0:T(8,128)}', space=vmem, size = 0x10000, scoped, tag = 'scratch operand']
  #allocation4 [shape = 'f32[1,1]{1,0:T(1,128)S(1)}', space=vmem, size = 0x200, scoped, tag = 'scoped memory for dual_lstm_forward.1']
  %s0 = inlined_call_operand.vmem [shape: f32[8,8,4,32], index: 0, kind: input, shape index: {}]
  %s1 = inlined_call_operand.vmem [shape: f32[1,32], index: 1, kind: input, shape index: {}]
  %s2 = inlined_call_operand.<no memory space> [shape: f32[1,1], index: 2, kind: input, shape index: {}]
  %s3 = inlined_call_operand.vmem [shape: bf16[2,64,256], index: 3, kind: input, shape index: {}]
  %s4 = inlined_call_operand.vmem [shape: bf16[2,64,256], index: 4, kind: input, shape index: {}]
  %s5 = inlined_call_operand.vmem [shape: f32[2,1,256], index: 5, kind: input, shape index: {}]
  %s6 = inlined_call_operand.vmem [shape: f32[8,8,64], index: 6, kind: output, shape index: {}]
  %s7 = sld [smem:[#allocation0]]
  $region34: #{dual_lstm_forward.1} parent=0
    _
  %s9 = ssub.s32 1, %s7
  %s10 = scalar_select 0, %s9, %s7
  %v11 = vstv %s2
  %12 = vst [vmem:[#allocation4] sm:$0x1] %v11
  // Predicated region
  $region2: #{dual_lstm_forward.1} parent=0 // pred_check
    _
  $region3: #{dual_lstm_forward.1} parent=0 // pred_check_branch
    %14 = sbr.rel (0) target = $region5
  $region4: #{dual_lstm_forward.1} parent=0 // pred_region
    _
  $region5: #{dual_lstm_forward.1} parent=0 // pred_fallthru
    _
  // Predicated region
  $region6: #{dual_lstm_forward.1} parent=0 // pred_check
    _
  $region7: #{dual_lstm_forward.1} parent=0 // pred_check_branch
    %16 = sbr.rel (0) target = $region9
  $region8: #{dual_lstm_forward.1} parent=0 // pred_region
    _
  $region9: #{dual_lstm_forward.1} parent=0 // pred_fallthru
    _
  // Predicated region
  $region10: #{dual_lstm_forward.1} parent=0 // pred_check
    _
  $region11: #{dual_lstm_forward.1} parent=0 // pred_check_branch
    %18 = sbr.rel (0) target = $region13
  $region12: #{dual_lstm_forward.1} parent=0 // pred_region
    _
  $region13: #{dual_lstm_forward.1} parent=0 // pred_fallthru
    _
  // Predicated region
  $region14: #{dual_lstm_forward.1} parent=0 // pred_check
    _
  $region15: #{dual_lstm_forward.1} parent=0 // pred_check_branch
    %20 = sbr.rel (0) target = $region17
  $region16: #{dual_lstm_forward.1} parent=0 // pred_region
    _
  $region17: #{dual_lstm_forward.1} parent=0 // pred_fallthru
    _
  // Predicated region
  $region18: #{dual_lstm_forward.1} parent=0 // pred_check
    _
  $region19: #{dual_lstm_forward.1} parent=0 // pred_check_branch
    %22 = sbr.rel (0) target = $region21
  $region20: #{dual_lstm_forward.1} parent=0 // pred_region
    _
  $region21: #{dual_lstm_forward.1} parent=0 // pred_fallthru
    _
  // Predicated region
  $region22: #{dual_lstm_forward.1} parent=0 // pred_check
    _
  $region23: #{dual_lstm_forward.1} parent=0 // pred_check_branch
    %24 = sbr.rel (0) target = $region25
  $region24: #{dual_lstm_forward.1} parent=0 // pred_region
    _
  $region25: #{dual_lstm_forward.1} parent=0 // pred_fallthru
    _
  %v26 = vld [vmem:[%s1] sm:$0x1]
  %v27 = vld [vmem:[%s0] sm:$0xf]
  %v28 = vld [vmem:[%s0 + $0x20] sm:$0xf]
  %v29 = vld [vmem:[%s0 + $0x40] sm:$0xf]
  %v30 = vld [vmem:[%s0 + $0x60] sm:$0xf]
  %v31 = vld [vmem:[%s0 + $0x80] sm:$0xf]
  %v32 = vld [vmem:[%s0 + $0xa0] sm:$0xf]
  %v33 = vld [vmem:[%s0 + $0xc0] sm:$0xf]
  %v34 = vld [vmem:[%s0 + $0xe0] sm:$0xf]
  %v36 = vlaneseq
  %v37 = vshrl.u32 %v36, 7
  %v38 = vsub.s32 0, %v37
  %v39 = vrot.slane %v26, %v38
  %v41 = vmul.f32 %v27, %v39
  %v42 = vmul.f32 %v28, %v39
  %v43 = vmul.f32 %v29, %v39
  %v44 = vmul.f32 %v30, %v39
  %v45 = vmul.f32 %v31, %v39
  %v46 = vmul.f32 %v32, %v39
  %v47 = vmul.f32 %v33, %v39
  %v48 = vmul.f32 %v34, %v39
  %vm49 = vcmask 257024
  %v50 = vsel %vm49, %v41, 0.0
  %51 = vadd.xlane.f32.xlu0 %v50
  %v52 = vpop.xlane.xlu0 %51
  %v53 = vsel %vm49, %v42, 0.0
  %54 = vadd.xlane.f32.xlu0 %v53
  %v55 = vpop.xlane.xlu0 %54
  %v56 = vsel %vm49, %v43, 0.0
  %57 = vadd.xlane.f32.xlu0 %v56
  %v58 = vpop.xlane.xlu0 %57
  %v59 = vsel %vm49, %v44, 0.0
  %60 = vadd.xlane.f32.xlu0 %v59
  %v61 = vpop.xlane.xlu0 %60
  %v62 = vsel %vm49, %v45, 0.0
  %63 = vadd.xlane.f32.xlu0 %v62
  %v64 = vpop.xlane.xlu0 %63
  %v65 = vsel %vm49, %v46, 0.0
  %66 = vadd.xlane.f32.xlu0 %v65
  %v67 = vpop.xlane.xlu0 %66
  %v68 = vsel %vm49, %v47, 0.0
  %69 = vadd.xlane.f32.xlu0 %v68
  %v70 = vpop.xlane.xlu0 %69
  %v71 = vsel %vm49, %v48, 0.0
  %72 = vadd.xlane.f32.xlu0 %v71
  %v73 = vpop.xlane.xlu0 %72
  %v74 = vld [vmem:[#allocation4] sm:$0x1]
  %v76 = vlaneseq
  %v77 = vshrl.u32 %v76, 7
  %v78 = vsub.s32 0, %v77
  %v79 = vrot.slane %v74, %v78
  %v81 = vadd.f32 %v52, %v79
  %v82 = vadd.f32 %v55, %v79
  %v83 = vadd.f32 %v58, %v79
  %v84 = vadd.f32 %v61, %v79
  %v85 = vadd.f32 %v64, %v79
  %v86 = vadd.f32 %v67, %v79
  %v87 = vadd.f32 %v70, %v79
  %v88 = vadd.f32 %v73, %v79
  %vm89 = vcmask 3072
  %v90 = vsel %vm89, %v81, -inf
  %v91 = vrot.slane %v90, 4
  %v92 = vmax.f32 %v90, %v91
  %v93 = vrot.slane %v92, 2
  %v94 = vmax.f32 %v92, %v93
  %v95 = vrot.slane %v94, 1
  %v96 = vmax.f32 %v94, %v95
  %v97 = vsel %vm89, %v82, -inf
  %v98 = vrot.slane %v97, 4
  %v99 = vmax.f32 %v97, %v98
  %v100 = vrot.slane %v99, 2
  %v101 = vmax.f32 %v99, %v100
  %v102 = vrot.slane %v101, 1
  %v103 = vmax.f32 %v101, %v102
  %v104 = vsel %vm89, %v83, -inf
  %v105 = vrot.slane %v104, 4
  %v106 = vmax.f32 %v104, %v105
  %v107 = vrot.slane %v106, 2
  %v108 = vmax.f32 %v106, %v107
  %v109 = vrot.slane %v108, 1
  %v110 = vmax.f32 %v108, %v109
  %v111 = vsel %vm89, %v84, -inf
  %v112 = vrot.slane %v111, 4
  %v113 = vmax.f32 %v111, %v112
  %v114 = vrot.slane %v113, 2
  %v115 = vmax.f32 %v113, %v114
  %v116 = vrot.slane %v115, 1
  %v117 = vmax.f32 %v115, %v116
  %v118 = vsel %vm89, %v85, -inf
  %v119 = vrot.slane %v118, 4
  %v120 = vmax.f32 %v118, %v119
  %v121 = vrot.slane %v120, 2
  %v122 = vmax.f32 %v120, %v121
  %v123 = vrot.slane %v122, 1
  %v124 = vmax.f32 %v122, %v123
  %v125 = vsel %vm89, %v86, -inf
  %v126 = vrot.slane %v125, 4
  %v127 = vmax.f32 %v125, %v126
  %v128 = vrot.slane %v127, 2
  %v129 = vmax.f32 %v127, %v128
  %v130 = vrot.slane %v129, 1
  %v131 = vmax.f32 %v129, %v130
  %v132 = vsel %vm89, %v87, -inf
  %v133 = vrot.slane %v132, 4
  %v134 = vmax.f32 %v132, %v133
  %v135 = vrot.slane %v134, 2
  %v136 = vmax.f32 %v134, %v135
  %v137 = vrot.slane %v136, 1
  %v138 = vmax.f32 %v136, %v137
  %v139 = vsel %vm89, %v88, -inf
  %v140 = vrot.slane %v139, 4
  %v141 = vmax.f32 %v139, %v140
  %v142 = vrot.slane %v141, 2
  %v143 = vmax.f32 %v141, %v142
  %v144 = vrot.slane %v143, 1
  %v145 = vmax.f32 %v143, %v144
  %v146 = vsub.f32 %v81, %v96
  %v147 = vsub.f32 %v82, %v103
  %v148 = vsub.f32 %v83, %v110
  %v149 = vsub.f32 %v84, %v117
  %v150 = vsub.f32 %v85, %v124
  %v151 = vsub.f32 %v86, %v131
  %v152 = vsub.f32 %v87, %v138
  %v153 = vsub.f32 %v88, %v145
  %v154 = vmul.f32 %v146, 1.442695
  %v155 = vpow.pop %v154
  %v156 = vmul.f32 %v147, 1.442695
  %v157 = vpow.pop %v156
  %v158 = vmul.f32 %v148, 1.442695
  %v159 = vpow.pop %v158
  %v160 = vmul.f32 %v149, 1.442695
  %v161 = vpow.pop %v160
  %v162 = vmul.f32 %v150, 1.442695
  %v163 = vpow.pop %v162
  %v164 = vmul.f32 %v151, 1.442695
  %v165 = vpow.pop %v164
  %v166 = vmul.f32 %v152, 1.442695
  %v167 = vpow.pop %v166
  %v168 = vmul.f32 %v153, 1.442695
  %v169 = vpow.pop %v168
  %v170 = vsel %vm89, %v155, 0.0
  %v171 = vrot.slane %v170, 4
  %v172 = vadd.f32 %v170, %v171
  %v173 = vrot.slane %v172, 2
  %v174 = vadd.f32 %v172, %v173
  %v175 = vrot.slane %v174, 1
  %v176 = vadd.f32 %v174, %v175
  %v177 = vsel %vm89, %v157, 0.0
  %v178 = vrot.slane %v177, 4
  %v179 = vadd.f32 %v177, %v178
  %v180 = vrot.slane %v179, 2
  %v181 = vadd.f32 %v179, %v180
  %v182 = vrot.slane %v181, 1
  %v183 = vadd.f32 %v181, %v182
  %v184 = vsel %vm89, %v159, 0.0
  %v185 = vrot.slane %v184, 4
  %v186 = vadd.f32 %v184, %v185
  %v187 = vrot.slane %v186, 2
  %v188 = vadd.f32 %v186, %v187
  %v189 = vrot.slane %v188, 1
  %v190 = vadd.f32 %v188, %v189
  %v191 = vsel %vm89, %v161, 0.0
  %v192 = vrot.slane %v191, 4
  %v193 = vadd.f32 %v191, %v192
  %v194 = vrot.slane %v193, 2
  %v195 = vadd.f32 %v193, %v194
  %v196 = vrot.slane %v195, 1
  %v197 = vadd.f32 %v195, %v196
  %v198 = vsel %vm89, %v163, 0.0
  %v199 = vrot.slane %v198, 4
  %v200 = vadd.f32 %v198, %v199
  %v201 = vrot.slane %v200, 2
  %v202 = vadd.f32 %v200, %v201
  %v203 = vrot.slane %v202, 1
  %v204 = vadd.f32 %v202, %v203
  %v205 = vsel %vm89, %v165, 0.0
  %v206 = vrot.slane %v205, 4
  %v207 = vadd.f32 %v205, %v206
  %v208 = vrot.slane %v207, 2
  %v209 = vadd.f32 %v207, %v208
  %v210 = vrot.slane %v209, 1
  %v211 = vadd.f32 %v209, %v210
  %v212 = vsel %vm89, %v167, 0.0
  %v213 = vrot.slane %v212, 4
  %v214 = vadd.f32 %v212, %v213
  %v215 = vrot.slane %v214, 2
  %v216 = vadd.f32 %v214, %v215
  %v217 = vrot.slane %v216, 1
  %v218 = vadd.f32 %v216, %v217
  %v219 = vsel %vm89, %v169, 0.0
  %v220 = vrot.slane %v219, 4
  %v221 = vadd.f32 %v219, %v220
  %v222 = vrot.slane %v221, 2
  %v223 = vadd.f32 %v221, %v222
  %v224 = vrot.slane %v223, 1
  %v225 = vadd.f32 %v223, %v224
  %v226 = vrcp.pop %v176
  %v227 = vmul.f32 %v155, %v226
  %v228 = vrcp.pop %v183
  %v229 = vmul.f32 %v157, %v228
  %v230 = vrcp.pop %v190
  %v231 = vmul.f32 %v159, %v230
  %v232 = vrcp.pop %v197
  %v233 = vmul.f32 %v161, %v232
  %v234 = vrcp.pop %v204
  %v235 = vmul.f32 %v163, %v234
  %v236 = vrcp.pop %v211
  %v237 = vmul.f32 %v165, %v236
  %v238 = vrcp.pop %v218
  %v239 = vmul.f32 %v167, %v238
  %v240 = vrcp.pop %v225
  %v241 = vmul.f32 %v169, %v240
  %v242 = vsub.f32 %v227, 0.25
  %v243 = vsub.f32 %v229, 0.25
  %v244 = vsub.f32 %v231, 0.25
  %v245 = vsub.f32 %v233, 0.25
  %v246 = vsub.f32 %v235, 0.25
  %v247 = vsub.f32 %v237, 0.25
  %v248 = vsub.f32 %v239, 0.25
  %v249 = vsub.f32 %v241, 0.25
  %v250 = vmul.f32 %v242, -10.0
  %v251 = vmul.f32 %v243, -10.0
  %v252 = vmul.f32 %v244, -10.0
  %v253 = vmul.f32 %v245, -10.0
  %v254 = vmul.f32 %v246, -10.0
  %v255 = vmul.f32 %v247, -10.0
  %v256 = vmul.f32 %v248, -10.0
  %v257 = vmul.f32 %v249, -10.0
  %v258 = vmul.f32 %v250, 1.442695
  %v259 = vpow.pop %v258
  %v260 = vmul.f32 %v251, 1.442695
  %v261 = vpow.pop %v260
  %v262 = vmul.f32 %v252, 1.442695
  %v263 = vpow.pop %v262
  %v264 = vmul.f32 %v253, 1.442695
  %v265 = vpow.pop %v264
  %v266 = vmul.f32 %v254, 1.442695
  %v267 = vpow.pop %v266
  %v268 = vmul.f32 %v255, 1.442695
  %v269 = vpow.pop %v268
  %v270 = vmul.f32 %v256, 1.442695
  %v271 = vpow.pop %v270
  %v272 = vmul.f32 %v257, 1.442695
  %v273 = vpow.pop %v272
  %v274 = vadd.f32 %v259, 1.0
  %v275 = vadd.f32 %v261, 1.0
  %v276 = vadd.f32 %v263, 1.0
  %v277 = vadd.f32 %v265, 1.0
  %v278 = vadd.f32 %v267, 1.0
  %v279 = vadd.f32 %v269, 1.0
  %v280 = vadd.f32 %v271, 1.0
  %v281 = vadd.f32 %v273, 1.0
  %v282 = vrcp.pop %v274
  %v283 = vmul.f32 1.0, %v282
  %v284 = vrcp.pop %v275
  %v285 = vmul.f32 1.0, %v284
  %v286 = vrcp.pop %v276
  %v287 = vmul.f32 1.0, %v286
  %v288 = vrcp.pop %v277
  %v289 = vmul.f32 1.0, %v288
  %v290 = vrcp.pop %v278
  %v291 = vmul.f32 1.0, %v290
  %v292 = vrcp.pop %v279
  %v293 = vmul.f32 1.0, %v292
  %v294 = vrcp.pop %v280
  %v295 = vmul.f32 1.0, %v294
  %v296 = vrcp.pop %v281
  %v297 = vmul.f32 1.0, %v296
  %v298 = vsub.f32 1.0, %v283
  %v299 = vsub.f32 1.0, %v285
  %v300 = vsub.f32 1.0, %v287
  %v301 = vsub.f32 1.0, %v289
  %v302 = vsub.f32 1.0, %v291
  %v303 = vsub.f32 1.0, %v293
  %v304 = vsub.f32 1.0, %v295
  %v305 = vsub.f32 1.0, %v297
  %307 = vset.pattern.permute.xlu0 0
  %308 = vperm.xlu0 %307, %v283
  %v309 = vpop.permute.xlu0 %308
  %312 = vset.pattern.permute.xlu0 0
  %313 = vperm.xlu0 %312, %v285
  %v314 = vpop.permute.xlu0 %313
  %317 = vset.pattern.permute.xlu0 0
  %318 = vperm.xlu0 %317, %v287
  %v319 = vpop.permute.xlu0 %318
  %322 = vset.pattern.permute.xlu0 0
  %323 = vperm.xlu0 %322, %v289
  %v324 = vpop.permute.xlu0 %323
  %327 = vset.pattern.permute.xlu0 0
  %328 = vperm.xlu0 %327, %v291
  %v329 = vpop.permute.xlu0 %328
  %332 = vset.pattern.permute.xlu0 0
  %333 = vperm.xlu0 %332, %v293
  %v334 = vpop.permute.xlu0 %333
  %337 = vset.pattern.permute.xlu0 0
  %338 = vperm.xlu0 %337, %v295
  %v339 = vpop.permute.xlu0 %338
  %342 = vset.pattern.permute.xlu0 0
  %343 = vperm.xlu0 %342, %v297
  %v344 = vpop.permute.xlu0 %343
  %v346 = vmul.f32 %v309, %v27
  %v347 = vmul.f32 %v314, %v28
  %v348 = vmul.f32 %v319, %v29
  %v349 = vmul.f32 %v324, %v30
  %v350 = vmul.f32 %v329, %v31
  %v351 = vmul.f32 %v334, %v32
  %v352 = vmul.f32 %v339, %v33
  %v353 = vmul.f32 %v344, %v34
  %v354 = vsel %vm49, %v346, 0.0
  %v355 = vrot.slane %v354, 4
  %v356 = vadd.f32 %v354, %v355
  %v357 = vrot.slane %v356, 2
  %v358 = vadd.f32 %v356, %v357
  %v359 = vrot.slane %v358, 1
  %v360 = vadd.f32 %v358, %v359
  %v361 = vsel %vm49, %v347, 0.0
  %v362 = vrot.slane %v361, 4
  %v363 = vadd.f32 %v361, %v362
  %v364 = vrot.slane %v363, 2
  %v365 = vadd.f32 %v363, %v364
  %v366 = vrot.slane %v365, 1
  %v367 = vadd.f32 %v365, %v366
  %v368 = vsel %vm49, %v348, 0.0
  %v369 = vrot.slane %v368, 4
  %v370 = vadd.f32 %v368, %v369
  %v371 = vrot.slane %v370, 2
  %v372 = vadd.f32 %v370, %v371
  %v373 = vrot.slane %v372, 1
  %v374 = vadd.f32 %v372, %v373
  %v375 = vsel %vm49, %v349, 0.0
  %v376 = vrot.slane %v375, 4
  %v377 = vadd.f32 %v375, %v376
  %v378 = vrot.slane %v377, 2
  %v379 = vadd.f32 %v377, %v378
  %v380 = vrot.slane %v379, 1
  %v381 = vadd.f32 %v379, %v380
  %v382 = vsel %vm49, %v350, 0.0
  %v383 = vrot.slane %v382, 4
  %v384 = vadd.f32 %v382, %v383
  %v385 = vrot.slane %v384, 2
  %v386 = vadd.f32 %v384, %v385
  %v387 = vrot.slane %v386, 1
  %v388 = vadd.f32 %v386, %v387
  %v389 = vsel %vm49, %v351, 0.0
  %v390 = vrot.slane %v389, 4
  %v391 = vadd.f32 %v389, %v390
  %v392 = vrot.slane %v391, 2
  %v393 = vadd.f32 %v391, %v392
  %v394 = vrot.slane %v393, 1
  %v395 = vadd.f32 %v393, %v394
  %v396 = vsel %vm49, %v352, 0.0
  %v397 = vrot.slane %v396, 4
  %v398 = vadd.f32 %v396, %v397
  %v399 = vrot.slane %v398, 2
  %v400 = vadd.f32 %v398, %v399
  %v401 = vrot.slane %v400, 1
  %v402 = vadd.f32 %v400, %v401
  %v403 = vsel %vm49, %v353, 0.0
  %v404 = vrot.slane %v403, 4
  %v405 = vadd.f32 %v403, %v404
  %v406 = vrot.slane %v405, 2
  %v407 = vadd.f32 %v405, %v406
  %v408 = vrot.slane %v407, 1
  %v409 = vadd.f32 %v407, %v408
  %v410 = vsel %vm89, %v283, 0.0
  %v411 = vrot.slane %v410, 4
  %v412 = vadd.f32 %v410, %v411
  %v413 = vrot.slane %v412, 2
  %v414 = vadd.f32 %v412, %v413
  %v415 = vrot.slane %v414, 1
  %v416 = vadd.f32 %v414, %v415
  %v417 = vsel %vm89, %v285, 0.0
  %v418 = vrot.slane %v417, 4
  %v419 = vadd.f32 %v417, %v418
  %v420 = vrot.slane %v419, 2
  %v421 = vadd.f32 %v419, %v420
  %v422 = vrot.slane %v421, 1
  %v423 = vadd.f32 %v421, %v422
  %v424 = vsel %vm89, %v287, 0.0
  %v425 = vrot.slane %v424, 4
  %v426 = vadd.f32 %v424, %v425
  %v427 = vrot.slane %v426, 2
  %v428 = vadd.f32 %v426, %v427
  %v429 = vrot.slane %v428, 1
  %v430 = vadd.f32 %v428, %v429
  %v431 = vsel %vm89, %v289, 0.0
  %v432 = vrot.slane %v431, 4
  %v433 = vadd.f32 %v431, %v432
  %v434 = vrot.slane %v433, 2
  %v435 = vadd.f32 %v433, %v434
  %v436 = vrot.slane %v435, 1
  %v437 = vadd.f32 %v435, %v436
  %v438 = vsel %vm89, %v291, 0.0
  %v439 = vrot.slane %v438, 4
  %v440 = vadd.f32 %v438, %v439
  %v441 = vrot.slane %v440, 2
  %v442 = vadd.f32 %v440, %v441
  %v443 = vrot.slane %v442, 1
  %v444 = vadd.f32 %v442, %v443
  %v445 = vsel %vm89, %v293, 0.0
  %v446 = vrot.slane %v445, 4
  %v447 = vadd.f32 %v445, %v446
  %v448 = vrot.slane %v447, 2
  %v449 = vadd.f32 %v447, %v448
  %v450 = vrot.slane %v449, 1
  %v451 = vadd.f32 %v449, %v450
  %v452 = vsel %vm89, %v295, 0.0
  %v453 = vrot.slane %v452, 4
  %v454 = vadd.f32 %v452, %v453
  %v455 = vrot.slane %v454, 2
  %v456 = vadd.f32 %v454, %v455
  %v457 = vrot.slane %v456, 1
  %v458 = vadd.f32 %v456, %v457
  %v459 = vsel %vm89, %v297, 0.0
  %v460 = vrot.slane %v459, 4
  %v461 = vadd.f32 %v459, %v460
  %v462 = vrot.slane %v461, 2
  %v463 = vadd.f32 %v461, %v462
  %v464 = vrot.slane %v463, 1
  %v465 = vadd.f32 %v463, %v464
  %v466 = vadd.f32 %v416, 1e-08
  %v467 = vadd.f32 %v423, 1e-08
  %v468 = vadd.f32 %v430, 1e-08
  %v469 = vadd.f32 %v437, 1e-08
  %v470 = vadd.f32 %v444, 1e-08
  %v471 = vadd.f32 %v451, 1e-08
  %v472 = vadd.f32 %v458, 1e-08
  %v473 = vadd.f32 %v465, 1e-08
  %475 = vset.pattern.permute.xlu0 0
  %476 = vperm.xlu0 %475, %v466
  %v477 = vpop.permute.xlu0 %476
  %480 = vset.pattern.permute.xlu0 0
  %481 = vperm.xlu0 %480, %v467
  %v482 = vpop.permute.xlu0 %481
  %485 = vset.pattern.permute.xlu0 0
  %486 = vperm.xlu0 %485, %v468
  %v487 = vpop.permute.xlu0 %486
  %490 = vset.pattern.permute.xlu0 0
  %491 = vperm.xlu0 %490, %v469
  %v492 = vpop.permute.xlu0 %491
  %495 = vset.pattern.permute.xlu0 0
  %496 = vperm.xlu0 %495, %v470
  %v497 = vpop.permute.xlu0 %496
  %500 = vset.pattern.permute.xlu0 0
  %501 = vperm.xlu0 %500, %v471
  %v502 = vpop.permute.xlu0 %501
  %505 = vset.pattern.permute.xlu0 0
  %506 = vperm.xlu0 %505, %v472
  %v507 = vpop.permute.xlu0 %506
  %510 = vset.pattern.permute.xlu0 0
  %511 = vperm.xlu0 %510, %v473
  %v512 = vpop.permute.xlu0 %511
  %v514 = vrcp.pop %v477
  %v515 = vmul.f32 %v360, %v514
  %v516 = vrcp.pop %v482
  %v517 = vmul.f32 %v367, %v516
  %v518 = vrcp.pop %v487
  %v519 = vmul.f32 %v374, %v518
  %v520 = vrcp.pop %v492
  %v521 = vmul.f32 %v381, %v520
  %v522 = vrcp.pop %v497
  %v523 = vmul.f32 %v388, %v522
  %v524 = vrcp.pop %v502
  %v525 = vmul.f32 %v395, %v524
  %v526 = vrcp.pop %v507
  %v527 = vmul.f32 %v402, %v526
  %v528 = vrcp.pop %v512
  %v529 = vmul.f32 %v409, %v528
  %531 = vset.pattern.permute.xlu0 0
  %532 = vperm.xlu0 %531, %v298
  %v533 = vpop.permute.xlu0 %532
  %536 = vset.pattern.permute.xlu0 0
  %537 = vperm.xlu0 %536, %v299
  %v538 = vpop.permute.xlu0 %537
  %541 = vset.pattern.permute.xlu0 0
  %542 = vperm.xlu0 %541, %v300
  %v543 = vpop.permute.xlu0 %542
  %546 = vset.pattern.permute.xlu0 0
  %547 = vperm.xlu0 %546, %v301
  %v548 = vpop.permute.xlu0 %547
  %551 = vset.pattern.permute.xlu0 0
  %552 = vperm.xlu0 %551, %v302
  %v553 = vpop.permute.xlu0 %552
  %556 = vset.pattern.permute.xlu0 0
  %557 = vperm.xlu0 %556, %v303
  %v558 = vpop.permute.xlu0 %557
  %561 = vset.pattern.permute.xlu0 0
  %562 = vperm.xlu0 %561, %v304
  %v563 = vpop.permute.xlu0 %562
  %566 = vset.pattern.permute.xlu0 0
  %567 = vperm.xlu0 %566, %v305
  %v568 = vpop.permute.xlu0 %567
  %v570 = vmul.f32 %v533, %v27
  %v571 = vmul.f32 %v538, %v28
  %v572 = vmul.f32 %v543, %v29
  %v573 = vmul.f32 %v548, %v30
  %v574 = vmul.f32 %v553, %v31
  %v575 = vmul.f32 %v558, %v32
  %v576 = vmul.f32 %v563, %v33
  %v577 = vmul.f32 %v568, %v34
  %v578 = vsel %vm49, %v570, 0.0
  %v579 = vrot.slane %v578, 4
  %v580 = vadd.f32 %v578, %v579
  %v581 = vrot.slane %v580, 2
  %v582 = vadd.f32 %v580, %v581
  %v583 = vrot.slane %v582, 1
  %v584 = vadd.f32 %v582, %v583
  %v585 = vsel %vm49, %v571, 0.0
  %v586 = vrot.slane %v585, 4
  %v587 = vadd.f32 %v585, %v586
  %v588 = vrot.slane %v587, 2
  %v589 = vadd.f32 %v587, %v588
  %v590 = vrot.slane %v589, 1
  %v591 = vadd.f32 %v589, %v590
  %v592 = vsel %vm49, %v572, 0.0
  %v593 = vrot.slane %v592, 4
  %v594 = vadd.f32 %v592, %v593
  %v595 = vrot.slane %v594, 2
  %v596 = vadd.f32 %v594, %v595
  %v597 = vrot.slane %v596, 1
  %v598 = vadd.f32 %v596, %v597
  %v599 = vsel %vm49, %v573, 0.0
  %v600 = vrot.slane %v599, 4
  %v601 = vadd.f32 %v599, %v600
  %v602 = vrot.slane %v601, 2
  %v603 = vadd.f32 %v601, %v602
  %v604 = vrot.slane %v603, 1
  %v605 = vadd.f32 %v603, %v604
  %v606 = vsel %vm49, %v574, 0.0
  %v607 = vrot.slane %v606, 4
  %v608 = vadd.f32 %v606, %v607
  %v609 = vrot.slane %v608, 2
  %v610 = vadd.f32 %v608, %v609
  %v611 = vrot.slane %v610, 1
  %v612 = vadd.f32 %v610, %v611
  %v613 = vsel %vm49, %v575, 0.0
  %v614 = vrot.slane %v613, 4
  %v615 = vadd.f32 %v613, %v614
  %v616 = vrot.slane %v615, 2
  %v617 = vadd.f32 %v615, %v616
  %v618 = vrot.slane %v617, 1
  %v619 = vadd.f32 %v617, %v618
  %v620 = vsel %vm49, %v576, 0.0
  %v621 = vrot.slane %v620, 4
  %v622 = vadd.f32 %v620, %v621
  %v623 = vrot.slane %v622, 2
  %v624 = vadd.f32 %v622, %v623
  %v625 = vrot.slane %v624, 1
  %v626 = vadd.f32 %v624, %v625
  %v627 = vsel %vm49, %v577, 0.0
  %v628 = vrot.slane %v627, 4
  %v629 = vadd.f32 %v627, %v628
  %v630 = vrot.slane %v629, 2
  %v631 = vadd.f32 %v629, %v630
  %v632 = vrot.slane %v631, 1
  %v633 = vadd.f32 %v631, %v632
  %v634 = vsel %vm89, %v298, 0.0
  %v635 = vrot.slane %v634, 4
  %v636 = vadd.f32 %v634, %v635
  %v637 = vrot.slane %v636, 2
  %v638 = vadd.f32 %v636, %v637
  %v639 = vrot.slane %v638, 1
  %v640 = vadd.f32 %v638, %v639
  %v641 = vsel %vm89, %v299, 0.0
  %v642 = vrot.slane %v641, 4
  %v643 = vadd.f32 %v641, %v642
  %v644 = vrot.slane %v643, 2
  %v645 = vadd.f32 %v643, %v644
  %v646 = vrot.slane %v645, 1
  %v647 = vadd.f32 %v645, %v646
  %v648 = vsel %vm89, %v300, 0.0
  %v649 = vrot.slane %v648, 4
  %v650 = vadd.f32 %v648, %v649
  %v651 = vrot.slane %v650, 2
  %v652 = vadd.f32 %v650, %v651
  %v653 = vrot.slane %v652, 1
  %v654 = vadd.f32 %v652, %v653
  %v655 = vsel %vm89, %v301, 0.0
  %v656 = vrot.slane %v655, 4
  %v657 = vadd.f32 %v655, %v656
  %v658 = vrot.slane %v657, 2
  %v659 = vadd.f32 %v657, %v658
  %v660 = vrot.slane %v659, 1
  %v661 = vadd.f32 %v659, %v660
  %v662 = vsel %vm89, %v302, 0.0
  %v663 = vrot.slane %v662, 4
  %v664 = vadd.f32 %v662, %v663
  %v665 = vrot.slane %v664, 2
  %v666 = vadd.f32 %v664, %v665
  %v667 = vrot.slane %v666, 1
  %v668 = vadd.f32 %v666, %v667
  %v669 = vsel %vm89, %v303, 0.0
  %v670 = vrot.slane %v669, 4
  %v671 = vadd.f32 %v669, %v670
  %v672 = vrot.slane %v671, 2
  %v673 = vadd.f32 %v671, %v672
  %v674 = vrot.slane %v673, 1
  %v675 = vadd.f32 %v673, %v674
  %v676 = vsel %vm89, %v304, 0.0
  %v677 = vrot.slane %v676, 4
  %v678 = vadd.f32 %v676, %v677
  %v679 = vrot.slane %v678, 2
  %v680 = vadd.f32 %v678, %v679
  %v681 = vrot.slane %v680, 1
  %v682 = vadd.f32 %v680, %v681
  %v683 = vsel %vm89, %v305, 0.0
  %v684 = vrot.slane %v683, 4
  %v685 = vadd.f32 %v683, %v684
  %v686 = vrot.slane %v685, 2
  %v687 = vadd.f32 %v685, %v686
  %v688 = vrot.slane %v687, 1
  %v689 = vadd.f32 %v687, %v688
  %v690 = vadd.f32 %v640, 1e-08
  %v691 = vadd.f32 %v647, 1e-08
  %v692 = vadd.f32 %v654, 1e-08
  %v693 = vadd.f32 %v661, 1e-08
  %v694 = vadd.f32 %v668, 1e-08
  %v695 = vadd.f32 %v675, 1e-08
  %v696 = vadd.f32 %v682, 1e-08
  %v697 = vadd.f32 %v689, 1e-08
  %699 = vset.pattern.permute.xlu0 0
  %700 = vperm.xlu0 %699, %v690
  %v701 = vpop.permute.xlu0 %700
  %704 = vset.pattern.permute.xlu0 0
  %705 = vperm.xlu0 %704, %v691
  %v706 = vpop.permute.xlu0 %705
  %709 = vset.pattern.permute.xlu0 0
  %710 = vperm.xlu0 %709, %v692
  %v711 = vpop.permute.xlu0 %710
  %714 = vset.pattern.permute.xlu0 0
  %715 = vperm.xlu0 %714, %v693
  %v716 = vpop.permute.xlu0 %715
  %719 = vset.pattern.permute.xlu0 0
  %720 = vperm.xlu0 %719, %v694
  %v721 = vpop.permute.xlu0 %720
  %724 = vset.pattern.permute.xlu0 0
  %725 = vperm.xlu0 %724, %v695
  %v726 = vpop.permute.xlu0 %725
  %729 = vset.pattern.permute.xlu0 0
  %730 = vperm.xlu0 %729, %v696
  %v731 = vpop.permute.xlu0 %730
  %734 = vset.pattern.permute.xlu0 0
  %735 = vperm.xlu0 %734, %v697
  %v736 = vpop.permute.xlu0 %735
  %v738 = vrcp.pop %v701
  %v739 = vmul.f32 %v584, %v738
  %v740 = vrcp.pop %v706
  %v741 = vmul.f32 %v591, %v740
  %v742 = vrcp.pop %v711
  %v743 = vmul.f32 %v598, %v742
  %v744 = vrcp.pop %v716
  %v745 = vmul.f32 %v605, %v744
  %v746 = vrcp.pop %v721
  %v747 = vmul.f32 %v612, %v746
  %v748 = vrcp.pop %v726
  %v749 = vmul.f32 %v619, %v748
  %v750 = vrcp.pop %v731
  %v751 = vmul.f32 %v626, %v750
  %v752 = vrcp.pop %v736
  %v753 = vmul.f32 %v633, %v752
  %vm762 = vcmask 1041409
  %v763 = vsel %vm762, %v517, %v515
  %vm764 = vcmask 1042434
  %v765 = vsel %vm764, %v519, %v763
  %vm766 = vcmask 1043459
  %v767 = vsel %vm766, %v521, %v765
  %vm768 = vcmask 1044484
  %v769 = vsel %vm768, %v523, %v767
  %vm770 = vcmask 1045509
  %v771 = vsel %vm770, %v525, %v769
  %vm772 = vcmask 1046534
  %v773 = vsel %vm772, %v527, %v771
  %vm774 = vcmask 1047559
  %v775 = vsel %vm774, %v529, %v773
  %vm777 = vcmask 261120
  %778 = vst.msk [vmem:[#allocation2] sm:$0xff] %vm777, %v775
  %v787 = vsel %vm762, %v741, %v739
  %v788 = vsel %vm764, %v743, %v787
  %v789 = vsel %vm766, %v745, %v788
  %v790 = vsel %vm768, %v747, %v789
  %v791 = vsel %vm770, %v749, %v790
  %v792 = vsel %vm772, %v751, %v791
  %v793 = vsel %vm774, %v753, %v792
  %794 = vrot.lane.b32.xlu0 %v793, 32
  %v795 = vpop.permute.xlu0 %794
  %vm797 = vcmask 523520
  %798 = vst.msk [vmem:[#allocation2] sm:$0xff] %vm797, %v795
  %s799 = scalar_lea.vmem %s0, 4
  %v800 = vld [vmem:[%s799] sm:$0xf]
  %v801 = vld [vmem:[%s799 + $0x20] sm:$0xf]
  %v802 = vld [vmem:[%s799 + $0x40] sm:$0xf]
  %v803 = vld [vmem:[%s799 + $0x60] sm:$0xf]
  %v804 = vld [vmem:[%s799 + $0x80] sm:$0xf]
  %v805 = vld [vmem:[%s799 + $0xa0] sm:$0xf]
  %v806 = vld [vmem:[%s799 + $0xc0] sm:$0xf]
  %v807 = vld [vmem:[%s799 + $0xe0] sm:$0xf]
  %v808 = vmul.f32 %v800, %v39
  %v809 = vmul.f32 %v801, %v39
  %v810 = vmul.f32 %v802, %v39
  %v811 = vmul.f32 %v803, %v39
  %v812 = vmul.f32 %v804, %v39
  %v813 = vmul.f32 %v805, %v39
  %v814 = vmul.f32 %v806, %v39
  %v815 = vmul.f32 %v807, %v39
  %v816 = vsel %vm49, %v808, 0.0
  %817 = vadd.xlane.f32.xlu0 %v816
  %v818 = vpop.xlane.xlu0 %817
  %v819 = vsel %vm49, %v809, 0.0
  %820 = vadd.xlane.f32.xlu0 %v819
  %v821 = vpop.xlane.xlu0 %820
  %v822 = vsel %vm49, %v810, 0.0
  %823 = vadd.xlane.f32.xlu0 %v822
  %v824 = vpop.xlane.xlu0 %823
  %v825 = vsel %vm49, %v811, 0.0
  %826 = vadd.xlane.f32.xlu0 %v825
  %v827 = vpop.xlane.xlu0 %826
  %v828 = vsel %vm49, %v812, 0.0
  %829 = vadd.xlane.f32.xlu0 %v828
  %v830 = vpop.xlane.xlu0 %829
  %v831 = vsel %vm49, %v813, 0.0
  %832 = vadd.xlane.f32.xlu0 %v831
  %v833 = vpop.xlane.xlu0 %832
  %v834 = vsel %vm49, %v814, 0.0
  %835 = vadd.xlane.f32.xlu0 %v834
  %v836 = vpop.xlane.xlu0 %835
  %v837 = vsel %vm49, %v815, 0.0
  %838 = vadd.xlane.f32.xlu0 %v837
  %v839 = vpop.xlane.xlu0 %838
  %v840 = vld [vmem:[#allocation4] sm:$0x1]
  %v842 = vlaneseq
  %v843 = vshrl.u32 %v842, 7
  %v844 = vsub.s32 0, %v843
  %v845 = vrot.slane %v840, %v844
  %v847 = vadd.f32 %v818, %v845
  %v848 = vadd.f32 %v821, %v845
  %v849 = vadd.f32 %v824, %v845
  %v850 = vadd.f32 %v827, %v845
  %v851 = vadd.f32 %v830, %v845
  %v852 = vadd.f32 %v833, %v845
  %v853 = vadd.f32 %v836, %v845
  %v854 = vadd.f32 %v839, %v845
  %v855 = vsel %vm89, %v847, -inf
  %v856 = vrot.slane %v855, 4
  %v857 = vmax.f32 %v855, %v856
  %v858 = vrot.slane %v857, 2
  %v859 = vmax.f32 %v857, %v858
  %v860 = vrot.slane %v859, 1
  %v861 = vmax.f32 %v859, %v860
  %v862 = vsel %vm89, %v848, -inf
  %v863 = vrot.slane %v862, 4
  %v864 = vmax.f32 %v862, %v863
  %v865 = vrot.slane %v864, 2
  %v866 = vmax.f32 %v864, %v865
  %v867 = vrot.slane %v866, 1
  %v868 = vmax.f32 %v866, %v867
  %v869 = vsel %vm89, %v849, -inf
  %v870 = vrot.slane %v869, 4
  %v871 = vmax.f32 %v869, %v870
  %v872 = vrot.slane %v871, 2
  %v873 = vmax.f32 %v871, %v872
  %v874 = vrot.slane %v873, 1
  %v875 = vmax.f32 %v873, %v874
  %v876 = vsel %vm89, %v850, -inf
  %v877 = vrot.slane %v876, 4
  %v878 = vmax.f32 %v876, %v877
  %v879 = vrot.slane %v878, 2
  %v880 = vmax.f32 %v878, %v879
  %v881 = vrot.slane %v880, 1
  %v882 = vmax.f32 %v880, %v881
  %v883 = vsel %vm89, %v851, -inf
  %v884 = vrot.slane %v883, 4
  %v885 = vmax.f32 %v883, %v884
  %v886 = vrot.slane %v885, 2
  %v887 = vmax.f32 %v885, %v886
  %v888 = vrot.slane %v887, 1
  %v889 = vmax.f32 %v887, %v888
  %v890 = vsel %vm89, %v852, -inf
  %v891 = vrot.slane %v890, 4
  %v892 = vmax.f32 %v890, %v891
  %v893 = vrot.slane %v892, 2
  %v894 = vmax.f32 %v892, %v893
  %v895 = vrot.slane %v894, 1
  %v896 = vmax.f32 %v894, %v895
  %v897 = vsel %vm89, %v853, -inf
  %v898 = vrot.slane %v897, 4
  %v899 = vmax.f32 %v897, %v898
  %v900 = vrot.slane %v899, 2
  %v901 = vmax.f32 %v899, %v900
  %v902 = vrot.slane %v901, 1
  %v903 = vmax.f32 %v901, %v902
  %v904 = vsel %vm89, %v854, -inf
  %v905 = vrot.slane %v904, 4
  %v906 = vmax.f32 %v904, %v905
  %v907 = vrot.slane %v906, 2
  %v908 = vmax.f32 %v906, %v907
  %v909 = vrot.slane %v908, 1
  %v910 = vmax.f32 %v908, %v909
  %v911 = vsub.f32 %v847, %v861
  %v912 = vsub.f32 %v848, %v868
  %v913 = vsub.f32 %v849, %v875
  %v914 = vsub.f32 %v850, %v882
  %v915 = vsub.f32 %v851, %v889
  %v916 = vsub.f32 %v852, %v896
  %v917 = vsub.f32 %v853, %v903
  %v918 = vsub.f32 %v854, %v910
  %v919 = vmul.f32 %v911, 1.442695
  %v920 = vpow.pop %v919
  %v921 = vmul.f32 %v912, 1.442695
  %v922 = vpow.pop %v921
  %v923 = vmul.f32 %v913, 1.442695
  %v924 = vpow.pop %v923
  %v925 = vmul.f32 %v914, 1.442695
  %v926 = vpow.pop %v925
  %v927 = vmul.f32 %v915, 1.442695
  %v928 = vpow.pop %v927
  %v929 = vmul.f32 %v916, 1.442695
  %v930 = vpow.pop %v929
  %v931 = vmul.f32 %v917, 1.442695
  %v932 = vpow.pop %v931
  %v933 = vmul.f32 %v918, 1.442695
  %v934 = vpow.pop %v933
  %v935 = vsel %vm89, %v920, 0.0
  %v936 = vrot.slane %v935, 4
  %v937 = vadd.f32 %v935, %v936
  %v938 = vrot.slane %v937, 2
  %v939 = vadd.f32 %v937, %v938
  %v940 = vrot.slane %v939, 1
  %v941 = vadd.f32 %v939, %v940
  %v942 = vsel %vm89, %v922, 0.0
  %v943 = vrot.slane %v942, 4
  %v944 = vadd.f32 %v942, %v943
  %v945 = vrot.slane %v944, 2
  %v946 = vadd.f32 %v944, %v945
  %v947 = vrot.slane %v946, 1
  %v948 = vadd.f32 %v946, %v947
  %v949 = vsel %vm89, %v924, 0.0
  %v950 = vrot.slane %v949, 4
  %v951 = vadd.f32 %v949, %v950
  %v952 = vrot.slane %v951, 2
  %v953 = vadd.f32 %v951, %v952
  %v954 = vrot.slane %v953, 1
  %v955 = vadd.f32 %v953, %v954
  %v956 = vsel %vm89, %v926, 0.0
  %v957 = vrot.slane %v956, 4
  %v958 = vadd.f32 %v956, %v957
  %v959 = vrot.slane %v958, 2
  %v960 = vadd.f32 %v958, %v959
  %v961 = vrot.slane %v960, 1
  %v962 = vadd.f32 %v960, %v961
  %v963 = vsel %vm89, %v928, 0.0
  %v964 = vrot.slane %v963, 4
  %v965 = vadd.f32 %v963, %v964
  %v966 = vrot.slane %v965, 2
  %v967 = vadd.f32 %v965, %v966
  %v968 = vrot.slane %v967, 1
  %v969 = vadd.f32 %v967, %v968
  %v970 = vsel %vm89, %v930, 0.0
  %v971 = vrot.slane %v970, 4
  %v972 = vadd.f32 %v970, %v971
  %v973 = vrot.slane %v972, 2
  %v974 = vadd.f32 %v972, %v973
  %v975 = vrot.slane %v974, 1
  %v976 = vadd.f32 %v974, %v975
  %v977 = vsel %vm89, %v932, 0.0
  %v978 = vrot.slane %v977, 4
  %v979 = vadd.f32 %v977, %v978
  %v980 = vrot.slane %v979, 2
  %v981 = vadd.f32 %v979, %v980
  %v982 = vrot.slane %v981, 1
  %v983 = vadd.f32 %v981, %v982
  %v984 = vsel %vm89, %v934, 0.0
  %v985 = vrot.slane %v984, 4
  %v986 = vadd.f32 %v984, %v985
  %v987 = vrot.slane %v986, 2
  %v988 = vadd.f32 %v986, %v987
  %v989 = vrot.slane %v988, 1
  %v990 = vadd.f32 %v988, %v989
  %v991 = vrcp.pop %v941
  %v992 = vmul.f32 %v920, %v991
  %v993 = vrcp.pop %v948
  %v994 = vmul.f32 %v922, %v993
  %v995 = vrcp.pop %v955
  %v996 = vmul.f32 %v924, %v995
  %v997 = vrcp.pop %v962
  %v998 = vmul.f32 %v926, %v997
  %v999 = vrcp.pop %v969
  %v1000 = vmul.f32 %v928, %v999
  %v1001 = vrcp.pop %v976
  %v1002 = vmul.f32 %v930, %v1001
  %v1003 = vrcp.pop %v983
  %v1004 = vmul.f32 %v932, %v1003
  %v1005 = vrcp.pop %v990
  %v1006 = vmul.f32 %v934, %v1005
  %v1007 = vsub.f32 %v992, 0.25
  %v1008 = vsub.f32 %v994, 0.25
  %v1009 = vsub.f32 %v996, 0.25
  %v1010 = vsub.f32 %v998, 0.25
  %v1011 = vsub.f32 %v1000, 0.25
  %v1012 = vsub.f32 %v1002, 0.25
  %v1013 = vsub.f32 %v1004, 0.25
  %v1014 = vsub.f32 %v1006, 0.25
  %v1015 = vmul.f32 %v1007, -10.0
  %v1016 = vmul.f32 %v1008, -10.0
  %v1017 = vmul.f32 %v1009, -10.0
  %v1018 = vmul.f32 %v1010, -10.0
  %v1019 = vmul.f32 %v1011, -10.0
  %v1020 = vmul.f32 %v1012, -10.0
  %v1021 = vmul.f32 %v1013, -10.0
  %v1022 = vmul.f32 %v1014, -10.0
  %v1023 = vmul.f32 %v1015, 1.442695
  %v1024 = vpow.pop %v1023
  %v1025 = vmul.f32 %v1016, 1.442695
  %v1026 = vpow.pop %v1025
  %v1027 = vmul.f32 %v1017, 1.442695
  %v1028 = vpow.pop %v1027
  %v1029 = vmul.f32 %v1018, 1.442695
  %v1030 = vpow.pop %v1029
  %v1031 = vmul.f32 %v1019, 1.442695
  %v1032 = vpow.pop %v1031
  %v1033 = vmul.f32 %v1020, 1.442695
  %v1034 = vpow.pop %v1033
  %v1035 = vmul.f32 %v1021, 1.442695
  %v1036 = vpow.pop %v1035
  %v1037 = vmul.f32 %v1022, 1.442695
  %v1038 = vpow.pop %v1037
  %v1039 = vadd.f32 %v1024, 1.0
  %v1040 = vadd.f32 %v1026, 1.0
  %v1041 = vadd.f32 %v1028, 1.0
  %v1042 = vadd.f32 %v1030, 1.0
  %v1043 = vadd.f32 %v1032, 1.0
  %v1044 = vadd.f32 %v1034, 1.0
  %v1045 = vadd.f32 %v1036, 1.0
  %v1046 = vadd.f32 %v1038, 1.0
  %v1047 = vrcp.pop %v1039
  %v1048 = vmul.f32 1.0, %v1047
  %v1049 = vrcp.pop %v1040
  %v1050 = vmul.f32 1.0, %v1049
  %v1051 = vrcp.pop %v1041
  %v1052 = vmul.f32 1.0, %v1051
  %v1053 = vrcp.pop %v1042
  %v1054 = vmul.f32 1.0, %v1053
  %v1055 = vrcp.pop %v1043
  %v1056 = vmul.f32 1.0, %v1055
  %v1057 = vrcp.pop %v1044
  %v1058 = vmul.f32 1.0, %v1057
  %v1059 = vrcp.pop %v1045
  %v1060 = vmul.f32 1.0, %v1059
  %v1061 = vrcp.pop %v1046
  %v1062 = vmul.f32 1.0, %v1061
  %v1063 = vsub.f32 1.0, %v1048
  %v1064 = vsub.f32 1.0, %v1050
  %v1065 = vsub.f32 1.0, %v1052
  %v1066 = vsub.f32 1.0, %v1054
  %v1067 = vsub.f32 1.0, %v1056
  %v1068 = vsub.f32 1.0, %v1058
  %v1069 = vsub.f32 1.0, %v1060
  %v1070 = vsub.f32 1.0, %v1062
  %1072 = vset.pattern.permute.xlu0 0
  %1073 = vperm.xlu0 %1072, %v1048
  %v1074 = vpop.permute.xlu0 %1073
  %1077 = vset.pattern.permute.xlu0 0
  %1078 = vperm.xlu0 %1077, %v1050
  %v1079 = vpop.permute.xlu0 %1078
  %1082 = vset.pattern.permute.xlu0 0
  %1083 = vperm.xlu0 %1082, %v1052
  %v1084 = vpop.permute.xlu0 %1083
  %1087 = vset.pattern.permute.xlu0 0
  %1088 = vperm.xlu0 %1087, %v1054
  %v1089 = vpop.permute.xlu0 %1088
  %1092 = vset.pattern.permute.xlu0 0
  %1093 = vperm.xlu0 %1092, %v1056
  %v1094 = vpop.permute.xlu0 %1093
  %1097 = vset.pattern.permute.xlu0 0
  %1098 = vperm.xlu0 %1097, %v1058
  %v1099 = vpop.permute.xlu0 %1098
  %1102 = vset.pattern.permute.xlu0 0
  %1103 = vperm.xlu0 %1102, %v1060
  %v1104 = vpop.permute.xlu0 %1103
  %1107 = vset.pattern.permute.xlu0 0
  %1108 = vperm.xlu0 %1107, %v1062
  %v1109 = vpop.permute.xlu0 %1108
  %v1111 = vmul.f32 %v1074, %v800
  %v1112 = vmul.f32 %v1079, %v801
  %v1113 = vmul.f32 %v1084, %v802
  %v1114 = vmul.f32 %v1089, %v803
  %v1115 = vmul.f32 %v1094, %v804
  %v1116 = vmul.f32 %v1099, %v805
  %v1117 = vmul.f32 %v1104, %v806
  %v1118 = vmul.f32 %v1109, %v807
  %v1119 = vsel %vm49, %v1111, 0.0
  %v1120 = vrot.slane %v1119, 4
  %v1121 = vadd.f32 %v1119, %v1120
  %v1122 = vrot.slane %v1121, 2
  %v1123 = vadd.f32 %v1121, %v1122
  %v1124 = vrot.slane %v1123, 1
  %v1125 = vadd.f32 %v1123, %v1124
  %v1126 = vsel %vm49, %v1112, 0.0
  %v1127 = vrot.slane %v1126, 4
  %v1128 = vadd.f32 %v1126, %v1127
  %v1129 = vrot.slane %v1128, 2
  %v1130 = vadd.f32 %v1128, %v1129
  %v1131 = vrot.slane %v1130, 1
  %v1132 = vadd.f32 %v1130, %v1131
  %v1133 = vsel %vm49, %v1113, 0.0
  %v1134 = vrot.slane %v1133, 4
  %v1135 = vadd.f32 %v1133, %v1134
  %v1136 = vrot.slane %v1135, 2
  %v1137 = vadd.f32 %v1135, %v1136
  %v1138 = vrot.slane %v1137, 1
  %v1139 = vadd.f32 %v1137, %v1138
  %v1140 = vsel %vm49, %v1114, 0.0
  %v1141 = vrot.slane %v1140, 4
  %v1142 = vadd.f32 %v1140, %v1141
  %v1143 = vrot.slane %v1142, 2
  %v1144 = vadd.f32 %v1142, %v1143
  %v1145 = vrot.slane %v1144, 1
  %v1146 = vadd.f32 %v1144, %v1145
  %v1147 = vsel %vm49, %v1115, 0.0
  %v1148 = vrot.slane %v1147, 4
  %v1149 = vadd.f32 %v1147, %v1148
  %v1150 = vrot.slane %v1149, 2
  %v1151 = vadd.f32 %v1149, %v1150
  %v1152 = vrot.slane %v1151, 1
  %v1153 = vadd.f32 %v1151, %v1152
  %v1154 = vsel %vm49, %v1116, 0.0
  %v1155 = vrot.slane %v1154, 4
  %v1156 = vadd.f32 %v1154, %v1155
  %v1157 = vrot.slane %v1156, 2
  %v1158 = vadd.f32 %v1156, %v1157
  %v1159 = vrot.slane %v1158, 1
  %v1160 = vadd.f32 %v1158, %v1159
  %v1161 = vsel %vm49, %v1117, 0.0
  %v1162 = vrot.slane %v1161, 4
  %v1163 = vadd.f32 %v1161, %v1162
  %v1164 = vrot.slane %v1163, 2
  %v1165 = vadd.f32 %v1163, %v1164
  %v1166 = vrot.slane %v1165, 1
  %v1167 = vadd.f32 %v1165, %v1166
  %v1168 = vsel %vm49, %v1118, 0.0
  %v1169 = vrot.slane %v1168, 4
  %v1170 = vadd.f32 %v1168, %v1169
  %v1171 = vrot.slane %v1170, 2
  %v1172 = vadd.f32 %v1170, %v1171
  %v1173 = vrot.slane %v1172, 1
  %v1174 = vadd.f32 %v1172, %v1173
  %v1175 = vsel %vm89, %v1048, 0.0
  %v1176 = vrot.slane %v1175, 4
  %v1177 = vadd.f32 %v1175, %v1176
  %v1178 = vrot.slane %v1177, 2
  %v1179 = vadd.f32 %v1177, %v1178
  %v1180 = vrot.slane %v1179, 1
  %v1181 = vadd.f32 %v1179, %v1180
  %v1182 = vsel %vm89, %v1050, 0.0
  %v1183 = vrot.slane %v1182, 4
  %v1184 = vadd.f32 %v1182, %v1183
  %v1185 = vrot.slane %v1184, 2
  %v1186 = vadd.f32 %v1184, %v1185
  %v1187 = vrot.slane %v1186, 1
  %v1188 = vadd.f32 %v1186, %v1187
  %v1189 = vsel %vm89, %v1052, 0.0
  %v1190 = vrot.slane %v1189, 4
  %v1191 = vadd.f32 %v1189, %v1190
  %v1192 = vrot.slane %v1191, 2
  %v1193 = vadd.f32 %v1191, %v1192
  %v1194 = vrot.slane %v1193, 1
  %v1195 = vadd.f32 %v1193, %v1194
  %v1196 = vsel %vm89, %v1054, 0.0
  %v1197 = vrot.slane %v1196, 4
  %v1198 = vadd.f32 %v1196, %v1197
  %v1199 = vrot.slane %v1198, 2
  %v1200 = vadd.f32 %v1198, %v1199
  %v1201 = vrot.slane %v1200, 1
  %v1202 = vadd.f32 %v1200, %v1201
  %v1203 = vsel %vm89, %v1056, 0.0
  %v1204 = vrot.slane %v1203, 4
  %v1205 = vadd.f32 %v1203, %v1204
  %v1206 = vrot.slane %v1205, 2
  %v1207 = vadd.f32 %v1205, %v1206
  %v1208 = vrot.slane %v1207, 1
  %v1209 = vadd.f32 %v1207, %v1208
  %v1210 = vsel %vm89, %v1058, 0.0
  %v1211 = vrot.slane %v1210, 4
  %v1212 = vadd.f32 %v1210, %v1211
  %v1213 = vrot.slane %v1212, 2
  %v1214 = vadd.f32 %v1212, %v1213
  %v1215 = vrot.slane %v1214, 1
  %v1216 = vadd.f32 %v1214, %v1215
  %v1217 = vsel %vm89, %v1060, 0.0
  %v1218 = vrot.slane %v1217, 4
  %v1219 = vadd.f32 %v1217, %v1218
  %v1220 = vrot.slane %v1219, 2
  %v1221 = vadd.f32 %v1219, %v1220
  %v1222 = vrot.slane %v1221, 1
  %v1223 = vadd.f32 %v1221, %v1222
  %v1224 = vsel %vm89, %v1062, 0.0
  %v1225 = vrot.slane %v1224, 4
  %v1226 = vadd.f32 %v1224, %v1225
  %v1227 = vrot.slane %v1226, 2
  %v1228 = vadd.f32 %v1226, %v1227
  %v1229 = vrot.slane %v1228, 1
  %v1230 = vadd.f32 %v1228, %v1229
  %v1231 = vadd.f32 %v1181, 1e-08
  %v1232 = vadd.f32 %v1188, 1e-08
  %v1233 = vadd.f32 %v1195, 1e-08
  %v1234 = vadd.f32 %v1202, 1e-08
  %v1235 = vadd.f32 %v1209, 1e-08
  %v1236 = vadd.f32 %v1216, 1e-08
  %v1237 = vadd.f32 %v1223, 1e-08
  %v1238 = vadd.f32 %v1230, 1e-08
  %1240 = vset.pattern.permute.xlu0 0
  %1241 = vperm.xlu0 %1240, %v1231
  %v1242 = vpop.permute.xlu0 %1241
  %1245 = vset.pattern.permute.xlu0 0
  %1246 = vperm.xlu0 %1245, %v1232
  %v1247 = vpop.permute.xlu0 %1246
  %1250 = vset.pattern.permute.xlu0 0
  %1251 = vperm.xlu0 %1250, %v1233
  %v1252 = vpop.permute.xlu0 %1251
  %1255 = vset.pattern.permute.xlu0 0
  %1256 = vperm.xlu0 %1255, %v1234
  %v1257 = vpop.permute.xlu0 %1256
  %1260 = vset.pattern.permute.xlu0 0
  %1261 = vperm.xlu0 %1260, %v1235
  %v1262 = vpop.permute.xlu0 %1261
  %1265 = vset.pattern.permute.xlu0 0
  %1266 = vperm.xlu0 %1265, %v1236
  %v1267 = vpop.permute.xlu0 %1266
  %1270 = vset.pattern.permute.xlu0 0
  %1271 = vperm.xlu0 %1270, %v1237
  %v1272 = vpop.permute.xlu0 %1271
  %1275 = vset.pattern.permute.xlu0 0
  %1276 = vperm.xlu0 %1275, %v1238
  %v1277 = vpop.permute.xlu0 %1276
  %v1279 = vrcp.pop %v1242
  %v1280 = vmul.f32 %v1125, %v1279
  %v1281 = vrcp.pop %v1247
  %v1282 = vmul.f32 %v1132, %v1281
  %v1283 = vrcp.pop %v1252
  %v1284 = vmul.f32 %v1139, %v1283
  %v1285 = vrcp.pop %v1257
  %v1286 = vmul.f32 %v1146, %v1285
  %v1287 = vrcp.pop %v1262
  %v1288 = vmul.f32 %v1153, %v1287
  %v1289 = vrcp.pop %v1267
  %v1290 = vmul.f32 %v1160, %v1289
  %v1291 = vrcp.pop %v1272
  %v1292 = vmul.f32 %v1167, %v1291
  %v1293 = vrcp.pop %v1277
  %v1294 = vmul.f32 %v1174, %v1293
  %1296 = vset.pattern.permute.xlu0 0
  %1297 = vperm.xlu0 %1296, %v1063
  %v1298 = vpop.permute.xlu0 %1297
  %1301 = vset.pattern.permute.xlu0 0
  %1302 = vperm.xlu0 %1301, %v1064
  %v1303 = vpop.permute.xlu0 %1302
  %1306 = vset.pattern.permute.xlu0 0
  %1307 = vperm.xlu0 %1306, %v1065
  %v1308 = vpop.permute.xlu0 %1307
  %1311 = vset.pattern.permute.xlu0 0
  %1312 = vperm.xlu0 %1311, %v1066
  %v1313 = vpop.permute.xlu0 %1312
  %1316 = vset.pattern.permute.xlu0 0
  %1317 = vperm.xlu0 %1316, %v1067
  %v1318 = vpop.permute.xlu0 %1317
  %1321 = vset.pattern.permute.xlu0 0
  %1322 = vperm.xlu0 %1321, %v1068
  %v1323 = vpop.permute.xlu0 %1322
  %1326 = vset.pattern.permute.xlu0 0
  %1327 = vperm.xlu0 %1326, %v1069
  %v1328 = vpop.permute.xlu0 %1327
  %1331 = vset.pattern.permute.xlu0 0
  %1332 = vperm.xlu0 %1331, %v1070
  %v1333 = vpop.permute.xlu0 %1332
  %v1335 = vmul.f32 %v1298, %v800
  %v1336 = vmul.f32 %v1303, %v801
  %v1337 = vmul.f32 %v1308, %v802
  %v1338 = vmul.f32 %v1313, %v803
  %v1339 = vmul.f32 %v1318, %v804
  %v1340 = vmul.f32 %v1323, %v805
  %v1341 = vmul.f32 %v1328, %v806
  %v1342 = vmul.f32 %v1333, %v807
  %v1343 = vsel %vm49, %v1335, 0.0
  %v1344 = vrot.slane %v1343, 4
  %v1345 = vadd.f32 %v1343, %v1344
  %v1346 = vrot.slane %v1345, 2
  %v1347 = vadd.f32 %v1345, %v1346
  %v1348 = vrot.slane %v1347, 1
  %v1349 = vadd.f32 %v1347, %v1348
  %v1350 = vsel %vm49, %v1336, 0.0
  %v1351 = vrot.slane %v1350, 4
  %v1352 = vadd.f32 %v1350, %v1351
  %v1353 = vrot.slane %v1352, 2
  %v1354 = vadd.f32 %v1352, %v1353
  %v1355 = vrot.slane %v1354, 1
  %v1356 = vadd.f32 %v1354, %v1355
  %v1357 = vsel %vm49, %v1337, 0.0
  %v1358 = vrot.slane %v1357, 4
  %v1359 = vadd.f32 %v1357, %v1358
  %v1360 = vrot.slane %v1359, 2
  %v1361 = vadd.f32 %v1359, %v1360
  %v1362 = vrot.slane %v1361, 1
  %v1363 = vadd.f32 %v1361, %v1362
  %v1364 = vsel %vm49, %v1338, 0.0
  %v1365 = vrot.slane %v1364, 4
  %v1366 = vadd.f32 %v1364, %v1365
  %v1367 = vrot.slane %v1366, 2
  %v1368 = vadd.f32 %v1366, %v1367
  %v1369 = vrot.slane %v1368, 1
  %v1370 = vadd.f32 %v1368, %v1369
  %v1371 = vsel %vm49, %v1339, 0.0
  %v1372 = vrot.slane %v1371, 4
  %v1373 = vadd.f32 %v1371, %v1372
  %v1374 = vrot.slane %v1373, 2
  %v1375 = vadd.f32 %v1373, %v1374
  %v1376 = vrot.slane %v1375, 1
  %v1377 = vadd.f32 %v1375, %v1376
  %v1378 = vsel %vm49, %v1340, 0.0
  %v1379 = vrot.slane %v1378, 4
  %v1380 = vadd.f32 %v1378, %v1379
  %v1381 = vrot.slane %v1380, 2
  %v1382 = vadd.f32 %v1380, %v1381
  %v1383 = vrot.slane %v1382, 1
  %v1384 = vadd.f32 %v1382, %v1383
  %v1385 = vsel %vm49, %v1341, 0.0
  %v1386 = vrot.slane %v1385, 4
  %v1387 = vadd.f32 %v1385, %v1386
  %v1388 = vrot.slane %v1387, 2
  %v1389 = vadd.f32 %v1387, %v1388
  %v1390 = vrot.slane %v1389, 1
  %v1391 = vadd.f32 %v1389, %v1390
  %v1392 = vsel %vm49, %v1342, 0.0
  %v1393 = vrot.slane %v1392, 4
  %v1394 = vadd.f32 %v1392, %v1393
  %v1395 = vrot.slane %v1394, 2
  %v1396 = vadd.f32 %v1394, %v1395
  %v1397 = vrot.slane %v1396, 1
  %v1398 = vadd.f32 %v1396, %v1397
  %v1399 = vsel %vm89, %v1063, 0.0
  %v1400 = vrot.slane %v1399, 4
  %v1401 = vadd.f32 %v1399, %v1400
  %v1402 = vrot.slane %v1401, 2
  %v1403 = vadd.f32 %v1401, %v1402
  %v1404 = vrot.slane %v1403, 1
  %v1405 = vadd.f32 %v1403, %v1404
  %v1406 = vsel %vm89, %v1064, 0.0
  %v1407 = vrot.slane %v1406, 4
  %v1408 = vadd.f32 %v1406, %v1407
  %v1409 = vrot.slane %v1408, 2
  %v1410 = vadd.f32 %v1408, %v1409
  %v1411 = vrot.slane %v1410, 1
  %v1412 = vadd.f32 %v1410, %v1411
  %v1413 = vsel %vm89, %v1065, 0.0
  %v1414 = vrot.slane %v1413, 4
  %v1415 = vadd.f32 %v1413, %v1414
  %v1416 = vrot.slane %v1415, 2
  %v1417 = vadd.f32 %v1415, %v1416
  %v1418 = vrot.slane %v1417, 1
  %v1419 = vadd.f32 %v1417, %v1418
  %v1420 = vsel %vm89, %v1066, 0.0
  %v1421 = vrot.slane %v1420, 4
  %v1422 = vadd.f32 %v1420, %v1421
  %v1423 = vrot.slane %v1422, 2
  %v1424 = vadd.f32 %v1422, %v1423
  %v1425 = vrot.slane %v1424, 1
  %v1426 = vadd.f32 %v1424, %v1425
  %v1427 = vsel %vm89, %v1067, 0.0
  %v1428 = vrot.slane %v1427, 4
  %v1429 = vadd.f32 %v1427, %v1428
  %v1430 = vrot.slane %v1429, 2
  %v1431 = vadd.f32 %v1429, %v1430
  %v1432 = vrot.slane %v1431, 1
  %v1433 = vadd.f32 %v1431, %v1432
  %v1434 = vsel %vm89, %v1068, 0.0
  %v1435 = vrot.slane %v1434, 4
  %v1436 = vadd.f32 %v1434, %v1435
  %v1437 = vrot.slane %v1436, 2
  %v1438 = vadd.f32 %v1436, %v1437
  %v1439 = vrot.slane %v1438, 1
  %v1440 = vadd.f32 %v1438, %v1439
  %v1441 = vsel %vm89, %v1069, 0.0
  %v1442 = vrot.slane %v1441, 4
  %v1443 = vadd.f32 %v1441, %v1442
  %v1444 = vrot.slane %v1443, 2
  %v1445 = vadd.f32 %v1443, %v1444
  %v1446 = vrot.slane %v1445, 1
  %v1447 = vadd.f32 %v1445, %v1446
  %v1448 = vsel %vm89, %v1070, 0.0
  %v1449 = vrot.slane %v1448, 4
  %v1450 = vadd.f32 %v1448, %v1449
  %v1451 = vrot.slane %v1450, 2
  %v1452 = vadd.f32 %v1450, %v1451
  %v1453 = vrot.slane %v1452, 1
  %v1454 = vadd.f32 %v1452, %v1453
  %v1455 = vadd.f32 %v1405, 1e-08
  %v1456 = vadd.f32 %v1412, 1e-08
  %v1457 = vadd.f32 %v1419, 1e-08
  %v1458 = vadd.f32 %v1426, 1e-08
  %v1459 = vadd.f32 %v1433, 1e-08
  %v1460 = vadd.f32 %v1440, 1e-08
  %v1461 = vadd.f32 %v1447, 1e-08
  %v1462 = vadd.f32 %v1454, 1e-08
  %1464 = vset.pattern.permute.xlu0 0
  %1465 = vperm.xlu0 %1464, %v1455
  %v1466 = vpop.permute.xlu0 %1465
  %1469 = vset.pattern.permute.xlu0 0
  %1470 = vperm.xlu0 %1469, %v1456
  %v1471 = vpop.permute.xlu0 %1470
  %1474 = vset.pattern.permute.xlu0 0
  %1475 = vperm.xlu0 %1474, %v1457
  %v1476 = vpop.permute.xlu0 %1475
  %1479 = vset.pattern.permute.xlu0 0
  %1480 = vperm.xlu0 %1479, %v1458
  %v1481 = vpop.permute.xlu0 %1480
  %1484 = vset.pattern.permute.xlu0 0
  %1485 = vperm.xlu0 %1484, %v1459
  %v1486 = vpop.permute.xlu0 %1485
  %1489 = vset.pattern.permute.xlu0 0
  %1490 = vperm.xlu0 %1489, %v1460
  %v1491 = vpop.permute.xlu0 %1490
  %1494 = vset.pattern.permute.xlu0 0
  %1495 = vperm.xlu0 %1494, %v1461
  %v1496 = vpop.permute.xlu0 %1495
  %1499 = vset.pattern.permute.xlu0 0
  %1500 = vperm.xlu0 %1499, %v1462
  %v1501 = vpop.permute.xlu0 %1500
  %v1503 = vrcp.pop %v1466
  %v1504 = vmul.f32 %v1349, %v1503
  %v1505 = vrcp.pop %v1471
  %v1506 = vmul.f32 %v1356, %v1505
  %v1507 = vrcp.pop %v1476
  %v1508 = vmul.f32 %v1363, %v1507
  %v1509 = vrcp.pop %v1481
  %v1510 = vmul.f32 %v1370, %v1509
  %v1511 = vrcp.pop %v1486
  %v1512 = vmul.f32 %v1377, %v1511
  %v1513 = vrcp.pop %v1491
  %v1514 = vmul.f32 %v1384, %v1513
  %v1515 = vrcp.pop %v1496
  %v1516 = vmul.f32 %v1391, %v1515
  %v1517 = vrcp.pop %v1501
  %v1518 = vmul.f32 %v1398, %v1517
  %v1527 = vsel %vm762, %v1282, %v1280
  %v1528 = vsel %vm764, %v1284, %v1527
  %v1529 = vsel %vm766, %v1286, %v1528
  %v1530 = vsel %vm768, %v1288, %v1529
  %v1531 = vsel %vm770, %v1290, %v1530
  %v1532 = vsel %vm772, %v1292, %v1531
  %v1533 = vsel %vm774, %v1294, %v1532
  %s1535 = scalar_lea.vmem [#allocation2], 8
  %1536 = vst.msk [vmem:[%s1535] sm:$0xff] %vm777, %v1533
  %v1545 = vsel %vm762, %v1506, %v1504
  %v1546 = vsel %vm764, %v1508, %v1545
  %v1547 = vsel %vm766, %v1510, %v1546
  %v1548 = vsel %vm768, %v1512, %v1547
  %v1549 = vsel %vm770, %v1514, %v1548
  %v1550 = vsel %vm772, %v1516, %v1549
  %v1551 = vsel %vm774, %v1518, %v1550
  %1552 = vrot.lane.b32.xlu0 %v1551, 32
  %v1553 = vpop.permute.xlu0 %1552
  %1555 = vst.msk [vmem:[%s1535] sm:$0xff] %vm797, %v1553
  %s1556 = scalar_lea.vmem %s0, 8
  %v1557 = vld [vmem:[%s1556] sm:$0xf]
  %v1558 = vld [vmem:[%s1556 + $0x20] sm:$0xf]
  %v1559 = vld [vmem:[%s1556 + $0x40] sm:$0xf]
  %v1560 = vld [vmem:[%s1556 + $0x60] sm:$0xf]
  %v1561 = vld [vmem:[%s1556 + $0x80] sm:$0xf]
  %v1562 = vld [vmem:[%s1556 + $0xa0] sm:$0xf]
  %v1563 = vld [vmem:[%s1556 + $0xc0] sm:$0xf]
  %v1564 = vld [vmem:[%s1556 + $0xe0] sm:$0xf]
  %v1565 = vmul.f32 %v1557, %v39
  %v1566 = vmul.f32 %v1558, %v39
  %v1567 = vmul.f32 %v1559, %v39
  %v1568 = vmul.f32 %v1560, %v39
  %v1569 = vmul.f32 %v1561, %v39
  %v1570 = vmul.f32 %v1562, %v39
  %v1571 = vmul.f32 %v1563, %v39
  %v1572 = vmul.f32 %v1564, %v39
  %v1573 = vsel %vm49, %v1565, 0.0
  %1574 = vadd.xlane.f32.xlu0 %v1573
  %v1575 = vpop.xlane.xlu0 %1574
  %v1576 = vsel %vm49, %v1566, 0.0
  %1577 = vadd.xlane.f32.xlu0 %v1576
  %v1578 = vpop.xlane.xlu0 %1577
  %v1579 = vsel %vm49, %v1567, 0.0
  %1580 = vadd.xlane.f32.xlu0 %v1579
  %v1581 = vpop.xlane.xlu0 %1580
  %v1582 = vsel %vm49, %v1568, 0.0
  %1583 = vadd.xlane.f32.xlu0 %v1582
  %v1584 = vpop.xlane.xlu0 %1583
  %v1585 = vsel %vm49, %v1569, 0.0
  %1586 = vadd.xlane.f32.xlu0 %v1585
  %v1587 = vpop.xlane.xlu0 %1586
  %v1588 = vsel %vm49, %v1570, 0.0
  %1589 = vadd.xlane.f32.xlu0 %v1588
  %v1590 = vpop.xlane.xlu0 %1589
  %v1591 = vsel %vm49, %v1571, 0.0
  %1592 = vadd.xlane.f32.xlu0 %v1591
  %v1593 = vpop.xlane.xlu0 %1592
  %v1594 = vsel %vm49, %v1572, 0.0
  %1595 = vadd.xlane.f32.xlu0 %v1594
  %v1596 = vpop.xlane.xlu0 %1595
  %v1597 = vld [vmem:[#allocation4] sm:$0x1]
  %v1599 = vlaneseq
  %v1600 = vshrl.u32 %v1599, 7
  %v1601 = vsub.s32 0, %v1600
  %v1602 = vrot.slane %v1597, %v1601
  %v1604 = vadd.f32 %v1575, %v1602
  %v1605 = vadd.f32 %v1578, %v1602
  %v1606 = vadd.f32 %v1581, %v1602
  %v1607 = vadd.f32 %v1584, %v1602
  %v1608 = vadd.f32 %v1587, %v1602
  %v1609 = vadd.f32 %v1590, %v1602
  %v1610 = vadd.f32 %v1593, %v1602
  %v1611 = vadd.f32 %v1596, %v1602
  %v1612 = vsel %vm89, %v1604, -inf
  %v1613 = vrot.slane %v1612, 4
  %v1614 = vmax.f32 %v1612, %v1613
  %v1615 = vrot.slane %v1614, 2
  %v1616 = vmax.f32 %v1614, %v1615
  %v1617 = vrot.slane %v1616, 1
  %v1618 = vmax.f32 %v1616, %v1617
  %v1619 = vsel %vm89, %v1605, -inf
  %v1620 = vrot.slane %v1619, 4
  %v1621 = vmax.f32 %v1619, %v1620
  %v1622 = vrot.slane %v1621, 2
  %v1623 = vmax.f32 %v1621, %v1622
  %v1624 = vrot.slane %v1623, 1
  %v1625 = vmax.f32 %v1623, %v1624
  %v1626 = vsel %vm89, %v1606, -inf
  %v1627 = vrot.slane %v1626, 4
  %v1628 = vmax.f32 %v1626, %v1627
  %v1629 = vrot.slane %v1628, 2
  %v1630 = vmax.f32 %v1628, %v1629
  %v1631 = vrot.slane %v1630, 1
  %v1632 = vmax.f32 %v1630, %v1631
  %v1633 = vsel %vm89, %v1607, -inf
  %v1634 = vrot.slane %v1633, 4
  %v1635 = vmax.f32 %v1633, %v1634
  %v1636 = vrot.slane %v1635, 2
  %v1637 = vmax.f32 %v1635, %v1636
  %v1638 = vrot.slane %v1637, 1
  %v1639 = vmax.f32 %v1637, %v1638
  %v1640 = vsel %vm89, %v1608, -inf
  %v1641 = vrot.slane %v1640, 4
  %v1642 = vmax.f32 %v1640, %v1641
  %v1643 = vrot.slane %v1642, 2
  %v1644 = vmax.f32 %v1642, %v1643
  %v1645 = vrot.slane %v1644, 1
  %v1646 = vmax.f32 %v1644, %v1645
  %v1647 = vsel %vm89, %v1609, -inf
  %v1648 = vrot.slane %v1647, 4
  %v1649 = vmax.f32 %v1647, %v1648
  %v1650 = vrot.slane %v1649, 2
  %v1651 = vmax.f32 %v1649, %v1650
  %v1652 = vrot.slane %v1651, 1
  %v1653 = vmax.f32 %v1651, %v1652
  %v1654 = vsel %vm89, %v1610, -inf
  %v1655 = vrot.slane %v1654, 4
  %v1656 = vmax.f32 %v1654, %v1655
  %v1657 = vrot.slane %v1656, 2
  %v1658 = vmax.f32 %v1656, %v1657
  %v1659 = vrot.slane %v1658, 1
  %v1660 = vmax.f32 %v1658, %v1659
  %v1661 = vsel %vm89, %v1611, -inf
  %v1662 = vrot.slane %v1661, 4
  %v1663 = vmax.f32 %v1661, %v1662
  %v1664 = vrot.slane %v1663, 2
  %v1665 = vmax.f32 %v1663, %v1664
  %v1666 = vrot.slane %v1665, 1
  %v1667 = vmax.f32 %v1665, %v1666
  %v1668 = vsub.f32 %v1604, %v1618
  %v1669 = vsub.f32 %v1605, %v1625
  %v1670 = vsub.f32 %v1606, %v1632
  %v1671 = vsub.f32 %v1607, %v1639
  %v1672 = vsub.f32 %v1608, %v1646
  %v1673 = vsub.f32 %v1609, %v1653
  %v1674 = vsub.f32 %v1610, %v1660
  %v1675 = vsub.f32 %v1611, %v1667
  %v1676 = vmul.f32 %v1668, 1.442695
  %v1677 = vpow.pop %v1676
  %v1678 = vmul.f32 %v1669, 1.442695
  %v1679 = vpow.pop %v1678
  %v1680 = vmul.f32 %v1670, 1.442695
  %v1681 = vpow.pop %v1680
  %v1682 = vmul.f32 %v1671, 1.442695
  %v1683 = vpow.pop %v1682
  %v1684 = vmul.f32 %v1672, 1.442695
  %v1685 = vpow.pop %v1684
  %v1686 = vmul.f32 %v1673, 1.442695
  %v1687 = vpow.pop %v1686
  %v1688 = vmul.f32 %v1674, 1.442695
  %v1689 = vpow.pop %v1688
  %v1690 = vmul.f32 %v1675, 1.442695
  %v1691 = vpow.pop %v1690
  %v1692 = vsel %vm89, %v1677, 0.0
  %v1693 = vrot.slane %v1692, 4
  %v1694 = vadd.f32 %v1692, %v1693
  %v1695 = vrot.slane %v1694, 2
  %v1696 = vadd.f32 %v1694, %v1695
  %v1697 = vrot.slane %v1696, 1
  %v1698 = vadd.f32 %v1696, %v1697
  %v1699 = vsel %vm89, %v1679, 0.0
  %v1700 = vrot.slane %v1699, 4
  %v1701 = vadd.f32 %v1699, %v1700
  %v1702 = vrot.slane %v1701, 2
  %v1703 = vadd.f32 %v1701, %v1702
  %v1704 = vrot.slane %v1703, 1
  %v1705 = vadd.f32 %v1703, %v1704
  %v1706 = vsel %vm89, %v1681, 0.0
  %v1707 = vrot.slane %v1706, 4
  %v1708 = vadd.f32 %v1706, %v1707
  %v1709 = vrot.slane %v1708, 2
  %v1710 = vadd.f32 %v1708, %v1709
  %v1711 = vrot.slane %v1710, 1
  %v1712 = vadd.f32 %v1710, %v1711
  %v1713 = vsel %vm89, %v1683, 0.0
  %v1714 = vrot.slane %v1713, 4
  %v1715 = vadd.f32 %v1713, %v1714
  %v1716 = vrot.slane %v1715, 2
  %v1717 = vadd.f32 %v1715, %v1716
  %v1718 = vrot.slane %v1717, 1
  %v1719 = vadd.f32 %v1717, %v1718
  %v1720 = vsel %vm89, %v1685, 0.0
  %v1721 = vrot.slane %v1720, 4
  %v1722 = vadd.f32 %v1720, %v1721
  %v1723 = vrot.slane %v1722, 2
  %v1724 = vadd.f32 %v1722, %v1723
  %v1725 = vrot.slane %v1724, 1
  %v1726 = vadd.f32 %v1724, %v1725
  %v1727 = vsel %vm89, %v1687, 0.0
  %v1728 = vrot.slane %v1727, 4
  %v1729 = vadd.f32 %v1727, %v1728
  %v1730 = vrot.slane %v1729, 2
  %v1731 = vadd.f32 %v1729, %v1730
  %v1732 = vrot.slane %v1731, 1
  %v1733 = vadd.f32 %v1731, %v1732
  %v1734 = vsel %vm89, %v1689, 0.0
  %v1735 = vrot.slane %v1734, 4
  %v1736 = vadd.f32 %v1734, %v1735
  %v1737 = vrot.slane %v1736, 2
  %v1738 = vadd.f32 %v1736, %v1737
  %v1739 = vrot.slane %v1738, 1
  %v1740 = vadd.f32 %v1738, %v1739
  %v1741 = vsel %vm89, %v1691, 0.0
  %v1742 = vrot.slane %v1741, 4
  %v1743 = vadd.f32 %v1741, %v1742
  %v1744 = vrot.slane %v1743, 2
  %v1745 = vadd.f32 %v1743, %v1744
  %v1746 = vrot.slane %v1745, 1
  %v1747 = vadd.f32 %v1745, %v1746
  %v1748 = vrcp.pop %v1698
  %v1749 = vmul.f32 %v1677, %v1748
  %v1750 = vrcp.pop %v1705
  %v1751 = vmul.f32 %v1679, %v1750
  %v1752 = vrcp.pop %v1712
  %v1753 = vmul.f32 %v1681, %v1752
  %v1754 = vrcp.pop %v1719
  %v1755 = vmul.f32 %v1683, %v1754
  %v1756 = vrcp.pop %v1726
  %v1757 = vmul.f32 %v1685, %v1756
  %v1758 = vrcp.pop %v1733
  %v1759 = vmul.f32 %v1687, %v1758
  %v1760 = vrcp.pop %v1740
  %v1761 = vmul.f32 %v1689, %v1760
  %v1762 = vrcp.pop %v1747
  %v1763 = vmul.f32 %v1691, %v1762
  %v1764 = vsub.f32 %v1749, 0.25
  %v1765 = vsub.f32 %v1751, 0.25
  %v1766 = vsub.f32 %v1753, 0.25
  %v1767 = vsub.f32 %v1755, 0.25
  %v1768 = vsub.f32 %v1757, 0.25
  %v1769 = vsub.f32 %v1759, 0.25
  %v1770 = vsub.f32 %v1761, 0.25
  %v1771 = vsub.f32 %v1763, 0.25
  %v1772 = vmul.f32 %v1764, -10.0
  %v1773 = vmul.f32 %v1765, -10.0
  %v1774 = vmul.f32 %v1766, -10.0
  %v1775 = vmul.f32 %v1767, -10.0
  %v1776 = vmul.f32 %v1768, -10.0
  %v1777 = vmul.f32 %v1769, -10.0
  %v1778 = vmul.f32 %v1770, -10.0
  %v1779 = vmul.f32 %v1771, -10.0
  %v1780 = vmul.f32 %v1772, 1.442695
  %v1781 = vpow.pop %v1780
  %v1782 = vmul.f32 %v1773, 1.442695
  %v1783 = vpow.pop %v1782
  %v1784 = vmul.f32 %v1774, 1.442695
  %v1785 = vpow.pop %v1784
  %v1786 = vmul.f32 %v1775, 1.442695
  %v1787 = vpow.pop %v1786
  %v1788 = vmul.f32 %v1776, 1.442695
  %v1789 = vpow.pop %v1788
  %v1790 = vmul.f32 %v1777, 1.442695
  %v1791 = vpow.pop %v1790
  %v1792 = vmul.f32 %v1778, 1.442695
  %v1793 = vpow.pop %v1792
  %v1794 = vmul.f32 %v1779, 1.442695
  %v1795 = vpow.pop %v1794
  %v1796 = vadd.f32 %v1781, 1.0
  %v1797 = vadd.f32 %v1783, 1.0
  %v1798 = vadd.f32 %v1785, 1.0
  %v1799 = vadd.f32 %v1787, 1.0
  %v1800 = vadd.f32 %v1789, 1.0
  %v1801 = vadd.f32 %v1791, 1.0
  %v1802 = vadd.f32 %v1793, 1.0
  %v1803 = vadd.f32 %v1795, 1.0
  %v1804 = vrcp.pop %v1796
  %v1805 = vmul.f32 1.0, %v1804
  %v1806 = vrcp.pop %v1797
  %v1807 = vmul.f32 1.0, %v1806
  %v1808 = vrcp.pop %v1798
  %v1809 = vmul.f32 1.0, %v1808
  %v1810 = vrcp.pop %v1799
  %v1811 = vmul.f32 1.0, %v1810
  %v1812 = vrcp.pop %v1800
  %v1813 = vmul.f32 1.0, %v1812
  %v1814 = vrcp.pop %v1801
  %v1815 = vmul.f32 1.0, %v1814
  %v1816 = vrcp.pop %v1802
  %v1817 = vmul.f32 1.0, %v1816
  %v1818 = vrcp.pop %v1803
  %v1819 = vmul.f32 1.0, %v1818
  %v1820 = vsub.f32 1.0, %v1805
  %v1821 = vsub.f32 1.0, %v1807
  %v1822 = vsub.f32 1.0, %v1809
  %v1823 = vsub.f32 1.0, %v1811
  %v1824 = vsub.f32 1.0, %v1813
  %v1825 = vsub.f32 1.0, %v1815
  %v1826 = vsub.f32 1.0, %v1817
  %v1827 = vsub.f32 1.0, %v1819
  %1829 = vset.pattern.permute.xlu0 0
  %1830 = vperm.xlu0 %1829, %v1805
  %v1831 = vpop.permute.xlu0 %1830
  %1834 = vset.pattern.permute.xlu0 0
  %1835 = vperm.xlu0 %1834, %v1807
  %v1836 = vpop.permute.xlu0 %1835
  %1839 = vset.pattern.permute.xlu0 0
  %1840 = vperm.xlu0 %1839, %v1809
  %v1841 = vpop.permute.xlu0 %1840
  %1844 = vset.pattern.permute.xlu0 0
  %1845 = vperm.xlu0 %1844, %v1811
  %v1846 = vpop.permute.xlu0 %1845
  %1849 = vset.pattern.permute.xlu0 0
  %1850 = vperm.xlu0 %1849, %v1813
  %v1851 = vpop.permute.xlu0 %1850
  %1854 = vset.pattern.permute.xlu0 0
  %1855 = vperm.xlu0 %1854, %v1815
  %v1856 = vpop.permute.xlu0 %1855
  %1859 = vset.pattern.permute.xlu0 0
  %1860 = vperm.xlu0 %1859, %v1817
  %v1861 = vpop.permute.xlu0 %1860
  %1864 = vset.pattern.permute.xlu0 0
  %1865 = vperm.xlu0 %1864, %v1819
  %v1866 = vpop.permute.xlu0 %1865
  %v1868 = vmul.f32 %v1831, %v1557
  %v1869 = vmul.f32 %v1836, %v1558
  %v1870 = vmul.f32 %v1841, %v1559
  %v1871 = vmul.f32 %v1846, %v1560
  %v1872 = vmul.f32 %v1851, %v1561
  %v1873 = vmul.f32 %v1856, %v1562
  %v1874 = vmul.f32 %v1861, %v1563
  %v1875 = vmul.f32 %v1866, %v1564
  %v1876 = vsel %vm49, %v1868, 0.0
  %v1877 = vrot.slane %v1876, 4
  %v1878 = vadd.f32 %v1876, %v1877
  %v1879 = vrot.slane %v1878, 2
  %v1880 = vadd.f32 %v1878, %v1879
  %v1881 = vrot.slane %v1880, 1
  %v1882 = vadd.f32 %v1880, %v1881
  %v1883 = vsel %vm49, %v1869, 0.0
  %v1884 = vrot.slane %v1883, 4
  %v1885 = vadd.f32 %v1883, %v1884
  %v1886 = vrot.slane %v1885, 2
  %v1887 = vadd.f32 %v1885, %v1886
  %v1888 = vrot.slane %v1887, 1
  %v1889 = vadd.f32 %v1887, %v1888
  %v1890 = vsel %vm49, %v1870, 0.0
  %v1891 = vrot.slane %v1890, 4
  %v1892 = vadd.f32 %v1890, %v1891
  %v1893 = vrot.slane %v1892, 2
  %v1894 = vadd.f32 %v1892, %v1893
  %v1895 = vrot.slane %v1894, 1
  %v1896 = vadd.f32 %v1894, %v1895
  %v1897 = vsel %vm49, %v1871, 0.0
  %v1898 = vrot.slane %v1897, 4
  %v1899 = vadd.f32 %v1897, %v1898
  %v1900 = vrot.slane %v1899, 2
  %v1901 = vadd.f32 %v1899, %v1900
  %v1902 = vrot.slane %v1901, 1
  %v1903 = vadd.f32 %v1901, %v1902
  %v1904 = vsel %vm49, %v1872, 0.0
  %v1905 = vrot.slane %v1904, 4
  %v1906 = vadd.f32 %v1904, %v1905
  %v1907 = vrot.slane %v1906, 2
  %v1908 = vadd.f32 %v1906, %v1907
  %v1909 = vrot.slane %v1908, 1
  %v1910 = vadd.f32 %v1908, %v1909
  %v1911 = vsel %vm49, %v1873, 0.0
  %v1912 = vrot.slane %v1911, 4
  %v1913 = vadd.f32 %v1911, %v1912
  %v1914 = vrot.slane %v1913, 2
  %v1915 = vadd.f32 %v1913, %v1914
  %v1916 = vrot.slane %v1915, 1
  %v1917 = vadd.f32 %v1915, %v1916
  %v1918 = vsel %vm49, %v1874, 0.0
  %v1919 = vrot.slane %v1918, 4
  %v1920 = vadd.f32 %v1918, %v1919
  %v1921 = vrot.slane %v1920, 2
  %v1922 = vadd.f32 %v1920, %v1921
  %v1923 = vrot.slane %v1922, 1
  %v1924 = vadd.f32 %v1922, %v1923
  %v1925 = vsel %vm49, %v1875, 0.0
  %v1926 = vrot.slane %v1925, 4
  %v1927 = vadd.f32 %v1925, %v1926
  %v1928 = vrot.slane %v1927, 2
  %v1929 = vadd.f32 %v1927, %v1928
  %v1930 = vrot.slane %v1929, 1
  %v1931 = vadd.f32 %v1929, %v1930
  %v1932 = vsel %vm89, %v1805, 0.0
  %v1933 = vrot.slane %v1932, 4
  %v1934 = vadd.f32 %v1932, %v1933
  %v1935 = vrot.slane %v1934, 2
  %v1936 = vadd.f32 %v1934, %v1935
  %v1937 = vrot.slane %v1936, 1
  %v1938 = vadd.f32 %v1936, %v1937
  %v1939 = vsel %vm89, %v1807, 0.0
  %v1940 = vrot.slane %v1939, 4
  %v1941 = vadd.f32 %v1939, %v1940
  %v1942 = vrot.slane %v1941, 2
  %v1943 = vadd.f32 %v1941, %v1942
  %v1944 = vrot.slane %v1943, 1
  %v1945 = vadd.f32 %v1943, %v1944
  %v1946 = vsel %vm89, %v1809, 0.0
  %v1947 = vrot.slane %v1946, 4
  %v1948 = vadd.f32 %v1946, %v1947
  %v1949 = vrot.slane %v1948, 2
  %v1950 = vadd.f32 %v1948, %v1949
  %v1951 = vrot.slane %v1950, 1
  %v1952 = vadd.f32 %v1950, %v1951
  %v1953 = vsel %vm89, %v1811, 0.0
  %v1954 = vrot.slane %v1953, 4
  %v1955 = vadd.f32 %v1953, %v1954
  %v1956 = vrot.slane %v1955, 2
  %v1957 = vadd.f32 %v1955, %v1956
  %v1958 = vrot.slane %v1957, 1
  %v1959 = vadd.f32 %v1957, %v1958
  %v1960 = vsel %vm89, %v1813, 0.0
  %v1961 = vrot.slane %v1960, 4
  %v1962 = vadd.f32 %v1960, %v1961
  %v1963 = vrot.slane %v1962, 2
  %v1964 = vadd.f32 %v1962, %v1963
  %v1965 = vrot.slane %v1964, 1
  %v1966 = vadd.f32 %v1964, %v1965
  %v1967 = vsel %vm89, %v1815, 0.0
  %v1968 = vrot.slane %v1967, 4
  %v1969 = vadd.f32 %v1967, %v1968
  %v1970 = vrot.slane %v1969, 2
  %v1971 = vadd.f32 %v1969, %v1970
  %v1972 = vrot.slane %v1971, 1
  %v1973 = vadd.f32 %v1971, %v1972
  %v1974 = vsel %vm89, %v1817, 0.0
  %v1975 = vrot.slane %v1974, 4
  %v1976 = vadd.f32 %v1974, %v1975
  %v1977 = vrot.slane %v1976, 2
  %v1978 = vadd.f32 %v1976, %v1977
  %v1979 = vrot.slane %v1978, 1
  %v1980 = vadd.f32 %v1978, %v1979
  %v1981 = vsel %vm89, %v1819, 0.0
  %v1982 = vrot.slane %v1981, 4
  %v1983 = vadd.f32 %v1981, %v1982
  %v1984 = vrot.slane %v1983, 2
  %v1985 = vadd.f32 %v1983, %v1984
  %v1986 = vrot.slane %v1985, 1
  %v1987 = vadd.f32 %v1985, %v1986
  %v1988 = vadd.f32 %v1938, 1e-08
  %v1989 = vadd.f32 %v1945, 1e-08
  %v1990 = vadd.f32 %v1952, 1e-08
  %v1991 = vadd.f32 %v1959, 1e-08
  %v1992 = vadd.f32 %v1966, 1e-08
  %v1993 = vadd.f32 %v1973, 1e-08
  %v1994 = vadd.f32 %v1980, 1e-08
  %v1995 = vadd.f32 %v1987, 1e-08
  %1997 = vset.pattern.permute.xlu0 0
  %1998 = vperm.xlu0 %1997, %v1988
  %v1999 = vpop.permute.xlu0 %1998
  %2002 = vset.pattern.permute.xlu0 0
  %2003 = vperm.xlu0 %2002, %v1989
  %v2004 = vpop.permute.xlu0 %2003
  %2007 = vset.pattern.permute.xlu0 0
  %2008 = vperm.xlu0 %2007, %v1990
  %v2009 = vpop.permute.xlu0 %2008
  %2012 = vset.pattern.permute.xlu0 0
  %2013 = vperm.xlu0 %2012, %v1991
  %v2014 = vpop.permute.xlu0 %2013
  %2017 = vset.pattern.permute.xlu0 0
  %2018 = vperm.xlu0 %2017, %v1992
  %v2019 = vpop.permute.xlu0 %2018
  %2022 = vset.pattern.permute.xlu0 0
  %2023 = vperm.xlu0 %2022, %v1993
  %v2024 = vpop.permute.xlu0 %2023
  %2027 = vset.pattern.permute.xlu0 0
  %2028 = vperm.xlu0 %2027, %v1994
  %v2029 = vpop.permute.xlu0 %2028
  %2032 = vset.pattern.permute.xlu0 0
  %2033 = vperm.xlu0 %2032, %v1995
  %v2034 = vpop.permute.xlu0 %2033
  %v2036 = vrcp.pop %v1999
  %v2037 = vmul.f32 %v1882, %v2036
  %v2038 = vrcp.pop %v2004
  %v2039 = vmul.f32 %v1889, %v2038
  %v2040 = vrcp.pop %v2009
  %v2041 = vmul.f32 %v1896, %v2040
  %v2042 = vrcp.pop %v2014
  %v2043 = vmul.f32 %v1903, %v2042
  %v2044 = vrcp.pop %v2019
  %v2045 = vmul.f32 %v1910, %v2044
  %v2046 = vrcp.pop %v2024
  %v2047 = vmul.f32 %v1917, %v2046
  %v2048 = vrcp.pop %v2029
  %v2049 = vmul.f32 %v1924, %v2048
  %v2050 = vrcp.pop %v2034
  %v2051 = vmul.f32 %v1931, %v2050
  %2053 = vset.pattern.permute.xlu0 0
  %2054 = vperm.xlu0 %2053, %v1820
  %v2055 = vpop.permute.xlu0 %2054
  %2058 = vset.pattern.permute.xlu0 0
  %2059 = vperm.xlu0 %2058, %v1821
  %v2060 = vpop.permute.xlu0 %2059
  %2063 = vset.pattern.permute.xlu0 0
  %2064 = vperm.xlu0 %2063, %v1822
  %v2065 = vpop.permute.xlu0 %2064
  %2068 = vset.pattern.permute.xlu0 0
  %2069 = vperm.xlu0 %2068, %v1823
  %v2070 = vpop.permute.xlu0 %2069
  %2073 = vset.pattern.permute.xlu0 0
  %2074 = vperm.xlu0 %2073, %v1824
  %v2075 = vpop.permute.xlu0 %2074
  %2078 = vset.pattern.permute.xlu0 0
  %2079 = vperm.xlu0 %2078, %v1825
  %v2080 = vpop.permute.xlu0 %2079
  %2083 = vset.pattern.permute.xlu0 0
  %2084 = vperm.xlu0 %2083, %v1826
  %v2085 = vpop.permute.xlu0 %2084
  %2088 = vset.pattern.permute.xlu0 0
  %2089 = vperm.xlu0 %2088, %v1827
  %v2090 = vpop.permute.xlu0 %2089
  %v2092 = vmul.f32 %v2055, %v1557
  %v2093 = vmul.f32 %v2060, %v1558
  %v2094 = vmul.f32 %v2065, %v1559
  %v2095 = vmul.f32 %v2070, %v1560
  %v2096 = vmul.f32 %v2075, %v1561
  %v2097 = vmul.f32 %v2080, %v1562
  %v2098 = vmul.f32 %v2085, %v1563
  %v2099 = vmul.f32 %v2090, %v1564
  %v2100 = vsel %vm49, %v2092, 0.0
  %v2101 = vrot.slane %v2100, 4
  %v2102 = vadd.f32 %v2100, %v2101
  %v2103 = vrot.slane %v2102, 2
  %v2104 = vadd.f32 %v2102, %v2103
  %v2105 = vrot.slane %v2104, 1
  %v2106 = vadd.f32 %v2104, %v2105
  %v2107 = vsel %vm49, %v2093, 0.0
  %v2108 = vrot.slane %v2107, 4
  %v2109 = vadd.f32 %v2107, %v2108
  %v2110 = vrot.slane %v2109, 2
  %v2111 = vadd.f32 %v2109, %v2110
  %v2112 = vrot.slane %v2111, 1
  %v2113 = vadd.f32 %v2111, %v2112
  %v2114 = vsel %vm49, %v2094, 0.0
  %v2115 = vrot.slane %v2114, 4
  %v2116 = vadd.f32 %v2114, %v2115
  %v2117 = vrot.slane %v2116, 2
  %v2118 = vadd.f32 %v2116, %v2117
  %v2119 = vrot.slane %v2118, 1
  %v2120 = vadd.f32 %v2118, %v2119
  %v2121 = vsel %vm49, %v2095, 0.0
  %v2122 = vrot.slane %v2121, 4
  %v2123 = vadd.f32 %v2121, %v2122
  %v2124 = vrot.slane %v2123, 2
  %v2125 = vadd.f32 %v2123, %v2124
  %v2126 = vrot.slane %v2125, 1
  %v2127 = vadd.f32 %v2125, %v2126
  %v2128 = vsel %vm49, %v2096, 0.0
  %v2129 = vrot.slane %v2128, 4
  %v2130 = vadd.f32 %v2128, %v2129
  %v2131 = vrot.slane %v2130, 2
  %v2132 = vadd.f32 %v2130, %v2131
  %v2133 = vrot.slane %v2132, 1
  %v2134 = vadd.f32 %v2132, %v2133
  %v2135 = vsel %vm49, %v2097, 0.0
  %v2136 = vrot.slane %v2135, 4
  %v2137 = vadd.f32 %v2135, %v2136
  %v2138 = vrot.slane %v2137, 2
  %v2139 = vadd.f32 %v2137, %v2138
  %v2140 = vrot.slane %v2139, 1
  %v2141 = vadd.f32 %v2139, %v2140
  %v2142 = vsel %vm49, %v2098, 0.0
  %v2143 = vrot.slane %v2142, 4
  %v2144 = vadd.f32 %v2142, %v2143
  %v2145 = vrot.slane %v2144, 2
  %v2146 = vadd.f32 %v2144, %v2145
  %v2147 = vrot.slane %v2146, 1
  %v2148 = vadd.f32 %v2146, %v2147
  %v2149 = vsel %vm49, %v2099, 0.0
  %v2150 = vrot.slane %v2149, 4
  %v2151 = vadd.f32 %v2149, %v2150
  %v2152 = vrot.slane %v2151, 2
  %v2153 = vadd.f32 %v2151, %v2152
  %v2154 = vrot.slane %v2153, 1
  %v2155 = vadd.f32 %v2153, %v2154
  %v2156 = vsel %vm89, %v1820, 0.0
  %v2157 = vrot.slane %v2156, 4
  %v2158 = vadd.f32 %v2156, %v2157
  %v2159 = vrot.slane %v2158, 2
  %v2160 = vadd.f32 %v2158, %v2159
  %v2161 = vrot.slane %v2160, 1
  %v2162 = vadd.f32 %v2160, %v2161
  %v2163 = vsel %vm89, %v1821, 0.0
  %v2164 = vrot.slane %v2163, 4
  %v2165 = vadd.f32 %v2163, %v2164
  %v2166 = vrot.slane %v2165, 2
  %v2167 = vadd.f32 %v2165, %v2166
  %v2168 = vrot.slane %v2167, 1
  %v2169 = vadd.f32 %v2167, %v2168
  %v2170 = vsel %vm89, %v1822, 0.0
  %v2171 = vrot.slane %v2170, 4
  %v2172 = vadd.f32 %v2170, %v2171
  %v2173 = vrot.slane %v2172, 2
  %v2174 = vadd.f32 %v2172, %v2173
  %v2175 = vrot.slane %v2174, 1
  %v2176 = vadd.f32 %v2174, %v2175
  %v2177 = vsel %vm89, %v1823, 0.0
  %v2178 = vrot.slane %v2177, 4
  %v2179 = vadd.f32 %v2177, %v2178
  %v2180 = vrot.slane %v2179, 2
  %v2181 = vadd.f32 %v2179, %v2180
  %v2182 = vrot.slane %v2181, 1
  %v2183 = vadd.f32 %v2181, %v2182
  %v2184 = vsel %vm89, %v1824, 0.0
  %v2185 = vrot.slane %v2184, 4
  %v2186 = vadd.f32 %v2184, %v2185
  %v2187 = vrot.slane %v2186, 2
  %v2188 = vadd.f32 %v2186, %v2187
  %v2189 = vrot.slane %v2188, 1
  %v2190 = vadd.f32 %v2188, %v2189
  %v2191 = vsel %vm89, %v1825, 0.0
  %v2192 = vrot.slane %v2191, 4
  %v2193 = vadd.f32 %v2191, %v2192
  %v2194 = vrot.slane %v2193, 2
  %v2195 = vadd.f32 %v2193, %v2194
  %v2196 = vrot.slane %v2195, 1
  %v2197 = vadd.f32 %v2195, %v2196
  %v2198 = vsel %vm89, %v1826, 0.0
  %v2199 = vrot.slane %v2198, 4
  %v2200 = vadd.f32 %v2198, %v2199
  %v2201 = vrot.slane %v2200, 2
  %v2202 = vadd.f32 %v2200, %v2201
  %v2203 = vrot.slane %v2202, 1
  %v2204 = vadd.f32 %v2202, %v2203
  %v2205 = vsel %vm89, %v1827, 0.0
  %v2206 = vrot.slane %v2205, 4
  %v2207 = vadd.f32 %v2205, %v2206
  %v2208 = vrot.slane %v2207, 2
  %v2209 = vadd.f32 %v2207, %v2208
  %v2210 = vrot.slane %v2209, 1
  %v2211 = vadd.f32 %v2209, %v2210
  %v2212 = vadd.f32 %v2162, 1e-08
  %v2213 = vadd.f32 %v2169, 1e-08
  %v2214 = vadd.f32 %v2176, 1e-08
  %v2215 = vadd.f32 %v2183, 1e-08
  %v2216 = vadd.f32 %v2190, 1e-08
  %v2217 = vadd.f32 %v2197, 1e-08
  %v2218 = vadd.f32 %v2204, 1e-08
  %v2219 = vadd.f32 %v2211, 1e-08
  %2221 = vset.pattern.permute.xlu0 0
  %2222 = vperm.xlu0 %2221, %v2212
  %v2223 = vpop.permute.xlu0 %2222
  %2226 = vset.pattern.permute.xlu0 0
  %2227 = vperm.xlu0 %2226, %v2213
  %v2228 = vpop.permute.xlu0 %2227
  %2231 = vset.pattern.permute.xlu0 0
  %2232 = vperm.xlu0 %2231, %v2214
  %v2233 = vpop.permute.xlu0 %2232
  %2236 = vset.pattern.permute.xlu0 0
  %2237 = vperm.xlu0 %2236, %v2215
  %v2238 = vpop.permute.xlu0 %2237
  %2241 = vset.pattern.permute.xlu0 0
  %2242 = vperm.xlu0 %2241, %v2216
  %v2243 = vpop.permute.xlu0 %2242
  %2246 = vset.pattern.permute.xlu0 0
  %2247 = vperm.xlu0 %2246, %v2217
  %v2248 = vpop.permute.xlu0 %2247
  %2251 = vset.pattern.permute.xlu0 0
  %2252 = vperm.xlu0 %2251, %v2218
  %v2253 = vpop.permute.xlu0 %2252
  %2256 = vset.pattern.permute.xlu0 0
  %2257 = vperm.xlu0 %2256, %v2219
  %v2258 = vpop.permute.xlu0 %2257
  %v2260 = vrcp.pop %v2223
  %v2261 = vmul.f32 %v2106, %v2260
  %v2262 = vrcp.pop %v2228
  %v2263 = vmul.f32 %v2113, %v2262
  %v2264 = vrcp.pop %v2233
  %v2265 = vmul.f32 %v2120, %v2264
  %v2266 = vrcp.pop %v2238
  %v2267 = vmul.f32 %v2127, %v2266
  %v2268 = vrcp.pop %v2243
  %v2269 = vmul.f32 %v2134, %v2268
  %v2270 = vrcp.pop %v2248
  %v2271 = vmul.f32 %v2141, %v2270
  %v2272 = vrcp.pop %v2253
  %v2273 = vmul.f32 %v2148, %v2272
  %v2274 = vrcp.pop %v2258
  %v2275 = vmul.f32 %v2155, %v2274
  %v2284 = vsel %vm762, %v2039, %v2037
  %v2285 = vsel %vm764, %v2041, %v2284
  %v2286 = vsel %vm766, %v2043, %v2285
  %v2287 = vsel %vm768, %v2045, %v2286
  %v2288 = vsel %vm770, %v2047, %v2287
  %v2289 = vsel %vm772, %v2049, %v2288
  %v2290 = vsel %vm774, %v2051, %v2289
  %s2292 = scalar_lea.vmem [#allocation2], 16
  %2293 = vst.msk [vmem:[%s2292] sm:$0xff] %vm777, %v2290
  %v2302 = vsel %vm762, %v2263, %v2261
  %v2303 = vsel %vm764, %v2265, %v2302
  %v2304 = vsel %vm766, %v2267, %v2303
  %v2305 = vsel %vm768, %v2269, %v2304
  %v2306 = vsel %vm770, %v2271, %v2305
  %v2307 = vsel %vm772, %v2273, %v2306
  %v2308 = vsel %vm774, %v2275, %v2307
  %2309 = vrot.lane.b32.xlu0 %v2308, 32
  %v2310 = vpop.permute.xlu0 %2309
  %2312 = vst.msk [vmem:[%s2292] sm:$0xff] %vm797, %v2310
  %s2313 = scalar_lea.vmem %s0, 12
  %v2314 = vld [vmem:[%s2313] sm:$0xf]
  %v2315 = vld [vmem:[%s2313 + $0x20] sm:$0xf]
  %v2316 = vld [vmem:[%s2313 + $0x40] sm:$0xf]
  %v2317 = vld [vmem:[%s2313 + $0x60] sm:$0xf]
  %v2318 = vld [vmem:[%s2313 + $0x80] sm:$0xf]
  %v2319 = vld [vmem:[%s2313 + $0xa0] sm:$0xf]
  %v2320 = vld [vmem:[%s2313 + $0xc0] sm:$0xf]
  %v2321 = vld [vmem:[%s2313 + $0xe0] sm:$0xf]
  %v2322 = vmul.f32 %v2314, %v39
  %v2323 = vmul.f32 %v2315, %v39
  %v2324 = vmul.f32 %v2316, %v39
  %v2325 = vmul.f32 %v2317, %v39
  %v2326 = vmul.f32 %v2318, %v39
  %v2327 = vmul.f32 %v2319, %v39
  %v2328 = vmul.f32 %v2320, %v39
  %v2329 = vmul.f32 %v2321, %v39
  %v2330 = vsel %vm49, %v2322, 0.0
  %2331 = vadd.xlane.f32.xlu0 %v2330
  %v2332 = vpop.xlane.xlu0 %2331
  %v2333 = vsel %vm49, %v2323, 0.0
  %2334 = vadd.xlane.f32.xlu0 %v2333
  %v2335 = vpop.xlane.xlu0 %2334
  %v2336 = vsel %vm49, %v2324, 0.0
  %2337 = vadd.xlane.f32.xlu0 %v2336
  %v2338 = vpop.xlane.xlu0 %2337
  %v2339 = vsel %vm49, %v2325, 0.0
  %2340 = vadd.xlane.f32.xlu0 %v2339
  %v2341 = vpop.xlane.xlu0 %2340
  %v2342 = vsel %vm49, %v2326, 0.0
  %2343 = vadd.xlane.f32.xlu0 %v2342
  %v2344 = vpop.xlane.xlu0 %2343
  %v2345 = vsel %vm49, %v2327, 0.0
  %2346 = vadd.xlane.f32.xlu0 %v2345
  %v2347 = vpop.xlane.xlu0 %2346
  %v2348 = vsel %vm49, %v2328, 0.0
  %2349 = vadd.xlane.f32.xlu0 %v2348
  %v2350 = vpop.xlane.xlu0 %2349
  %v2351 = vsel %vm49, %v2329, 0.0
  %2352 = vadd.xlane.f32.xlu0 %v2351
  %v2353 = vpop.xlane.xlu0 %2352
  %v2354 = vld [vmem:[#allocation4] sm:$0x1]
  %v2356 = vlaneseq
  %v2357 = vshrl.u32 %v2356, 7
  %v2358 = vsub.s32 0, %v2357
  %v2359 = vrot.slane %v2354, %v2358
  %v2361 = vadd.f32 %v2332, %v2359
  %v2362 = vadd.f32 %v2335, %v2359
  %v2363 = vadd.f32 %v2338, %v2359
  %v2364 = vadd.f32 %v2341, %v2359
  %v2365 = vadd.f32 %v2344, %v2359
  %v2366 = vadd.f32 %v2347, %v2359
  %v2367 = vadd.f32 %v2350, %v2359
  %v2368 = vadd.f32 %v2353, %v2359
  %v2369 = vsel %vm89, %v2361, -inf
  %v2370 = vrot.slane %v2369, 4
  %v2371 = vmax.f32 %v2369, %v2370
  %v2372 = vrot.slane %v2371, 2
  %v2373 = vmax.f32 %v2371, %v2372
  %v2374 = vrot.slane %v2373, 1
  %v2375 = vmax.f32 %v2373, %v2374
  %v2376 = vsel %vm89, %v2362, -inf
  %v2377 = vrot.slane %v2376, 4
  %v2378 = vmax.f32 %v2376, %v2377
  %v2379 = vrot.slane %v2378, 2
  %v2380 = vmax.f32 %v2378, %v2379
  %v2381 = vrot.slane %v2380, 1
  %v2382 = vmax.f32 %v2380, %v2381
  %v2383 = vsel %vm89, %v2363, -inf
  %v2384 = vrot.slane %v2383, 4
  %v2385 = vmax.f32 %v2383, %v2384
  %v2386 = vrot.slane %v2385, 2
  %v2387 = vmax.f32 %v2385, %v2386
  %v2388 = vrot.slane %v2387, 1
  %v2389 = vmax.f32 %v2387, %v2388
  %v2390 = vsel %vm89, %v2364, -inf
  %v2391 = vrot.slane %v2390, 4
  %v2392 = vmax.f32 %v2390, %v2391
  %v2393 = vrot.slane %v2392, 2
  %v2394 = vmax.f32 %v2392, %v2393
  %v2395 = vrot.slane %v2394, 1
  %v2396 = vmax.f32 %v2394, %v2395
  %v2397 = vsel %vm89, %v2365, -inf
  %v2398 = vrot.slane %v2397, 4
  %v2399 = vmax.f32 %v2397, %v2398
  %v2400 = vrot.slane %v2399, 2
  %v2401 = vmax.f32 %v2399, %v2400
  %v2402 = vrot.slane %v2401, 1
  %v2403 = vmax.f32 %v2401, %v2402
  %v2404 = vsel %vm89, %v2366, -inf
  %v2405 = vrot.slane %v2404, 4
  %v2406 = vmax.f32 %v2404, %v2405
  %v2407 = vrot.slane %v2406, 2
  %v2408 = vmax.f32 %v2406, %v2407
  %v2409 = vrot.slane %v2408, 1
  %v2410 = vmax.f32 %v2408, %v2409
  %v2411 = vsel %vm89, %v2367, -inf
  %v2412 = vrot.slane %v2411, 4
  %v2413 = vmax.f32 %v2411, %v2412
  %v2414 = vrot.slane %v2413, 2
  %v2415 = vmax.f32 %v2413, %v2414
  %v2416 = vrot.slane %v2415, 1
  %v2417 = vmax.f32 %v2415, %v2416
  %v2418 = vsel %vm89, %v2368, -inf
  %v2419 = vrot.slane %v2418, 4
  %v2420 = vmax.f32 %v2418, %v2419
  %v2421 = vrot.slane %v2420, 2
  %v2422 = vmax.f32 %v2420, %v2421
  %v2423 = vrot.slane %v2422, 1
  %v2424 = vmax.f32 %v2422, %v2423
  %v2425 = vsub.f32 %v2361, %v2375
  %v2426 = vsub.f32 %v2362, %v2382
  %v2427 = vsub.f32 %v2363, %v2389
  %v2428 = vsub.f32 %v2364, %v2396
  %v2429 = vsub.f32 %v2365, %v2403
  %v2430 = vsub.f32 %v2366, %v2410
  %v2431 = vsub.f32 %v2367, %v2417
  %v2432 = vsub.f32 %v2368, %v2424
  %v2433 = vmul.f32 %v2425, 1.442695
  %v2434 = vpow.pop %v2433
  %v2435 = vmul.f32 %v2426, 1.442695
  %v2436 = vpow.pop %v2435
  %v2437 = vmul.f32 %v2427, 1.442695
  %v2438 = vpow.pop %v2437
  %v2439 = vmul.f32 %v2428, 1.442695
  %v2440 = vpow.pop %v2439
  %v2441 = vmul.f32 %v2429, 1.442695
  %v2442 = vpow.pop %v2441
  %v2443 = vmul.f32 %v2430, 1.442695
  %v2444 = vpow.pop %v2443
  %v2445 = vmul.f32 %v2431, 1.442695
  %v2446 = vpow.pop %v2445
  %v2447 = vmul.f32 %v2432, 1.442695
  %v2448 = vpow.pop %v2447
  %v2449 = vsel %vm89, %v2434, 0.0
  %v2450 = vrot.slane %v2449, 4
  %v2451 = vadd.f32 %v2449, %v2450
  %v2452 = vrot.slane %v2451, 2
  %v2453 = vadd.f32 %v2451, %v2452
  %v2454 = vrot.slane %v2453, 1
  %v2455 = vadd.f32 %v2453, %v2454
  %v2456 = vsel %vm89, %v2436, 0.0
  %v2457 = vrot.slane %v2456, 4
  %v2458 = vadd.f32 %v2456, %v2457
  %v2459 = vrot.slane %v2458, 2
  %v2460 = vadd.f32 %v2458, %v2459
  %v2461 = vrot.slane %v2460, 1
  %v2462 = vadd.f32 %v2460, %v2461
  %v2463 = vsel %vm89, %v2438, 0.0
  %v2464 = vrot.slane %v2463, 4
  %v2465 = vadd.f32 %v2463, %v2464
  %v2466 = vrot.slane %v2465, 2
  %v2467 = vadd.f32 %v2465, %v2466
  %v2468 = vrot.slane %v2467, 1
  %v2469 = vadd.f32 %v2467, %v2468
  %v2470 = vsel %vm89, %v2440, 0.0
  %v2471 = vrot.slane %v2470, 4
  %v2472 = vadd.f32 %v2470, %v2471
  %v2473 = vrot.slane %v2472, 2
  %v2474 = vadd.f32 %v2472, %v2473
  %v2475 = vrot.slane %v2474, 1
  %v2476 = vadd.f32 %v2474, %v2475
  %v2477 = vsel %vm89, %v2442, 0.0
  %v2478 = vrot.slane %v2477, 4
  %v2479 = vadd.f32 %v2477, %v2478
  %v2480 = vrot.slane %v2479, 2
  %v2481 = vadd.f32 %v2479, %v2480
  %v2482 = vrot.slane %v2481, 1
  %v2483 = vadd.f32 %v2481, %v2482
  %v2484 = vsel %vm89, %v2444, 0.0
  %v2485 = vrot.slane %v2484, 4
  %v2486 = vadd.f32 %v2484, %v2485
  %v2487 = vrot.slane %v2486, 2
  %v2488 = vadd.f32 %v2486, %v2487
  %v2489 = vrot.slane %v2488, 1
  %v2490 = vadd.f32 %v2488, %v2489
  %v2491 = vsel %vm89, %v2446, 0.0
  %v2492 = vrot.slane %v2491, 4
  %v2493 = vadd.f32 %v2491, %v2492
  %v2494 = vrot.slane %v2493, 2
  %v2495 = vadd.f32 %v2493, %v2494
  %v2496 = vrot.slane %v2495, 1
  %v2497 = vadd.f32 %v2495, %v2496
  %v2498 = vsel %vm89, %v2448, 0.0
  %v2499 = vrot.slane %v2498, 4
  %v2500 = vadd.f32 %v2498, %v2499
  %v2501 = vrot.slane %v2500, 2
  %v2502 = vadd.f32 %v2500, %v2501
  %v2503 = vrot.slane %v2502, 1
  %v2504 = vadd.f32 %v2502, %v2503
  %v2505 = vrcp.pop %v2455
  %v2506 = vmul.f32 %v2434, %v2505
  %v2507 = vrcp.pop %v2462
  %v2508 = vmul.f32 %v2436, %v2507
  %v2509 = vrcp.pop %v2469
  %v2510 = vmul.f32 %v2438, %v2509
  %v2511 = vrcp.pop %v2476
  %v2512 = vmul.f32 %v2440, %v2511
  %v2513 = vrcp.pop %v2483
  %v2514 = vmul.f32 %v2442, %v2513
  %v2515 = vrcp.pop %v2490
  %v2516 = vmul.f32 %v2444, %v2515
  %v2517 = vrcp.pop %v2497
  %v2518 = vmul.f32 %v2446, %v2517
  %v2519 = vrcp.pop %v2504
  %v2520 = vmul.f32 %v2448, %v2519
  %v2521 = vsub.f32 %v2506, 0.25
  %v2522 = vsub.f32 %v2508, 0.25
  %v2523 = vsub.f32 %v2510, 0.25
  %v2524 = vsub.f32 %v2512, 0.25
  %v2525 = vsub.f32 %v2514, 0.25
  %v2526 = vsub.f32 %v2516, 0.25
  %v2527 = vsub.f32 %v2518, 0.25
  %v2528 = vsub.f32 %v2520, 0.25
  %v2529 = vmul.f32 %v2521, -10.0
  %v2530 = vmul.f32 %v2522, -10.0
  %v2531 = vmul.f32 %v2523, -10.0
  %v2532 = vmul.f32 %v2524, -10.0
  %v2533 = vmul.f32 %v2525, -10.0
  %v2534 = vmul.f32 %v2526, -10.0
  %v2535 = vmul.f32 %v2527, -10.0
  %v2536 = vmul.f32 %v2528, -10.0
  %v2537 = vmul.f32 %v2529, 1.442695
  %v2538 = vpow.pop %v2537
  %v2539 = vmul.f32 %v2530, 1.442695
  %v2540 = vpow.pop %v2539
  %v2541 = vmul.f32 %v2531, 1.442695
  %v2542 = vpow.pop %v2541
  %v2543 = vmul.f32 %v2532, 1.442695
  %v2544 = vpow.pop %v2543
  %v2545 = vmul.f32 %v2533, 1.442695
  %v2546 = vpow.pop %v2545
  %v2547 = vmul.f32 %v2534, 1.442695
  %v2548 = vpow.pop %v2547
  %v2549 = vmul.f32 %v2535, 1.442695
  %v2550 = vpow.pop %v2549
  %v2551 = vmul.f32 %v2536, 1.442695
  %v2552 = vpow.pop %v2551
  %v2553 = vadd.f32 %v2538, 1.0
  %v2554 = vadd.f32 %v2540, 1.0
  %v2555 = vadd.f32 %v2542, 1.0
  %v2556 = vadd.f32 %v2544, 1.0
  %v2557 = vadd.f32 %v2546, 1.0
  %v2558 = vadd.f32 %v2548, 1.0
  %v2559 = vadd.f32 %v2550, 1.0
  %v2560 = vadd.f32 %v2552, 1.0
  %v2561 = vrcp.pop %v2553
  %v2562 = vmul.f32 1.0, %v2561
  %v2563 = vrcp.pop %v2554
  %v2564 = vmul.f32 1.0, %v2563
  %v2565 = vrcp.pop %v2555
  %v2566 = vmul.f32 1.0, %v2565
  %v2567 = vrcp.pop %v2556
  %v2568 = vmul.f32 1.0, %v2567
  %v2569 = vrcp.pop %v2557
  %v2570 = vmul.f32 1.0, %v2569
  %v2571 = vrcp.pop %v2558
  %v2572 = vmul.f32 1.0, %v2571
  %v2573 = vrcp.pop %v2559
  %v2574 = vmul.f32 1.0, %v2573
  %v2575 = vrcp.pop %v2560
  %v2576 = vmul.f32 1.0, %v2575
  %v2577 = vsub.f32 1.0, %v2562
  %v2578 = vsub.f32 1.0, %v2564
  %v2579 = vsub.f32 1.0, %v2566
  %v2580 = vsub.f32 1.0, %v2568
  %v2581 = vsub.f32 1.0, %v2570
  %v2582 = vsub.f32 1.0, %v2572
  %v2583 = vsub.f32 1.0, %v2574
  %v2584 = vsub.f32 1.0, %v2576
  %2586 = vset.pattern.permute.xlu0 0
  %2587 = vperm.xlu0 %2586, %v2562
  %v2588 = vpop.permute.xlu0 %2587
  %2591 = vset.pattern.permute.xlu0 0
  %2592 = vperm.xlu0 %2591, %v2564
  %v2593 = vpop.permute.xlu0 %2592
  %2596 = vset.pattern.permute.xlu0 0
  %2597 = vperm.xlu0 %2596, %v2566
  %v2598 = vpop.permute.xlu0 %2597
  %2601 = vset.pattern.permute.xlu0 0
  %2602 = vperm.xlu0 %2601, %v2568
  %v2603 = vpop.permute.xlu0 %2602
  %2606 = vset.pattern.permute.xlu0 0
  %2607 = vperm.xlu0 %2606, %v2570
  %v2608 = vpop.permute.xlu0 %2607
  %2611 = vset.pattern.permute.xlu0 0
  %2612 = vperm.xlu0 %2611, %v2572
  %v2613 = vpop.permute.xlu0 %2612
  %2616 = vset.pattern.permute.xlu0 0
  %2617 = vperm.xlu0 %2616, %v2574
  %v2618 = vpop.permute.xlu0 %2617
  %2621 = vset.pattern.permute.xlu0 0
  %2622 = vperm.xlu0 %2621, %v2576
  %v2623 = vpop.permute.xlu0 %2622
  %v2625 = vmul.f32 %v2588, %v2314
  %v2626 = vmul.f32 %v2593, %v2315
  %v2627 = vmul.f32 %v2598, %v2316
  %v2628 = vmul.f32 %v2603, %v2317
  %v2629 = vmul.f32 %v2608, %v2318
  %v2630 = vmul.f32 %v2613, %v2319
  %v2631 = vmul.f32 %v2618, %v2320
  %v2632 = vmul.f32 %v2623, %v2321
  %v2633 = vsel %vm49, %v2625, 0.0
  %v2634 = vrot.slane %v2633, 4
  %v2635 = vadd.f32 %v2633, %v2634
  %v2636 = vrot.slane %v2635, 2
  %v2637 = vadd.f32 %v2635, %v2636
  %v2638 = vrot.slane %v2637, 1
  %v2639 = vadd.f32 %v2637, %v2638
  %v2640 = vsel %vm49, %v2626, 0.0
  %v2641 = vrot.slane %v2640, 4
  %v2642 = vadd.f32 %v2640, %v2641
  %v2643 = vrot.slane %v2642, 2
  %v2644 = vadd.f32 %v2642, %v2643
  %v2645 = vrot.slane %v2644, 1
  %v2646 = vadd.f32 %v2644, %v2645
  %v2647 = vsel %vm49, %v2627, 0.0
  %v2648 = vrot.slane %v2647, 4
  %v2649 = vadd.f32 %v2647, %v2648
  %v2650 = vrot.slane %v2649, 2
  %v2651 = vadd.f32 %v2649, %v2650
  %v2652 = vrot.slane %v2651, 1
  %v2653 = vadd.f32 %v2651, %v2652
  %v2654 = vsel %vm49, %v2628, 0.0
  %v2655 = vrot.slane %v2654, 4
  %v2656 = vadd.f32 %v2654, %v2655
  %v2657 = vrot.slane %v2656, 2
  %v2658 = vadd.f32 %v2656, %v2657
  %v2659 = vrot.slane %v2658, 1
  %v2660 = vadd.f32 %v2658, %v2659
  %v2661 = vsel %vm49, %v2629, 0.0
  %v2662 = vrot.slane %v2661, 4
  %v2663 = vadd.f32 %v2661, %v2662
  %v2664 = vrot.slane %v2663, 2
  %v2665 = vadd.f32 %v2663, %v2664
  %v2666 = vrot.slane %v2665, 1
  %v2667 = vadd.f32 %v2665, %v2666
  %v2668 = vsel %vm49, %v2630, 0.0
  %v2669 = vrot.slane %v2668, 4
  %v2670 = vadd.f32 %v2668, %v2669
  %v2671 = vrot.slane %v2670, 2
  %v2672 = vadd.f32 %v2670, %v2671
  %v2673 = vrot.slane %v2672, 1
  %v2674 = vadd.f32 %v2672, %v2673
  %v2675 = vsel %vm49, %v2631, 0.0
  %v2676 = vrot.slane %v2675, 4
  %v2677 = vadd.f32 %v2675, %v2676
  %v2678 = vrot.slane %v2677, 2
  %v2679 = vadd.f32 %v2677, %v2678
  %v2680 = vrot.slane %v2679, 1
  %v2681 = vadd.f32 %v2679, %v2680
  %v2682 = vsel %vm49, %v2632, 0.0
  %v2683 = vrot.slane %v2682, 4
  %v2684 = vadd.f32 %v2682, %v2683
  %v2685 = vrot.slane %v2684, 2
  %v2686 = vadd.f32 %v2684, %v2685
  %v2687 = vrot.slane %v2686, 1
  %v2688 = vadd.f32 %v2686, %v2687
  %v2689 = vsel %vm89, %v2562, 0.0
  %v2690 = vrot.slane %v2689, 4
  %v2691 = vadd.f32 %v2689, %v2690
  %v2692 = vrot.slane %v2691, 2
  %v2693 = vadd.f32 %v2691, %v2692
  %v2694 = vrot.slane %v2693, 1
  %v2695 = vadd.f32 %v2693, %v2694
  %v2696 = vsel %vm89, %v2564, 0.0
  %v2697 = vrot.slane %v2696, 4
  %v2698 = vadd.f32 %v2696, %v2697
  %v2699 = vrot.slane %v2698, 2
  %v2700 = vadd.f32 %v2698, %v2699
  %v2701 = vrot.slane %v2700, 1
  %v2702 = vadd.f32 %v2700, %v2701
  %v2703 = vsel %vm89, %v2566, 0.0
  %v2704 = vrot.slane %v2703, 4
  %v2705 = vadd.f32 %v2703, %v2704
  %v2706 = vrot.slane %v2705, 2
  %v2707 = vadd.f32 %v2705, %v2706
  %v2708 = vrot.slane %v2707, 1
  %v2709 = vadd.f32 %v2707, %v2708
  %v2710 = vsel %vm89, %v2568, 0.0
  %v2711 = vrot.slane %v2710, 4
  %v2712 = vadd.f32 %v2710, %v2711
  %v2713 = vrot.slane %v2712, 2
  %v2714 = vadd.f32 %v2712, %v2713
  %v2715 = vrot.slane %v2714, 1
  %v2716 = vadd.f32 %v2714, %v2715
  %v2717 = vsel %vm89, %v2570, 0.0
  %v2718 = vrot.slane %v2717, 4
  %v2719 = vadd.f32 %v2717, %v2718
  %v2720 = vrot.slane %v2719, 2
  %v2721 = vadd.f32 %v2719, %v2720
  %v2722 = vrot.slane %v2721, 1
  %v2723 = vadd.f32 %v2721, %v2722
  %v2724 = vsel %vm89, %v2572, 0.0
  %v2725 = vrot.slane %v2724, 4
  %v2726 = vadd.f32 %v2724, %v2725
  %v2727 = vrot.slane %v2726, 2
  %v2728 = vadd.f32 %v2726, %v2727
  %v2729 = vrot.slane %v2728, 1
  %v2730 = vadd.f32 %v2728, %v2729
  %v2731 = vsel %vm89, %v2574, 0.0
  %v2732 = vrot.slane %v2731, 4
  %v2733 = vadd.f32 %v2731, %v2732
  %v2734 = vrot.slane %v2733, 2
  %v2735 = vadd.f32 %v2733, %v2734
  %v2736 = vrot.slane %v2735, 1
  %v2737 = vadd.f32 %v2735, %v2736
  %v2738 = vsel %vm89, %v2576, 0.0
  %v2739 = vrot.slane %v2738, 4
  %v2740 = vadd.f32 %v2738, %v2739
  %v2741 = vrot.slane %v2740, 2
  %v2742 = vadd.f32 %v2740, %v2741
  %v2743 = vrot.slane %v2742, 1
  %v2744 = vadd.f32 %v2742, %v2743
  %v2745 = vadd.f32 %v2695, 1e-08
  %v2746 = vadd.f32 %v2702, 1e-08
  %v2747 = vadd.f32 %v2709, 1e-08
  %v2748 = vadd.f32 %v2716, 1e-08
  %v2749 = vadd.f32 %v2723, 1e-08
  %v2750 = vadd.f32 %v2730, 1e-08
  %v2751 = vadd.f32 %v2737, 1e-08
  %v2752 = vadd.f32 %v2744, 1e-08
  %2754 = vset.pattern.permute.xlu0 0
  %2755 = vperm.xlu0 %2754, %v2745
  %v2756 = vpop.permute.xlu0 %2755
  %2759 = vset.pattern.permute.xlu0 0
  %2760 = vperm.xlu0 %2759, %v2746
  %v2761 = vpop.permute.xlu0 %2760
  %2764 = vset.pattern.permute.xlu0 0
  %2765 = vperm.xlu0 %2764, %v2747
  %v2766 = vpop.permute.xlu0 %2765
  %2769 = vset.pattern.permute.xlu0 0
  %2770 = vperm.xlu0 %2769, %v2748
  %v2771 = vpop.permute.xlu0 %2770
  %2774 = vset.pattern.permute.xlu0 0
  %2775 = vperm.xlu0 %2774, %v2749
  %v2776 = vpop.permute.xlu0 %2775
  %2779 = vset.pattern.permute.xlu0 0
  %2780 = vperm.xlu0 %2779, %v2750
  %v2781 = vpop.permute.xlu0 %2780
  %2784 = vset.pattern.permute.xlu0 0
  %2785 = vperm.xlu0 %2784, %v2751
  %v2786 = vpop.permute.xlu0 %2785
  %2789 = vset.pattern.permute.xlu0 0
  %2790 = vperm.xlu0 %2789, %v2752
  %v2791 = vpop.permute.xlu0 %2790
  %v2793 = vrcp.pop %v2756
  %v2794 = vmul.f32 %v2639, %v2793
  %v2795 = vrcp.pop %v2761
  %v2796 = vmul.f32 %v2646, %v2795
  %v2797 = vrcp.pop %v2766
  %v2798 = vmul.f32 %v2653, %v2797
  %v2799 = vrcp.pop %v2771
  %v2800 = vmul.f32 %v2660, %v2799
  %v2801 = vrcp.pop %v2776
  %v2802 = vmul.f32 %v2667, %v2801
  %v2803 = vrcp.pop %v2781
  %v2804 = vmul.f32 %v2674, %v2803
  %v2805 = vrcp.pop %v2786
  %v2806 = vmul.f32 %v2681, %v2805
  %v2807 = vrcp.pop %v2791
  %v2808 = vmul.f32 %v2688, %v2807
  %2810 = vset.pattern.permute.xlu0 0
  %2811 = vperm.xlu0 %2810, %v2577
  %v2812 = vpop.permute.xlu0 %2811
  %2815 = vset.pattern.permute.xlu0 0
  %2816 = vperm.xlu0 %2815, %v2578
  %v2817 = vpop.permute.xlu0 %2816
  %2820 = vset.pattern.permute.xlu0 0
  %2821 = vperm.xlu0 %2820, %v2579
  %v2822 = vpop.permute.xlu0 %2821
  %2825 = vset.pattern.permute.xlu0 0
  %2826 = vperm.xlu0 %2825, %v2580
  %v2827 = vpop.permute.xlu0 %2826
  %2830 = vset.pattern.permute.xlu0 0
  %2831 = vperm.xlu0 %2830, %v2581
  %v2832 = vpop.permute.xlu0 %2831
  %2835 = vset.pattern.permute.xlu0 0
  %2836 = vperm.xlu0 %2835, %v2582
  %v2837 = vpop.permute.xlu0 %2836
  %2840 = vset.pattern.permute.xlu0 0
  %2841 = vperm.xlu0 %2840, %v2583
  %v2842 = vpop.permute.xlu0 %2841
  %2845 = vset.pattern.permute.xlu0 0
  %2846 = vperm.xlu0 %2845, %v2584
  %v2847 = vpop.permute.xlu0 %2846
  %v2849 = vmul.f32 %v2812, %v2314
  %v2850 = vmul.f32 %v2817, %v2315
  %v2851 = vmul.f32 %v2822, %v2316
  %v2852 = vmul.f32 %v2827, %v2317
  %v2853 = vmul.f32 %v2832, %v2318
  %v2854 = vmul.f32 %v2837, %v2319
  %v2855 = vmul.f32 %v2842, %v2320
  %v2856 = vmul.f32 %v2847, %v2321
  %v2857 = vsel %vm49, %v2849, 0.0
  %v2858 = vrot.slane %v2857, 4
  %v2859 = vadd.f32 %v2857, %v2858
  %v2860 = vrot.slane %v2859, 2
  %v2861 = vadd.f32 %v2859, %v2860
  %v2862 = vrot.slane %v2861, 1
  %v2863 = vadd.f32 %v2861, %v2862
  %v2864 = vsel %vm49, %v2850, 0.0
  %v2865 = vrot.slane %v2864, 4
  %v2866 = vadd.f32 %v2864, %v2865
  %v2867 = vrot.slane %v2866, 2
  %v2868 = vadd.f32 %v2866, %v2867
  %v2869 = vrot.slane %v2868, 1
  %v2870 = vadd.f32 %v2868, %v2869
  %v2871 = vsel %vm49, %v2851, 0.0
  %v2872 = vrot.slane %v2871, 4
  %v2873 = vadd.f32 %v2871, %v2872
  %v2874 = vrot.slane %v2873, 2
  %v2875 = vadd.f32 %v2873, %v2874
  %v2876 = vrot.slane %v2875, 1
  %v2877 = vadd.f32 %v2875, %v2876
  %v2878 = vsel %vm49, %v2852, 0.0
  %v2879 = vrot.slane %v2878, 4
  %v2880 = vadd.f32 %v2878, %v2879
  %v2881 = vrot.slane %v2880, 2
  %v2882 = vadd.f32 %v2880, %v2881
  %v2883 = vrot.slane %v2882, 1
  %v2884 = vadd.f32 %v2882, %v2883
  %v2885 = vsel %vm49, %v2853, 0.0
  %v2886 = vrot.slane %v2885, 4
  %v2887 = vadd.f32 %v2885, %v2886
  %v2888 = vrot.slane %v2887, 2
  %v2889 = vadd.f32 %v2887, %v2888
  %v2890 = vrot.slane %v2889, 1
  %v2891 = vadd.f32 %v2889, %v2890
  %v2892 = vsel %vm49, %v2854, 0.0
  %v2893 = vrot.slane %v2892, 4
  %v2894 = vadd.f32 %v2892, %v2893
  %v2895 = vrot.slane %v2894, 2
  %v2896 = vadd.f32 %v2894, %v2895
  %v2897 = vrot.slane %v2896, 1
  %v2898 = vadd.f32 %v2896, %v2897
  %v2899 = vsel %vm49, %v2855, 0.0
  %v2900 = vrot.slane %v2899, 4
  %v2901 = vadd.f32 %v2899, %v2900
  %v2902 = vrot.slane %v2901, 2
  %v2903 = vadd.f32 %v2901, %v2902
  %v2904 = vrot.slane %v2903, 1
  %v2905 = vadd.f32 %v2903, %v2904
  %v2906 = vsel %vm49, %v2856, 0.0
  %v2907 = vrot.slane %v2906, 4
  %v2908 = vadd.f32 %v2906, %v2907
  %v2909 = vrot.slane %v2908, 2
  %v2910 = vadd.f32 %v2908, %v2909
  %v2911 = vrot.slane %v2910, 1
  %v2912 = vadd.f32 %v2910, %v2911
  %v2913 = vsel %vm89, %v2577, 0.0
  %v2914 = vrot.slane %v2913, 4
  %v2915 = vadd.f32 %v2913, %v2914
  %v2916 = vrot.slane %v2915, 2
  %v2917 = vadd.f32 %v2915, %v2916
  %v2918 = vrot.slane %v2917, 1
  %v2919 = vadd.f32 %v2917, %v2918
  %v2920 = vsel %vm89, %v2578, 0.0
  %v2921 = vrot.slane %v2920, 4
  %v2922 = vadd.f32 %v2920, %v2921
  %v2923 = vrot.slane %v2922, 2
  %v2924 = vadd.f32 %v2922, %v2923
  %v2925 = vrot.slane %v2924, 1
  %v2926 = vadd.f32 %v2924, %v2925
  %v2927 = vsel %vm89, %v2579, 0.0
  %v2928 = vrot.slane %v2927, 4
  %v2929 = vadd.f32 %v2927, %v2928
  %v2930 = vrot.slane %v2929, 2
  %v2931 = vadd.f32 %v2929, %v2930
  %v2932 = vrot.slane %v2931, 1
  %v2933 = vadd.f32 %v2931, %v2932
  %v2934 = vsel %vm89, %v2580, 0.0
  %v2935 = vrot.slane %v2934, 4
  %v2936 = vadd.f32 %v2934, %v2935
  %v2937 = vrot.slane %v2936, 2
  %v2938 = vadd.f32 %v2936, %v2937
  %v2939 = vrot.slane %v2938, 1
  %v2940 = vadd.f32 %v2938, %v2939
  %v2941 = vsel %vm89, %v2581, 0.0
  %v2942 = vrot.slane %v2941, 4
  %v2943 = vadd.f32 %v2941, %v2942
  %v2944 = vrot.slane %v2943, 2
  %v2945 = vadd.f32 %v2943, %v2944
  %v2946 = vrot.slane %v2945, 1
  %v2947 = vadd.f32 %v2945, %v2946
  %v2948 = vsel %vm89, %v2582, 0.0
  %v2949 = vrot.slane %v2948, 4
  %v2950 = vadd.f32 %v2948, %v2949
  %v2951 = vrot.slane %v2950, 2
  %v2952 = vadd.f32 %v2950, %v2951
  %v2953 = vrot.slane %v2952, 1
  %v2954 = vadd.f32 %v2952, %v2953
  %v2955 = vsel %vm89, %v2583, 0.0
  %v2956 = vrot.slane %v2955, 4
  %v2957 = vadd.f32 %v2955, %v2956
  %v2958 = vrot.slane %v2957, 2
  %v2959 = vadd.f32 %v2957, %v2958
  %v2960 = vrot.slane %v2959, 1
  %v2961 = vadd.f32 %v2959, %v2960
  %v2962 = vsel %vm89, %v2584, 0.0
  %v2963 = vrot.slane %v2962, 4
  %v2964 = vadd.f32 %v2962, %v2963
  %v2965 = vrot.slane %v2964, 2
  %v2966 = vadd.f32 %v2964, %v2965
  %v2967 = vrot.slane %v2966, 1
  %v2968 = vadd.f32 %v2966, %v2967
  %v2969 = vadd.f32 %v2919, 1e-08
  %v2970 = vadd.f32 %v2926, 1e-08
  %v2971 = vadd.f32 %v2933, 1e-08
  %v2972 = vadd.f32 %v2940, 1e-08
  %v2973 = vadd.f32 %v2947, 1e-08
  %v2974 = vadd.f32 %v2954, 1e-08
  %v2975 = vadd.f32 %v2961, 1e-08
  %v2976 = vadd.f32 %v2968, 1e-08
  %2978 = vset.pattern.permute.xlu0 0
  %2979 = vperm.xlu0 %2978, %v2969
  %v2980 = vpop.permute.xlu0 %2979
  %2983 = vset.pattern.permute.xlu0 0
  %2984 = vperm.xlu0 %2983, %v2970
  %v2985 = vpop.permute.xlu0 %2984
  %2988 = vset.pattern.permute.xlu0 0
  %2989 = vperm.xlu0 %2988, %v2971
  %v2990 = vpop.permute.xlu0 %2989
  %2993 = vset.pattern.permute.xlu0 0
  %2994 = vperm.xlu0 %2993, %v2972
  %v2995 = vpop.permute.xlu0 %2994
  %2998 = vset.pattern.permute.xlu0 0
  %2999 = vperm.xlu0 %2998, %v2973
  %v3000 = vpop.permute.xlu0 %2999
  %3003 = vset.pattern.permute.xlu0 0
  %3004 = vperm.xlu0 %3003, %v2974
  %v3005 = vpop.permute.xlu0 %3004
  %3008 = vset.pattern.permute.xlu0 0
  %3009 = vperm.xlu0 %3008, %v2975
  %v3010 = vpop.permute.xlu0 %3009
  %3013 = vset.pattern.permute.xlu0 0
  %3014 = vperm.xlu0 %3013, %v2976
  %v3015 = vpop.permute.xlu0 %3014
  %v3017 = vrcp.pop %v2980
  %v3018 = vmul.f32 %v2863, %v3017
  %v3019 = vrcp.pop %v2985
  %v3020 = vmul.f32 %v2870, %v3019
  %v3021 = vrcp.pop %v2990
  %v3022 = vmul.f32 %v2877, %v3021
  %v3023 = vrcp.pop %v2995
  %v3024 = vmul.f32 %v2884, %v3023
  %v3025 = vrcp.pop %v3000
  %v3026 = vmul.f32 %v2891, %v3025
  %v3027 = vrcp.pop %v3005
  %v3028 = vmul.f32 %v2898, %v3027
  %v3029 = vrcp.pop %v3010
  %v3030 = vmul.f32 %v2905, %v3029
  %v3031 = vrcp.pop %v3015
  %v3032 = vmul.f32 %v2912, %v3031
  %v3041 = vsel %vm762, %v2796, %v2794
  %v3042 = vsel %vm764, %v2798, %v3041
  %v3043 = vsel %vm766, %v2800, %v3042
  %v3044 = vsel %vm768, %v2802, %v3043
  %v3045 = vsel %vm770, %v2804, %v3044
  %v3046 = vsel %vm772, %v2806, %v3045
  %v3047 = vsel %vm774, %v2808, %v3046
  %s3049 = scalar_lea.vmem [#allocation2], 24
  %3050 = vst.msk [vmem:[%s3049] sm:$0xff] %vm777, %v3047
  %v3059 = vsel %vm762, %v3020, %v3018
  %v3060 = vsel %vm764, %v3022, %v3059
  %v3061 = vsel %vm766, %v3024, %v3060
  %v3062 = vsel %vm768, %v3026, %v3061
  %v3063 = vsel %vm770, %v3028, %v3062
  %v3064 = vsel %vm772, %v3030, %v3063
  %v3065 = vsel %vm774, %v3032, %v3064
  %3066 = vrot.lane.b32.xlu0 %v3065, 32
  %v3067 = vpop.permute.xlu0 %3066
  %3069 = vst.msk [vmem:[%s3049] sm:$0xff] %vm797, %v3067
  %s3070 = scalar_lea.vmem %s0, 16
  %v3071 = vld [vmem:[%s3070] sm:$0xf]
  %v3072 = vld [vmem:[%s3070 + $0x20] sm:$0xf]
  %v3073 = vld [vmem:[%s3070 + $0x40] sm:$0xf]
  %v3074 = vld [vmem:[%s3070 + $0x60] sm:$0xf]
  %v3075 = vld [vmem:[%s3070 + $0x80] sm:$0xf]
  %v3076 = vld [vmem:[%s3070 + $0xa0] sm:$0xf]
  %v3077 = vld [vmem:[%s3070 + $0xc0] sm:$0xf]
  %v3078 = vld [vmem:[%s3070 + $0xe0] sm:$0xf]
  %v3079 = vmul.f32 %v3071, %v39
  %v3080 = vmul.f32 %v3072, %v39
  %v3081 = vmul.f32 %v3073, %v39
  %v3082 = vmul.f32 %v3074, %v39
  %v3083 = vmul.f32 %v3075, %v39
  %v3084 = vmul.f32 %v3076, %v39
  %v3085 = vmul.f32 %v3077, %v39
  %v3086 = vmul.f32 %v3078, %v39
  %v3087 = vsel %vm49, %v3079, 0.0
  %3088 = vadd.xlane.f32.xlu0 %v3087
  %v3089 = vpop.xlane.xlu0 %3088
  %v3090 = vsel %vm49, %v3080, 0.0
  %3091 = vadd.xlane.f32.xlu0 %v3090
  %v3092 = vpop.xlane.xlu0 %3091
  %v3093 = vsel %vm49, %v3081, 0.0
  %3094 = vadd.xlane.f32.xlu0 %v3093
  %v3095 = vpop.xlane.xlu0 %3094
  %v3096 = vsel %vm49, %v3082, 0.0
  %3097 = vadd.xlane.f32.xlu0 %v3096
  %v3098 = vpop.xlane.xlu0 %3097
  %v3099 = vsel %vm49, %v3083, 0.0
  %3100 = vadd.xlane.f32.xlu0 %v3099
  %v3101 = vpop.xlane.xlu0 %3100
  %v3102 = vsel %vm49, %v3084, 0.0
  %3103 = vadd.xlane.f32.xlu0 %v3102
  %v3104 = vpop.xlane.xlu0 %3103
  %v3105 = vsel %vm49, %v3085, 0.0
  %3106 = vadd.xlane.f32.xlu0 %v3105
  %v3107 = vpop.xlane.xlu0 %3106
  %v3108 = vsel %vm49, %v3086, 0.0
  %3109 = vadd.xlane.f32.xlu0 %v3108
  %v3110 = vpop.xlane.xlu0 %3109
  %v3111 = vld [vmem:[#allocation4] sm:$0x1]
  %v3113 = vlaneseq
  %v3114 = vshrl.u32 %v3113, 7
  %v3115 = vsub.s32 0, %v3114
  %v3116 = vrot.slane %v3111, %v3115
  %v3118 = vadd.f32 %v3089, %v3116
  %v3119 = vadd.f32 %v3092, %v3116
  %v3120 = vadd.f32 %v3095, %v3116
  %v3121 = vadd.f32 %v3098, %v3116
  %v3122 = vadd.f32 %v3101, %v3116
  %v3123 = vadd.f32 %v3104, %v3116
  %v3124 = vadd.f32 %v3107, %v3116
  %v3125 = vadd.f32 %v3110, %v3116
  %v3126 = vsel %vm89, %v3118, -inf
  %v3127 = vrot.slane %v3126, 4
  %v3128 = vmax.f32 %v3126, %v3127
  %v3129 = vrot.slane %v3128, 2
  %v3130 = vmax.f32 %v3128, %v3129
  %v3131 = vrot.slane %v3130, 1
  %v3132 = vmax.f32 %v3130, %v3131
  %v3133 = vsel %vm89, %v3119, -inf
  %v3134 = vrot.slane %v3133, 4
  %v3135 = vmax.f32 %v3133, %v3134
  %v3136 = vrot.slane %v3135, 2
  %v3137 = vmax.f32 %v3135, %v3136
  %v3138 = vrot.slane %v3137, 1
  %v3139 = vmax.f32 %v3137, %v3138
  %v3140 = vsel %vm89, %v3120, -inf
  %v3141 = vrot.slane %v3140, 4
  %v3142 = vmax.f32 %v3140, %v3141
  %v3143 = vrot.slane %v3142, 2
  %v3144 = vmax.f32 %v3142, %v3143
  %v3145 = vrot.slane %v3144, 1
  %v3146 = vmax.f32 %v3144, %v3145
  %v3147 = vsel %vm89, %v3121, -inf
  %v3148 = vrot.slane %v3147, 4
  %v3149 = vmax.f32 %v3147, %v3148
  %v3150 = vrot.slane %v3149, 2
  %v3151 = vmax.f32 %v3149, %v3150
  %v3152 = vrot.slane %v3151, 1
  %v3153 = vmax.f32 %v3151, %v3152
  %v3154 = vsel %vm89, %v3122, -inf
  %v3155 = vrot.slane %v3154, 4
  %v3156 = vmax.f32 %v3154, %v3155
  %v3157 = vrot.slane %v3156, 2
  %v3158 = vmax.f32 %v3156, %v3157
  %v3159 = vrot.slane %v3158, 1
  %v3160 = vmax.f32 %v3158, %v3159
  %v3161 = vsel %vm89, %v3123, -inf
  %v3162 = vrot.slane %v3161, 4
  %v3163 = vmax.f32 %v3161, %v3162
  %v3164 = vrot.slane %v3163, 2
  %v3165 = vmax.f32 %v3163, %v3164
  %v3166 = vrot.slane %v3165, 1
  %v3167 = vmax.f32 %v3165, %v3166
  %v3168 = vsel %vm89, %v3124, -inf
  %v3169 = vrot.slane %v3168, 4
  %v3170 = vmax.f32 %v3168, %v3169
  %v3171 = vrot.slane %v3170, 2
  %v3172 = vmax.f32 %v3170, %v3171
  %v3173 = vrot.slane %v3172, 1
  %v3174 = vmax.f32 %v3172, %v3173
  %v3175 = vsel %vm89, %v3125, -inf
  %v3176 = vrot.slane %v3175, 4
  %v3177 = vmax.f32 %v3175, %v3176
  %v3178 = vrot.slane %v3177, 2
  %v3179 = vmax.f32 %v3177, %v3178
  %v3180 = vrot.slane %v3179, 1
  %v3181 = vmax.f32 %v3179, %v3180
  %v3182 = vsub.f32 %v3118, %v3132
  %v3183 = vsub.f32 %v3119, %v3139
  %v3184 = vsub.f32 %v3120, %v3146
  %v3185 = vsub.f32 %v3121, %v3153
  %v3186 = vsub.f32 %v3122, %v3160
  %v3187 = vsub.f32 %v3123, %v3167
  %v3188 = vsub.f32 %v3124, %v3174
  %v3189 = vsub.f32 %v3125, %v3181
  %v3190 = vmul.f32 %v3182, 1.442695
  %v3191 = vpow.pop %v3190
  %v3192 = vmul.f32 %v3183, 1.442695
  %v3193 = vpow.pop %v3192
  %v3194 = vmul.f32 %v3184, 1.442695
  %v3195 = vpow.pop %v3194
  %v3196 = vmul.f32 %v3185, 1.442695
  %v3197 = vpow.pop %v3196
  %v3198 = vmul.f32 %v3186, 1.442695
  %v3199 = vpow.pop %v3198
  %v3200 = vmul.f32 %v3187, 1.442695
  %v3201 = vpow.pop %v3200
  %v3202 = vmul.f32 %v3188, 1.442695
  %v3203 = vpow.pop %v3202
  %v3204 = vmul.f32 %v3189, 1.442695
  %v3205 = vpow.pop %v3204
  %v3206 = vsel %vm89, %v3191, 0.0
  %v3207 = vrot.slane %v3206, 4
  %v3208 = vadd.f32 %v3206, %v3207
  %v3209 = vrot.slane %v3208, 2
  %v3210 = vadd.f32 %v3208, %v3209
  %v3211 = vrot.slane %v3210, 1
  %v3212 = vadd.f32 %v3210, %v3211
  %v3213 = vsel %vm89, %v3193, 0.0
  %v3214 = vrot.slane %v3213, 4
  %v3215 = vadd.f32 %v3213, %v3214
  %v3216 = vrot.slane %v3215, 2
  %v3217 = vadd.f32 %v3215, %v3216
  %v3218 = vrot.slane %v3217, 1
  %v3219 = vadd.f32 %v3217, %v3218
  %v3220 = vsel %vm89, %v3195, 0.0
  %v3221 = vrot.slane %v3220, 4
  %v3222 = vadd.f32 %v3220, %v3221
  %v3223 = vrot.slane %v3222, 2
  %v3224 = vadd.f32 %v3222, %v3223
  %v3225 = vrot.slane %v3224, 1
  %v3226 = vadd.f32 %v3224, %v3225
  %v3227 = vsel %vm89, %v3197, 0.0
  %v3228 = vrot.slane %v3227, 4
  %v3229 = vadd.f32 %v3227, %v3228
  %v3230 = vrot.slane %v3229, 2
  %v3231 = vadd.f32 %v3229, %v3230
  %v3232 = vrot.slane %v3231, 1
  %v3233 = vadd.f32 %v3231, %v3232
  %v3234 = vsel %vm89, %v3199, 0.0
  %v3235 = vrot.slane %v3234, 4
  %v3236 = vadd.f32 %v3234, %v3235
  %v3237 = vrot.slane %v3236, 2
  %v3238 = vadd.f32 %v3236, %v3237
  %v3239 = vrot.slane %v3238, 1
  %v3240 = vadd.f32 %v3238, %v3239
  %v3241 = vsel %vm89, %v3201, 0.0
  %v3242 = vrot.slane %v3241, 4
  %v3243 = vadd.f32 %v3241, %v3242
  %v3244 = vrot.slane %v3243, 2
  %v3245 = vadd.f32 %v3243, %v3244
  %v3246 = vrot.slane %v3245, 1
  %v3247 = vadd.f32 %v3245, %v3246
  %v3248 = vsel %vm89, %v3203, 0.0
  %v3249 = vrot.slane %v3248, 4
  %v3250 = vadd.f32 %v3248, %v3249
  %v3251 = vrot.slane %v3250, 2
  %v3252 = vadd.f32 %v3250, %v3251
  %v3253 = vrot.slane %v3252, 1
  %v3254 = vadd.f32 %v3252, %v3253
  %v3255 = vsel %vm89, %v3205, 0.0
  %v3256 = vrot.slane %v3255, 4
  %v3257 = vadd.f32 %v3255, %v3256
  %v3258 = vrot.slane %v3257, 2
  %v3259 = vadd.f32 %v3257, %v3258
  %v3260 = vrot.slane %v3259, 1
  %v3261 = vadd.f32 %v3259, %v3260
  %v3262 = vrcp.pop %v3212
  %v3263 = vmul.f32 %v3191, %v3262
  %v3264 = vrcp.pop %v3219
  %v3265 = vmul.f32 %v3193, %v3264
  %v3266 = vrcp.pop %v3226
  %v3267 = vmul.f32 %v3195, %v3266
  %v3268 = vrcp.pop %v3233
  %v3269 = vmul.f32 %v3197, %v3268
  %v3270 = vrcp.pop %v3240
  %v3271 = vmul.f32 %v3199, %v3270
  %v3272 = vrcp.pop %v3247
  %v3273 = vmul.f32 %v3201, %v3272
  %v3274 = vrcp.pop %v3254
  %v3275 = vmul.f32 %v3203, %v3274
  %v3276 = vrcp.pop %v3261
  %v3277 = vmul.f32 %v3205, %v3276
  %v3278 = vsub.f32 %v3263, 0.25
  %v3279 = vsub.f32 %v3265, 0.25
  %v3280 = vsub.f32 %v3267, 0.25
  %v3281 = vsub.f32 %v3269, 0.25
  %v3282 = vsub.f32 %v3271, 0.25
  %v3283 = vsub.f32 %v3273, 0.25
  %v3284 = vsub.f32 %v3275, 0.25
  %v3285 = vsub.f32 %v3277, 0.25
  %v3286 = vmul.f32 %v3278, -10.0
  %v3287 = vmul.f32 %v3279, -10.0
  %v3288 = vmul.f32 %v3280, -10.0
  %v3289 = vmul.f32 %v3281, -10.0
  %v3290 = vmul.f32 %v3282, -10.0
  %v3291 = vmul.f32 %v3283, -10.0
  %v3292 = vmul.f32 %v3284, -10.0
  %v3293 = vmul.f32 %v3285, -10.0
  %v3294 = vmul.f32 %v3286, 1.442695
  %v3295 = vpow.pop %v3294
  %v3296 = vmul.f32 %v3287, 1.442695
  %v3297 = vpow.pop %v3296
  %v3298 = vmul.f32 %v3288, 1.442695
  %v3299 = vpow.pop %v3298
  %v3300 = vmul.f32 %v3289, 1.442695
  %v3301 = vpow.pop %v3300
  %v3302 = vmul.f32 %v3290, 1.442695
  %v3303 = vpow.pop %v3302
  %v3304 = vmul.f32 %v3291, 1.442695
  %v3305 = vpow.pop %v3304
  %v3306 = vmul.f32 %v3292, 1.442695
  %v3307 = vpow.pop %v3306
  %v3308 = vmul.f32 %v3293, 1.442695
  %v3309 = vpow.pop %v3308
  %v3310 = vadd.f32 %v3295, 1.0
  %v3311 = vadd.f32 %v3297, 1.0
  %v3312 = vadd.f32 %v3299, 1.0
  %v3313 = vadd.f32 %v3301, 1.0
  %v3314 = vadd.f32 %v3303, 1.0
  %v3315 = vadd.f32 %v3305, 1.0
  %v3316 = vadd.f32 %v3307, 1.0
  %v3317 = vadd.f32 %v3309, 1.0
  %v3318 = vrcp.pop %v3310
  %v3319 = vmul.f32 1.0, %v3318
  %v3320 = vrcp.pop %v3311
  %v3321 = vmul.f32 1.0, %v3320
  %v3322 = vrcp.pop %v3312
  %v3323 = vmul.f32 1.0, %v3322
  %v3324 = vrcp.pop %v3313
  %v3325 = vmul.f32 1.0, %v3324
  %v3326 = vrcp.pop %v3314
  %v3327 = vmul.f32 1.0, %v3326
  %v3328 = vrcp.pop %v3315
  %v3329 = vmul.f32 1.0, %v3328
  %v3330 = vrcp.pop %v3316
  %v3331 = vmul.f32 1.0, %v3330
  %v3332 = vrcp.pop %v3317
  %v3333 = vmul.f32 1.0, %v3332
  %v3334 = vsub.f32 1.0, %v3319
  %v3335 = vsub.f32 1.0, %v3321
  %v3336 = vsub.f32 1.0, %v3323
  %v3337 = vsub.f32 1.0, %v3325
  %v3338 = vsub.f32 1.0, %v3327
  %v3339 = vsub.f32 1.0, %v3329
  %v3340 = vsub.f32 1.0, %v3331
  %v3341 = vsub.f32 1.0, %v3333
  %3343 = vset.pattern.permute.xlu0 0
  %3344 = vperm.xlu0 %3343, %v3319
  %v3345 = vpop.permute.xlu0 %3344
  %3348 = vset.pattern.permute.xlu0 0
  %3349 = vperm.xlu0 %3348, %v3321
  %v3350 = vpop.permute.xlu0 %3349
  %3353 = vset.pattern.permute.xlu0 0
  %3354 = vperm.xlu0 %3353, %v3323
  %v3355 = vpop.permute.xlu0 %3354
  %3358 = vset.pattern.permute.xlu0 0
  %3359 = vperm.xlu0 %3358, %v3325
  %v3360 = vpop.permute.xlu0 %3359
  %3363 = vset.pattern.permute.xlu0 0
  %3364 = vperm.xlu0 %3363, %v3327
  %v3365 = vpop.permute.xlu0 %3364
  %3368 = vset.pattern.permute.xlu0 0
  %3369 = vperm.xlu0 %3368, %v3329
  %v3370 = vpop.permute.xlu0 %3369
  %3373 = vset.pattern.permute.xlu0 0
  %3374 = vperm.xlu0 %3373, %v3331
  %v3375 = vpop.permute.xlu0 %3374
  %3378 = vset.pattern.permute.xlu0 0
  %3379 = vperm.xlu0 %3378, %v3333
  %v3380 = vpop.permute.xlu0 %3379
  %v3382 = vmul.f32 %v3345, %v3071
  %v3383 = vmul.f32 %v3350, %v3072
  %v3384 = vmul.f32 %v3355, %v3073
  %v3385 = vmul.f32 %v3360, %v3074
  %v3386 = vmul.f32 %v3365, %v3075
  %v3387 = vmul.f32 %v3370, %v3076
  %v3388 = vmul.f32 %v3375, %v3077
  %v3389 = vmul.f32 %v3380, %v3078
  %v3390 = vsel %vm49, %v3382, 0.0
  %v3391 = vrot.slane %v3390, 4
  %v3392 = vadd.f32 %v3390, %v3391
  %v3393 = vrot.slane %v3392, 2
  %v3394 = vadd.f32 %v3392, %v3393
  %v3395 = vrot.slane %v3394, 1
  %v3396 = vadd.f32 %v3394, %v3395
  %v3397 = vsel %vm49, %v3383, 0.0
  %v3398 = vrot.slane %v3397, 4
  %v3399 = vadd.f32 %v3397, %v3398
  %v3400 = vrot.slane %v3399, 2
  %v3401 = vadd.f32 %v3399, %v3400
  %v3402 = vrot.slane %v3401, 1
  %v3403 = vadd.f32 %v3401, %v3402
  %v3404 = vsel %vm49, %v3384, 0.0
  %v3405 = vrot.slane %v3404, 4
  %v3406 = vadd.f32 %v3404, %v3405
  %v3407 = vrot.slane %v3406, 2
  %v3408 = vadd.f32 %v3406, %v3407
  %v3409 = vrot.slane %v3408, 1
  %v3410 = vadd.f32 %v3408, %v3409
  %v3411 = vsel %vm49, %v3385, 0.0
  %v3412 = vrot.slane %v3411, 4
  %v3413 = vadd.f32 %v3411, %v3412
  %v3414 = vrot.slane %v3413, 2
  %v3415 = vadd.f32 %v3413, %v3414
  %v3416 = vrot.slane %v3415, 1
  %v3417 = vadd.f32 %v3415, %v3416
  %v3418 = vsel %vm49, %v3386, 0.0
  %v3419 = vrot.slane %v3418, 4
  %v3420 = vadd.f32 %v3418, %v3419
  %v3421 = vrot.slane %v3420, 2
  %v3422 = vadd.f32 %v3420, %v3421
  %v3423 = vrot.slane %v3422, 1
  %v3424 = vadd.f32 %v3422, %v3423
  %v3425 = vsel %vm49, %v3387, 0.0
  %v3426 = vrot.slane %v3425, 4
  %v3427 = vadd.f32 %v3425, %v3426
  %v3428 = vrot.slane %v3427, 2
  %v3429 = vadd.f32 %v3427, %v3428
  %v3430 = vrot.slane %v3429, 1
  %v3431 = vadd.f32 %v3429, %v3430
  %v3432 = vsel %vm49, %v3388, 0.0
  %v3433 = vrot.slane %v3432, 4
  %v3434 = vadd.f32 %v3432, %v3433
  %v3435 = vrot.slane %v3434, 2
  %v3436 = vadd.f32 %v3434, %v3435
  %v3437 = vrot.slane %v3436, 1
  %v3438 = vadd.f32 %v3436, %v3437
  %v3439 = vsel %vm49, %v3389, 0.0
  %v3440 = vrot.slane %v3439, 4
  %v3441 = vadd.f32 %v3439, %v3440
  %v3442 = vrot.slane %v3441, 2
  %v3443 = vadd.f32 %v3441, %v3442
  %v3444 = vrot.slane %v3443, 1
  %v3445 = vadd.f32 %v3443, %v3444
  %v3446 = vsel %vm89, %v3319, 0.0
  %v3447 = vrot.slane %v3446, 4
  %v3448 = vadd.f32 %v3446, %v3447
  %v3449 = vrot.slane %v3448, 2
  %v3450 = vadd.f32 %v3448, %v3449
  %v3451 = vrot.slane %v3450, 1
  %v3452 = vadd.f32 %v3450, %v3451
  %v3453 = vsel %vm89, %v3321, 0.0
  %v3454 = vrot.slane %v3453, 4
  %v3455 = vadd.f32 %v3453, %v3454
  %v3456 = vrot.slane %v3455, 2
  %v3457 = vadd.f32 %v3455, %v3456
  %v3458 = vrot.slane %v3457, 1
  %v3459 = vadd.f32 %v3457, %v3458
  %v3460 = vsel %vm89, %v3323, 0.0
  %v3461 = vrot.slane %v3460, 4
  %v3462 = vadd.f32 %v3460, %v3461
  %v3463 = vrot.slane %v3462, 2
  %v3464 = vadd.f32 %v3462, %v3463
  %v3465 = vrot.slane %v3464, 1
  %v3466 = vadd.f32 %v3464, %v3465
  %v3467 = vsel %vm89, %v3325, 0.0
  %v3468 = vrot.slane %v3467, 4
  %v3469 = vadd.f32 %v3467, %v3468
  %v3470 = vrot.slane %v3469, 2
  %v3471 = vadd.f32 %v3469, %v3470
  %v3472 = vrot.slane %v3471, 1
  %v3473 = vadd.f32 %v3471, %v3472
  %v3474 = vsel %vm89, %v3327, 0.0
  %v3475 = vrot.slane %v3474, 4
  %v3476 = vadd.f32 %v3474, %v3475
  %v3477 = vrot.slane %v3476, 2
  %v3478 = vadd.f32 %v3476, %v3477
  %v3479 = vrot.slane %v3478, 1
  %v3480 = vadd.f32 %v3478, %v3479
  %v3481 = vsel %vm89, %v3329, 0.0
  %v3482 = vrot.slane %v3481, 4
  %v3483 = vadd.f32 %v3481, %v3482
  %v3484 = vrot.slane %v3483, 2
  %v3485 = vadd.f32 %v3483, %v3484
  %v3486 = vrot.slane %v3485, 1
  %v3487 = vadd.f32 %v3485, %v3486
  %v3488 = vsel %vm89, %v3331, 0.0
  %v3489 = vrot.slane %v3488, 4
  %v3490 = vadd.f32 %v3488, %v3489
  %v3491 = vrot.slane %v3490, 2
  %v3492 = vadd.f32 %v3490, %v3491
  %v3493 = vrot.slane %v3492, 1
  %v3494 = vadd.f32 %v3492, %v3493
  %v3495 = vsel %vm89, %v3333, 0.0
  %v3496 = vrot.slane %v3495, 4
  %v3497 = vadd.f32 %v3495, %v3496
  %v3498 = vrot.slane %v3497, 2
  %v3499 = vadd.f32 %v3497, %v3498
  %v3500 = vrot.slane %v3499, 1
  %v3501 = vadd.f32 %v3499, %v3500
  %v3502 = vadd.f32 %v3452, 1e-08
  %v3503 = vadd.f32 %v3459, 1e-08
  %v3504 = vadd.f32 %v3466, 1e-08
  %v3505 = vadd.f32 %v3473, 1e-08
  %v3506 = vadd.f32 %v3480, 1e-08
  %v3507 = vadd.f32 %v3487, 1e-08
  %v3508 = vadd.f32 %v3494, 1e-08
  %v3509 = vadd.f32 %v3501, 1e-08
  %3511 = vset.pattern.permute.xlu0 0
  %3512 = vperm.xlu0 %3511, %v3502
  %v3513 = vpop.permute.xlu0 %3512
  %3516 = vset.pattern.permute.xlu0 0
  %3517 = vperm.xlu0 %3516, %v3503
  %v3518 = vpop.permute.xlu0 %3517
  %3521 = vset.pattern.permute.xlu0 0
  %3522 = vperm.xlu0 %3521, %v3504
  %v3523 = vpop.permute.xlu0 %3522
  %3526 = vset.pattern.permute.xlu0 0
  %3527 = vperm.xlu0 %3526, %v3505
  %v3528 = vpop.permute.xlu0 %3527
  %3531 = vset.pattern.permute.xlu0 0
  %3532 = vperm.xlu0 %3531, %v3506
  %v3533 = vpop.permute.xlu0 %3532
  %3536 = vset.pattern.permute.xlu0 0
  %3537 = vperm.xlu0 %3536, %v3507
  %v3538 = vpop.permute.xlu0 %3537
  %3541 = vset.pattern.permute.xlu0 0
  %3542 = vperm.xlu0 %3541, %v3508
  %v3543 = vpop.permute.xlu0 %3542
  %3546 = vset.pattern.permute.xlu0 0
  %3547 = vperm.xlu0 %3546, %v3509
  %v3548 = vpop.permute.xlu0 %3547
  %v3550 = vrcp.pop %v3513
  %v3551 = vmul.f32 %v3396, %v3550
  %v3552 = vrcp.pop %v3518
  %v3553 = vmul.f32 %v3403, %v3552
  %v3554 = vrcp.pop %v3523
  %v3555 = vmul.f32 %v3410, %v3554
  %v3556 = vrcp.pop %v3528
  %v3557 = vmul.f32 %v3417, %v3556
  %v3558 = vrcp.pop %v3533
  %v3559 = vmul.f32 %v3424, %v3558
  %v3560 = vrcp.pop %v3538
  %v3561 = vmul.f32 %v3431, %v3560
  %v3562 = vrcp.pop %v3543
  %v3563 = vmul.f32 %v3438, %v3562
  %v3564 = vrcp.pop %v3548
  %v3565 = vmul.f32 %v3445, %v3564
  %3567 = vset.pattern.permute.xlu0 0
  %3568 = vperm.xlu0 %3567, %v3334
  %v3569 = vpop.permute.xlu0 %3568
  %3572 = vset.pattern.permute.xlu0 0
  %3573 = vperm.xlu0 %3572, %v3335
  %v3574 = vpop.permute.xlu0 %3573
  %3577 = vset.pattern.permute.xlu0 0
  %3578 = vperm.xlu0 %3577, %v3336
  %v3579 = vpop.permute.xlu0 %3578
  %3582 = vset.pattern.permute.xlu0 0
  %3583 = vperm.xlu0 %3582, %v3337
  %v3584 = vpop.permute.xlu0 %3583
  %3587 = vset.pattern.permute.xlu0 0
  %3588 = vperm.xlu0 %3587, %v3338
  %v3589 = vpop.permute.xlu0 %3588
  %3592 = vset.pattern.permute.xlu0 0
  %3593 = vperm.xlu0 %3592, %v3339
  %v3594 = vpop.permute.xlu0 %3593
  %3597 = vset.pattern.permute.xlu0 0
  %3598 = vperm.xlu0 %3597, %v3340
  %v3599 = vpop.permute.xlu0 %3598
  %3602 = vset.pattern.permute.xlu0 0
  %3603 = vperm.xlu0 %3602, %v3341
  %v3604 = vpop.permute.xlu0 %3603
  %v3606 = vmul.f32 %v3569, %v3071
  %v3607 = vmul.f32 %v3574, %v3072
  %v3608 = vmul.f32 %v3579, %v3073
  %v3609 = vmul.f32 %v3584, %v3074
  %v3610 = vmul.f32 %v3589, %v3075
  %v3611 = vmul.f32 %v3594, %v3076
  %v3612 = vmul.f32 %v3599, %v3077
  %v3613 = vmul.f32 %v3604, %v3078
  %v3614 = vsel %vm49, %v3606, 0.0
  %v3615 = vrot.slane %v3614, 4
  %v3616 = vadd.f32 %v3614, %v3615
  %v3617 = vrot.slane %v3616, 2
  %v3618 = vadd.f32 %v3616, %v3617
  %v3619 = vrot.slane %v3618, 1
  %v3620 = vadd.f32 %v3618, %v3619
  %v3621 = vsel %vm49, %v3607, 0.0
  %v3622 = vrot.slane %v3621, 4
  %v3623 = vadd.f32 %v3621, %v3622
  %v3624 = vrot.slane %v3623, 2
  %v3625 = vadd.f32 %v3623, %v3624
  %v3626 = vrot.slane %v3625, 1
  %v3627 = vadd.f32 %v3625, %v3626
  %v3628 = vsel %vm49, %v3608, 0.0
  %v3629 = vrot.slane %v3628, 4
  %v3630 = vadd.f32 %v3628, %v3629
  %v3631 = vrot.slane %v3630, 2
  %v3632 = vadd.f32 %v3630, %v3631
  %v3633 = vrot.slane %v3632, 1
  %v3634 = vadd.f32 %v3632, %v3633
  %v3635 = vsel %vm49, %v3609, 0.0
  %v3636 = vrot.slane %v3635, 4
  %v3637 = vadd.f32 %v3635, %v3636
  %v3638 = vrot.slane %v3637, 2
  %v3639 = vadd.f32 %v3637, %v3638
  %v3640 = vrot.slane %v3639, 1
  %v3641 = vadd.f32 %v3639, %v3640
  %v3642 = vsel %vm49, %v3610, 0.0
  %v3643 = vrot.slane %v3642, 4
  %v3644 = vadd.f32 %v3642, %v3643
  %v3645 = vrot.slane %v3644, 2
  %v3646 = vadd.f32 %v3644, %v3645
  %v3647 = vrot.slane %v3646, 1
  %v3648 = vadd.f32 %v3646, %v3647
  %v3649 = vsel %vm49, %v3611, 0.0
  %v3650 = vrot.slane %v3649, 4
  %v3651 = vadd.f32 %v3649, %v3650
  %v3652 = vrot.slane %v3651, 2
  %v3653 = vadd.f32 %v3651, %v3652
  %v3654 = vrot.slane %v3653, 1
  %v3655 = vadd.f32 %v3653, %v3654
  %v3656 = vsel %vm49, %v3612, 0.0
  %v3657 = vrot.slane %v3656, 4
  %v3658 = vadd.f32 %v3656, %v3657
  %v3659 = vrot.slane %v3658, 2
  %v3660 = vadd.f32 %v3658, %v3659
  %v3661 = vrot.slane %v3660, 1
  %v3662 = vadd.f32 %v3660, %v3661
  %v3663 = vsel %vm49, %v3613, 0.0
  %v3664 = vrot.slane %v3663, 4
  %v3665 = vadd.f32 %v3663, %v3664
  %v3666 = vrot.slane %v3665, 2
  %v3667 = vadd.f32 %v3665, %v3666
  %v3668 = vrot.slane %v3667, 1
  %v3669 = vadd.f32 %v3667, %v3668
  %v3670 = vsel %vm89, %v3334, 0.0
  %v3671 = vrot.slane %v3670, 4
  %v3672 = vadd.f32 %v3670, %v3671
  %v3673 = vrot.slane %v3672, 2
  %v3674 = vadd.f32 %v3672, %v3673
  %v3675 = vrot.slane %v3674, 1
  %v3676 = vadd.f32 %v3674, %v3675
  %v3677 = vsel %vm89, %v3335, 0.0
  %v3678 = vrot.slane %v3677, 4
  %v3679 = vadd.f32 %v3677, %v3678
  %v3680 = vrot.slane %v3679, 2
  %v3681 = vadd.f32 %v3679, %v3680
  %v3682 = vrot.slane %v3681, 1
  %v3683 = vadd.f32 %v3681, %v3682
  %v3684 = vsel %vm89, %v3336, 0.0
  %v3685 = vrot.slane %v3684, 4
  %v3686 = vadd.f32 %v3684, %v3685
  %v3687 = vrot.slane %v3686, 2
  %v3688 = vadd.f32 %v3686, %v3687
  %v3689 = vrot.slane %v3688, 1
  %v3690 = vadd.f32 %v3688, %v3689
  %v3691 = vsel %vm89, %v3337, 0.0
  %v3692 = vrot.slane %v3691, 4
  %v3693 = vadd.f32 %v3691, %v3692
  %v3694 = vrot.slane %v3693, 2
  %v3695 = vadd.f32 %v3693, %v3694
  %v3696 = vrot.slane %v3695, 1
  %v3697 = vadd.f32 %v3695, %v3696
  %v3698 = vsel %vm89, %v3338, 0.0
  %v3699 = vrot.slane %v3698, 4
  %v3700 = vadd.f32 %v3698, %v3699
  %v3701 = vrot.slane %v3700, 2
  %v3702 = vadd.f32 %v3700, %v3701
  %v3703 = vrot.slane %v3702, 1
  %v3704 = vadd.f32 %v3702, %v3703
  %v3705 = vsel %vm89, %v3339, 0.0
  %v3706 = vrot.slane %v3705, 4
  %v3707 = vadd.f32 %v3705, %v3706
  %v3708 = vrot.slane %v3707, 2
  %v3709 = vadd.f32 %v3707, %v3708
  %v3710 = vrot.slane %v3709, 1
  %v3711 = vadd.f32 %v3709, %v3710
  %v3712 = vsel %vm89, %v3340, 0.0
  %v3713 = vrot.slane %v3712, 4
  %v3714 = vadd.f32 %v3712, %v3713
  %v3715 = vrot.slane %v3714, 2
  %v3716 = vadd.f32 %v3714, %v3715
  %v3717 = vrot.slane %v3716, 1
  %v3718 = vadd.f32 %v3716, %v3717
  %v3719 = vsel %vm89, %v3341, 0.0
  %v3720 = vrot.slane %v3719, 4
  %v3721 = vadd.f32 %v3719, %v3720
  %v3722 = vrot.slane %v3721, 2
  %v3723 = vadd.f32 %v3721, %v3722
  %v3724 = vrot.slane %v3723, 1
  %v3725 = vadd.f32 %v3723, %v3724
  %v3726 = vadd.f32 %v3676, 1e-08
  %v3727 = vadd.f32 %v3683, 1e-08
  %v3728 = vadd.f32 %v3690, 1e-08
  %v3729 = vadd.f32 %v3697, 1e-08
  %v3730 = vadd.f32 %v3704, 1e-08
  %v3731 = vadd.f32 %v3711, 1e-08
  %v3732 = vadd.f32 %v3718, 1e-08
  %v3733 = vadd.f32 %v3725, 1e-08
  %3735 = vset.pattern.permute.xlu0 0
  %3736 = vperm.xlu0 %3735, %v3726
  %v3737 = vpop.permute.xlu0 %3736
  %3740 = vset.pattern.permute.xlu0 0
  %3741 = vperm.xlu0 %3740, %v3727
  %v3742 = vpop.permute.xlu0 %3741
  %3745 = vset.pattern.permute.xlu0 0
  %3746 = vperm.xlu0 %3745, %v3728
  %v3747 = vpop.permute.xlu0 %3746
  %3750 = vset.pattern.permute.xlu0 0
  %3751 = vperm.xlu0 %3750, %v3729
  %v3752 = vpop.permute.xlu0 %3751
  %3755 = vset.pattern.permute.xlu0 0
  %3756 = vperm.xlu0 %3755, %v3730
  %v3757 = vpop.permute.xlu0 %3756
  %3760 = vset.pattern.permute.xlu0 0
  %3761 = vperm.xlu0 %3760, %v3731
  %v3762 = vpop.permute.xlu0 %3761
  %3765 = vset.pattern.permute.xlu0 0
  %3766 = vperm.xlu0 %3765, %v3732
  %v3767 = vpop.permute.xlu0 %3766
  %3770 = vset.pattern.permute.xlu0 0
  %3771 = vperm.xlu0 %3770, %v3733
  %v3772 = vpop.permute.xlu0 %3771
  %v3774 = vrcp.pop %v3737
  %v3775 = vmul.f32 %v3620, %v3774
  %v3776 = vrcp.pop %v3742
  %v3777 = vmul.f32 %v3627, %v3776
  %v3778 = vrcp.pop %v3747
  %v3779 = vmul.f32 %v3634, %v3778
  %v3780 = vrcp.pop %v3752
  %v3781 = vmul.f32 %v3641, %v3780
  %v3782 = vrcp.pop %v3757
  %v3783 = vmul.f32 %v3648, %v3782
  %v3784 = vrcp.pop %v3762
  %v3785 = vmul.f32 %v3655, %v3784
  %v3786 = vrcp.pop %v3767
  %v3787 = vmul.f32 %v3662, %v3786
  %v3788 = vrcp.pop %v3772
  %v3789 = vmul.f32 %v3669, %v3788
  %v3798 = vsel %vm762, %v3553, %v3551
  %v3799 = vsel %vm764, %v3555, %v3798
  %v3800 = vsel %vm766, %v3557, %v3799
  %v3801 = vsel %vm768, %v3559, %v3800
  %v3802 = vsel %vm770, %v3561, %v3801
  %v3803 = vsel %vm772, %v3563, %v3802
  %v3804 = vsel %vm774, %v3565, %v3803
  %s3806 = scalar_lea.vmem [#allocation2], 32
  %3807 = vst.msk [vmem:[%s3806] sm:$0xff] %vm777, %v3804
  %v3816 = vsel %vm762, %v3777, %v3775
  %v3817 = vsel %vm764, %v3779, %v3816
  %v3818 = vsel %vm766, %v3781, %v3817
  %v3819 = vsel %vm768, %v3783, %v3818
  %v3820 = vsel %vm770, %v3785, %v3819
  %v3821 = vsel %vm772, %v3787, %v3820
  %v3822 = vsel %vm774, %v3789, %v3821
  %3823 = vrot.lane.b32.xlu0 %v3822, 32
  %v3824 = vpop.permute.xlu0 %3823
  %3826 = vst.msk [vmem:[%s3806] sm:$0xff] %vm797, %v3824
  %s3827 = scalar_lea.vmem %s0, 20
  %v3828 = vld [vmem:[%s3827] sm:$0xf]
  %v3829 = vld [vmem:[%s3827 + $0x20] sm:$0xf]
  %v3830 = vld [vmem:[%s3827 + $0x40] sm:$0xf]
  %v3831 = vld [vmem:[%s3827 + $0x60] sm:$0xf]
  %v3832 = vld [vmem:[%s3827 + $0x80] sm:$0xf]
  %v3833 = vld [vmem:[%s3827 + $0xa0] sm:$0xf]
  %v3834 = vld [vmem:[%s3827 + $0xc0] sm:$0xf]
  %v3835 = vld [vmem:[%s3827 + $0xe0] sm:$0xf]
  %v3836 = vmul.f32 %v3828, %v39
  %v3837 = vmul.f32 %v3829, %v39
  %v3838 = vmul.f32 %v3830, %v39
  %v3839 = vmul.f32 %v3831, %v39
  %v3840 = vmul.f32 %v3832, %v39
  %v3841 = vmul.f32 %v3833, %v39
  %v3842 = vmul.f32 %v3834, %v39
  %v3843 = vmul.f32 %v3835, %v39
  %v3844 = vsel %vm49, %v3836, 0.0
  %3845 = vadd.xlane.f32.xlu0 %v3844
  %v3846 = vpop.xlane.xlu0 %3845
  %v3847 = vsel %vm49, %v3837, 0.0
  %3848 = vadd.xlane.f32.xlu0 %v3847
  %v3849 = vpop.xlane.xlu0 %3848
  %v3850 = vsel %vm49, %v3838, 0.0
  %3851 = vadd.xlane.f32.xlu0 %v3850
  %v3852 = vpop.xlane.xlu0 %3851
  %v3853 = vsel %vm49, %v3839, 0.0
  %3854 = vadd.xlane.f32.xlu0 %v3853
  %v3855 = vpop.xlane.xlu0 %3854
  %v3856 = vsel %vm49, %v3840, 0.0
  %3857 = vadd.xlane.f32.xlu0 %v3856
  %v3858 = vpop.xlane.xlu0 %3857
  %v3859 = vsel %vm49, %v3841, 0.0
  %3860 = vadd.xlane.f32.xlu0 %v3859
  %v3861 = vpop.xlane.xlu0 %3860
  %v3862 = vsel %vm49, %v3842, 0.0
  %3863 = vadd.xlane.f32.xlu0 %v3862
  %v3864 = vpop.xlane.xlu0 %3863
  %v3865 = vsel %vm49, %v3843, 0.0
  %3866 = vadd.xlane.f32.xlu0 %v3865
  %v3867 = vpop.xlane.xlu0 %3866
  %v3868 = vld [vmem:[#allocation4] sm:$0x1]
  %v3870 = vlaneseq
  %v3871 = vshrl.u32 %v3870, 7
  %v3872 = vsub.s32 0, %v3871
  %v3873 = vrot.slane %v3868, %v3872
  %v3875 = vadd.f32 %v3846, %v3873
  %v3876 = vadd.f32 %v3849, %v3873
  %v3877 = vadd.f32 %v3852, %v3873
  %v3878 = vadd.f32 %v3855, %v3873
  %v3879 = vadd.f32 %v3858, %v3873
  %v3880 = vadd.f32 %v3861, %v3873
  %v3881 = vadd.f32 %v3864, %v3873
  %v3882 = vadd.f32 %v3867, %v3873
  %v3883 = vsel %vm89, %v3875, -inf
  %v3884 = vrot.slane %v3883, 4
  %v3885 = vmax.f32 %v3883, %v3884
  %v3886 = vrot.slane %v3885, 2
  %v3887 = vmax.f32 %v3885, %v3886
  %v3888 = vrot.slane %v3887, 1
  %v3889 = vmax.f32 %v3887, %v3888
  %v3890 = vsel %vm89, %v3876, -inf
  %v3891 = vrot.slane %v3890, 4
  %v3892 = vmax.f32 %v3890, %v3891
  %v3893 = vrot.slane %v3892, 2
  %v3894 = vmax.f32 %v3892, %v3893
  %v3895 = vrot.slane %v3894, 1
  %v3896 = vmax.f32 %v3894, %v3895
  %v3897 = vsel %vm89, %v3877, -inf
  %v3898 = vrot.slane %v3897, 4
  %v3899 = vmax.f32 %v3897, %v3898
  %v3900 = vrot.slane %v3899, 2
  %v3901 = vmax.f32 %v3899, %v3900
  %v3902 = vrot.slane %v3901, 1
  %v3903 = vmax.f32 %v3901, %v3902
  %v3904 = vsel %vm89, %v3878, -inf
  %v3905 = vrot.slane %v3904, 4
  %v3906 = vmax.f32 %v3904, %v3905
  %v3907 = vrot.slane %v3906, 2
  %v3908 = vmax.f32 %v3906, %v3907
  %v3909 = vrot.slane %v3908, 1
  %v3910 = vmax.f32 %v3908, %v3909
  %v3911 = vsel %vm89, %v3879, -inf
  %v3912 = vrot.slane %v3911, 4
  %v3913 = vmax.f32 %v3911, %v3912
  %v3914 = vrot.slane %v3913, 2
  %v3915 = vmax.f32 %v3913, %v3914
  %v3916 = vrot.slane %v3915, 1
  %v3917 = vmax.f32 %v3915, %v3916
  %v3918 = vsel %vm89, %v3880, -inf
  %v3919 = vrot.slane %v3918, 4
  %v3920 = vmax.f32 %v3918, %v3919
  %v3921 = vrot.slane %v3920, 2
  %v3922 = vmax.f32 %v3920, %v3921
  %v3923 = vrot.slane %v3922, 1
  %v3924 = vmax.f32 %v3922, %v3923
  %v3925 = vsel %vm89, %v3881, -inf
  %v3926 = vrot.slane %v3925, 4
  %v3927 = vmax.f32 %v3925, %v3926
  %v3928 = vrot.slane %v3927, 2
  %v3929 = vmax.f32 %v3927, %v3928
  %v3930 = vrot.slane %v3929, 1
  %v3931 = vmax.f32 %v3929, %v3930
  %v3932 = vsel %vm89, %v3882, -inf
  %v3933 = vrot.slane %v3932, 4
  %v3934 = vmax.f32 %v3932, %v3933
  %v3935 = vrot.slane %v3934, 2
  %v3936 = vmax.f32 %v3934, %v3935
  %v3937 = vrot.slane %v3936, 1
  %v3938 = vmax.f32 %v3936, %v3937
  %v3939 = vsub.f32 %v3875, %v3889
  %v3940 = vsub.f32 %v3876, %v3896
  %v3941 = vsub.f32 %v3877, %v3903
  %v3942 = vsub.f32 %v3878, %v3910
  %v3943 = vsub.f32 %v3879, %v3917
  %v3944 = vsub.f32 %v3880, %v3924
  %v3945 = vsub.f32 %v3881, %v3931
  %v3946 = vsub.f32 %v3882, %v3938
  %v3947 = vmul.f32 %v3939, 1.442695
  %v3948 = vpow.pop %v3947
  %v3949 = vmul.f32 %v3940, 1.442695
  %v3950 = vpow.pop %v3949
  %v3951 = vmul.f32 %v3941, 1.442695
  %v3952 = vpow.pop %v3951
  %v3953 = vmul.f32 %v3942, 1.442695
  %v3954 = vpow.pop %v3953
  %v3955 = vmul.f32 %v3943, 1.442695
  %v3956 = vpow.pop %v3955
  %v3957 = vmul.f32 %v3944, 1.442695
  %v3958 = vpow.pop %v3957
  %v3959 = vmul.f32 %v3945, 1.442695
  %v3960 = vpow.pop %v3959
  %v3961 = vmul.f32 %v3946, 1.442695
  %v3962 = vpow.pop %v3961
  %v3963 = vsel %vm89, %v3948, 0.0
  %v3964 = vrot.slane %v3963, 4
  %v3965 = vadd.f32 %v3963, %v3964
  %v3966 = vrot.slane %v3965, 2
  %v3967 = vadd.f32 %v3965, %v3966
  %v3968 = vrot.slane %v3967, 1
  %v3969 = vadd.f32 %v3967, %v3968
  %v3970 = vsel %vm89, %v3950, 0.0
  %v3971 = vrot.slane %v3970, 4
  %v3972 = vadd.f32 %v3970, %v3971
  %v3973 = vrot.slane %v3972, 2
  %v3974 = vadd.f32 %v3972, %v3973
  %v3975 = vrot.slane %v3974, 1
  %v3976 = vadd.f32 %v3974, %v3975
  %v3977 = vsel %vm89, %v3952, 0.0
  %v3978 = vrot.slane %v3977, 4
  %v3979 = vadd.f32 %v3977, %v3978
  %v3980 = vrot.slane %v3979, 2
  %v3981 = vadd.f32 %v3979, %v3980
  %v3982 = vrot.slane %v3981, 1
  %v3983 = vadd.f32 %v3981, %v3982
  %v3984 = vsel %vm89, %v3954, 0.0
  %v3985 = vrot.slane %v3984, 4
  %v3986 = vadd.f32 %v3984, %v3985
  %v3987 = vrot.slane %v3986, 2
  %v3988 = vadd.f32 %v3986, %v3987
  %v3989 = vrot.slane %v3988, 1
  %v3990 = vadd.f32 %v3988, %v3989
  %v3991 = vsel %vm89, %v3956, 0.0
  %v3992 = vrot.slane %v3991, 4
  %v3993 = vadd.f32 %v3991, %v3992
  %v3994 = vrot.slane %v3993, 2
  %v3995 = vadd.f32 %v3993, %v3994
  %v3996 = vrot.slane %v3995, 1
  %v3997 = vadd.f32 %v3995, %v3996
  %v3998 = vsel %vm89, %v3958, 0.0
  %v3999 = vrot.slane %v3998, 4
  %v4000 = vadd.f32 %v3998, %v3999
  %v4001 = vrot.slane %v4000, 2
  %v4002 = vadd.f32 %v4000, %v4001
  %v4003 = vrot.slane %v4002, 1
  %v4004 = vadd.f32 %v4002, %v4003
  %v4005 = vsel %vm89, %v3960, 0.0
  %v4006 = vrot.slane %v4005, 4
  %v4007 = vadd.f32 %v4005, %v4006
  %v4008 = vrot.slane %v4007, 2
  %v4009 = vadd.f32 %v4007, %v4008
  %v4010 = vrot.slane %v4009, 1
  %v4011 = vadd.f32 %v4009, %v4010
  %v4012 = vsel %vm89, %v3962, 0.0
  %v4013 = vrot.slane %v4012, 4
  %v4014 = vadd.f32 %v4012, %v4013
  %v4015 = vrot.slane %v4014, 2
  %v4016 = vadd.f32 %v4014, %v4015
  %v4017 = vrot.slane %v4016, 1
  %v4018 = vadd.f32 %v4016, %v4017
  %v4019 = vrcp.pop %v3969
  %v4020 = vmul.f32 %v3948, %v4019
  %v4021 = vrcp.pop %v3976
  %v4022 = vmul.f32 %v3950, %v4021
  %v4023 = vrcp.pop %v3983
  %v4024 = vmul.f32 %v3952, %v4023
  %v4025 = vrcp.pop %v3990
  %v4026 = vmul.f32 %v3954, %v4025
  %v4027 = vrcp.pop %v3997
  %v4028 = vmul.f32 %v3956, %v4027
  %v4029 = vrcp.pop %v4004
  %v4030 = vmul.f32 %v3958, %v4029
  %v4031 = vrcp.pop %v4011
  %v4032 = vmul.f32 %v3960, %v4031
  %v4033 = vrcp.pop %v4018
  %v4034 = vmul.f32 %v3962, %v4033
  %v4035 = vsub.f32 %v4020, 0.25
  %v4036 = vsub.f32 %v4022, 0.25
  %v4037 = vsub.f32 %v4024, 0.25
  %v4038 = vsub.f32 %v4026, 0.25
  %v4039 = vsub.f32 %v4028, 0.25
  %v4040 = vsub.f32 %v4030, 0.25
  %v4041 = vsub.f32 %v4032, 0.25
  %v4042 = vsub.f32 %v4034, 0.25
  %v4043 = vmul.f32 %v4035, -10.0
  %v4044 = vmul.f32 %v4036, -10.0
  %v4045 = vmul.f32 %v4037, -10.0
  %v4046 = vmul.f32 %v4038, -10.0
  %v4047 = vmul.f32 %v4039, -10.0
  %v4048 = vmul.f32 %v4040, -10.0
  %v4049 = vmul.f32 %v4041, -10.0
  %v4050 = vmul.f32 %v4042, -10.0
  %v4051 = vmul.f32 %v4043, 1.442695
  %v4052 = vpow.pop %v4051
  %v4053 = vmul.f32 %v4044, 1.442695
  %v4054 = vpow.pop %v4053
  %v4055 = vmul.f32 %v4045, 1.442695
  %v4056 = vpow.pop %v4055
  %v4057 = vmul.f32 %v4046, 1.442695
  %v4058 = vpow.pop %v4057
  %v4059 = vmul.f32 %v4047, 1.442695
  %v4060 = vpow.pop %v4059
  %v4061 = vmul.f32 %v4048, 1.442695
  %v4062 = vpow.pop %v4061
  %v4063 = vmul.f32 %v4049, 1.442695
  %v4064 = vpow.pop %v4063
  %v4065 = vmul.f32 %v4050, 1.442695
  %v4066 = vpow.pop %v4065
  %v4067 = vadd.f32 %v4052, 1.0
  %v4068 = vadd.f32 %v4054, 1.0
  %v4069 = vadd.f32 %v4056, 1.0
  %v4070 = vadd.f32 %v4058, 1.0
  %v4071 = vadd.f32 %v4060, 1.0
  %v4072 = vadd.f32 %v4062, 1.0
  %v4073 = vadd.f32 %v4064, 1.0
  %v4074 = vadd.f32 %v4066, 1.0
  %v4075 = vrcp.pop %v4067
  %v4076 = vmul.f32 1.0, %v4075
  %v4077 = vrcp.pop %v4068
  %v4078 = vmul.f32 1.0, %v4077
  %v4079 = vrcp.pop %v4069
  %v4080 = vmul.f32 1.0, %v4079
  %v4081 = vrcp.pop %v4070
  %v4082 = vmul.f32 1.0, %v4081
  %v4083 = vrcp.pop %v4071
  %v4084 = vmul.f32 1.0, %v4083
  %v4085 = vrcp.pop %v4072
  %v4086 = vmul.f32 1.0, %v4085
  %v4087 = vrcp.pop %v4073
  %v4088 = vmul.f32 1.0, %v4087
  %v4089 = vrcp.pop %v4074
  %v4090 = vmul.f32 1.0, %v4089
  %v4091 = vsub.f32 1.0, %v4076
  %v4092 = vsub.f32 1.0, %v4078
  %v4093 = vsub.f32 1.0, %v4080
  %v4094 = vsub.f32 1.0, %v4082
  %v4095 = vsub.f32 1.0, %v4084
  %v4096 = vsub.f32 1.0, %v4086
  %v4097 = vsub.f32 1.0, %v4088
  %v4098 = vsub.f32 1.0, %v4090
  %4100 = vset.pattern.permute.xlu0 0
  %4101 = vperm.xlu0 %4100, %v4076
  %v4102 = vpop.permute.xlu0 %4101
  %4105 = vset.pattern.permute.xlu0 0
  %4106 = vperm.xlu0 %4105, %v4078
  %v4107 = vpop.permute.xlu0 %4106
  %4110 = vset.pattern.permute.xlu0 0
  %4111 = vperm.xlu0 %4110, %v4080
  %v4112 = vpop.permute.xlu0 %4111
  %4115 = vset.pattern.permute.xlu0 0
  %4116 = vperm.xlu0 %4115, %v4082
  %v4117 = vpop.permute.xlu0 %4116
  %4120 = vset.pattern.permute.xlu0 0
  %4121 = vperm.xlu0 %4120, %v4084
  %v4122 = vpop.permute.xlu0 %4121
  %4125 = vset.pattern.permute.xlu0 0
  %4126 = vperm.xlu0 %4125, %v4086
  %v4127 = vpop.permute.xlu0 %4126
  %4130 = vset.pattern.permute.xlu0 0
  %4131 = vperm.xlu0 %4130, %v4088
  %v4132 = vpop.permute.xlu0 %4131
  %4135 = vset.pattern.permute.xlu0 0
  %4136 = vperm.xlu0 %4135, %v4090
  %v4137 = vpop.permute.xlu0 %4136
  %v4139 = vmul.f32 %v4102, %v3828
  %v4140 = vmul.f32 %v4107, %v3829
  %v4141 = vmul.f32 %v4112, %v3830
  %v4142 = vmul.f32 %v4117, %v3831
  %v4143 = vmul.f32 %v4122, %v3832
  %v4144 = vmul.f32 %v4127, %v3833
  %v4145 = vmul.f32 %v4132, %v3834
  %v4146 = vmul.f32 %v4137, %v3835
  %v4147 = vsel %vm49, %v4139, 0.0
  %v4148 = vrot.slane %v4147, 4
  %v4149 = vadd.f32 %v4147, %v4148
  %v4150 = vrot.slane %v4149, 2
  %v4151 = vadd.f32 %v4149, %v4150
  %v4152 = vrot.slane %v4151, 1
  %v4153 = vadd.f32 %v4151, %v4152
  %v4154 = vsel %vm49, %v4140, 0.0
  %v4155 = vrot.slane %v4154, 4
  %v4156 = vadd.f32 %v4154, %v4155
  %v4157 = vrot.slane %v4156, 2
  %v4158 = vadd.f32 %v4156, %v4157
  %v4159 = vrot.slane %v4158, 1
  %v4160 = vadd.f32 %v4158, %v4159
  %v4161 = vsel %vm49, %v4141, 0.0
  %v4162 = vrot.slane %v4161, 4
  %v4163 = vadd.f32 %v4161, %v4162
  %v4164 = vrot.slane %v4163, 2
  %v4165 = vadd.f32 %v4163, %v4164
  %v4166 = vrot.slane %v4165, 1
  %v4167 = vadd.f32 %v4165, %v4166
  %v4168 = vsel %vm49, %v4142, 0.0
  %v4169 = vrot.slane %v4168, 4
  %v4170 = vadd.f32 %v4168, %v4169
  %v4171 = vrot.slane %v4170, 2
  %v4172 = vadd.f32 %v4170, %v4171
  %v4173 = vrot.slane %v4172, 1
  %v4174 = vadd.f32 %v4172, %v4173
  %v4175 = vsel %vm49, %v4143, 0.0
  %v4176 = vrot.slane %v4175, 4
  %v4177 = vadd.f32 %v4175, %v4176
  %v4178 = vrot.slane %v4177, 2
  %v4179 = vadd.f32 %v4177, %v4178
  %v4180 = vrot.slane %v4179, 1
  %v4181 = vadd.f32 %v4179, %v4180
  %v4182 = vsel %vm49, %v4144, 0.0
  %v4183 = vrot.slane %v4182, 4
  %v4184 = vadd.f32 %v4182, %v4183
  %v4185 = vrot.slane %v4184, 2
  %v4186 = vadd.f32 %v4184, %v4185
  %v4187 = vrot.slane %v4186, 1
  %v4188 = vadd.f32 %v4186, %v4187
  %v4189 = vsel %vm49, %v4145, 0.0
  %v4190 = vrot.slane %v4189, 4
  %v4191 = vadd.f32 %v4189, %v4190
  %v4192 = vrot.slane %v4191, 2
  %v4193 = vadd.f32 %v4191, %v4192
  %v4194 = vrot.slane %v4193, 1
  %v4195 = vadd.f32 %v4193, %v4194
  %v4196 = vsel %vm49, %v4146, 0.0
  %v4197 = vrot.slane %v4196, 4
  %v4198 = vadd.f32 %v4196, %v4197
  %v4199 = vrot.slane %v4198, 2
  %v4200 = vadd.f32 %v4198, %v4199
  %v4201 = vrot.slane %v4200, 1
  %v4202 = vadd.f32 %v4200, %v4201
  %v4203 = vsel %vm89, %v4076, 0.0
  %v4204 = vrot.slane %v4203, 4
  %v4205 = vadd.f32 %v4203, %v4204
  %v4206 = vrot.slane %v4205, 2
  %v4207 = vadd.f32 %v4205, %v4206
  %v4208 = vrot.slane %v4207, 1
  %v4209 = vadd.f32 %v4207, %v4208
  %v4210 = vsel %vm89, %v4078, 0.0
  %v4211 = vrot.slane %v4210, 4
  %v4212 = vadd.f32 %v4210, %v4211
  %v4213 = vrot.slane %v4212, 2
  %v4214 = vadd.f32 %v4212, %v4213
  %v4215 = vrot.slane %v4214, 1
  %v4216 = vadd.f32 %v4214, %v4215
  %v4217 = vsel %vm89, %v4080, 0.0
  %v4218 = vrot.slane %v4217, 4
  %v4219 = vadd.f32 %v4217, %v4218
  %v4220 = vrot.slane %v4219, 2
  %v4221 = vadd.f32 %v4219, %v4220
  %v4222 = vrot.slane %v4221, 1
  %v4223 = vadd.f32 %v4221, %v4222
  %v4224 = vsel %vm89, %v4082, 0.0
  %v4225 = vrot.slane %v4224, 4
  %v4226 = vadd.f32 %v4224, %v4225
  %v4227 = vrot.slane %v4226, 2
  %v4228 = vadd.f32 %v4226, %v4227
  %v4229 = vrot.slane %v4228, 1
  %v4230 = vadd.f32 %v4228, %v4229
  %v4231 = vsel %vm89, %v4084, 0.0
  %v4232 = vrot.slane %v4231, 4
  %v4233 = vadd.f32 %v4231, %v4232
  %v4234 = vrot.slane %v4233, 2
  %v4235 = vadd.f32 %v4233, %v4234
  %v4236 = vrot.slane %v4235, 1
  %v4237 = vadd.f32 %v4235, %v4236
  %v4238 = vsel %vm89, %v4086, 0.0
  %v4239 = vrot.slane %v4238, 4
  %v4240 = vadd.f32 %v4238, %v4239
  %v4241 = vrot.slane %v4240, 2
  %v4242 = vadd.f32 %v4240, %v4241
  %v4243 = vrot.slane %v4242, 1
  %v4244 = vadd.f32 %v4242, %v4243
  %v4245 = vsel %vm89, %v4088, 0.0
  %v4246 = vrot.slane %v4245, 4
  %v4247 = vadd.f32 %v4245, %v4246
  %v4248 = vrot.slane %v4247, 2
  %v4249 = vadd.f32 %v4247, %v4248
  %v4250 = vrot.slane %v4249, 1
  %v4251 = vadd.f32 %v4249, %v4250
  %v4252 = vsel %vm89, %v4090, 0.0
  %v4253 = vrot.slane %v4252, 4
  %v4254 = vadd.f32 %v4252, %v4253
  %v4255 = vrot.slane %v4254, 2
  %v4256 = vadd.f32 %v4254, %v4255
  %v4257 = vrot.slane %v4256, 1
  %v4258 = vadd.f32 %v4256, %v4257
  %v4259 = vadd.f32 %v4209, 1e-08
  %v4260 = vadd.f32 %v4216, 1e-08
  %v4261 = vadd.f32 %v4223, 1e-08
  %v4262 = vadd.f32 %v4230, 1e-08
  %v4263 = vadd.f32 %v4237, 1e-08
  %v4264 = vadd.f32 %v4244, 1e-08
  %v4265 = vadd.f32 %v4251, 1e-08
  %v4266 = vadd.f32 %v4258, 1e-08
  %4268 = vset.pattern.permute.xlu0 0
  %4269 = vperm.xlu0 %4268, %v4259
  %v4270 = vpop.permute.xlu0 %4269
  %4273 = vset.pattern.permute.xlu0 0
  %4274 = vperm.xlu0 %4273, %v4260
  %v4275 = vpop.permute.xlu0 %4274
  %4278 = vset.pattern.permute.xlu0 0
  %4279 = vperm.xlu0 %4278, %v4261
  %v4280 = vpop.permute.xlu0 %4279
  %4283 = vset.pattern.permute.xlu0 0
  %4284 = vperm.xlu0 %4283, %v4262
  %v4285 = vpop.permute.xlu0 %4284
  %4288 = vset.pattern.permute.xlu0 0
  %4289 = vperm.xlu0 %4288, %v4263
  %v4290 = vpop.permute.xlu0 %4289
  %4293 = vset.pattern.permute.xlu0 0
  %4294 = vperm.xlu0 %4293, %v4264
  %v4295 = vpop.permute.xlu0 %4294
  %4298 = vset.pattern.permute.xlu0 0
  %4299 = vperm.xlu0 %4298, %v4265
  %v4300 = vpop.permute.xlu0 %4299
  %4303 = vset.pattern.permute.xlu0 0
  %4304 = vperm.xlu0 %4303, %v4266
  %v4305 = vpop.permute.xlu0 %4304
  %v4307 = vrcp.pop %v4270
  %v4308 = vmul.f32 %v4153, %v4307
  %v4309 = vrcp.pop %v4275
  %v4310 = vmul.f32 %v4160, %v4309
  %v4311 = vrcp.pop %v4280
  %v4312 = vmul.f32 %v4167, %v4311
  %v4313 = vrcp.pop %v4285
  %v4314 = vmul.f32 %v4174, %v4313
  %v4315 = vrcp.pop %v4290
  %v4316 = vmul.f32 %v4181, %v4315
  %v4317 = vrcp.pop %v4295
  %v4318 = vmul.f32 %v4188, %v4317
  %v4319 = vrcp.pop %v4300
  %v4320 = vmul.f32 %v4195, %v4319
  %v4321 = vrcp.pop %v4305
  %v4322 = vmul.f32 %v4202, %v4321
  %4324 = vset.pattern.permute.xlu0 0
  %4325 = vperm.xlu0 %4324, %v4091
  %v4326 = vpop.permute.xlu0 %4325
  %4329 = vset.pattern.permute.xlu0 0
  %4330 = vperm.xlu0 %4329, %v4092
  %v4331 = vpop.permute.xlu0 %4330
  %4334 = vset.pattern.permute.xlu0 0
  %4335 = vperm.xlu0 %4334, %v4093
  %v4336 = vpop.permute.xlu0 %4335
  %4339 = vset.pattern.permute.xlu0 0
  %4340 = vperm.xlu0 %4339, %v4094
  %v4341 = vpop.permute.xlu0 %4340
  %4344 = vset.pattern.permute.xlu0 0
  %4345 = vperm.xlu0 %4344, %v4095
  %v4346 = vpop.permute.xlu0 %4345
  %4349 = vset.pattern.permute.xlu0 0
  %4350 = vperm.xlu0 %4349, %v4096
  %v4351 = vpop.permute.xlu0 %4350
  %4354 = vset.pattern.permute.xlu0 0
  %4355 = vperm.xlu0 %4354, %v4097
  %v4356 = vpop.permute.xlu0 %4355
  %4359 = vset.pattern.permute.xlu0 0
  %4360 = vperm.xlu0 %4359, %v4098
  %v4361 = vpop.permute.xlu0 %4360
  %v4363 = vmul.f32 %v4326, %v3828
  %v4364 = vmul.f32 %v4331, %v3829
  %v4365 = vmul.f32 %v4336, %v3830
  %v4366 = vmul.f32 %v4341, %v3831
  %v4367 = vmul.f32 %v4346, %v3832
  %v4368 = vmul.f32 %v4351, %v3833
  %v4369 = vmul.f32 %v4356, %v3834
  %v4370 = vmul.f32 %v4361, %v3835
  %v4371 = vsel %vm49, %v4363, 0.0
  %v4372 = vrot.slane %v4371, 4
  %v4373 = vadd.f32 %v4371, %v4372
  %v4374 = vrot.slane %v4373, 2
  %v4375 = vadd.f32 %v4373, %v4374
  %v4376 = vrot.slane %v4375, 1
  %v4377 = vadd.f32 %v4375, %v4376
  %v4378 = vsel %vm49, %v4364, 0.0
  %v4379 = vrot.slane %v4378, 4
  %v4380 = vadd.f32 %v4378, %v4379
  %v4381 = vrot.slane %v4380, 2
  %v4382 = vadd.f32 %v4380, %v4381
  %v4383 = vrot.slane %v4382, 1
  %v4384 = vadd.f32 %v4382, %v4383
  %v4385 = vsel %vm49, %v4365, 0.0
  %v4386 = vrot.slane %v4385, 4
  %v4387 = vadd.f32 %v4385, %v4386
  %v4388 = vrot.slane %v4387, 2
  %v4389 = vadd.f32 %v4387, %v4388
  %v4390 = vrot.slane %v4389, 1
  %v4391 = vadd.f32 %v4389, %v4390
  %v4392 = vsel %vm49, %v4366, 0.0
  %v4393 = vrot.slane %v4392, 4
  %v4394 = vadd.f32 %v4392, %v4393
  %v4395 = vrot.slane %v4394, 2
  %v4396 = vadd.f32 %v4394, %v4395
  %v4397 = vrot.slane %v4396, 1
  %v4398 = vadd.f32 %v4396, %v4397
  %v4399 = vsel %vm49, %v4367, 0.0
  %v4400 = vrot.slane %v4399, 4
  %v4401 = vadd.f32 %v4399, %v4400
  %v4402 = vrot.slane %v4401, 2
  %v4403 = vadd.f32 %v4401, %v4402
  %v4404 = vrot.slane %v4403, 1
  %v4405 = vadd.f32 %v4403, %v4404
  %v4406 = vsel %vm49, %v4368, 0.0
  %v4407 = vrot.slane %v4406, 4
  %v4408 = vadd.f32 %v4406, %v4407
  %v4409 = vrot.slane %v4408, 2
  %v4410 = vadd.f32 %v4408, %v4409
  %v4411 = vrot.slane %v4410, 1
  %v4412 = vadd.f32 %v4410, %v4411
  %v4413 = vsel %vm49, %v4369, 0.0
  %v4414 = vrot.slane %v4413, 4
  %v4415 = vadd.f32 %v4413, %v4414
  %v4416 = vrot.slane %v4415, 2
  %v4417 = vadd.f32 %v4415, %v4416
  %v4418 = vrot.slane %v4417, 1
  %v4419 = vadd.f32 %v4417, %v4418
  %v4420 = vsel %vm49, %v4370, 0.0
  %v4421 = vrot.slane %v4420, 4
  %v4422 = vadd.f32 %v4420, %v4421
  %v4423 = vrot.slane %v4422, 2
  %v4424 = vadd.f32 %v4422, %v4423
  %v4425 = vrot.slane %v4424, 1
  %v4426 = vadd.f32 %v4424, %v4425
  %v4427 = vsel %vm89, %v4091, 0.0
  %v4428 = vrot.slane %v4427, 4
  %v4429 = vadd.f32 %v4427, %v4428
  %v4430 = vrot.slane %v4429, 2
  %v4431 = vadd.f32 %v4429, %v4430
  %v4432 = vrot.slane %v4431, 1
  %v4433 = vadd.f32 %v4431, %v4432
  %v4434 = vsel %vm89, %v4092, 0.0
  %v4435 = vrot.slane %v4434, 4
  %v4436 = vadd.f32 %v4434, %v4435
  %v4437 = vrot.slane %v4436, 2
  %v4438 = vadd.f32 %v4436, %v4437
  %v4439 = vrot.slane %v4438, 1
  %v4440 = vadd.f32 %v4438, %v4439
  %v4441 = vsel %vm89, %v4093, 0.0
  %v4442 = vrot.slane %v4441, 4
  %v4443 = vadd.f32 %v4441, %v4442
  %v4444 = vrot.slane %v4443, 2
  %v4445 = vadd.f32 %v4443, %v4444
  %v4446 = vrot.slane %v4445, 1
  %v4447 = vadd.f32 %v4445, %v4446
  %v4448 = vsel %vm89, %v4094, 0.0
  %v4449 = vrot.slane %v4448, 4
  %v4450 = vadd.f32 %v4448, %v4449
  %v4451 = vrot.slane %v4450, 2
  %v4452 = vadd.f32 %v4450, %v4451
  %v4453 = vrot.slane %v4452, 1
  %v4454 = vadd.f32 %v4452, %v4453
  %v4455 = vsel %vm89, %v4095, 0.0
  %v4456 = vrot.slane %v4455, 4
  %v4457 = vadd.f32 %v4455, %v4456
  %v4458 = vrot.slane %v4457, 2
  %v4459 = vadd.f32 %v4457, %v4458
  %v4460 = vrot.slane %v4459, 1
  %v4461 = vadd.f32 %v4459, %v4460
  %v4462 = vsel %vm89, %v4096, 0.0
  %v4463 = vrot.slane %v4462, 4
  %v4464 = vadd.f32 %v4462, %v4463
  %v4465 = vrot.slane %v4464, 2
  %v4466 = vadd.f32 %v4464, %v4465
  %v4467 = vrot.slane %v4466, 1
  %v4468 = vadd.f32 %v4466, %v4467
  %v4469 = vsel %vm89, %v4097, 0.0
  %v4470 = vrot.slane %v4469, 4
  %v4471 = vadd.f32 %v4469, %v4470
  %v4472 = vrot.slane %v4471, 2
  %v4473 = vadd.f32 %v4471, %v4472
  %v4474 = vrot.slane %v4473, 1
  %v4475 = vadd.f32 %v4473, %v4474
  %v4476 = vsel %vm89, %v4098, 0.0
  %v4477 = vrot.slane %v4476, 4
  %v4478 = vadd.f32 %v4476, %v4477
  %v4479 = vrot.slane %v4478, 2
  %v4480 = vadd.f32 %v4478, %v4479
  %v4481 = vrot.slane %v4480, 1
  %v4482 = vadd.f32 %v4480, %v4481
  %v4483 = vadd.f32 %v4433, 1e-08
  %v4484 = vadd.f32 %v4440, 1e-08
  %v4485 = vadd.f32 %v4447, 1e-08
  %v4486 = vadd.f32 %v4454, 1e-08
  %v4487 = vadd.f32 %v4461, 1e-08
  %v4488 = vadd.f32 %v4468, 1e-08
  %v4489 = vadd.f32 %v4475, 1e-08
  %v4490 = vadd.f32 %v4482, 1e-08
  %4492 = vset.pattern.permute.xlu0 0
  %4493 = vperm.xlu0 %4492, %v4483
  %v4494 = vpop.permute.xlu0 %4493
  %4497 = vset.pattern.permute.xlu0 0
  %4498 = vperm.xlu0 %4497, %v4484
  %v4499 = vpop.permute.xlu0 %4498
  %4502 = vset.pattern.permute.xlu0 0
  %4503 = vperm.xlu0 %4502, %v4485
  %v4504 = vpop.permute.xlu0 %4503
  %4507 = vset.pattern.permute.xlu0 0
  %4508 = vperm.xlu0 %4507, %v4486
  %v4509 = vpop.permute.xlu0 %4508
  %4512 = vset.pattern.permute.xlu0 0
  %4513 = vperm.xlu0 %4512, %v4487
  %v4514 = vpop.permute.xlu0 %4513
  %4517 = vset.pattern.permute.xlu0 0
  %4518 = vperm.xlu0 %4517, %v4488
  %v4519 = vpop.permute.xlu0 %4518
  %4522 = vset.pattern.permute.xlu0 0
  %4523 = vperm.xlu0 %4522, %v4489
  %v4524 = vpop.permute.xlu0 %4523
  %4527 = vset.pattern.permute.xlu0 0
  %4528 = vperm.xlu0 %4527, %v4490
  %v4529 = vpop.permute.xlu0 %4528
  %v4531 = vrcp.pop %v4494
  %v4532 = vmul.f32 %v4377, %v4531
  %v4533 = vrcp.pop %v4499
  %v4534 = vmul.f32 %v4384, %v4533
  %v4535 = vrcp.pop %v4504
  %v4536 = vmul.f32 %v4391, %v4535
  %v4537 = vrcp.pop %v4509
  %v4538 = vmul.f32 %v4398, %v4537
  %v4539 = vrcp.pop %v4514
  %v4540 = vmul.f32 %v4405, %v4539
  %v4541 = vrcp.pop %v4519
  %v4542 = vmul.f32 %v4412, %v4541
  %v4543 = vrcp.pop %v4524
  %v4544 = vmul.f32 %v4419, %v4543
  %v4545 = vrcp.pop %v4529
  %v4546 = vmul.f32 %v4426, %v4545
  %v4555 = vsel %vm762, %v4310, %v4308
  %v4556 = vsel %vm764, %v4312, %v4555
  %v4557 = vsel %vm766, %v4314, %v4556
  %v4558 = vsel %vm768, %v4316, %v4557
  %v4559 = vsel %vm770, %v4318, %v4558
  %v4560 = vsel %vm772, %v4320, %v4559
  %v4561 = vsel %vm774, %v4322, %v4560
  %s4563 = scalar_lea.vmem [#allocation2], 40
  %4564 = vst.msk [vmem:[%s4563] sm:$0xff] %vm777, %v4561
  %v4573 = vsel %vm762, %v4534, %v4532
  %v4574 = vsel %vm764, %v4536, %v4573
  %v4575 = vsel %vm766, %v4538, %v4574
  %v4576 = vsel %vm768, %v4540, %v4575
  %v4577 = vsel %vm770, %v4542, %v4576
  %v4578 = vsel %vm772, %v4544, %v4577
  %v4579 = vsel %vm774, %v4546, %v4578
  %4580 = vrot.lane.b32.xlu0 %v4579, 32
  %v4581 = vpop.permute.xlu0 %4580
  %4583 = vst.msk [vmem:[%s4563] sm:$0xff] %vm797, %v4581
  %s4584 = scalar_lea.vmem %s0, 24
  %v4585 = vld [vmem:[%s4584] sm:$0xf]
  %v4586 = vld [vmem:[%s4584 + $0x20] sm:$0xf]
  %v4587 = vld [vmem:[%s4584 + $0x40] sm:$0xf]
  %v4588 = vld [vmem:[%s4584 + $0x60] sm:$0xf]
  %v4589 = vld [vmem:[%s4584 + $0x80] sm:$0xf]
  %v4590 = vld [vmem:[%s4584 + $0xa0] sm:$0xf]
  %v4591 = vld [vmem:[%s4584 + $0xc0] sm:$0xf]
  %v4592 = vld [vmem:[%s4584 + $0xe0] sm:$0xf]
  %v4593 = vmul.f32 %v4585, %v39
  %v4594 = vmul.f32 %v4586, %v39
  %v4595 = vmul.f32 %v4587, %v39
  %v4596 = vmul.f32 %v4588, %v39
  %v4597 = vmul.f32 %v4589, %v39
  %v4598 = vmul.f32 %v4590, %v39
  %v4599 = vmul.f32 %v4591, %v39
  %v4600 = vmul.f32 %v4592, %v39
  %v4601 = vsel %vm49, %v4593, 0.0
  %4602 = vadd.xlane.f32.xlu0 %v4601
  %v4603 = vpop.xlane.xlu0 %4602
  %v4604 = vsel %vm49, %v4594, 0.0
  %4605 = vadd.xlane.f32.xlu0 %v4604
  %v4606 = vpop.xlane.xlu0 %4605
  %v4607 = vsel %vm49, %v4595, 0.0
  %4608 = vadd.xlane.f32.xlu0 %v4607
  %v4609 = vpop.xlane.xlu0 %4608
  %v4610 = vsel %vm49, %v4596, 0.0
  %4611 = vadd.xlane.f32.xlu0 %v4610
  %v4612 = vpop.xlane.xlu0 %4611
  %v4613 = vsel %vm49, %v4597, 0.0
  %4614 = vadd.xlane.f32.xlu0 %v4613
  %v4615 = vpop.xlane.xlu0 %4614
  %v4616 = vsel %vm49, %v4598, 0.0
  %4617 = vadd.xlane.f32.xlu0 %v4616
  %v4618 = vpop.xlane.xlu0 %4617
  %v4619 = vsel %vm49, %v4599, 0.0
  %4620 = vadd.xlane.f32.xlu0 %v4619
  %v4621 = vpop.xlane.xlu0 %4620
  %v4622 = vsel %vm49, %v4600, 0.0
  %4623 = vadd.xlane.f32.xlu0 %v4622
  %v4624 = vpop.xlane.xlu0 %4623
  %v4625 = vld [vmem:[#allocation4] sm:$0x1]
  %v4627 = vlaneseq
  %v4628 = vshrl.u32 %v4627, 7
  %v4629 = vsub.s32 0, %v4628
  %v4630 = vrot.slane %v4625, %v4629
  %v4632 = vadd.f32 %v4603, %v4630
  %v4633 = vadd.f32 %v4606, %v4630
  %v4634 = vadd.f32 %v4609, %v4630
  %v4635 = vadd.f32 %v4612, %v4630
  %v4636 = vadd.f32 %v4615, %v4630
  %v4637 = vadd.f32 %v4618, %v4630
  %v4638 = vadd.f32 %v4621, %v4630
  %v4639 = vadd.f32 %v4624, %v4630
  %v4640 = vsel %vm89, %v4632, -inf
  %v4641 = vrot.slane %v4640, 4
  %v4642 = vmax.f32 %v4640, %v4641
  %v4643 = vrot.slane %v4642, 2
  %v4644 = vmax.f32 %v4642, %v4643
  %v4645 = vrot.slane %v4644, 1
  %v4646 = vmax.f32 %v4644, %v4645
  %v4647 = vsel %vm89, %v4633, -inf
  %v4648 = vrot.slane %v4647, 4
  %v4649 = vmax.f32 %v4647, %v4648
  %v4650 = vrot.slane %v4649, 2
  %v4651 = vmax.f32 %v4649, %v4650
  %v4652 = vrot.slane %v4651, 1
  %v4653 = vmax.f32 %v4651, %v4652
  %v4654 = vsel %vm89, %v4634, -inf
  %v4655 = vrot.slane %v4654, 4
  %v4656 = vmax.f32 %v4654, %v4655
  %v4657 = vrot.slane %v4656, 2
  %v4658 = vmax.f32 %v4656, %v4657
  %v4659 = vrot.slane %v4658, 1
  %v4660 = vmax.f32 %v4658, %v4659
  %v4661 = vsel %vm89, %v4635, -inf
  %v4662 = vrot.slane %v4661, 4
  %v4663 = vmax.f32 %v4661, %v4662
  %v4664 = vrot.slane %v4663, 2
  %v4665 = vmax.f32 %v4663, %v4664
  %v4666 = vrot.slane %v4665, 1
  %v4667 = vmax.f32 %v4665, %v4666
  %v4668 = vsel %vm89, %v4636, -inf
  %v4669 = vrot.slane %v4668, 4
  %v4670 = vmax.f32 %v4668, %v4669
  %v4671 = vrot.slane %v4670, 2
  %v4672 = vmax.f32 %v4670, %v4671
  %v4673 = vrot.slane %v4672, 1
  %v4674 = vmax.f32 %v4672, %v4673
  %v4675 = vsel %vm89, %v4637, -inf
  %v4676 = vrot.slane %v4675, 4
  %v4677 = vmax.f32 %v4675, %v4676
  %v4678 = vrot.slane %v4677, 2
  %v4679 = vmax.f32 %v4677, %v4678
  %v4680 = vrot.slane %v4679, 1
  %v4681 = vmax.f32 %v4679, %v4680
  %v4682 = vsel %vm89, %v4638, -inf
  %v4683 = vrot.slane %v4682, 4
  %v4684 = vmax.f32 %v4682, %v4683
  %v4685 = vrot.slane %v4684, 2
  %v4686 = vmax.f32 %v4684, %v4685
  %v4687 = vrot.slane %v4686, 1
  %v4688 = vmax.f32 %v4686, %v4687
  %v4689 = vsel %vm89, %v4639, -inf
  %v4690 = vrot.slane %v4689, 4
  %v4691 = vmax.f32 %v4689, %v4690
  %v4692 = vrot.slane %v4691, 2
  %v4693 = vmax.f32 %v4691, %v4692
  %v4694 = vrot.slane %v4693, 1
  %v4695 = vmax.f32 %v4693, %v4694
  %v4696 = vsub.f32 %v4632, %v4646
  %v4697 = vsub.f32 %v4633, %v4653
  %v4698 = vsub.f32 %v4634, %v4660
  %v4699 = vsub.f32 %v4635, %v4667
  %v4700 = vsub.f32 %v4636, %v4674
  %v4701 = vsub.f32 %v4637, %v4681
  %v4702 = vsub.f32 %v4638, %v4688
  %v4703 = vsub.f32 %v4639, %v4695
  %v4704 = vmul.f32 %v4696, 1.442695
  %v4705 = vpow.pop %v4704
  %v4706 = vmul.f32 %v4697, 1.442695
  %v4707 = vpow.pop %v4706
  %v4708 = vmul.f32 %v4698, 1.442695
  %v4709 = vpow.pop %v4708
  %v4710 = vmul.f32 %v4699, 1.442695
  %v4711 = vpow.pop %v4710
  %v4712 = vmul.f32 %v4700, 1.442695
  %v4713 = vpow.pop %v4712
  %v4714 = vmul.f32 %v4701, 1.442695
  %v4715 = vpow.pop %v4714
  %v4716 = vmul.f32 %v4702, 1.442695
  %v4717 = vpow.pop %v4716
  %v4718 = vmul.f32 %v4703, 1.442695
  %v4719 = vpow.pop %v4718
  %v4720 = vsel %vm89, %v4705, 0.0
  %v4721 = vrot.slane %v4720, 4
  %v4722 = vadd.f32 %v4720, %v4721
  %v4723 = vrot.slane %v4722, 2
  %v4724 = vadd.f32 %v4722, %v4723
  %v4725 = vrot.slane %v4724, 1
  %v4726 = vadd.f32 %v4724, %v4725
  %v4727 = vsel %vm89, %v4707, 0.0
  %v4728 = vrot.slane %v4727, 4
  %v4729 = vadd.f32 %v4727, %v4728
  %v4730 = vrot.slane %v4729, 2
  %v4731 = vadd.f32 %v4729, %v4730
  %v4732 = vrot.slane %v4731, 1
  %v4733 = vadd.f32 %v4731, %v4732
  %v4734 = vsel %vm89, %v4709, 0.0
  %v4735 = vrot.slane %v4734, 4
  %v4736 = vadd.f32 %v4734, %v4735
  %v4737 = vrot.slane %v4736, 2
  %v4738 = vadd.f32 %v4736, %v4737
  %v4739 = vrot.slane %v4738, 1
  %v4740 = vadd.f32 %v4738, %v4739
  %v4741 = vsel %vm89, %v4711, 0.0
  %v4742 = vrot.slane %v4741, 4
  %v4743 = vadd.f32 %v4741, %v4742
  %v4744 = vrot.slane %v4743, 2
  %v4745 = vadd.f32 %v4743, %v4744
  %v4746 = vrot.slane %v4745, 1
  %v4747 = vadd.f32 %v4745, %v4746
  %v4748 = vsel %vm89, %v4713, 0.0
  %v4749 = vrot.slane %v4748, 4
  %v4750 = vadd.f32 %v4748, %v4749
  %v4751 = vrot.slane %v4750, 2
  %v4752 = vadd.f32 %v4750, %v4751
  %v4753 = vrot.slane %v4752, 1
  %v4754 = vadd.f32 %v4752, %v4753
  %v4755 = vsel %vm89, %v4715, 0.0
  %v4756 = vrot.slane %v4755, 4
  %v4757 = vadd.f32 %v4755, %v4756
  %v4758 = vrot.slane %v4757, 2
  %v4759 = vadd.f32 %v4757, %v4758
  %v4760 = vrot.slane %v4759, 1
  %v4761 = vadd.f32 %v4759, %v4760
  %v4762 = vsel %vm89, %v4717, 0.0
  %v4763 = vrot.slane %v4762, 4
  %v4764 = vadd.f32 %v4762, %v4763
  %v4765 = vrot.slane %v4764, 2
  %v4766 = vadd.f32 %v4764, %v4765
  %v4767 = vrot.slane %v4766, 1
  %v4768 = vadd.f32 %v4766, %v4767
  %v4769 = vsel %vm89, %v4719, 0.0
  %v4770 = vrot.slane %v4769, 4
  %v4771 = vadd.f32 %v4769, %v4770
  %v4772 = vrot.slane %v4771, 2
  %v4773 = vadd.f32 %v4771, %v4772
  %v4774 = vrot.slane %v4773, 1
  %v4775 = vadd.f32 %v4773, %v4774
  %v4776 = vrcp.pop %v4726
  %v4777 = vmul.f32 %v4705, %v4776
  %v4778 = vrcp.pop %v4733
  %v4779 = vmul.f32 %v4707, %v4778
  %v4780 = vrcp.pop %v4740
  %v4781 = vmul.f32 %v4709, %v4780
  %v4782 = vrcp.pop %v4747
  %v4783 = vmul.f32 %v4711, %v4782
  %v4784 = vrcp.pop %v4754
  %v4785 = vmul.f32 %v4713, %v4784
  %v4786 = vrcp.pop %v4761
  %v4787 = vmul.f32 %v4715, %v4786
  %v4788 = vrcp.pop %v4768
  %v4789 = vmul.f32 %v4717, %v4788
  %v4790 = vrcp.pop %v4775
  %v4791 = vmul.f32 %v4719, %v4790
  %v4792 = vsub.f32 %v4777, 0.25
  %v4793 = vsub.f32 %v4779, 0.25
  %v4794 = vsub.f32 %v4781, 0.25
  %v4795 = vsub.f32 %v4783, 0.25
  %v4796 = vsub.f32 %v4785, 0.25
  %v4797 = vsub.f32 %v4787, 0.25
  %v4798 = vsub.f32 %v4789, 0.25
  %v4799 = vsub.f32 %v4791, 0.25
  %v4800 = vmul.f32 %v4792, -10.0
  %v4801 = vmul.f32 %v4793, -10.0
  %v4802 = vmul.f32 %v4794, -10.0
  %v4803 = vmul.f32 %v4795, -10.0
  %v4804 = vmul.f32 %v4796, -10.0
  %v4805 = vmul.f32 %v4797, -10.0
  %v4806 = vmul.f32 %v4798, -10.0
  %v4807 = vmul.f32 %v4799, -10.0
  %v4808 = vmul.f32 %v4800, 1.442695
  %v4809 = vpow.pop %v4808
  %v4810 = vmul.f32 %v4801, 1.442695
  %v4811 = vpow.pop %v4810
  %v4812 = vmul.f32 %v4802, 1.442695
  %v4813 = vpow.pop %v4812
  %v4814 = vmul.f32 %v4803, 1.442695
  %v4815 = vpow.pop %v4814
  %v4816 = vmul.f32 %v4804, 1.442695
  %v4817 = vpow.pop %v4816
  %v4818 = vmul.f32 %v4805, 1.442695
  %v4819 = vpow.pop %v4818
  %v4820 = vmul.f32 %v4806, 1.442695
  %v4821 = vpow.pop %v4820
  %v4822 = vmul.f32 %v4807, 1.442695
  %v4823 = vpow.pop %v4822
  %v4824 = vadd.f32 %v4809, 1.0
  %v4825 = vadd.f32 %v4811, 1.0
  %v4826 = vadd.f32 %v4813, 1.0
  %v4827 = vadd.f32 %v4815, 1.0
  %v4828 = vadd.f32 %v4817, 1.0
  %v4829 = vadd.f32 %v4819, 1.0
  %v4830 = vadd.f32 %v4821, 1.0
  %v4831 = vadd.f32 %v4823, 1.0
  %v4832 = vrcp.pop %v4824
  %v4833 = vmul.f32 1.0, %v4832
  %v4834 = vrcp.pop %v4825
  %v4835 = vmul.f32 1.0, %v4834
  %v4836 = vrcp.pop %v4826
  %v4837 = vmul.f32 1.0, %v4836
  %v4838 = vrcp.pop %v4827
  %v4839 = vmul.f32 1.0, %v4838
  %v4840 = vrcp.pop %v4828
  %v4841 = vmul.f32 1.0, %v4840
  %v4842 = vrcp.pop %v4829
  %v4843 = vmul.f32 1.0, %v4842
  %v4844 = vrcp.pop %v4830
  %v4845 = vmul.f32 1.0, %v4844
  %v4846 = vrcp.pop %v4831
  %v4847 = vmul.f32 1.0, %v4846
  %v4848 = vsub.f32 1.0, %v4833
  %v4849 = vsub.f32 1.0, %v4835
  %v4850 = vsub.f32 1.0, %v4837
  %v4851 = vsub.f32 1.0, %v4839
  %v4852 = vsub.f32 1.0, %v4841
  %v4853 = vsub.f32 1.0, %v4843
  %v4854 = vsub.f32 1.0, %v4845
  %v4855 = vsub.f32 1.0, %v4847
  %4857 = vset.pattern.permute.xlu0 0
  %4858 = vperm.xlu0 %4857, %v4833
  %v4859 = vpop.permute.xlu0 %4858
  %4862 = vset.pattern.permute.xlu0 0
  %4863 = vperm.xlu0 %4862, %v4835
  %v4864 = vpop.permute.xlu0 %4863
  %4867 = vset.pattern.permute.xlu0 0
  %4868 = vperm.xlu0 %4867, %v4837
  %v4869 = vpop.permute.xlu0 %4868
  %4872 = vset.pattern.permute.xlu0 0
  %4873 = vperm.xlu0 %4872, %v4839
  %v4874 = vpop.permute.xlu0 %4873
  %4877 = vset.pattern.permute.xlu0 0
  %4878 = vperm.xlu0 %4877, %v4841
  %v4879 = vpop.permute.xlu0 %4878
  %4882 = vset.pattern.permute.xlu0 0
  %4883 = vperm.xlu0 %4882, %v4843
  %v4884 = vpop.permute.xlu0 %4883
  %4887 = vset.pattern.permute.xlu0 0
  %4888 = vperm.xlu0 %4887, %v4845
  %v4889 = vpop.permute.xlu0 %4888
  %4892 = vset.pattern.permute.xlu0 0
  %4893 = vperm.xlu0 %4892, %v4847
  %v4894 = vpop.permute.xlu0 %4893
  %v4896 = vmul.f32 %v4859, %v4585
  %v4897 = vmul.f32 %v4864, %v4586
  %v4898 = vmul.f32 %v4869, %v4587
  %v4899 = vmul.f32 %v4874, %v4588
  %v4900 = vmul.f32 %v4879, %v4589
  %v4901 = vmul.f32 %v4884, %v4590
  %v4902 = vmul.f32 %v4889, %v4591
  %v4903 = vmul.f32 %v4894, %v4592
  %v4904 = vsel %vm49, %v4896, 0.0
  %v4905 = vrot.slane %v4904, 4
  %v4906 = vadd.f32 %v4904, %v4905
  %v4907 = vrot.slane %v4906, 2
  %v4908 = vadd.f32 %v4906, %v4907
  %v4909 = vrot.slane %v4908, 1
  %v4910 = vadd.f32 %v4908, %v4909
  %v4911 = vsel %vm49, %v4897, 0.0
  %v4912 = vrot.slane %v4911, 4
  %v4913 = vadd.f32 %v4911, %v4912
  %v4914 = vrot.slane %v4913, 2
  %v4915 = vadd.f32 %v4913, %v4914
  %v4916 = vrot.slane %v4915, 1
  %v4917 = vadd.f32 %v4915, %v4916
  %v4918 = vsel %vm49, %v4898, 0.0
  %v4919 = vrot.slane %v4918, 4
  %v4920 = vadd.f32 %v4918, %v4919
  %v4921 = vrot.slane %v4920, 2
  %v4922 = vadd.f32 %v4920, %v4921
  %v4923 = vrot.slane %v4922, 1
  %v4924 = vadd.f32 %v4922, %v4923
  %v4925 = vsel %vm49, %v4899, 0.0
  %v4926 = vrot.slane %v4925, 4
  %v4927 = vadd.f32 %v4925, %v4926
  %v4928 = vrot.slane %v4927, 2
  %v4929 = vadd.f32 %v4927, %v4928
  %v4930 = vrot.slane %v4929, 1
  %v4931 = vadd.f32 %v4929, %v4930
  %v4932 = vsel %vm49, %v4900, 0.0
  %v4933 = vrot.slane %v4932, 4
  %v4934 = vadd.f32 %v4932, %v4933
  %v4935 = vrot.slane %v4934, 2
  %v4936 = vadd.f32 %v4934, %v4935
  %v4937 = vrot.slane %v4936, 1
  %v4938 = vadd.f32 %v4936, %v4937
  %v4939 = vsel %vm49, %v4901, 0.0
  %v4940 = vrot.slane %v4939, 4
  %v4941 = vadd.f32 %v4939, %v4940
  %v4942 = vrot.slane %v4941, 2
  %v4943 = vadd.f32 %v4941, %v4942
  %v4944 = vrot.slane %v4943, 1
  %v4945 = vadd.f32 %v4943, %v4944
  %v4946 = vsel %vm49, %v4902, 0.0
  %v4947 = vrot.slane %v4946, 4
  %v4948 = vadd.f32 %v4946, %v4947
  %v4949 = vrot.slane %v4948, 2
  %v4950 = vadd.f32 %v4948, %v4949
  %v4951 = vrot.slane %v4950, 1
  %v4952 = vadd.f32 %v4950, %v4951
  %v4953 = vsel %vm49, %v4903, 0.0
  %v4954 = vrot.slane %v4953, 4
  %v4955 = vadd.f32 %v4953, %v4954
  %v4956 = vrot.slane %v4955, 2
  %v4957 = vadd.f32 %v4955, %v4956
  %v4958 = vrot.slane %v4957, 1
  %v4959 = vadd.f32 %v4957, %v4958
  %v4960 = vsel %vm89, %v4833, 0.0
  %v4961 = vrot.slane %v4960, 4
  %v4962 = vadd.f32 %v4960, %v4961
  %v4963 = vrot.slane %v4962, 2
  %v4964 = vadd.f32 %v4962, %v4963
  %v4965 = vrot.slane %v4964, 1
  %v4966 = vadd.f32 %v4964, %v4965
  %v4967 = vsel %vm89, %v4835, 0.0
  %v4968 = vrot.slane %v4967, 4
  %v4969 = vadd.f32 %v4967, %v4968
  %v4970 = vrot.slane %v4969, 2
  %v4971 = vadd.f32 %v4969, %v4970
  %v4972 = vrot.slane %v4971, 1
  %v4973 = vadd.f32 %v4971, %v4972
  %v4974 = vsel %vm89, %v4837, 0.0
  %v4975 = vrot.slane %v4974, 4
  %v4976 = vadd.f32 %v4974, %v4975
  %v4977 = vrot.slane %v4976, 2
  %v4978 = vadd.f32 %v4976, %v4977
  %v4979 = vrot.slane %v4978, 1
  %v4980 = vadd.f32 %v4978, %v4979
  %v4981 = vsel %vm89, %v4839, 0.0
  %v4982 = vrot.slane %v4981, 4
  %v4983 = vadd.f32 %v4981, %v4982
  %v4984 = vrot.slane %v4983, 2
  %v4985 = vadd.f32 %v4983, %v4984
  %v4986 = vrot.slane %v4985, 1
  %v4987 = vadd.f32 %v4985, %v4986
  %v4988 = vsel %vm89, %v4841, 0.0
  %v4989 = vrot.slane %v4988, 4
  %v4990 = vadd.f32 %v4988, %v4989
  %v4991 = vrot.slane %v4990, 2
  %v4992 = vadd.f32 %v4990, %v4991
  %v4993 = vrot.slane %v4992, 1
  %v4994 = vadd.f32 %v4992, %v4993
  %v4995 = vsel %vm89, %v4843, 0.0
  %v4996 = vrot.slane %v4995, 4
  %v4997 = vadd.f32 %v4995, %v4996
  %v4998 = vrot.slane %v4997, 2
  %v4999 = vadd.f32 %v4997, %v4998
  %v5000 = vrot.slane %v4999, 1
  %v5001 = vadd.f32 %v4999, %v5000
  %v5002 = vsel %vm89, %v4845, 0.0
  %v5003 = vrot.slane %v5002, 4
  %v5004 = vadd.f32 %v5002, %v5003
  %v5005 = vrot.slane %v5004, 2
  %v5006 = vadd.f32 %v5004, %v5005
  %v5007 = vrot.slane %v5006, 1
  %v5008 = vadd.f32 %v5006, %v5007
  %v5009 = vsel %vm89, %v4847, 0.0
  %v5010 = vrot.slane %v5009, 4
  %v5011 = vadd.f32 %v5009, %v5010
  %v5012 = vrot.slane %v5011, 2
  %v5013 = vadd.f32 %v5011, %v5012
  %v5014 = vrot.slane %v5013, 1
  %v5015 = vadd.f32 %v5013, %v5014
  %v5016 = vadd.f32 %v4966, 1e-08
  %v5017 = vadd.f32 %v4973, 1e-08
  %v5018 = vadd.f32 %v4980, 1e-08
  %v5019 = vadd.f32 %v4987, 1e-08
  %v5020 = vadd.f32 %v4994, 1e-08
  %v5021 = vadd.f32 %v5001, 1e-08
  %v5022 = vadd.f32 %v5008, 1e-08
  %v5023 = vadd.f32 %v5015, 1e-08
  %5025 = vset.pattern.permute.xlu0 0
  %5026 = vperm.xlu0 %5025, %v5016
  %v5027 = vpop.permute.xlu0 %5026
  %5030 = vset.pattern.permute.xlu0 0
  %5031 = vperm.xlu0 %5030, %v5017
  %v5032 = vpop.permute.xlu0 %5031
  %5035 = vset.pattern.permute.xlu0 0
  %5036 = vperm.xlu0 %5035, %v5018
  %v5037 = vpop.permute.xlu0 %5036
  %5040 = vset.pattern.permute.xlu0 0
  %5041 = vperm.xlu0 %5040, %v5019
  %v5042 = vpop.permute.xlu0 %5041
  %5045 = vset.pattern.permute.xlu0 0
  %5046 = vperm.xlu0 %5045, %v5020
  %v5047 = vpop.permute.xlu0 %5046
  %5050 = vset.pattern.permute.xlu0 0
  %5051 = vperm.xlu0 %5050, %v5021
  %v5052 = vpop.permute.xlu0 %5051
  %5055 = vset.pattern.permute.xlu0 0
  %5056 = vperm.xlu0 %5055, %v5022
  %v5057 = vpop.permute.xlu0 %5056
  %5060 = vset.pattern.permute.xlu0 0
  %5061 = vperm.xlu0 %5060, %v5023
  %v5062 = vpop.permute.xlu0 %5061
  %v5064 = vrcp.pop %v5027
  %v5065 = vmul.f32 %v4910, %v5064
  %v5066 = vrcp.pop %v5032
  %v5067 = vmul.f32 %v4917, %v5066
  %v5068 = vrcp.pop %v5037
  %v5069 = vmul.f32 %v4924, %v5068
  %v5070 = vrcp.pop %v5042
  %v5071 = vmul.f32 %v4931, %v5070
  %v5072 = vrcp.pop %v5047
  %v5073 = vmul.f32 %v4938, %v5072
  %v5074 = vrcp.pop %v5052
  %v5075 = vmul.f32 %v4945, %v5074
  %v5076 = vrcp.pop %v5057
  %v5077 = vmul.f32 %v4952, %v5076
  %v5078 = vrcp.pop %v5062
  %v5079 = vmul.f32 %v4959, %v5078
  %5081 = vset.pattern.permute.xlu0 0
  %5082 = vperm.xlu0 %5081, %v4848
  %v5083 = vpop.permute.xlu0 %5082
  %5086 = vset.pattern.permute.xlu0 0
  %5087 = vperm.xlu0 %5086, %v4849
  %v5088 = vpop.permute.xlu0 %5087
  %5091 = vset.pattern.permute.xlu0 0
  %5092 = vperm.xlu0 %5091, %v4850
  %v5093 = vpop.permute.xlu0 %5092
  %5096 = vset.pattern.permute.xlu0 0
  %5097 = vperm.xlu0 %5096, %v4851
  %v5098 = vpop.permute.xlu0 %5097
  %5101 = vset.pattern.permute.xlu0 0
  %5102 = vperm.xlu0 %5101, %v4852
  %v5103 = vpop.permute.xlu0 %5102
  %5106 = vset.pattern.permute.xlu0 0
  %5107 = vperm.xlu0 %5106, %v4853
  %v5108 = vpop.permute.xlu0 %5107
  %5111 = vset.pattern.permute.xlu0 0
  %5112 = vperm.xlu0 %5111, %v4854
  %v5113 = vpop.permute.xlu0 %5112
  %5116 = vset.pattern.permute.xlu0 0
  %5117 = vperm.xlu0 %5116, %v4855
  %v5118 = vpop.permute.xlu0 %5117
  %v5120 = vmul.f32 %v5083, %v4585
  %v5121 = vmul.f32 %v5088, %v4586
  %v5122 = vmul.f32 %v5093, %v4587
  %v5123 = vmul.f32 %v5098, %v4588
  %v5124 = vmul.f32 %v5103, %v4589
  %v5125 = vmul.f32 %v5108, %v4590
  %v5126 = vmul.f32 %v5113, %v4591
  %v5127 = vmul.f32 %v5118, %v4592
  %v5128 = vsel %vm49, %v5120, 0.0
  %v5129 = vrot.slane %v5128, 4
  %v5130 = vadd.f32 %v5128, %v5129
  %v5131 = vrot.slane %v5130, 2
  %v5132 = vadd.f32 %v5130, %v5131
  %v5133 = vrot.slane %v5132, 1
  %v5134 = vadd.f32 %v5132, %v5133
  %v5135 = vsel %vm49, %v5121, 0.0
  %v5136 = vrot.slane %v5135, 4
  %v5137 = vadd.f32 %v5135, %v5136
  %v5138 = vrot.slane %v5137, 2
  %v5139 = vadd.f32 %v5137, %v5138
  %v5140 = vrot.slane %v5139, 1
  %v5141 = vadd.f32 %v5139, %v5140
  %v5142 = vsel %vm49, %v5122, 0.0
  %v5143 = vrot.slane %v5142, 4
  %v5144 = vadd.f32 %v5142, %v5143
  %v5145 = vrot.slane %v5144, 2
  %v5146 = vadd.f32 %v5144, %v5145
  %v5147 = vrot.slane %v5146, 1
  %v5148 = vadd.f32 %v5146, %v5147
  %v5149 = vsel %vm49, %v5123, 0.0
  %v5150 = vrot.slane %v5149, 4
  %v5151 = vadd.f32 %v5149, %v5150
  %v5152 = vrot.slane %v5151, 2
  %v5153 = vadd.f32 %v5151, %v5152
  %v5154 = vrot.slane %v5153, 1
  %v5155 = vadd.f32 %v5153, %v5154
  %v5156 = vsel %vm49, %v5124, 0.0
  %v5157 = vrot.slane %v5156, 4
  %v5158 = vadd.f32 %v5156, %v5157
  %v5159 = vrot.slane %v5158, 2
  %v5160 = vadd.f32 %v5158, %v5159
  %v5161 = vrot.slane %v5160, 1
  %v5162 = vadd.f32 %v5160, %v5161
  %v5163 = vsel %vm49, %v5125, 0.0
  %v5164 = vrot.slane %v5163, 4
  %v5165 = vadd.f32 %v5163, %v5164
  %v5166 = vrot.slane %v5165, 2
  %v5167 = vadd.f32 %v5165, %v5166
  %v5168 = vrot.slane %v5167, 1
  %v5169 = vadd.f32 %v5167, %v5168
  %v5170 = vsel %vm49, %v5126, 0.0
  %v5171 = vrot.slane %v5170, 4
  %v5172 = vadd.f32 %v5170, %v5171
  %v5173 = vrot.slane %v5172, 2
  %v5174 = vadd.f32 %v5172, %v5173
  %v5175 = vrot.slane %v5174, 1
  %v5176 = vadd.f32 %v5174, %v5175
  %v5177 = vsel %vm49, %v5127, 0.0
  %v5178 = vrot.slane %v5177, 4
  %v5179 = vadd.f32 %v5177, %v5178
  %v5180 = vrot.slane %v5179, 2
  %v5181 = vadd.f32 %v5179, %v5180
  %v5182 = vrot.slane %v5181, 1
  %v5183 = vadd.f32 %v5181, %v5182
  %v5184 = vsel %vm89, %v4848, 0.0
  %v5185 = vrot.slane %v5184, 4
  %v5186 = vadd.f32 %v5184, %v5185
  %v5187 = vrot.slane %v5186, 2
  %v5188 = vadd.f32 %v5186, %v5187
  %v5189 = vrot.slane %v5188, 1
  %v5190 = vadd.f32 %v5188, %v5189
  %v5191 = vsel %vm89, %v4849, 0.0
  %v5192 = vrot.slane %v5191, 4
  %v5193 = vadd.f32 %v5191, %v5192
  %v5194 = vrot.slane %v5193, 2
  %v5195 = vadd.f32 %v5193, %v5194
  %v5196 = vrot.slane %v5195, 1
  %v5197 = vadd.f32 %v5195, %v5196
  %v5198 = vsel %vm89, %v4850, 0.0
  %v5199 = vrot.slane %v5198, 4
  %v5200 = vadd.f32 %v5198, %v5199
  %v5201 = vrot.slane %v5200, 2
  %v5202 = vadd.f32 %v5200, %v5201
  %v5203 = vrot.slane %v5202, 1
  %v5204 = vadd.f32 %v5202, %v5203
  %v5205 = vsel %vm89, %v4851, 0.0
  %v5206 = vrot.slane %v5205, 4
  %v5207 = vadd.f32 %v5205, %v5206
  %v5208 = vrot.slane %v5207, 2
  %v5209 = vadd.f32 %v5207, %v5208
  %v5210 = vrot.slane %v5209, 1
  %v5211 = vadd.f32 %v5209, %v5210
  %v5212 = vsel %vm89, %v4852, 0.0
  %v5213 = vrot.slane %v5212, 4
  %v5214 = vadd.f32 %v5212, %v5213
  %v5215 = vrot.slane %v5214, 2
  %v5216 = vadd.f32 %v5214, %v5215
  %v5217 = vrot.slane %v5216, 1
  %v5218 = vadd.f32 %v5216, %v5217
  %v5219 = vsel %vm89, %v4853, 0.0
  %v5220 = vrot.slane %v5219, 4
  %v5221 = vadd.f32 %v5219, %v5220
  %v5222 = vrot.slane %v5221, 2
  %v5223 = vadd.f32 %v5221, %v5222
  %v5224 = vrot.slane %v5223, 1
  %v5225 = vadd.f32 %v5223, %v5224
  %v5226 = vsel %vm89, %v4854, 0.0
  %v5227 = vrot.slane %v5226, 4
  %v5228 = vadd.f32 %v5226, %v5227
  %v5229 = vrot.slane %v5228, 2
  %v5230 = vadd.f32 %v5228, %v5229
  %v5231 = vrot.slane %v5230, 1
  %v5232 = vadd.f32 %v5230, %v5231
  %v5233 = vsel %vm89, %v4855, 0.0
  %v5234 = vrot.slane %v5233, 4
  %v5235 = vadd.f32 %v5233, %v5234
  %v5236 = vrot.slane %v5235, 2
  %v5237 = vadd.f32 %v5235, %v5236
  %v5238 = vrot.slane %v5237, 1
  %v5239 = vadd.f32 %v5237, %v5238
  %v5240 = vadd.f32 %v5190, 1e-08
  %v5241 = vadd.f32 %v5197, 1e-08
  %v5242 = vadd.f32 %v5204, 1e-08
  %v5243 = vadd.f32 %v5211, 1e-08
  %v5244 = vadd.f32 %v5218, 1e-08
  %v5245 = vadd.f32 %v5225, 1e-08
  %v5246 = vadd.f32 %v5232, 1e-08
  %v5247 = vadd.f32 %v5239, 1e-08
  %5249 = vset.pattern.permute.xlu0 0
  %5250 = vperm.xlu0 %5249, %v5240
  %v5251 = vpop.permute.xlu0 %5250
  %5254 = vset.pattern.permute.xlu0 0
  %5255 = vperm.xlu0 %5254, %v5241
  %v5256 = vpop.permute.xlu0 %5255
  %5259 = vset.pattern.permute.xlu0 0
  %5260 = vperm.xlu0 %5259, %v5242
  %v5261 = vpop.permute.xlu0 %5260
  %5264 = vset.pattern.permute.xlu0 0
  %5265 = vperm.xlu0 %5264, %v5243
  %v5266 = vpop.permute.xlu0 %5265
  %5269 = vset.pattern.permute.xlu0 0
  %5270 = vperm.xlu0 %5269, %v5244
  %v5271 = vpop.permute.xlu0 %5270
  %5274 = vset.pattern.permute.xlu0 0
  %5275 = vperm.xlu0 %5274, %v5245
  %v5276 = vpop.permute.xlu0 %5275
  %5279 = vset.pattern.permute.xlu0 0
  %5280 = vperm.xlu0 %5279, %v5246
  %v5281 = vpop.permute.xlu0 %5280
  %5284 = vset.pattern.permute.xlu0 0
  %5285 = vperm.xlu0 %5284, %v5247
  %v5286 = vpop.permute.xlu0 %5285
  %v5288 = vrcp.pop %v5251
  %v5289 = vmul.f32 %v5134, %v5288
  %v5290 = vrcp.pop %v5256
  %v5291 = vmul.f32 %v5141, %v5290
  %v5292 = vrcp.pop %v5261
  %v5293 = vmul.f32 %v5148, %v5292
  %v5294 = vrcp.pop %v5266
  %v5295 = vmul.f32 %v5155, %v5294
  %v5296 = vrcp.pop %v5271
  %v5297 = vmul.f32 %v5162, %v5296
  %v5298 = vrcp.pop %v5276
  %v5299 = vmul.f32 %v5169, %v5298
  %v5300 = vrcp.pop %v5281
  %v5301 = vmul.f32 %v5176, %v5300
  %v5302 = vrcp.pop %v5286
  %v5303 = vmul.f32 %v5183, %v5302
  %v5312 = vsel %vm762, %v5067, %v5065
  %v5313 = vsel %vm764, %v5069, %v5312
  %v5314 = vsel %vm766, %v5071, %v5313
  %v5315 = vsel %vm768, %v5073, %v5314
  %v5316 = vsel %vm770, %v5075, %v5315
  %v5317 = vsel %vm772, %v5077, %v5316
  %v5318 = vsel %vm774, %v5079, %v5317
  %s5320 = scalar_lea.vmem [#allocation2], 48
  %5321 = vst.msk [vmem:[%s5320] sm:$0xff] %vm777, %v5318
  %v5330 = vsel %vm762, %v5291, %v5289
  %v5331 = vsel %vm764, %v5293, %v5330
  %v5332 = vsel %vm766, %v5295, %v5331
  %v5333 = vsel %vm768, %v5297, %v5332
  %v5334 = vsel %vm770, %v5299, %v5333
  %v5335 = vsel %vm772, %v5301, %v5334
  %v5336 = vsel %vm774, %v5303, %v5335
  %5337 = vrot.lane.b32.xlu0 %v5336, 32
  %v5338 = vpop.permute.xlu0 %5337
  %5340 = vst.msk [vmem:[%s5320] sm:$0xff] %vm797, %v5338
  %s5341 = scalar_lea.vmem %s0, 28
  %v5342 = vld [vmem:[%s5341] sm:$0xf]
  %v5343 = vld [vmem:[%s5341 + $0x20] sm:$0xf]
  %v5344 = vld [vmem:[%s5341 + $0x40] sm:$0xf]
  %v5345 = vld [vmem:[%s5341 + $0x60] sm:$0xf]
  %v5346 = vld [vmem:[%s5341 + $0x80] sm:$0xf]
  %v5347 = vld [vmem:[%s5341 + $0xa0] sm:$0xf]
  %v5348 = vld [vmem:[%s5341 + $0xc0] sm:$0xf]
  %v5349 = vld [vmem:[%s5341 + $0xe0] sm:$0xf]
  %v5350 = vmul.f32 %v5342, %v39
  %v5351 = vmul.f32 %v5343, %v39
  %v5352 = vmul.f32 %v5344, %v39
  %v5353 = vmul.f32 %v5345, %v39
  %v5354 = vmul.f32 %v5346, %v39
  %v5355 = vmul.f32 %v5347, %v39
  %v5356 = vmul.f32 %v5348, %v39
  %v5357 = vmul.f32 %v5349, %v39
  %v5358 = vsel %vm49, %v5350, 0.0
  %5359 = vadd.xlane.f32.xlu0 %v5358
  %v5360 = vpop.xlane.xlu0 %5359
  %v5361 = vsel %vm49, %v5351, 0.0
  %5362 = vadd.xlane.f32.xlu0 %v5361
  %v5363 = vpop.xlane.xlu0 %5362
  %v5364 = vsel %vm49, %v5352, 0.0
  %5365 = vadd.xlane.f32.xlu0 %v5364
  %v5366 = vpop.xlane.xlu0 %5365
  %v5367 = vsel %vm49, %v5353, 0.0
  %5368 = vadd.xlane.f32.xlu0 %v5367
  %v5369 = vpop.xlane.xlu0 %5368
  %v5370 = vsel %vm49, %v5354, 0.0
  %5371 = vadd.xlane.f32.xlu0 %v5370
  %v5372 = vpop.xlane.xlu0 %5371
  %v5373 = vsel %vm49, %v5355, 0.0
  %5374 = vadd.xlane.f32.xlu0 %v5373
  %v5375 = vpop.xlane.xlu0 %5374
  %v5376 = vsel %vm49, %v5356, 0.0
  %5377 = vadd.xlane.f32.xlu0 %v5376
  %v5378 = vpop.xlane.xlu0 %5377
  %v5379 = vsel %vm49, %v5357, 0.0
  %5380 = vadd.xlane.f32.xlu0 %v5379
  %v5381 = vpop.xlane.xlu0 %5380
  %v5382 = vld [vmem:[#allocation4] sm:$0x1]
  %v5384 = vlaneseq
  %v5385 = vshrl.u32 %v5384, 7
  %v5386 = vsub.s32 0, %v5385
  %v5387 = vrot.slane %v5382, %v5386
  %v5389 = vadd.f32 %v5360, %v5387
  %v5390 = vadd.f32 %v5363, %v5387
  %v5391 = vadd.f32 %v5366, %v5387
  %v5392 = vadd.f32 %v5369, %v5387
  %v5393 = vadd.f32 %v5372, %v5387
  %v5394 = vadd.f32 %v5375, %v5387
  %v5395 = vadd.f32 %v5378, %v5387
  %v5396 = vadd.f32 %v5381, %v5387
  %v5397 = vsel %vm89, %v5389, -inf
  %v5398 = vrot.slane %v5397, 4
  %v5399 = vmax.f32 %v5397, %v5398
  %v5400 = vrot.slane %v5399, 2
  %v5401 = vmax.f32 %v5399, %v5400
  %v5402 = vrot.slane %v5401, 1
  %v5403 = vmax.f32 %v5401, %v5402
  %v5404 = vsel %vm89, %v5390, -inf
  %v5405 = vrot.slane %v5404, 4
  %v5406 = vmax.f32 %v5404, %v5405
  %v5407 = vrot.slane %v5406, 2
  %v5408 = vmax.f32 %v5406, %v5407
  %v5409 = vrot.slane %v5408, 1
  %v5410 = vmax.f32 %v5408, %v5409
  %v5411 = vsel %vm89, %v5391, -inf
  %v5412 = vrot.slane %v5411, 4
  %v5413 = vmax.f32 %v5411, %v5412
  %v5414 = vrot.slane %v5413, 2
  %v5415 = vmax.f32 %v5413, %v5414
  %v5416 = vrot.slane %v5415, 1
  %v5417 = vmax.f32 %v5415, %v5416
  %v5418 = vsel %vm89, %v5392, -inf
  %v5419 = vrot.slane %v5418, 4
  %v5420 = vmax.f32 %v5418, %v5419
  %v5421 = vrot.slane %v5420, 2
  %v5422 = vmax.f32 %v5420, %v5421
  %v5423 = vrot.slane %v5422, 1
  %v5424 = vmax.f32 %v5422, %v5423
  %v5425 = vsel %vm89, %v5393, -inf
  %v5426 = vrot.slane %v5425, 4
  %v5427 = vmax.f32 %v5425, %v5426
  %v5428 = vrot.slane %v5427, 2
  %v5429 = vmax.f32 %v5427, %v5428
  %v5430 = vrot.slane %v5429, 1
  %v5431 = vmax.f32 %v5429, %v5430
  %v5432 = vsel %vm89, %v5394, -inf
  %v5433 = vrot.slane %v5432, 4
  %v5434 = vmax.f32 %v5432, %v5433
  %v5435 = vrot.slane %v5434, 2
  %v5436 = vmax.f32 %v5434, %v5435
  %v5437 = vrot.slane %v5436, 1
  %v5438 = vmax.f32 %v5436, %v5437
  %v5439 = vsel %vm89, %v5395, -inf
  %v5440 = vrot.slane %v5439, 4
  %v5441 = vmax.f32 %v5439, %v5440
  %v5442 = vrot.slane %v5441, 2
  %v5443 = vmax.f32 %v5441, %v5442
  %v5444 = vrot.slane %v5443, 1
  %v5445 = vmax.f32 %v5443, %v5444
  %v5446 = vsel %vm89, %v5396, -inf
  %v5447 = vrot.slane %v5446, 4
  %v5448 = vmax.f32 %v5446, %v5447
  %v5449 = vrot.slane %v5448, 2
  %v5450 = vmax.f32 %v5448, %v5449
  %v5451 = vrot.slane %v5450, 1
  %v5452 = vmax.f32 %v5450, %v5451
  %v5453 = vsub.f32 %v5389, %v5403
  %v5454 = vsub.f32 %v5390, %v5410
  %v5455 = vsub.f32 %v5391, %v5417
  %v5456 = vsub.f32 %v5392, %v5424
  %v5457 = vsub.f32 %v5393, %v5431
  %v5458 = vsub.f32 %v5394, %v5438
  %v5459 = vsub.f32 %v5395, %v5445
  %v5460 = vsub.f32 %v5396, %v5452
  %v5461 = vmul.f32 %v5453, 1.442695
  %v5462 = vpow.pop %v5461
  %v5463 = vmul.f32 %v5454, 1.442695
  %v5464 = vpow.pop %v5463
  %v5465 = vmul.f32 %v5455, 1.442695
  %v5466 = vpow.pop %v5465
  %v5467 = vmul.f32 %v5456, 1.442695
  %v5468 = vpow.pop %v5467
  %v5469 = vmul.f32 %v5457, 1.442695
  %v5470 = vpow.pop %v5469
  %v5471 = vmul.f32 %v5458, 1.442695
  %v5472 = vpow.pop %v5471
  %v5473 = vmul.f32 %v5459, 1.442695
  %v5474 = vpow.pop %v5473
  %v5475 = vmul.f32 %v5460, 1.442695
  %v5476 = vpow.pop %v5475
  %v5477 = vsel %vm89, %v5462, 0.0
  %v5478 = vrot.slane %v5477, 4
  %v5479 = vadd.f32 %v5477, %v5478
  %v5480 = vrot.slane %v5479, 2
  %v5481 = vadd.f32 %v5479, %v5480
  %v5482 = vrot.slane %v5481, 1
  %v5483 = vadd.f32 %v5481, %v5482
  %v5484 = vsel %vm89, %v5464, 0.0
  %v5485 = vrot.slane %v5484, 4
  %v5486 = vadd.f32 %v5484, %v5485
  %v5487 = vrot.slane %v5486, 2
  %v5488 = vadd.f32 %v5486, %v5487
  %v5489 = vrot.slane %v5488, 1
  %v5490 = vadd.f32 %v5488, %v5489
  %v5491 = vsel %vm89, %v5466, 0.0
  %v5492 = vrot.slane %v5491, 4
  %v5493 = vadd.f32 %v5491, %v5492
  %v5494 = vrot.slane %v5493, 2
  %v5495 = vadd.f32 %v5493, %v5494
  %v5496 = vrot.slane %v5495, 1
  %v5497 = vadd.f32 %v5495, %v5496
  %v5498 = vsel %vm89, %v5468, 0.0
  %v5499 = vrot.slane %v5498, 4
  %v5500 = vadd.f32 %v5498, %v5499
  %v5501 = vrot.slane %v5500, 2
  %v5502 = vadd.f32 %v5500, %v5501
  %v5503 = vrot.slane %v5502, 1
  %v5504 = vadd.f32 %v5502, %v5503
  %v5505 = vsel %vm89, %v5470, 0.0
  %v5506 = vrot.slane %v5505, 4
  %v5507 = vadd.f32 %v5505, %v5506
  %v5508 = vrot.slane %v5507, 2
  %v5509 = vadd.f32 %v5507, %v5508
  %v5510 = vrot.slane %v5509, 1
  %v5511 = vadd.f32 %v5509, %v5510
  %v5512 = vsel %vm89, %v5472, 0.0
  %v5513 = vrot.slane %v5512, 4
  %v5514 = vadd.f32 %v5512, %v5513
  %v5515 = vrot.slane %v5514, 2
  %v5516 = vadd.f32 %v5514, %v5515
  %v5517 = vrot.slane %v5516, 1
  %v5518 = vadd.f32 %v5516, %v5517
  %v5519 = vsel %vm89, %v5474, 0.0
  %v5520 = vrot.slane %v5519, 4
  %v5521 = vadd.f32 %v5519, %v5520
  %v5522 = vrot.slane %v5521, 2
  %v5523 = vadd.f32 %v5521, %v5522
  %v5524 = vrot.slane %v5523, 1
  %v5525 = vadd.f32 %v5523, %v5524
  %v5526 = vsel %vm89, %v5476, 0.0
  %v5527 = vrot.slane %v5526, 4
  %v5528 = vadd.f32 %v5526, %v5527
  %v5529 = vrot.slane %v5528, 2
  %v5530 = vadd.f32 %v5528, %v5529
  %v5531 = vrot.slane %v5530, 1
  %v5532 = vadd.f32 %v5530, %v5531
  %v5533 = vrcp.pop %v5483
  %v5534 = vmul.f32 %v5462, %v5533
  %v5535 = vrcp.pop %v5490
  %v5536 = vmul.f32 %v5464, %v5535
  %v5537 = vrcp.pop %v5497
  %v5538 = vmul.f32 %v5466, %v5537
  %v5539 = vrcp.pop %v5504
  %v5540 = vmul.f32 %v5468, %v5539
  %v5541 = vrcp.pop %v5511
  %v5542 = vmul.f32 %v5470, %v5541
  %v5543 = vrcp.pop %v5518
  %v5544 = vmul.f32 %v5472, %v5543
  %v5545 = vrcp.pop %v5525
  %v5546 = vmul.f32 %v5474, %v5545
  %v5547 = vrcp.pop %v5532
  %v5548 = vmul.f32 %v5476, %v5547
  %v5549 = vsub.f32 %v5534, 0.25
  %v5550 = vsub.f32 %v5536, 0.25
  %v5551 = vsub.f32 %v5538, 0.25
  %v5552 = vsub.f32 %v5540, 0.25
  %v5553 = vsub.f32 %v5542, 0.25
  %v5554 = vsub.f32 %v5544, 0.25
  %v5555 = vsub.f32 %v5546, 0.25
  %v5556 = vsub.f32 %v5548, 0.25
  %v5557 = vmul.f32 %v5549, -10.0
  %v5558 = vmul.f32 %v5550, -10.0
  %v5559 = vmul.f32 %v5551, -10.0
  %v5560 = vmul.f32 %v5552, -10.0
  %v5561 = vmul.f32 %v5553, -10.0
  %v5562 = vmul.f32 %v5554, -10.0
  %v5563 = vmul.f32 %v5555, -10.0
  %v5564 = vmul.f32 %v5556, -10.0
  %v5565 = vmul.f32 %v5557, 1.442695
  %v5566 = vpow.pop %v5565
  %v5567 = vmul.f32 %v5558, 1.442695
  %v5568 = vpow.pop %v5567
  %v5569 = vmul.f32 %v5559, 1.442695
  %v5570 = vpow.pop %v5569
  %v5571 = vmul.f32 %v5560, 1.442695
  %v5572 = vpow.pop %v5571
  %v5573 = vmul.f32 %v5561, 1.442695
  %v5574 = vpow.pop %v5573
  %v5575 = vmul.f32 %v5562, 1.442695
  %v5576 = vpow.pop %v5575
  %v5577 = vmul.f32 %v5563, 1.442695
  %v5578 = vpow.pop %v5577
  %v5579 = vmul.f32 %v5564, 1.442695
  %v5580 = vpow.pop %v5579
  %v5581 = vadd.f32 %v5566, 1.0
  %v5582 = vadd.f32 %v5568, 1.0
  %v5583 = vadd.f32 %v5570, 1.0
  %v5584 = vadd.f32 %v5572, 1.0
  %v5585 = vadd.f32 %v5574, 1.0
  %v5586 = vadd.f32 %v5576, 1.0
  %v5587 = vadd.f32 %v5578, 1.0
  %v5588 = vadd.f32 %v5580, 1.0
  %v5589 = vrcp.pop %v5581
  %v5590 = vmul.f32 1.0, %v5589
  %v5591 = vrcp.pop %v5582
  %v5592 = vmul.f32 1.0, %v5591
  %v5593 = vrcp.pop %v5583
  %v5594 = vmul.f32 1.0, %v5593
  %v5595 = vrcp.pop %v5584
  %v5596 = vmul.f32 1.0, %v5595
  %v5597 = vrcp.pop %v5585
  %v5598 = vmul.f32 1.0, %v5597
  %v5599 = vrcp.pop %v5586
  %v5600 = vmul.f32 1.0, %v5599
  %v5601 = vrcp.pop %v5587
  %v5602 = vmul.f32 1.0, %v5601
  %v5603 = vrcp.pop %v5588
  %v5604 = vmul.f32 1.0, %v5603
  %v5605 = vsub.f32 1.0, %v5590
  %v5606 = vsub.f32 1.0, %v5592
  %v5607 = vsub.f32 1.0, %v5594
  %v5608 = vsub.f32 1.0, %v5596
  %v5609 = vsub.f32 1.0, %v5598
  %v5610 = vsub.f32 1.0, %v5600
  %v5611 = vsub.f32 1.0, %v5602
  %v5612 = vsub.f32 1.0, %v5604
  %5614 = vset.pattern.permute.xlu0 0
  %5615 = vperm.xlu0 %5614, %v5590
  %v5616 = vpop.permute.xlu0 %5615
  %5619 = vset.pattern.permute.xlu0 0
  %5620 = vperm.xlu0 %5619, %v5592
  %v5621 = vpop.permute.xlu0 %5620
  %5624 = vset.pattern.permute.xlu0 0
  %5625 = vperm.xlu0 %5624, %v5594
  %v5626 = vpop.permute.xlu0 %5625
  %5629 = vset.pattern.permute.xlu0 0
  %5630 = vperm.xlu0 %5629, %v5596
  %v5631 = vpop.permute.xlu0 %5630
  %5634 = vset.pattern.permute.xlu0 0
  %5635 = vperm.xlu0 %5634, %v5598
  %v5636 = vpop.permute.xlu0 %5635
  %5639 = vset.pattern.permute.xlu0 0
  %5640 = vperm.xlu0 %5639, %v5600
  %v5641 = vpop.permute.xlu0 %5640
  %5644 = vset.pattern.permute.xlu0 0
  %5645 = vperm.xlu0 %5644, %v5602
  %v5646 = vpop.permute.xlu0 %5645
  %5649 = vset.pattern.permute.xlu0 0
  %5650 = vperm.xlu0 %5649, %v5604
  %v5651 = vpop.permute.xlu0 %5650
  %v5653 = vmul.f32 %v5616, %v5342
  %v5654 = vmul.f32 %v5621, %v5343
  %v5655 = vmul.f32 %v5626, %v5344
  %v5656 = vmul.f32 %v5631, %v5345
  %v5657 = vmul.f32 %v5636, %v5346
  %v5658 = vmul.f32 %v5641, %v5347
  %v5659 = vmul.f32 %v5646, %v5348
  %v5660 = vmul.f32 %v5651, %v5349
  %v5661 = vsel %vm49, %v5653, 0.0
  %v5662 = vrot.slane %v5661, 4
  %v5663 = vadd.f32 %v5661, %v5662
  %v5664 = vrot.slane %v5663, 2
  %v5665 = vadd.f32 %v5663, %v5664
  %v5666 = vrot.slane %v5665, 1
  %v5667 = vadd.f32 %v5665, %v5666
  %v5668 = vsel %vm49, %v5654, 0.0
  %v5669 = vrot.slane %v5668, 4
  %v5670 = vadd.f32 %v5668, %v5669
  %v5671 = vrot.slane %v5670, 2
  %v5672 = vadd.f32 %v5670, %v5671
  %v5673 = vrot.slane %v5672, 1
  %v5674 = vadd.f32 %v5672, %v5673
  %v5675 = vsel %vm49, %v5655, 0.0
  %v5676 = vrot.slane %v5675, 4
  %v5677 = vadd.f32 %v5675, %v5676
  %v5678 = vrot.slane %v5677, 2
  %v5679 = vadd.f32 %v5677, %v5678
  %v5680 = vrot.slane %v5679, 1
  %v5681 = vadd.f32 %v5679, %v5680
  %v5682 = vsel %vm49, %v5656, 0.0
  %v5683 = vrot.slane %v5682, 4
  %v5684 = vadd.f32 %v5682, %v5683
  %v5685 = vrot.slane %v5684, 2
  %v5686 = vadd.f32 %v5684, %v5685
  %v5687 = vrot.slane %v5686, 1
  %v5688 = vadd.f32 %v5686, %v5687
  %v5689 = vsel %vm49, %v5657, 0.0
  %v5690 = vrot.slane %v5689, 4
  %v5691 = vadd.f32 %v5689, %v5690
  %v5692 = vrot.slane %v5691, 2
  %v5693 = vadd.f32 %v5691, %v5692
  %v5694 = vrot.slane %v5693, 1
  %v5695 = vadd.f32 %v5693, %v5694
  %v5696 = vsel %vm49, %v5658, 0.0
  %v5697 = vrot.slane %v5696, 4
  %v5698 = vadd.f32 %v5696, %v5697
  %v5699 = vrot.slane %v5698, 2
  %v5700 = vadd.f32 %v5698, %v5699
  %v5701 = vrot.slane %v5700, 1
  %v5702 = vadd.f32 %v5700, %v5701
  %v5703 = vsel %vm49, %v5659, 0.0
  %v5704 = vrot.slane %v5703, 4
  %v5705 = vadd.f32 %v5703, %v5704
  %v5706 = vrot.slane %v5705, 2
  %v5707 = vadd.f32 %v5705, %v5706
  %v5708 = vrot.slane %v5707, 1
  %v5709 = vadd.f32 %v5707, %v5708
  %v5710 = vsel %vm49, %v5660, 0.0
  %v5711 = vrot.slane %v5710, 4
  %v5712 = vadd.f32 %v5710, %v5711
  %v5713 = vrot.slane %v5712, 2
  %v5714 = vadd.f32 %v5712, %v5713
  %v5715 = vrot.slane %v5714, 1
  %v5716 = vadd.f32 %v5714, %v5715
  %v5717 = vsel %vm89, %v5590, 0.0
  %v5718 = vrot.slane %v5717, 4
  %v5719 = vadd.f32 %v5717, %v5718
  %v5720 = vrot.slane %v5719, 2
  %v5721 = vadd.f32 %v5719, %v5720
  %v5722 = vrot.slane %v5721, 1
  %v5723 = vadd.f32 %v5721, %v5722
  %v5724 = vsel %vm89, %v5592, 0.0
  %v5725 = vrot.slane %v5724, 4
  %v5726 = vadd.f32 %v5724, %v5725
  %v5727 = vrot.slane %v5726, 2
  %v5728 = vadd.f32 %v5726, %v5727
  %v5729 = vrot.slane %v5728, 1
  %v5730 = vadd.f32 %v5728, %v5729
  %v5731 = vsel %vm89, %v5594, 0.0
  %v5732 = vrot.slane %v5731, 4
  %v5733 = vadd.f32 %v5731, %v5732
  %v5734 = vrot.slane %v5733, 2
  %v5735 = vadd.f32 %v5733, %v5734
  %v5736 = vrot.slane %v5735, 1
  %v5737 = vadd.f32 %v5735, %v5736
  %v5738 = vsel %vm89, %v5596, 0.0
  %v5739 = vrot.slane %v5738, 4
  %v5740 = vadd.f32 %v5738, %v5739
  %v5741 = vrot.slane %v5740, 2
  %v5742 = vadd.f32 %v5740, %v5741
  %v5743 = vrot.slane %v5742, 1
  %v5744 = vadd.f32 %v5742, %v5743
  %v5745 = vsel %vm89, %v5598, 0.0
  %v5746 = vrot.slane %v5745, 4
  %v5747 = vadd.f32 %v5745, %v5746
  %v5748 = vrot.slane %v5747, 2
  %v5749 = vadd.f32 %v5747, %v5748
  %v5750 = vrot.slane %v5749, 1
  %v5751 = vadd.f32 %v5749, %v5750
  %v5752 = vsel %vm89, %v5600, 0.0
  %v5753 = vrot.slane %v5752, 4
  %v5754 = vadd.f32 %v5752, %v5753
  %v5755 = vrot.slane %v5754, 2
  %v5756 = vadd.f32 %v5754, %v5755
  %v5757 = vrot.slane %v5756, 1
  %v5758 = vadd.f32 %v5756, %v5757
  %v5759 = vsel %vm89, %v5602, 0.0
  %v5760 = vrot.slane %v5759, 4
  %v5761 = vadd.f32 %v5759, %v5760
  %v5762 = vrot.slane %v5761, 2
  %v5763 = vadd.f32 %v5761, %v5762
  %v5764 = vrot.slane %v5763, 1
  %v5765 = vadd.f32 %v5763, %v5764
  %v5766 = vsel %vm89, %v5604, 0.0
  %v5767 = vrot.slane %v5766, 4
  %v5768 = vadd.f32 %v5766, %v5767
  %v5769 = vrot.slane %v5768, 2
  %v5770 = vadd.f32 %v5768, %v5769
  %v5771 = vrot.slane %v5770, 1
  %v5772 = vadd.f32 %v5770, %v5771
  %v5773 = vadd.f32 %v5723, 1e-08
  %v5774 = vadd.f32 %v5730, 1e-08
  %v5775 = vadd.f32 %v5737, 1e-08
  %v5776 = vadd.f32 %v5744, 1e-08
  %v5777 = vadd.f32 %v5751, 1e-08
  %v5778 = vadd.f32 %v5758, 1e-08
  %v5779 = vadd.f32 %v5765, 1e-08
  %v5780 = vadd.f32 %v5772, 1e-08
  %5782 = vset.pattern.permute.xlu0 0
  %5783 = vperm.xlu0 %5782, %v5773
  %v5784 = vpop.permute.xlu0 %5783
  %5787 = vset.pattern.permute.xlu0 0
  %5788 = vperm.xlu0 %5787, %v5774
  %v5789 = vpop.permute.xlu0 %5788
  %5792 = vset.pattern.permute.xlu0 0
  %5793 = vperm.xlu0 %5792, %v5775
  %v5794 = vpop.permute.xlu0 %5793
  %5797 = vset.pattern.permute.xlu0 0
  %5798 = vperm.xlu0 %5797, %v5776
  %v5799 = vpop.permute.xlu0 %5798
  %5802 = vset.pattern.permute.xlu0 0
  %5803 = vperm.xlu0 %5802, %v5777
  %v5804 = vpop.permute.xlu0 %5803
  %5807 = vset.pattern.permute.xlu0 0
  %5808 = vperm.xlu0 %5807, %v5778
  %v5809 = vpop.permute.xlu0 %5808
  %5812 = vset.pattern.permute.xlu0 0
  %5813 = vperm.xlu0 %5812, %v5779
  %v5814 = vpop.permute.xlu0 %5813
  %5817 = vset.pattern.permute.xlu0 0
  %5818 = vperm.xlu0 %5817, %v5780
  %v5819 = vpop.permute.xlu0 %5818
  %v5821 = vrcp.pop %v5784
  %v5822 = vmul.f32 %v5667, %v5821
  %v5823 = vrcp.pop %v5789
  %v5824 = vmul.f32 %v5674, %v5823
  %v5825 = vrcp.pop %v5794
  %v5826 = vmul.f32 %v5681, %v5825
  %v5827 = vrcp.pop %v5799
  %v5828 = vmul.f32 %v5688, %v5827
  %v5829 = vrcp.pop %v5804
  %v5830 = vmul.f32 %v5695, %v5829
  %v5831 = vrcp.pop %v5809
  %v5832 = vmul.f32 %v5702, %v5831
  %v5833 = vrcp.pop %v5814
  %v5834 = vmul.f32 %v5709, %v5833
  %v5835 = vrcp.pop %v5819
  %v5836 = vmul.f32 %v5716, %v5835
  %5838 = vset.pattern.permute.xlu0 0
  %5839 = vperm.xlu0 %5838, %v5605
  %v5840 = vpop.permute.xlu0 %5839
  %5843 = vset.pattern.permute.xlu0 0
  %5844 = vperm.xlu0 %5843, %v5606
  %v5845 = vpop.permute.xlu0 %5844
  %5848 = vset.pattern.permute.xlu0 0
  %5849 = vperm.xlu0 %5848, %v5607
  %v5850 = vpop.permute.xlu0 %5849
  %5853 = vset.pattern.permute.xlu0 0
  %5854 = vperm.xlu0 %5853, %v5608
  %v5855 = vpop.permute.xlu0 %5854
  %5858 = vset.pattern.permute.xlu0 0
  %5859 = vperm.xlu0 %5858, %v5609
  %v5860 = vpop.permute.xlu0 %5859
  %5863 = vset.pattern.permute.xlu0 0
  %5864 = vperm.xlu0 %5863, %v5610
  %v5865 = vpop.permute.xlu0 %5864
  %5868 = vset.pattern.permute.xlu0 0
  %5869 = vperm.xlu0 %5868, %v5611
  %v5870 = vpop.permute.xlu0 %5869
  %5873 = vset.pattern.permute.xlu0 0
  %5874 = vperm.xlu0 %5873, %v5612
  %v5875 = vpop.permute.xlu0 %5874
  %v5877 = vmul.f32 %v5840, %v5342
  %v5878 = vmul.f32 %v5845, %v5343
  %v5879 = vmul.f32 %v5850, %v5344
  %v5880 = vmul.f32 %v5855, %v5345
  %v5881 = vmul.f32 %v5860, %v5346
  %v5882 = vmul.f32 %v5865, %v5347
  %v5883 = vmul.f32 %v5870, %v5348
  %v5884 = vmul.f32 %v5875, %v5349
  %v5885 = vsel %vm49, %v5877, 0.0
  %v5886 = vrot.slane %v5885, 4
  %v5887 = vadd.f32 %v5885, %v5886
  %v5888 = vrot.slane %v5887, 2
  %v5889 = vadd.f32 %v5887, %v5888
  %v5890 = vrot.slane %v5889, 1
  %v5891 = vadd.f32 %v5889, %v5890
  %v5892 = vsel %vm49, %v5878, 0.0
  %v5893 = vrot.slane %v5892, 4
  %v5894 = vadd.f32 %v5892, %v5893
  %v5895 = vrot.slane %v5894, 2
  %v5896 = vadd.f32 %v5894, %v5895
  %v5897 = vrot.slane %v5896, 1
  %v5898 = vadd.f32 %v5896, %v5897
  %v5899 = vsel %vm49, %v5879, 0.0
  %v5900 = vrot.slane %v5899, 4
  %v5901 = vadd.f32 %v5899, %v5900
  %v5902 = vrot.slane %v5901, 2
  %v5903 = vadd.f32 %v5901, %v5902
  %v5904 = vrot.slane %v5903, 1
  %v5905 = vadd.f32 %v5903, %v5904
  %v5906 = vsel %vm49, %v5880, 0.0
  %v5907 = vrot.slane %v5906, 4
  %v5908 = vadd.f32 %v5906, %v5907
  %v5909 = vrot.slane %v5908, 2
  %v5910 = vadd.f32 %v5908, %v5909
  %v5911 = vrot.slane %v5910, 1
  %v5912 = vadd.f32 %v5910, %v5911
  %v5913 = vsel %vm49, %v5881, 0.0
  %v5914 = vrot.slane %v5913, 4
  %v5915 = vadd.f32 %v5913, %v5914
  %v5916 = vrot.slane %v5915, 2
  %v5917 = vadd.f32 %v5915, %v5916
  %v5918 = vrot.slane %v5917, 1
  %v5919 = vadd.f32 %v5917, %v5918
  %v5920 = vsel %vm49, %v5882, 0.0
  %v5921 = vrot.slane %v5920, 4
  %v5922 = vadd.f32 %v5920, %v5921
  %v5923 = vrot.slane %v5922, 2
  %v5924 = vadd.f32 %v5922, %v5923
  %v5925 = vrot.slane %v5924, 1
  %v5926 = vadd.f32 %v5924, %v5925
  %v5927 = vsel %vm49, %v5883, 0.0
  %v5928 = vrot.slane %v5927, 4
  %v5929 = vadd.f32 %v5927, %v5928
  %v5930 = vrot.slane %v5929, 2
  %v5931 = vadd.f32 %v5929, %v5930
  %v5932 = vrot.slane %v5931, 1
  %v5933 = vadd.f32 %v5931, %v5932
  %v5934 = vsel %vm49, %v5884, 0.0
  %v5935 = vrot.slane %v5934, 4
  %v5936 = vadd.f32 %v5934, %v5935
  %v5937 = vrot.slane %v5936, 2
  %v5938 = vadd.f32 %v5936, %v5937
  %v5939 = vrot.slane %v5938, 1
  %v5940 = vadd.f32 %v5938, %v5939
  %v5941 = vsel %vm89, %v5605, 0.0
  %v5942 = vrot.slane %v5941, 4
  %v5943 = vadd.f32 %v5941, %v5942
  %v5944 = vrot.slane %v5943, 2
  %v5945 = vadd.f32 %v5943, %v5944
  %v5946 = vrot.slane %v5945, 1
  %v5947 = vadd.f32 %v5945, %v5946
  %v5948 = vsel %vm89, %v5606, 0.0
  %v5949 = vrot.slane %v5948, 4
  %v5950 = vadd.f32 %v5948, %v5949
  %v5951 = vrot.slane %v5950, 2
  %v5952 = vadd.f32 %v5950, %v5951
  %v5953 = vrot.slane %v5952, 1
  %v5954 = vadd.f32 %v5952, %v5953
  %v5955 = vsel %vm89, %v5607, 0.0
  %v5956 = vrot.slane %v5955, 4
  %v5957 = vadd.f32 %v5955, %v5956
  %v5958 = vrot.slane %v5957, 2
  %v5959 = vadd.f32 %v5957, %v5958
  %v5960 = vrot.slane %v5959, 1
  %v5961 = vadd.f32 %v5959, %v5960
  %v5962 = vsel %vm89, %v5608, 0.0
  %v5963 = vrot.slane %v5962, 4
  %v5964 = vadd.f32 %v5962, %v5963
  %v5965 = vrot.slane %v5964, 2
  %v5966 = vadd.f32 %v5964, %v5965
  %v5967 = vrot.slane %v5966, 1
  %v5968 = vadd.f32 %v5966, %v5967
  %v5969 = vsel %vm89, %v5609, 0.0
  %v5970 = vrot.slane %v5969, 4
  %v5971 = vadd.f32 %v5969, %v5970
  %v5972 = vrot.slane %v5971, 2
  %v5973 = vadd.f32 %v5971, %v5972
  %v5974 = vrot.slane %v5973, 1
  %v5975 = vadd.f32 %v5973, %v5974
  %v5976 = vsel %vm89, %v5610, 0.0
  %v5977 = vrot.slane %v5976, 4
  %v5978 = vadd.f32 %v5976, %v5977
  %v5979 = vrot.slane %v5978, 2
  %v5980 = vadd.f32 %v5978, %v5979
  %v5981 = vrot.slane %v5980, 1
  %v5982 = vadd.f32 %v5980, %v5981
  %v5983 = vsel %vm89, %v5611, 0.0
  %v5984 = vrot.slane %v5983, 4
  %v5985 = vadd.f32 %v5983, %v5984
  %v5986 = vrot.slane %v5985, 2
  %v5987 = vadd.f32 %v5985, %v5986
  %v5988 = vrot.slane %v5987, 1
  %v5989 = vadd.f32 %v5987, %v5988
  %v5990 = vsel %vm89, %v5612, 0.0
  %v5991 = vrot.slane %v5990, 4
  %v5992 = vadd.f32 %v5990, %v5991
  %v5993 = vrot.slane %v5992, 2
  %v5994 = vadd.f32 %v5992, %v5993
  %v5995 = vrot.slane %v5994, 1
  %v5996 = vadd.f32 %v5994, %v5995
  %v5997 = vadd.f32 %v5947, 1e-08
  %v5998 = vadd.f32 %v5954, 1e-08
  %v5999 = vadd.f32 %v5961, 1e-08
  %v6000 = vadd.f32 %v5968, 1e-08
  %v6001 = vadd.f32 %v5975, 1e-08
  %v6002 = vadd.f32 %v5982, 1e-08
  %v6003 = vadd.f32 %v5989, 1e-08
  %v6004 = vadd.f32 %v5996, 1e-08
  %6006 = vset.pattern.permute.xlu0 0
  %6007 = vperm.xlu0 %6006, %v5997
  %v6008 = vpop.permute.xlu0 %6007
  %6011 = vset.pattern.permute.xlu0 0
  %6012 = vperm.xlu0 %6011, %v5998
  %v6013 = vpop.permute.xlu0 %6012
  %6016 = vset.pattern.permute.xlu0 0
  %6017 = vperm.xlu0 %6016, %v5999
  %v6018 = vpop.permute.xlu0 %6017
  %6021 = vset.pattern.permute.xlu0 0
  %6022 = vperm.xlu0 %6021, %v6000
  %v6023 = vpop.permute.xlu0 %6022
  %6026 = vset.pattern.permute.xlu0 0
  %6027 = vperm.xlu0 %6026, %v6001
  %v6028 = vpop.permute.xlu0 %6027
  %6031 = vset.pattern.permute.xlu0 0
  %6032 = vperm.xlu0 %6031, %v6002
  %v6033 = vpop.permute.xlu0 %6032
  %6036 = vset.pattern.permute.xlu0 0
  %6037 = vperm.xlu0 %6036, %v6003
  %v6038 = vpop.permute.xlu0 %6037
  %6041 = vset.pattern.permute.xlu0 0
  %6042 = vperm.xlu0 %6041, %v6004
  %v6043 = vpop.permute.xlu0 %6042
  %v6045 = vrcp.pop %v6008
  %v6046 = vmul.f32 %v5891, %v6045
  %v6047 = vrcp.pop %v6013
  %v6048 = vmul.f32 %v5898, %v6047
  %v6049 = vrcp.pop %v6018
  %v6050 = vmul.f32 %v5905, %v6049
  %v6051 = vrcp.pop %v6023
  %v6052 = vmul.f32 %v5912, %v6051
  %v6053 = vrcp.pop %v6028
  %v6054 = vmul.f32 %v5919, %v6053
  %v6055 = vrcp.pop %v6033
  %v6056 = vmul.f32 %v5926, %v6055
  %v6057 = vrcp.pop %v6038
  %v6058 = vmul.f32 %v5933, %v6057
  %v6059 = vrcp.pop %v6043
  %v6060 = vmul.f32 %v5940, %v6059
  %v6069 = vsel %vm762, %v5824, %v5822
  %v6070 = vsel %vm764, %v5826, %v6069
  %v6071 = vsel %vm766, %v5828, %v6070
  %v6072 = vsel %vm768, %v5830, %v6071
  %v6073 = vsel %vm770, %v5832, %v6072
  %v6074 = vsel %vm772, %v5834, %v6073
  %v6075 = vsel %vm774, %v5836, %v6074
  %s6077 = scalar_lea.vmem [#allocation2], 56
  %6078 = vst.msk [vmem:[%s6077] sm:$0xff] %vm777, %v6075
  %v6087 = vsel %vm762, %v6048, %v6046
  %v6088 = vsel %vm764, %v6050, %v6087
  %v6089 = vsel %vm766, %v6052, %v6088
  %v6090 = vsel %vm768, %v6054, %v6089
  %v6091 = vsel %vm770, %v6056, %v6090
  %v6092 = vsel %vm772, %v6058, %v6091
  %v6093 = vsel %vm774, %v6060, %v6092
  %6094 = vrot.lane.b32.xlu0 %v6093, 32
  %v6095 = vpop.permute.xlu0 %6094
  %6097 = vst.msk [vmem:[%s6077] sm:$0xff] %vm797, %v6095
  %v6098 = vld [vmem:[#allocation2] sm:$0xff]
  %v6099 = vld [vmem:[#allocation2 + $0x8] sm:$0xff]
  %v6100 = vld [vmem:[#allocation2 + $0x10] sm:$0xff]
  %v6101 = vld [vmem:[#allocation2 + $0x18] sm:$0xff]
  %v6102 = vld [vmem:[#allocation2 + $0x20] sm:$0xff]
  %v6103 = vld [vmem:[#allocation2 + $0x28] sm:$0xff]
  %v6104 = vld [vmem:[#allocation2 + $0x30] sm:$0xff]
  %v6105 = vld [vmem:[#allocation2 + $0x38] sm:$0xff]
  %v6106 = vpack.c.bf16 %v6099, %v6098
  %v6107 = vpack.c.bf16 %v6101, %v6100
  %v6108 = vpack.c.bf16 %v6103, %v6102
  %v6109 = vpack.c.bf16 %v6105, %v6104
  %v6110 = vld [vmem:[%s3] sm:$0xff]
  %v6111 = vld [vmem:[%s3 + $0x8] sm:$0xff]
  %v6112 = vld [vmem:[%s3 + $0x10] sm:$0xff]
  %v6113 = vld [vmem:[%s3 + $0x18] sm:$0xff]
  %v6114 = vld [vmem:[%s3 + $0x20] sm:$0xff]
  %v6115 = vld [vmem:[%s3 + $0x28] sm:$0xff]
  %v6116 = vld [vmem:[%s3 + $0x30] sm:$0xff]
  %v6117 = vld [vmem:[%s3 + $0x38] sm:$0xff]
  %v6118 = vld [vmem:[%s5] sm:$0x3]
  %v6120 = vlaneseq
  %v6121 = vshrl.u32 %v6120, 7
  %v6122 = vsub.s32 0, %v6121
  %v6123 = vrot.slane %v6118, %v6122
  %v6124 = vlaneseq
  %v6125 = vshrl.u32 %v6124, 7
  %v6126 = vsub.s32 1, %v6125
  %v6127 = vrot.slane %v6118, %v6126
  %v6138 = vunpack.c.l.b16 %v6110
  %v6139 = vunpack.c.h.b16 %v6110
  %v6140 = vunpack.c.l.b16 %v6111
  %v6141 = vunpack.c.h.b16 %v6111
  %v6142 = vunpack.c.l.b16 %v6112
  %v6143 = vunpack.c.h.b16 %v6112
  %v6144 = vunpack.c.l.b16 %v6113
  %v6145 = vunpack.c.h.b16 %v6113
  %v6146 = vunpack.c.l.b16 %v6114
  %v6147 = vunpack.c.h.b16 %v6114
  %v6148 = vunpack.c.l.b16 %v6115
  %v6149 = vunpack.c.h.b16 %v6115
  %v6150 = vunpack.c.l.b16 %v6116
  %v6151 = vunpack.c.h.b16 %v6116
  %v6152 = vunpack.c.l.b16 %v6117
  %v6153 = vunpack.c.h.b16 %v6117
  %v6154 = vpack.c.b16 %v6140, %v6138
  %v6155 = vpack.c.b16 %v6141, %v6139
  %v6156 = vpack.c.b16 %v6144, %v6142
  %v6157 = vpack.c.b16 %v6145, %v6143
  %v6158 = vpack.c.b16 %v6148, %v6146
  %v6159 = vpack.c.b16 %v6149, %v6147
  %v6160 = vpack.c.b16 %v6152, %v6150
  %v6161 = vpack.c.b16 %v6153, %v6151
  %vm6170 = vcmask 523264
  %v6172 = vsel %vm6170, %v6106, 0
  %v6175 = vsel %vm6170, %v6107, 0
  %v6178 = vsel %vm6170, %v6108, 0
  %v6181 = vsel %vm6170, %v6109, 0
  %6183 = vmatprep.subr.bf16.mxu0 0
  %6184 = vmatpush1.bf16.msra.mxu0 0
  %6185 = vmatprep.subr.bf16.mxu0 0
  %6186 = vmatpush1.bf16.msra.mxu0 0
  %6187 = vmatprep.subr.bf16.mxu0 0
  %6188 = vmatpush1.bf16.msra.mxu0 0
  %6189 = vmatprep.subr.bf16.mxu0 0
  %6190 = vmatpush1.bf16.msra.mxu0 0
  %6191 = vmatprep.subr.bf16.mxu0 %v6161
  %6192 = vmatpush1.bf16.msra.mxu0 %v6160
  %6193 = vmatprep.subr.bf16.mxu0 %v6159
  %6194 = vmatpush1.bf16.msra.mxu0 %v6158
  %6195 = vmatprep.subr.bf16.mxu0 %v6157
  %6196 = vmatpush1.bf16.msra.mxu0 %v6156
  %6197 = vmatprep.subr.bf16.mxu0 %v6155
  %6198 = vmatpush1.bf16.msra.mxu0 %v6154
  %6199 = vmatprep.subr.bf16.mxu0 0
  %6200 = vmatpush2.bf16.msra.mxu0 0
  %6201 = vmatprep.subr.bf16.mxu0 0
  %6202 = vmatpush2.bf16.msra.mxu0 0
  %6203 = vmatprep.subr.bf16.mxu0 0
  %6204 = vmatpush2.bf16.msra.mxu0 0
  %6205 = vmatprep.subr.bf16.mxu0 0
  %6206 = vmatpush2.bf16.msra.mxu0 0
  %6207 = vmatprep.subr.bf16.mxu0 0
  %6208 = vmatpush2.bf16.msra.mxu0 0
  %6209 = vmatprep.subr.bf16.mxu0 0
  %6210 = vmatpush2.bf16.msra.mxu0 0
  %6211 = vmatprep.subr.bf16.mxu0 0
  %6212 = vmatpush2.bf16.msra.mxu0 0
  %6213 = vmatprep.subr.bf16.mxu0 0
  %6214 = vmatpush2.bf16.msra.mxu0 0
  %6215 = vmatprep.mubr.bf16.mxu0 0
  %6216 = vmatmul.mubr.bf16.gmra.mxu0 %v6172
  %v6217 = vpop.f32.mrf.mxu0
  %v6218 = vadd.f32 %v6123, %v6217
  %v6219 = vpop.f32.mrf.mxu0
  %v6220 = vadd.f32 %v6127, %v6219
  %v6221 = vpop.f32.mrf.mxu0
  %v6222 = vadd.f32 %v6123, %v6221
  %v6223 = vpop.f32.mrf.mxu0
  %v6224 = vadd.f32 %v6127, %v6223
  %6225 = vmatprep.mubr.bf16.mxu0 0
  %6226 = vmatmul.mubr.bf16.gmra.mxu0 %v6175
  %v6227 = vpop.f32.mrf.mxu0
  %v6228 = vadd.f32 %v6123, %v6227
  %v6229 = vpop.f32.mrf.mxu0
  %v6230 = vadd.f32 %v6127, %v6229
  %v6231 = vpop.f32.mrf.mxu0
  %v6232 = vadd.f32 %v6123, %v6231
  %v6233 = vpop.f32.mrf.mxu0
  %v6234 = vadd.f32 %v6127, %v6233
  %6235 = vmatprep.mubr.bf16.mxu0 0
  %6236 = vmatmul.mubr.bf16.gmra.mxu0 %v6178
  %v6237 = vpop.f32.mrf.mxu0
  %v6238 = vadd.f32 %v6123, %v6237
  %v6239 = vpop.f32.mrf.mxu0
  %v6240 = vadd.f32 %v6127, %v6239
  %v6241 = vpop.f32.mrf.mxu0
  %v6242 = vadd.f32 %v6123, %v6241
  %v6243 = vpop.f32.mrf.mxu0
  %v6244 = vadd.f32 %v6127, %v6243
  %6245 = vmatprep.mubr.bf16.mxu0 0
  %6246 = vmatmul.mubr.bf16.gmra.mxu0 %v6181
  %v6247 = vpop.f32.mrf.mxu0
  %v6248 = vadd.f32 %v6123, %v6247
  %v6249 = vpop.f32.mrf.mxu0
  %v6250 = vadd.f32 %v6127, %v6249
  %v6251 = vpop.f32.mrf.mxu0
  %v6252 = vadd.f32 %v6123, %v6251
  %v6253 = vpop.f32.mrf.mxu0
  %v6254 = vadd.f32 %v6127, %v6253
  %6255 = vdwg.mxu0
  %6256 = vst [vmem:[#allocation3] sm:$0xff] %v6218
  %6257 = vst [vmem:[#allocation3 + $0x8] sm:$0xff] %v6220
  %6258 = vst [vmem:[#allocation3 + $0x10] sm:$0xff] %v6222
  %6259 = vst [vmem:[#allocation3 + $0x18] sm:$0xff] %v6224
  %6260 = vst [vmem:[#allocation3 + $0x20] sm:$0xff] %v6228
  %6261 = vst [vmem:[#allocation3 + $0x28] sm:$0xff] %v6230
  %6262 = vst [vmem:[#allocation3 + $0x30] sm:$0xff] %v6232
  %6263 = vst [vmem:[#allocation3 + $0x38] sm:$0xff] %v6234
  %6264 = vst [vmem:[#allocation3 + $0x40] sm:$0xff] %v6238
  %6265 = vst [vmem:[#allocation3 + $0x48] sm:$0xff] %v6240
  %6266 = vst [vmem:[#allocation3 + $0x50] sm:$0xff] %v6242
  %6267 = vst [vmem:[#allocation3 + $0x58] sm:$0xff] %v6244
  %6268 = vst [vmem:[#allocation3 + $0x60] sm:$0xff] %v6248
  %6269 = vst [vmem:[#allocation3 + $0x68] sm:$0xff] %v6250
  %6270 = vst [vmem:[#allocation3 + $0x70] sm:$0xff] %v6252
  %6271 = vst [vmem:[#allocation3 + $0x78] sm:$0xff] %v6254
  %v6272 = vld [vmem:[%s4] sm:$0xff]
  %v6273 = vld [vmem:[%s4 + $0x8] sm:$0xff]
  %v6274 = vld [vmem:[%s4 + $0x10] sm:$0xff]
  %v6275 = vld [vmem:[%s4 + $0x18] sm:$0xff]
  %v6276 = vld [vmem:[%s4 + $0x20] sm:$0xff]
  %v6277 = vld [vmem:[%s4 + $0x28] sm:$0xff]
  %v6278 = vld [vmem:[%s4 + $0x30] sm:$0xff]
  %v6279 = vld [vmem:[%s4 + $0x38] sm:$0xff]
  %v6280 = vld [vmem:[#allocation3] sm:$0xff]
  %v6281 = vld [vmem:[#allocation3 + $0x8] sm:$0xff]
  %v6290 = vunpack.c.l.b16 %v6272
  %v6291 = vunpack.c.h.b16 %v6272
  %v6292 = vunpack.c.l.b16 %v6273
  %v6293 = vunpack.c.h.b16 %v6273
  %v6294 = vunpack.c.l.b16 %v6274
  %v6295 = vunpack.c.h.b16 %v6274
  %v6296 = vunpack.c.l.b16 %v6275
  %v6297 = vunpack.c.h.b16 %v6275
  %v6298 = vunpack.c.l.b16 %v6276
  %v6299 = vunpack.c.h.b16 %v6276
  %v6300 = vunpack.c.l.b16 %v6277
  %v6301 = vunpack.c.h.b16 %v6277
  %v6302 = vunpack.c.l.b16 %v6278
  %v6303 = vunpack.c.h.b16 %v6278
  %v6304 = vunpack.c.l.b16 %v6279
  %v6305 = vunpack.c.h.b16 %v6279
  %v6306 = vpack.c.b16 %v6292, %v6290
  %v6307 = vpack.c.b16 %v6293, %v6291
  %v6308 = vpack.c.b16 %v6296, %v6294
  %v6309 = vpack.c.b16 %v6297, %v6295
  %v6310 = vpack.c.b16 %v6300, %v6298
  %v6311 = vpack.c.b16 %v6301, %v6299
  %v6312 = vpack.c.b16 %v6304, %v6302
  %v6313 = vpack.c.b16 %v6305, %v6303
  %v6323 = vsel %vm6170, 0, 0
  %6325 = vmatprep.subr.bf16.mxu0 0
  %6326 = vmatpush1.bf16.msra.mxu0 0
  %6327 = vmatprep.subr.bf16.mxu0 0
  %6328 = vmatpush1.bf16.msra.mxu0 0
  %6329 = vmatprep.subr.bf16.mxu0 0
  %6330 = vmatpush1.bf16.msra.mxu0 0
  %6331 = vmatprep.subr.bf16.mxu0 0
  %6332 = vmatpush1.bf16.msra.mxu0 0
  %6333 = vmatprep.subr.bf16.mxu0 %v6313
  %6334 = vmatpush1.bf16.msra.mxu0 %v6312
  %6335 = vmatprep.subr.bf16.mxu0 %v6311
  %6336 = vmatpush1.bf16.msra.mxu0 %v6310
  %6337 = vmatprep.subr.bf16.mxu0 %v6309
  %6338 = vmatpush1.bf16.msra.mxu0 %v6308
  %6339 = vmatprep.subr.bf16.mxu0 %v6307
  %6340 = vmatpush1.bf16.msra.mxu0 %v6306
  %6341 = vmatprep.subr.bf16.mxu0 0
  %6342 = vmatpush2.bf16.msra.mxu0 0
  %6343 = vmatprep.subr.bf16.mxu0 0
  %6344 = vmatpush2.bf16.msra.mxu0 0
  %6345 = vmatprep.subr.bf16.mxu0 0
  %6346 = vmatpush2.bf16.msra.mxu0 0
  %6347 = vmatprep.subr.bf16.mxu0 0
  %6348 = vmatpush2.bf16.msra.mxu0 0
  %6349 = vmatprep.subr.bf16.mxu0 0
  %6350 = vmatpush2.bf16.msra.mxu0 0
  %6351 = vmatprep.subr.bf16.mxu0 0
  %6352 = vmatpush2.bf16.msra.mxu0 0
  %6353 = vmatprep.subr.bf16.mxu0 0
  %6354 = vmatpush2.bf16.msra.mxu0 0
  %6355 = vmatprep.subr.bf16.mxu0 0
  %6356 = vmatpush2.bf16.msra.mxu0 0
  %6357 = vmatprep.mubr.bf16.mxu0 0
  %6358 = vmatmul.mubr.bf16.gmra.mxu0 %v6323
  %v6359 = vpop.f32.mrf.mxu0
  %v6360 = vadd.f32 0.0, %v6359
  %v6361 = vpop.f32.mrf.mxu0
  %v6362 = vadd.f32 0.0, %v6361
  %v6363 = vpop.f32.mrf.mxu0
  %v6364 = vpop.f32.mrf.mxu0
  %6365 = vdwg.mxu0
  %v6366 = vadd.f32 %v6280, %v6360
  %v6367 = vadd.f32 %v6281, %v6362
  %v6368 = vsub.f32 0.0, %v6366
  %v6369 = vsub.f32 0.0, %v6367
  %v6370 = vmul.f32 %v6368, 1.442695
  %v6371 = vpow.pop %v6370
  %v6372 = vmul.f32 %v6369, 1.442695
  %v6373 = vpow.pop %v6372
  %v6374 = vadd.f32 %v6371, 1.0
  %v6375 = vadd.f32 %v6373, 1.0
  %v6376 = vrcp.pop %v6374
  %v6377 = vrcp.pop %v6375
  %v6378 = vtanh.pop %v6367
  %v6379 = vmul.f32 %v6376, 0.0
  %6381 = vrot.lane.b32.xlu0 %v6378, 64
  %v6382 = vpop.permute.xlu0 %6381
  %v6384 = vmul.f32 %v6376, %v6382
  %6386 = vrot.lane.b32.xlu0 %v6384, 64
  %v6387 = vpop.permute.xlu0 %6386
  %v6389 = vadd.f32 %v6379, %v6387
  %v6390 = vtanh.pop %v6389
  %6392 = vrot.lane.b32.xlu0 %v6390, 64
  %v6393 = vpop.permute.xlu0 %6392
  %v6395 = vmul.f32 %v6377, %v6393
  %6396 = vst.msk [vmem:[#allocation2] sm:$0xff] %vm6170, %v6395
  %s6397 = scalar_lea.vmem [#allocation3], 16
  %v6398 = vld [vmem:[%s6397] sm:$0xff]
  %v6399 = vld [vmem:[%s6397 + $0x8] sm:$0xff]
  %v6400 = vpack.c.bf16 %v6395, %v6395
  %v6402 = vsel %vm6170, %v6400, 0
  %6404 = vmatprep.subr.bf16.mxu0 0
  %6405 = vmatpush1.bf16.msra.mxu0 0
  %6406 = vmatprep.subr.bf16.mxu0 0
  %6407 = vmatpush1.bf16.msra.mxu0 0
  %6408 = vmatprep.subr.bf16.mxu0 0
  %6409 = vmatpush1.bf16.msra.mxu0 0
  %6410 = vmatprep.subr.bf16.mxu0 0
  %6411 = vmatpush1.bf16.msra.mxu0 0
  %6412 = vmatprep.subr.bf16.mxu0 %v6313
  %6413 = vmatpush1.bf16.msra.mxu0 %v6312
  %6414 = vmatprep.subr.bf16.mxu0 %v6311
  %6415 = vmatpush1.bf16.msra.mxu0 %v6310
  %6416 = vmatprep.subr.bf16.mxu0 %v6309
  %6417 = vmatpush1.bf16.msra.mxu0 %v6308
  %6418 = vmatprep.subr.bf16.mxu0 %v6307
  %6419 = vmatpush1.bf16.msra.mxu0 %v6306
  %6420 = vmatprep.subr.bf16.mxu0 0
  %6421 = vmatpush2.bf16.msra.mxu0 0
  %6422 = vmatprep.subr.bf16.mxu0 0
  %6423 = vmatpush2.bf16.msra.mxu0 0
  %6424 = vmatprep.subr.bf16.mxu0 0
  %6425 = vmatpush2.bf16.msra.mxu0 0
  %6426 = vmatprep.subr.bf16.mxu0 0
  %6427 = vmatpush2.bf16.msra.mxu0 0
  %6428 = vmatprep.subr.bf16.mxu0 0
  %6429 = vmatpush2.bf16.msra.mxu0 0
  %6430 = vmatprep.subr.bf16.mxu0 0
  %6431 = vmatpush2.bf16.msra.mxu0 0
  %6432 = vmatprep.subr.bf16.mxu0 0
  %6433 = vmatpush2.bf16.msra.mxu0 0
  %6434 = vmatprep.subr.bf16.mxu0 0
  %6435 = vmatpush2.bf16.msra.mxu0 0
  %6436 = vmatprep.mubr.bf16.mxu0 0
  %6437 = vmatmul.mubr.bf16.gmra.mxu0 %v6402
  %v6438 = vpop.f32.mrf.mxu0
  %v6439 = vadd.f32 0.0, %v6438
  %v6440 = vpop.f32.mrf.mxu0
  %v6441 = vadd.f32 0.0, %v6440
  %v6442 = vpop.f32.mrf.mxu0
  %v6443 = vpop.f32.mrf.mxu0
  %6444 = vdwg.mxu0
  %v6445 = vadd.f32 %v6398, %v6439
  %v6446 = vadd.f32 %v6399, %v6441
  %v6447 = vsub.f32 0.0, %v6445
  %v6448 = vsub.f32 0.0, %v6446
  %v6449 = vmul.f32 %v6447, 1.442695
  %v6450 = vpow.pop %v6449
  %v6451 = vmul.f32 %v6448, 1.442695
  %v6452 = vpow.pop %v6451
  %v6453 = vadd.f32 %v6450, 1.0
  %v6454 = vadd.f32 %v6452, 1.0
  %v6455 = vrcp.pop %v6453
  %v6456 = vrcp.pop %v6454
  %v6457 = vtanh.pop %v6446
  %v6458 = vmul.f32 %v6455, %v6389
  %6460 = vrot.lane.b32.xlu0 %v6457, 64
  %v6461 = vpop.permute.xlu0 %6460
  %v6463 = vmul.f32 %v6455, %v6461
  %6465 = vrot.lane.b32.xlu0 %v6463, 64
  %v6466 = vpop.permute.xlu0 %6465
  %v6468 = vadd.f32 %v6458, %v6466
  %v6469 = vtanh.pop %v6468
  %6471 = vrot.lane.b32.xlu0 %v6469, 64
  %v6472 = vpop.permute.xlu0 %6471
  %v6474 = vmul.f32 %v6456, %v6472
  %6475 = vst.msk [vmem:[%s1535] sm:$0xff] %vm6170, %v6474
  %s6476 = scalar_lea.vmem [#allocation3], 32
  %v6477 = vld [vmem:[%s6476] sm:$0xff]
  %v6478 = vld [vmem:[%s6476 + $0x8] sm:$0xff]
  %v6479 = vpack.c.bf16 %v6474, %v6474
  %v6481 = vsel %vm6170, %v6479, 0
  %6483 = vmatprep.subr.bf16.mxu0 0
  %6484 = vmatpush1.bf16.msra.mxu0 0
  %6485 = vmatprep.subr.bf16.mxu0 0
  %6486 = vmatpush1.bf16.msra.mxu0 0
  %6487 = vmatprep.subr.bf16.mxu0 0
  %6488 = vmatpush1.bf16.msra.mxu0 0
  %6489 = vmatprep.subr.bf16.mxu0 0
  %6490 = vmatpush1.bf16.msra.mxu0 0
  %6491 = vmatprep.subr.bf16.mxu0 %v6313
  %6492 = vmatpush1.bf16.msra.mxu0 %v6312
  %6493 = vmatprep.subr.bf16.mxu0 %v6311
  %6494 = vmatpush1.bf16.msra.mxu0 %v6310
  %6495 = vmatprep.subr.bf16.mxu0 %v6309
  %6496 = vmatpush1.bf16.msra.mxu0 %v6308
  %6497 = vmatprep.subr.bf16.mxu0 %v6307
  %6498 = vmatpush1.bf16.msra.mxu0 %v6306
  %6499 = vmatprep.subr.bf16.mxu0 0
  %6500 = vmatpush2.bf16.msra.mxu0 0
  %6501 = vmatprep.subr.bf16.mxu0 0
  %6502 = vmatpush2.bf16.msra.mxu0 0
  %6503 = vmatprep.subr.bf16.mxu0 0
  %6504 = vmatpush2.bf16.msra.mxu0 0
  %6505 = vmatprep.subr.bf16.mxu0 0
  %6506 = vmatpush2.bf16.msra.mxu0 0
  %6507 = vmatprep.subr.bf16.mxu0 0
  %6508 = vmatpush2.bf16.msra.mxu0 0
  %6509 = vmatprep.subr.bf16.mxu0 0
  %6510 = vmatpush2.bf16.msra.mxu0 0
  %6511 = vmatprep.subr.bf16.mxu0 0
  %6512 = vmatpush2.bf16.msra.mxu0 0
  %6513 = vmatprep.subr.bf16.mxu0 0
  %6514 = vmatpush2.bf16.msra.mxu0 0
  %6515 = vmatprep.mubr.bf16.mxu0 0
  %6516 = vmatmul.mubr.bf16.gmra.mxu0 %v6481
  %v6517 = vpop.f32.mrf.mxu0
  %v6518 = vadd.f32 0.0, %v6517
  %v6519 = vpop.f32.mrf.mxu0
  %v6520 = vadd.f32 0.0, %v6519
  %v6521 = vpop.f32.mrf.mxu0
  %v6522 = vpop.f32.mrf.mxu0
  %6523 = vdwg.mxu0
  %v6524 = vadd.f32 %v6477, %v6518
  %v6525 = vadd.f32 %v6478, %v6520
  %v6526 = vsub.f32 0.0, %v6524
  %v6527 = vsub.f32 0.0, %v6525
  %v6528 = vmul.f32 %v6526, 1.442695
  %v6529 = vpow.pop %v6528
  %v6530 = vmul.f32 %v6527, 1.442695
  %v6531 = vpow.pop %v6530
  %v6532 = vadd.f32 %v6529, 1.0
  %v6533 = vadd.f32 %v6531, 1.0
  %v6534 = vrcp.pop %v6532
  %v6535 = vrcp.pop %v6533
  %v6536 = vtanh.pop %v6525
  %v6537 = vmul.f32 %v6534, %v6468
  %6539 = vrot.lane.b32.xlu0 %v6536, 64
  %v6540 = vpop.permute.xlu0 %6539
  %v6542 = vmul.f32 %v6534, %v6540
  %6544 = vrot.lane.b32.xlu0 %v6542, 64
  %v6545 = vpop.permute.xlu0 %6544
  %v6547 = vadd.f32 %v6537, %v6545
  %v6548 = vtanh.pop %v6547
  %6550 = vrot.lane.b32.xlu0 %v6548, 64
  %v6551 = vpop.permute.xlu0 %6550
  %v6553 = vmul.f32 %v6535, %v6551
  %6554 = vst.msk [vmem:[%s2292] sm:$0xff] %vm6170, %v6553
  %s6555 = scalar_lea.vmem [#allocation3], 48
  %v6556 = vld [vmem:[%s6555] sm:$0xff]
  %v6557 = vld [vmem:[%s6555 + $0x8] sm:$0xff]
  %v6558 = vpack.c.bf16 %v6553, %v6553
  %v6560 = vsel %vm6170, %v6558, 0
  %6562 = vmatprep.subr.bf16.mxu0 0
  %6563 = vmatpush1.bf16.msra.mxu0 0
  %6564 = vmatprep.subr.bf16.mxu0 0
  %6565 = vmatpush1.bf16.msra.mxu0 0
  %6566 = vmatprep.subr.bf16.mxu0 0
  %6567 = vmatpush1.bf16.msra.mxu0 0
  %6568 = vmatprep.subr.bf16.mxu0 0
  %6569 = vmatpush1.bf16.msra.mxu0 0
  %6570 = vmatprep.subr.bf16.mxu0 %v6313
  %6571 = vmatpush1.bf16.msra.mxu0 %v6312
  %6572 = vmatprep.subr.bf16.mxu0 %v6311
  %6573 = vmatpush1.bf16.msra.mxu0 %v6310
  %6574 = vmatprep.subr.bf16.mxu0 %v6309
  %6575 = vmatpush1.bf16.msra.mxu0 %v6308
  %6576 = vmatprep.subr.bf16.mxu0 %v6307
  %6577 = vmatpush1.bf16.msra.mxu0 %v6306
  %6578 = vmatprep.subr.bf16.mxu0 0
  %6579 = vmatpush2.bf16.msra.mxu0 0
  %6580 = vmatprep.subr.bf16.mxu0 0
  %6581 = vmatpush2.bf16.msra.mxu0 0
  %6582 = vmatprep.subr.bf16.mxu0 0
  %6583 = vmatpush2.bf16.msra.mxu0 0
  %6584 = vmatprep.subr.bf16.mxu0 0
  %6585 = vmatpush2.bf16.msra.mxu0 0
  %6586 = vmatprep.subr.bf16.mxu0 0
  %6587 = vmatpush2.bf16.msra.mxu0 0
  %6588 = vmatprep.subr.bf16.mxu0 0
  %6589 = vmatpush2.bf16.msra.mxu0 0
  %6590 = vmatprep.subr.bf16.mxu0 0
  %6591 = vmatpush2.bf16.msra.mxu0 0
  %6592 = vmatprep.subr.bf16.mxu0 0
  %6593 = vmatpush2.bf16.msra.mxu0 0
  %6594 = vmatprep.mubr.bf16.mxu0 0
  %6595 = vmatmul.mubr.bf16.gmra.mxu0 %v6560
  %v6596 = vpop.f32.mrf.mxu0
  %v6597 = vadd.f32 0.0, %v6596
  %v6598 = vpop.f32.mrf.mxu0
  %v6599 = vadd.f32 0.0, %v6598
  %v6600 = vpop.f32.mrf.mxu0
  %v6601 = vpop.f32.mrf.mxu0
  %6602 = vdwg.mxu0
  %v6603 = vadd.f32 %v6556, %v6597
  %v6604 = vadd.f32 %v6557, %v6599
  %v6605 = vsub.f32 0.0, %v6603
  %v6606 = vsub.f32 0.0, %v6604
  %v6607 = vmul.f32 %v6605, 1.442695
  %v6608 = vpow.pop %v6607
  %v6609 = vmul.f32 %v6606, 1.442695
  %v6610 = vpow.pop %v6609
  %v6611 = vadd.f32 %v6608, 1.0
  %v6612 = vadd.f32 %v6610, 1.0
  %v6613 = vrcp.pop %v6611
  %v6614 = vrcp.pop %v6612
  %v6615 = vtanh.pop %v6604
  %v6616 = vmul.f32 %v6613, %v6547
  %6618 = vrot.lane.b32.xlu0 %v6615, 64
  %v6619 = vpop.permute.xlu0 %6618
  %v6621 = vmul.f32 %v6613, %v6619
  %6623 = vrot.lane.b32.xlu0 %v6621, 64
  %v6624 = vpop.permute.xlu0 %6623
  %v6626 = vadd.f32 %v6616, %v6624
  %v6627 = vtanh.pop %v6626
  %6629 = vrot.lane.b32.xlu0 %v6627, 64
  %v6630 = vpop.permute.xlu0 %6629
  %v6632 = vmul.f32 %v6614, %v6630
  %6633 = vst.msk [vmem:[%s3049] sm:$0xff] %vm6170, %v6632
  %s6634 = scalar_lea.vmem [#allocation3], 64
  %v6635 = vld [vmem:[%s6634] sm:$0xff]
  %v6636 = vld [vmem:[%s6634 + $0x8] sm:$0xff]
  %v6637 = vpack.c.bf16 %v6632, %v6632
  %v6639 = vsel %vm6170, %v6637, 0
  %6641 = vmatprep.subr.bf16.mxu0 0
  %6642 = vmatpush1.bf16.msra.mxu0 0
  %6643 = vmatprep.subr.bf16.mxu0 0
  %6644 = vmatpush1.bf16.msra.mxu0 0
  %6645 = vmatprep.subr.bf16.mxu0 0
  %6646 = vmatpush1.bf16.msra.mxu0 0
  %6647 = vmatprep.subr.bf16.mxu0 0
  %6648 = vmatpush1.bf16.msra.mxu0 0
  %6649 = vmatprep.subr.bf16.mxu0 %v6313
  %6650 = vmatpush1.bf16.msra.mxu0 %v6312
  %6651 = vmatprep.subr.bf16.mxu0 %v6311
  %6652 = vmatpush1.bf16.msra.mxu0 %v6310
  %6653 = vmatprep.subr.bf16.mxu0 %v6309
  %6654 = vmatpush1.bf16.msra.mxu0 %v6308
  %6655 = vmatprep.subr.bf16.mxu0 %v6307
  %6656 = vmatpush1.bf16.msra.mxu0 %v6306
  %6657 = vmatprep.subr.bf16.mxu0 0
  %6658 = vmatpush2.bf16.msra.mxu0 0
  %6659 = vmatprep.subr.bf16.mxu0 0
  %6660 = vmatpush2.bf16.msra.mxu0 0
  %6661 = vmatprep.subr.bf16.mxu0 0
  %6662 = vmatpush2.bf16.msra.mxu0 0
  %6663 = vmatprep.subr.bf16.mxu0 0
  %6664 = vmatpush2.bf16.msra.mxu0 0
  %6665 = vmatprep.subr.bf16.mxu0 0
  %6666 = vmatpush2.bf16.msra.mxu0 0
  %6667 = vmatprep.subr.bf16.mxu0 0
  %6668 = vmatpush2.bf16.msra.mxu0 0
  %6669 = vmatprep.subr.bf16.mxu0 0
  %6670 = vmatpush2.bf16.msra.mxu0 0
  %6671 = vmatprep.subr.bf16.mxu0 0
  %6672 = vmatpush2.bf16.msra.mxu0 0
  %6673 = vmatprep.mubr.bf16.mxu0 0
  %6674 = vmatmul.mubr.bf16.gmra.mxu0 %v6639
  %v6675 = vpop.f32.mrf.mxu0
  %v6676 = vadd.f32 0.0, %v6675
  %v6677 = vpop.f32.mrf.mxu0
  %v6678 = vadd.f32 0.0, %v6677
  %v6679 = vpop.f32.mrf.mxu0
  %v6680 = vpop.f32.mrf.mxu0
  %6681 = vdwg.mxu0
  %v6682 = vadd.f32 %v6635, %v6676
  %v6683 = vadd.f32 %v6636, %v6678
  %v6684 = vsub.f32 0.0, %v6682
  %v6685 = vsub.f32 0.0, %v6683
  %v6686 = vmul.f32 %v6684, 1.442695
  %v6687 = vpow.pop %v6686
  %v6688 = vmul.f32 %v6685, 1.442695
  %v6689 = vpow.pop %v6688
  %v6690 = vadd.f32 %v6687, 1.0
  %v6691 = vadd.f32 %v6689, 1.0
  %v6692 = vrcp.pop %v6690
  %v6693 = vrcp.pop %v6691
  %v6694 = vtanh.pop %v6683
  %v6695 = vmul.f32 %v6692, %v6626
  %6697 = vrot.lane.b32.xlu0 %v6694, 64
  %v6698 = vpop.permute.xlu0 %6697
  %v6700 = vmul.f32 %v6692, %v6698
  %6702 = vrot.lane.b32.xlu0 %v6700, 64
  %v6703 = vpop.permute.xlu0 %6702
  %v6705 = vadd.f32 %v6695, %v6703
  %v6706 = vtanh.pop %v6705
  %6708 = vrot.lane.b32.xlu0 %v6706, 64
  %v6709 = vpop.permute.xlu0 %6708
  %v6711 = vmul.f32 %v6693, %v6709
  %6712 = vst.msk [vmem:[%s3806] sm:$0xff] %vm6170, %v6711
  %s6713 = scalar_lea.vmem [#allocation3], 80
  %v6714 = vld [vmem:[%s6713] sm:$0xff]
  %v6715 = vld [vmem:[%s6713 + $0x8] sm:$0xff]
  %v6716 = vpack.c.bf16 %v6711, %v6711
  %v6718 = vsel %vm6170, %v6716, 0
  %6720 = vmatprep.subr.bf16.mxu0 0
  %6721 = vmatpush1.bf16.msra.mxu0 0
  %6722 = vmatprep.subr.bf16.mxu0 0
  %6723 = vmatpush1.bf16.msra.mxu0 0
  %6724 = vmatprep.subr.bf16.mxu0 0
  %6725 = vmatpush1.bf16.msra.mxu0 0
  %6726 = vmatprep.subr.bf16.mxu0 0
  %6727 = vmatpush1.bf16.msra.mxu0 0
  %6728 = vmatprep.subr.bf16.mxu0 %v6313
  %6729 = vmatpush1.bf16.msra.mxu0 %v6312
  %6730 = vmatprep.subr.bf16.mxu0 %v6311
  %6731 = vmatpush1.bf16.msra.mxu0 %v6310
  %6732 = vmatprep.subr.bf16.mxu0 %v6309
  %6733 = vmatpush1.bf16.msra.mxu0 %v6308
  %6734 = vmatprep.subr.bf16.mxu0 %v6307
  %6735 = vmatpush1.bf16.msra.mxu0 %v6306
  %6736 = vmatprep.subr.bf16.mxu0 0
  %6737 = vmatpush2.bf16.msra.mxu0 0
  %6738 = vmatprep.subr.bf16.mxu0 0
  %6739 = vmatpush2.bf16.msra.mxu0 0
  %6740 = vmatprep.subr.bf16.mxu0 0
  %6741 = vmatpush2.bf16.msra.mxu0 0
  %6742 = vmatprep.subr.bf16.mxu0 0
  %6743 = vmatpush2.bf16.msra.mxu0 0
  %6744 = vmatprep.subr.bf16.mxu0 0
  %6745 = vmatpush2.bf16.msra.mxu0 0
  %6746 = vmatprep.subr.bf16.mxu0 0
  %6747 = vmatpush2.bf16.msra.mxu0 0
  %6748 = vmatprep.subr.bf16.mxu0 0
  %6749 = vmatpush2.bf16.msra.mxu0 0
  %6750 = vmatprep.subr.bf16.mxu0 0
  %6751 = vmatpush2.bf16.msra.mxu0 0
  %6752 = vmatprep.mubr.bf16.mxu0 0
  %6753 = vmatmul.mubr.bf16.gmra.mxu0 %v6718
  %v6754 = vpop.f32.mrf.mxu0
  %v6755 = vadd.f32 0.0, %v6754
  %v6756 = vpop.f32.mrf.mxu0
  %v6757 = vadd.f32 0.0, %v6756
  %v6758 = vpop.f32.mrf.mxu0
  %v6759 = vpop.f32.mrf.mxu0
  %6760 = vdwg.mxu0
  %v6761 = vadd.f32 %v6714, %v6755
  %v6762 = vadd.f32 %v6715, %v6757
  %v6763 = vsub.f32 0.0, %v6761
  %v6764 = vsub.f32 0.0, %v6762
  %v6765 = vmul.f32 %v6763, 1.442695
  %v6766 = vpow.pop %v6765
  %v6767 = vmul.f32 %v6764, 1.442695
  %v6768 = vpow.pop %v6767
  %v6769 = vadd.f32 %v6766, 1.0
  %v6770 = vadd.f32 %v6768, 1.0
  %v6771 = vrcp.pop %v6769
  %v6772 = vrcp.pop %v6770
  %v6773 = vtanh.pop %v6762
  %v6774 = vmul.f32 %v6771, %v6705
  %6776 = vrot.lane.b32.xlu0 %v6773, 64
  %v6777 = vpop.permute.xlu0 %6776
  %v6779 = vmul.f32 %v6771, %v6777
  %6781 = vrot.lane.b32.xlu0 %v6779, 64
  %v6782 = vpop.permute.xlu0 %6781
  %v6784 = vadd.f32 %v6774, %v6782
  %v6785 = vtanh.pop %v6784
  %6787 = vrot.lane.b32.xlu0 %v6785, 64
  %v6788 = vpop.permute.xlu0 %6787
  %v6790 = vmul.f32 %v6772, %v6788
  %6791 = vst.msk [vmem:[%s4563] sm:$0xff] %vm6170, %v6790
  %s6792 = scalar_lea.vmem [#allocation3], 96
  %v6793 = vld [vmem:[%s6792] sm:$0xff]
  %v6794 = vld [vmem:[%s6792 + $0x8] sm:$0xff]
  %v6795 = vpack.c.bf16 %v6790, %v6790
  %v6797 = vsel %vm6170, %v6795, 0
  %6799 = vmatprep.subr.bf16.mxu0 0
  %6800 = vmatpush1.bf16.msra.mxu0 0
  %6801 = vmatprep.subr.bf16.mxu0 0
  %6802 = vmatpush1.bf16.msra.mxu0 0
  %6803 = vmatprep.subr.bf16.mxu0 0
  %6804 = vmatpush1.bf16.msra.mxu0 0
  %6805 = vmatprep.subr.bf16.mxu0 0
  %6806 = vmatpush1.bf16.msra.mxu0 0
  %6807 = vmatprep.subr.bf16.mxu0 %v6313
  %6808 = vmatpush1.bf16.msra.mxu0 %v6312
  %6809 = vmatprep.subr.bf16.mxu0 %v6311
  %6810 = vmatpush1.bf16.msra.mxu0 %v6310
  %6811 = vmatprep.subr.bf16.mxu0 %v6309
  %6812 = vmatpush1.bf16.msra.mxu0 %v6308
  %6813 = vmatprep.subr.bf16.mxu0 %v6307
  %6814 = vmatpush1.bf16.msra.mxu0 %v6306
  %6815 = vmatprep.subr.bf16.mxu0 0
  %6816 = vmatpush2.bf16.msra.mxu0 0
  %6817 = vmatprep.subr.bf16.mxu0 0
  %6818 = vmatpush2.bf16.msra.mxu0 0
  %6819 = vmatprep.subr.bf16.mxu0 0
  %6820 = vmatpush2.bf16.msra.mxu0 0
  %6821 = vmatprep.subr.bf16.mxu0 0
  %6822 = vmatpush2.bf16.msra.mxu0 0
  %6823 = vmatprep.subr.bf16.mxu0 0
  %6824 = vmatpush2.bf16.msra.mxu0 0
  %6825 = vmatprep.subr.bf16.mxu0 0
  %6826 = vmatpush2.bf16.msra.mxu0 0
  %6827 = vmatprep.subr.bf16.mxu0 0
  %6828 = vmatpush2.bf16.msra.mxu0 0
  %6829 = vmatprep.subr.bf16.mxu0 0
  %6830 = vmatpush2.bf16.msra.mxu0 0
  %6831 = vmatprep.mubr.bf16.mxu0 0
  %6832 = vmatmul.mubr.bf16.gmra.mxu0 %v6797
  %v6833 = vpop.f32.mrf.mxu0
  %v6834 = vadd.f32 0.0, %v6833
  %v6835 = vpop.f32.mrf.mxu0
  %v6836 = vadd.f32 0.0, %v6835
  %v6837 = vpop.f32.mrf.mxu0
  %v6838 = vpop.f32.mrf.mxu0
  %6839 = vdwg.mxu0
  %v6840 = vadd.f32 %v6793, %v6834
  %v6841 = vadd.f32 %v6794, %v6836
  %v6842 = vsub.f32 0.0, %v6840
  %v6843 = vsub.f32 0.0, %v6841
  %v6844 = vmul.f32 %v6842, 1.442695
  %v6845 = vpow.pop %v6844
  %v6846 = vmul.f32 %v6843, 1.442695
  %v6847 = vpow.pop %v6846
  %v6848 = vadd.f32 %v6845, 1.0
  %v6849 = vadd.f32 %v6847, 1.0
  %v6850 = vrcp.pop %v6848
  %v6851 = vrcp.pop %v6849
  %v6852 = vtanh.pop %v6841
  %v6853 = vmul.f32 %v6850, %v6784
  %6855 = vrot.lane.b32.xlu0 %v6852, 64
  %v6856 = vpop.permute.xlu0 %6855
  %v6858 = vmul.f32 %v6850, %v6856
  %6860 = vrot.lane.b32.xlu0 %v6858, 64
  %v6861 = vpop.permute.xlu0 %6860
  %v6863 = vadd.f32 %v6853, %v6861
  %v6864 = vtanh.pop %v6863
  %6866 = vrot.lane.b32.xlu0 %v6864, 64
  %v6867 = vpop.permute.xlu0 %6866
  %v6869 = vmul.f32 %v6851, %v6867
  %6870 = vst.msk [vmem:[%s5320] sm:$0xff] %vm6170, %v6869
  %s6871 = scalar_lea.vmem [#allocation3], 112
  %v6872 = vld [vmem:[%s6871] sm:$0xff]
  %v6873 = vld [vmem:[%s6871 + $0x8] sm:$0xff]
  %v6874 = vpack.c.bf16 %v6869, %v6869
  %v6876 = vsel %vm6170, %v6874, 0
  %6878 = vmatprep.subr.bf16.mxu0 0
  %6879 = vmatpush1.bf16.msra.mxu0 0
  %6880 = vmatprep.subr.bf16.mxu0 0
  %6881 = vmatpush1.bf16.msra.mxu0 0
  %6882 = vmatprep.subr.bf16.mxu0 0
  %6883 = vmatpush1.bf16.msra.mxu0 0
  %6884 = vmatprep.subr.bf16.mxu0 0
  %6885 = vmatpush1.bf16.msra.mxu0 0
  %6886 = vmatprep.subr.bf16.mxu0 %v6313
  %6887 = vmatpush1.bf16.msra.mxu0 %v6312
  %6888 = vmatprep.subr.bf16.mxu0 %v6311
  %6889 = vmatpush1.bf16.msra.mxu0 %v6310
  %6890 = vmatprep.subr.bf16.mxu0 %v6309
  %6891 = vmatpush1.bf16.msra.mxu0 %v6308
  %6892 = vmatprep.subr.bf16.mxu0 %v6307
  %6893 = vmatpush1.bf16.msra.mxu0 %v6306
  %6894 = vmatprep.subr.bf16.mxu0 0
  %6895 = vmatpush2.bf16.msra.mxu0 0
  %6896 = vmatprep.subr.bf16.mxu0 0
  %6897 = vmatpush2.bf16.msra.mxu0 0
  %6898 = vmatprep.subr.bf16.mxu0 0
  %6899 = vmatpush2.bf16.msra.mxu0 0
  %6900 = vmatprep.subr.bf16.mxu0 0
  %6901 = vmatpush2.bf16.msra.mxu0 0
  %6902 = vmatprep.subr.bf16.mxu0 0
  %6903 = vmatpush2.bf16.msra.mxu0 0
  %6904 = vmatprep.subr.bf16.mxu0 0
  %6905 = vmatpush2.bf16.msra.mxu0 0
  %6906 = vmatprep.subr.bf16.mxu0 0
  %6907 = vmatpush2.bf16.msra.mxu0 0
  %6908 = vmatprep.subr.bf16.mxu0 0
  %6909 = vmatpush2.bf16.msra.mxu0 0
  %6910 = vmatprep.mubr.bf16.mxu0 0
  %6911 = vmatmul.mubr.bf16.gmra.mxu0 %v6876
  %v6912 = vpop.f32.mrf.mxu0
  %v6913 = vadd.f32 0.0, %v6912
  %v6914 = vpop.f32.mrf.mxu0
  %v6915 = vadd.f32 0.0, %v6914
  %v6916 = vpop.f32.mrf.mxu0
  %v6917 = vpop.f32.mrf.mxu0
  %6918 = vdwg.mxu0
  %v6919 = vadd.f32 %v6872, %v6913
  %v6920 = vadd.f32 %v6873, %v6915
  %v6921 = vsub.f32 0.0, %v6919
  %v6922 = vsub.f32 0.0, %v6920
  %v6923 = vmul.f32 %v6921, 1.442695
  %v6924 = vpow.pop %v6923
  %v6925 = vmul.f32 %v6922, 1.442695
  %v6926 = vpow.pop %v6925
  %v6927 = vadd.f32 %v6924, 1.0
  %v6928 = vadd.f32 %v6926, 1.0
  %v6929 = vrcp.pop %v6927
  %v6930 = vrcp.pop %v6928
  %v6931 = vtanh.pop %v6920
  %v6932 = vmul.f32 %v6929, %v6863
  %6934 = vrot.lane.b32.xlu0 %v6931, 64
  %v6935 = vpop.permute.xlu0 %6934
  %v6937 = vmul.f32 %v6929, %v6935
  %6939 = vrot.lane.b32.xlu0 %v6937, 64
  %v6940 = vpop.permute.xlu0 %6939
  %v6942 = vadd.f32 %v6932, %v6940
  %v6943 = vtanh.pop %v6942
  %6945 = vrot.lane.b32.xlu0 %v6943, 64
  %v6946 = vpop.permute.xlu0 %6945
  %v6948 = vmul.f32 %v6930, %v6946
  %6949 = vst.msk [vmem:[%s6077] sm:$0xff] %vm6170, %v6948
  %v6950 = vld [vmem:[#allocation2] sm:$0xff]
  %v6951 = vld [vmem:[#allocation2 + $0x8] sm:$0xff]
  %v6952 = vld [vmem:[#allocation2 + $0x10] sm:$0xff]
  %v6953 = vld [vmem:[#allocation2 + $0x18] sm:$0xff]
  %v6954 = vld [vmem:[#allocation2 + $0x20] sm:$0xff]
  %v6955 = vld [vmem:[#allocation2 + $0x28] sm:$0xff]
  %v6956 = vld [vmem:[#allocation2 + $0x30] sm:$0xff]
  %v6957 = vld [vmem:[#allocation2 + $0x38] sm:$0xff]
  %v6958 = vpack.c.bf16 %v6951, %v6950
  %v6959 = vpack.c.bf16 %v6953, %v6952
  %v6960 = vpack.c.bf16 %v6955, %v6954
  %v6961 = vpack.c.bf16 %v6957, %v6956
  %s6962 = scalar_lea.vmem %s3, 64
  %v6963 = vld [vmem:[%s6962] sm:$0xff]
  %v6964 = vld [vmem:[%s6962 + $0x8] sm:$0xff]
  %v6965 = vld [vmem:[%s6962 + $0x10] sm:$0xff]
  %v6966 = vld [vmem:[%s6962 + $0x18] sm:$0xff]
  %v6967 = vld [vmem:[%s6962 + $0x20] sm:$0xff]
  %v6968 = vld [vmem:[%s6962 + $0x28] sm:$0xff]
  %v6969 = vld [vmem:[%s6962 + $0x30] sm:$0xff]
  %v6970 = vld [vmem:[%s6962 + $0x38] sm:$0xff]
  %s6971 = scalar_lea.vmem %s5, 2
  %v6972 = vld [vmem:[%s6971] sm:$0x3]
  %v6974 = vlaneseq
  %v6975 = vshrl.u32 %v6974, 7
  %v6976 = vsub.s32 0, %v6975
  %v6977 = vrot.slane %v6972, %v6976
  %v6978 = vlaneseq
  %v6979 = vshrl.u32 %v6978, 7
  %v6980 = vsub.s32 1, %v6979
  %v6981 = vrot.slane %v6972, %v6980
  %v6992 = vunpack.c.l.b16 %v6963
  %v6993 = vunpack.c.h.b16 %v6963
  %v6994 = vunpack.c.l.b16 %v6964
  %v6995 = vunpack.c.h.b16 %v6964
  %v6996 = vunpack.c.l.b16 %v6965
  %v6997 = vunpack.c.h.b16 %v6965
  %v6998 = vunpack.c.l.b16 %v6966
  %v6999 = vunpack.c.h.b16 %v6966
  %v7000 = vunpack.c.l.b16 %v6967
  %v7001 = vunpack.c.h.b16 %v6967
  %v7002 = vunpack.c.l.b16 %v6968
  %v7003 = vunpack.c.h.b16 %v6968
  %v7004 = vunpack.c.l.b16 %v6969
  %v7005 = vunpack.c.h.b16 %v6969
  %v7006 = vunpack.c.l.b16 %v6970
  %v7007 = vunpack.c.h.b16 %v6970
  %v7008 = vpack.c.b16 %v6994, %v6992
  %v7009 = vpack.c.b16 %v6995, %v6993
  %v7010 = vpack.c.b16 %v6998, %v6996
  %v7011 = vpack.c.b16 %v6999, %v6997
  %v7012 = vpack.c.b16 %v7002, %v7000
  %v7013 = vpack.c.b16 %v7003, %v7001
  %v7014 = vpack.c.b16 %v7006, %v7004
  %v7015 = vpack.c.b16 %v7007, %v7005
  %v7025 = vsel %vm6170, %v6958, 0
  %v7028 = vsel %vm6170, %v6959, 0
  %v7031 = vsel %vm6170, %v6960, 0
  %v7034 = vsel %vm6170, %v6961, 0
  %7036 = vmatprep.subr.bf16.mxu0 0
  %7037 = vmatpush1.bf16.msra.mxu0 0
  %7038 = vmatprep.subr.bf16.mxu0 0
  %7039 = vmatpush1.bf16.msra.mxu0 0
  %7040 = vmatprep.subr.bf16.mxu0 0
  %7041 = vmatpush1.bf16.msra.mxu0 0
  %7042 = vmatprep.subr.bf16.mxu0 0
  %7043 = vmatpush1.bf16.msra.mxu0 0
  %7044 = vmatprep.subr.bf16.mxu0 %v7015
  %7045 = vmatpush1.bf16.msra.mxu0 %v7014
  %7046 = vmatprep.subr.bf16.mxu0 %v7013
  %7047 = vmatpush1.bf16.msra.mxu0 %v7012
  %7048 = vmatprep.subr.bf16.mxu0 %v7011
  %7049 = vmatpush1.bf16.msra.mxu0 %v7010
  %7050 = vmatprep.subr.bf16.mxu0 %v7009
  %7051 = vmatpush1.bf16.msra.mxu0 %v7008
  %7052 = vmatprep.subr.bf16.mxu0 0
  %7053 = vmatpush2.bf16.msra.mxu0 0
  %7054 = vmatprep.subr.bf16.mxu0 0
  %7055 = vmatpush2.bf16.msra.mxu0 0
  %7056 = vmatprep.subr.bf16.mxu0 0
  %7057 = vmatpush2.bf16.msra.mxu0 0
  %7058 = vmatprep.subr.bf16.mxu0 0
  %7059 = vmatpush2.bf16.msra.mxu0 0
  %7060 = vmatprep.subr.bf16.mxu0 0
  %7061 = vmatpush2.bf16.msra.mxu0 0
  %7062 = vmatprep.subr.bf16.mxu0 0
  %7063 = vmatpush2.bf16.msra.mxu0 0
  %7064 = vmatprep.subr.bf16.mxu0 0
  %7065 = vmatpush2.bf16.msra.mxu0 0
  %7066 = vmatprep.subr.bf16.mxu0 0
  %7067 = vmatpush2.bf16.msra.mxu0 0
  %7068 = vmatprep.mubr.bf16.mxu0 0
  %7069 = vmatmul.mubr.bf16.gmra.mxu0 %v7025
  %v7070 = vpop.f32.mrf.mxu0
  %v7071 = vadd.f32 %v6977, %v7070
  %v7072 = vpop.f32.mrf.mxu0
  %v7073 = vadd.f32 %v6981, %v7072
  %v7074 = vpop.f32.mrf.mxu0
  %v7075 = vadd.f32 %v6977, %v7074
  %v7076 = vpop.f32.mrf.mxu0
  %v7077 = vadd.f32 %v6981, %v7076
  %7078 = vmatprep.mubr.bf16.mxu0 0
  %7079 = vmatmul.mubr.bf16.gmra.mxu0 %v7028
  %v7080 = vpop.f32.mrf.mxu0
  %v7081 = vadd.f32 %v6977, %v7080
  %v7082 = vpop.f32.mrf.mxu0
  %v7083 = vadd.f32 %v6981, %v7082
  %v7084 = vpop.f32.mrf.mxu0
  %v7085 = vadd.f32 %v6977, %v7084
  %v7086 = vpop.f32.mrf.mxu0
  %v7087 = vadd.f32 %v6981, %v7086
  %7088 = vmatprep.mubr.bf16.mxu0 0
  %7089 = vmatmul.mubr.bf16.gmra.mxu0 %v7031
  %v7090 = vpop.f32.mrf.mxu0
  %v7091 = vadd.f32 %v6977, %v7090
  %v7092 = vpop.f32.mrf.mxu0
  %v7093 = vadd.f32 %v6981, %v7092
  %v7094 = vpop.f32.mrf.mxu0
  %v7095 = vadd.f32 %v6977, %v7094
  %v7096 = vpop.f32.mrf.mxu0
  %v7097 = vadd.f32 %v6981, %v7096
  %7098 = vmatprep.mubr.bf16.mxu0 0
  %7099 = vmatmul.mubr.bf16.gmra.mxu0 %v7034
  %v7100 = vpop.f32.mrf.mxu0
  %v7101 = vadd.f32 %v6977, %v7100
  %v7102 = vpop.f32.mrf.mxu0
  %v7103 = vadd.f32 %v6981, %v7102
  %v7104 = vpop.f32.mrf.mxu0
  %v7105 = vadd.f32 %v6977, %v7104
  %v7106 = vpop.f32.mrf.mxu0
  %v7107 = vadd.f32 %v6981, %v7106
  %7108 = vdwg.mxu0
  %7109 = vst [vmem:[#allocation3] sm:$0xff] %v7071
  %7110 = vst [vmem:[#allocation3 + $0x8] sm:$0xff] %v7073
  %7111 = vst [vmem:[#allocation3 + $0x10] sm:$0xff] %v7075
  %7112 = vst [vmem:[#allocation3 + $0x18] sm:$0xff] %v7077
  %7113 = vst [vmem:[#allocation3 + $0x20] sm:$0xff] %v7081
  %7114 = vst [vmem:[#allocation3 + $0x28] sm:$0xff] %v7083
  %7115 = vst [vmem:[#allocation3 + $0x30] sm:$0xff] %v7085
  %7116 = vst [vmem:[#allocation3 + $0x38] sm:$0xff] %v7087
  %7117 = vst [vmem:[#allocation3 + $0x40] sm:$0xff] %v7091
  %7118 = vst [vmem:[#allocation3 + $0x48] sm:$0xff] %v7093
  %7119 = vst [vmem:[#allocation3 + $0x50] sm:$0xff] %v7095
  %7120 = vst [vmem:[#allocation3 + $0x58] sm:$0xff] %v7097
  %7121 = vst [vmem:[#allocation3 + $0x60] sm:$0xff] %v7101
  %7122 = vst [vmem:[#allocation3 + $0x68] sm:$0xff] %v7103
  %7123 = vst [vmem:[#allocation3 + $0x70] sm:$0xff] %v7105
  %7124 = vst [vmem:[#allocation3 + $0x78] sm:$0xff] %v7107
  %s7125 = scalar_lea.vmem %s4, 64
  %v7126 = vld [vmem:[%s7125] sm:$0xff]
  %v7127 = vld [vmem:[%s7125 + $0x8] sm:$0xff]
  %v7128 = vld [vmem:[%s7125 + $0x10] sm:$0xff]
  %v7129 = vld [vmem:[%s7125 + $0x18] sm:$0xff]
  %v7130 = vld [vmem:[%s7125 + $0x20] sm:$0xff]
  %v7131 = vld [vmem:[%s7125 + $0x28] sm:$0xff]
  %v7132 = vld [vmem:[%s7125 + $0x30] sm:$0xff]
  %v7133 = vld [vmem:[%s7125 + $0x38] sm:$0xff]
  %v7134 = vld [vmem:[#allocation3] sm:$0xff]
  %v7135 = vld [vmem:[#allocation3 + $0x8] sm:$0xff]
  %v7144 = vunpack.c.l.b16 %v7126
  %v7145 = vunpack.c.h.b16 %v7126
  %v7146 = vunpack.c.l.b16 %v7127
  %v7147 = vunpack.c.h.b16 %v7127
  %v7148 = vunpack.c.l.b16 %v7128
  %v7149 = vunpack.c.h.b16 %v7128
  %v7150 = vunpack.c.l.b16 %v7129
  %v7151 = vunpack.c.h.b16 %v7129
  %v7152 = vunpack.c.l.b16 %v7130
  %v7153 = vunpack.c.h.b16 %v7130
  %v7154 = vunpack.c.l.b16 %v7131
  %v7155 = vunpack.c.h.b16 %v7131
  %v7156 = vunpack.c.l.b16 %v7132
  %v7157 = vunpack.c.h.b16 %v7132
  %v7158 = vunpack.c.l.b16 %v7133
  %v7159 = vunpack.c.h.b16 %v7133
  %v7160 = vpack.c.b16 %v7146, %v7144
  %v7161 = vpack.c.b16 %v7147, %v7145
  %v7162 = vpack.c.b16 %v7150, %v7148
  %v7163 = vpack.c.b16 %v7151, %v7149
  %v7164 = vpack.c.b16 %v7154, %v7152
  %v7165 = vpack.c.b16 %v7155, %v7153
  %v7166 = vpack.c.b16 %v7158, %v7156
  %v7167 = vpack.c.b16 %v7159, %v7157
  %7176 = vmatprep.subr.bf16.mxu0 0
  %7177 = vmatpush1.bf16.msra.mxu0 0
  %7178 = vmatprep.subr.bf16.mxu0 0
  %7179 = vmatpush1.bf16.msra.mxu0 0
  %7180 = vmatprep.subr.bf16.mxu0 0
  %7181 = vmatpush1.bf16.msra.mxu0 0
  %7182 = vmatprep.subr.bf16.mxu0 0
  %7183 = vmatpush1.bf16.msra.mxu0 0
  %7184 = vmatprep.subr.bf16.mxu0 %v7167
  %7185 = vmatpush1.bf16.msra.mxu0 %v7166
  %7186 = vmatprep.subr.bf16.mxu0 %v7165
  %7187 = vmatpush1.bf16.msra.mxu0 %v7164
  %7188 = vmatprep.subr.bf16.mxu0 %v7163
  %7189 = vmatpush1.bf16.msra.mxu0 %v7162
  %7190 = vmatprep.subr.bf16.mxu0 %v7161
  %7191 = vmatpush1.bf16.msra.mxu0 %v7160
  %7192 = vmatprep.subr.bf16.mxu0 0
  %7193 = vmatpush2.bf16.msra.mxu0 0
  %7194 = vmatprep.subr.bf16.mxu0 0
  %7195 = vmatpush2.bf16.msra.mxu0 0
  %7196 = vmatprep.subr.bf16.mxu0 0
  %7197 = vmatpush2.bf16.msra.mxu0 0
  %7198 = vmatprep.subr.bf16.mxu0 0
  %7199 = vmatpush2.bf16.msra.mxu0 0
  %7200 = vmatprep.subr.bf16.mxu0 0
  %7201 = vmatpush2.bf16.msra.mxu0 0
  %7202 = vmatprep.subr.bf16.mxu0 0
  %7203 = vmatpush2.bf16.msra.mxu0 0
  %7204 = vmatprep.subr.bf16.mxu0 0
  %7205 = vmatpush2.bf16.msra.mxu0 0
  %7206 = vmatprep.subr.bf16.mxu0 0
  %7207 = vmatpush2.bf16.msra.mxu0 0
  %7208 = vmatprep.mubr.bf16.mxu0 0
  %7209 = vmatmul.mubr.bf16.gmra.mxu0 %v6323
  %v7210 = vpop.f32.mrf.mxu0
  %v7211 = vadd.f32 0.0, %v7210
  %v7212 = vpop.f32.mrf.mxu0
  %v7213 = vadd.f32 0.0, %v7212
  %v7214 = vpop.f32.mrf.mxu0
  %v7215 = vpop.f32.mrf.mxu0
  %7216 = vdwg.mxu0
  %v7217 = vadd.f32 %v7134, %v7211
  %v7218 = vadd.f32 %v7135, %v7213
  %v7219 = vsub.f32 0.0, %v7217
  %v7220 = vsub.f32 0.0, %v7218
  %v7221 = vmul.f32 %v7219, 1.442695
  %v7222 = vpow.pop %v7221
  %v7223 = vmul.f32 %v7220, 1.442695
  %v7224 = vpow.pop %v7223
  %v7225 = vadd.f32 %v7222, 1.0
  %v7226 = vadd.f32 %v7224, 1.0
  %v7227 = vrcp.pop %v7225
  %v7228 = vrcp.pop %v7226
  %v7229 = vtanh.pop %v7218
  %v7230 = vmul.f32 %v7227, 0.0
  %7232 = vrot.lane.b32.xlu0 %v7229, 64
  %v7233 = vpop.permute.xlu0 %7232
  %v7235 = vmul.f32 %v7227, %v7233
  %7237 = vrot.lane.b32.xlu0 %v7235, 64
  %v7238 = vpop.permute.xlu0 %7237
  %v7240 = vadd.f32 %v7230, %v7238
  %v7241 = vtanh.pop %v7240
  %7243 = vrot.lane.b32.xlu0 %v7241, 64
  %v7244 = vpop.permute.xlu0 %7243
  %v7246 = vmul.f32 %v7228, %v7244
  %7247 = vst.msk [vmem:[#allocation2] sm:$0xff] %vm6170, %v7246
  %v7248 = vld [vmem:[%s6397] sm:$0xff]
  %v7249 = vld [vmem:[%s6397 + $0x8] sm:$0xff]
  %v7250 = vpack.c.bf16 %v7246, %v7246
  %v7252 = vsel %vm6170, %v7250, 0
  %7254 = vmatprep.subr.bf16.mxu0 0
  %7255 = vmatpush1.bf16.msra.mxu0 0
  %7256 = vmatprep.subr.bf16.mxu0 0
  %7257 = vmatpush1.bf16.msra.mxu0 0
  %7258 = vmatprep.subr.bf16.mxu0 0
  %7259 = vmatpush1.bf16.msra.mxu0 0
  %7260 = vmatprep.subr.bf16.mxu0 0
  %7261 = vmatpush1.bf16.msra.mxu0 0
  %7262 = vmatprep.subr.bf16.mxu0 %v7167
  %7263 = vmatpush1.bf16.msra.mxu0 %v7166
  %7264 = vmatprep.subr.bf16.mxu0 %v7165
  %7265 = vmatpush1.bf16.msra.mxu0 %v7164
  %7266 = vmatprep.subr.bf16.mxu0 %v7163
  %7267 = vmatpush1.bf16.msra.mxu0 %v7162
  %7268 = vmatprep.subr.bf16.mxu0 %v7161
  %7269 = vmatpush1.bf16.msra.mxu0 %v7160
  %7270 = vmatprep.subr.bf16.mxu0 0
  %7271 = vmatpush2.bf16.msra.mxu0 0
  %7272 = vmatprep.subr.bf16.mxu0 0
  %7273 = vmatpush2.bf16.msra.mxu0 0
  %7274 = vmatprep.subr.bf16.mxu0 0
  %7275 = vmatpush2.bf16.msra.mxu0 0
  %7276 = vmatprep.subr.bf16.mxu0 0
  %7277 = vmatpush2.bf16.msra.mxu0 0
  %7278 = vmatprep.subr.bf16.mxu0 0
  %7279 = vmatpush2.bf16.msra.mxu0 0
  %7280 = vmatprep.subr.bf16.mxu0 0
  %7281 = vmatpush2.bf16.msra.mxu0 0
  %7282 = vmatprep.subr.bf16.mxu0 0
  %7283 = vmatpush2.bf16.msra.mxu0 0
  %7284 = vmatprep.subr.bf16.mxu0 0
  %7285 = vmatpush2.bf16.msra.mxu0 0
  %7286 = vmatprep.mubr.bf16.mxu0 0
  %7287 = vmatmul.mubr.bf16.gmra.mxu0 %v7252
  %v7288 = vpop.f32.mrf.mxu0
  %v7289 = vadd.f32 0.0, %v7288
  %v7290 = vpop.f32.mrf.mxu0
  %v7291 = vadd.f32 0.0, %v7290
  %v7292 = vpop.f32.mrf.mxu0
  %v7293 = vpop.f32.mrf.mxu0
  %7294 = vdwg.mxu0
  %v7295 = vadd.f32 %v7248, %v7289
  %v7296 = vadd.f32 %v7249, %v7291
  %v7297 = vsub.f32 0.0, %v7295
  %v7298 = vsub.f32 0.0, %v7296
  %v7299 = vmul.f32 %v7297, 1.442695
  %v7300 = vpow.pop %v7299
  %v7301 = vmul.f32 %v7298, 1.442695
  %v7302 = vpow.pop %v7301
  %v7303 = vadd.f32 %v7300, 1.0
  %v7304 = vadd.f32 %v7302, 1.0
  %v7305 = vrcp.pop %v7303
  %v7306 = vrcp.pop %v7304
  %v7307 = vtanh.pop %v7296
  %v7308 = vmul.f32 %v7305, %v7240
  %7310 = vrot.lane.b32.xlu0 %v7307, 64
  %v7311 = vpop.permute.xlu0 %7310
  %v7313 = vmul.f32 %v7305, %v7311
  %7315 = vrot.lane.b32.xlu0 %v7313, 64
  %v7316 = vpop.permute.xlu0 %7315
  %v7318 = vadd.f32 %v7308, %v7316
  %v7319 = vtanh.pop %v7318
  %7321 = vrot.lane.b32.xlu0 %v7319, 64
  %v7322 = vpop.permute.xlu0 %7321
  %v7324 = vmul.f32 %v7306, %v7322
  %7325 = vst.msk [vmem:[%s1535] sm:$0xff] %vm6170, %v7324
  %v7326 = vld [vmem:[%s6476] sm:$0xff]
  %v7327 = vld [vmem:[%s6476 + $0x8] sm:$0xff]
  %v7328 = vpack.c.bf16 %v7324, %v7324
  %v7330 = vsel %vm6170, %v7328, 0
  %7332 = vmatprep.subr.bf16.mxu0 0
  %7333 = vmatpush1.bf16.msra.mxu0 0
  %7334 = vmatprep.subr.bf16.mxu0 0
  %7335 = vmatpush1.bf16.msra.mxu0 0
  %7336 = vmatprep.subr.bf16.mxu0 0
  %7337 = vmatpush1.bf16.msra.mxu0 0
  %7338 = vmatprep.subr.bf16.mxu0 0
  %7339 = vmatpush1.bf16.msra.mxu0 0
  %7340 = vmatprep.subr.bf16.mxu0 %v7167
  %7341 = vmatpush1.bf16.msra.mxu0 %v7166
  %7342 = vmatprep.subr.bf16.mxu0 %v7165
  %7343 = vmatpush1.bf16.msra.mxu0 %v7164
  %7344 = vmatprep.subr.bf16.mxu0 %v7163
  %7345 = vmatpush1.bf16.msra.mxu0 %v7162
  %7346 = vmatprep.subr.bf16.mxu0 %v7161
  %7347 = vmatpush1.bf16.msra.mxu0 %v7160
  %7348 = vmatprep.subr.bf16.mxu0 0
  %7349 = vmatpush2.bf16.msra.mxu0 0
  %7350 = vmatprep.subr.bf16.mxu0 0
  %7351 = vmatpush2.bf16.msra.mxu0 0
  %7352 = vmatprep.subr.bf16.mxu0 0
  %7353 = vmatpush2.bf16.msra.mxu0 0
  %7354 = vmatprep.subr.bf16.mxu0 0
  %7355 = vmatpush2.bf16.msra.mxu0 0
  %7356 = vmatprep.subr.bf16.mxu0 0
  %7357 = vmatpush2.bf16.msra.mxu0 0
  %7358 = vmatprep.subr.bf16.mxu0 0
  %7359 = vmatpush2.bf16.msra.mxu0 0
  %7360 = vmatprep.subr.bf16.mxu0 0
  %7361 = vmatpush2.bf16.msra.mxu0 0
  %7362 = vmatprep.subr.bf16.mxu0 0
  %7363 = vmatpush2.bf16.msra.mxu0 0
  %7364 = vmatprep.mubr.bf16.mxu0 0
  %7365 = vmatmul.mubr.bf16.gmra.mxu0 %v7330
  %v7366 = vpop.f32.mrf.mxu0
  %v7367 = vadd.f32 0.0, %v7366
  %v7368 = vpop.f32.mrf.mxu0
  %v7369 = vadd.f32 0.0, %v7368
  %v7370 = vpop.f32.mrf.mxu0
  %v7371 = vpop.f32.mrf.mxu0
  %7372 = vdwg.mxu0
  %v7373 = vadd.f32 %v7326, %v7367
  %v7374 = vadd.f32 %v7327, %v7369
  %v7375 = vsub.f32 0.0, %v7373
  %v7376 = vsub.f32 0.0, %v7374
  %v7377 = vmul.f32 %v7375, 1.442695
  %v7378 = vpow.pop %v7377
  %v7379 = vmul.f32 %v7376, 1.442695
  %v7380 = vpow.pop %v7379
  %v7381 = vadd.f32 %v7378, 1.0
  %v7382 = vadd.f32 %v7380, 1.0
  %v7383 = vrcp.pop %v7381
  %v7384 = vrcp.pop %v7382
  %v7385 = vtanh.pop %v7374
  %v7386 = vmul.f32 %v7383, %v7318
  %7388 = vrot.lane.b32.xlu0 %v7385, 64
  %v7389 = vpop.permute.xlu0 %7388
  %v7391 = vmul.f32 %v7383, %v7389
  %7393 = vrot.lane.b32.xlu0 %v7391, 64
  %v7394 = vpop.permute.xlu0 %7393
  %v7396 = vadd.f32 %v7386, %v7394
  %v7397 = vtanh.pop %v7396
  %7399 = vrot.lane.b32.xlu0 %v7397, 64
  %v7400 = vpop.permute.xlu0 %7399
  %v7402 = vmul.f32 %v7384, %v7400
  %7403 = vst.msk [vmem:[%s2292] sm:$0xff] %vm6170, %v7402
  %v7404 = vld [vmem:[%s6555] sm:$0xff]
  %v7405 = vld [vmem:[%s6555 + $0x8] sm:$0xff]
  %v7406 = vpack.c.bf16 %v7402, %v7402
  %v7408 = vsel %vm6170, %v7406, 0
  %7410 = vmatprep.subr.bf16.mxu0 0
  %7411 = vmatpush1.bf16.msra.mxu0 0
  %7412 = vmatprep.subr.bf16.mxu0 0
  %7413 = vmatpush1.bf16.msra.mxu0 0
  %7414 = vmatprep.subr.bf16.mxu0 0
  %7415 = vmatpush1.bf16.msra.mxu0 0
  %7416 = vmatprep.subr.bf16.mxu0 0
  %7417 = vmatpush1.bf16.msra.mxu0 0
  %7418 = vmatprep.subr.bf16.mxu0 %v7167
  %7419 = vmatpush1.bf16.msra.mxu0 %v7166
  %7420 = vmatprep.subr.bf16.mxu0 %v7165
  %7421 = vmatpush1.bf16.msra.mxu0 %v7164
  %7422 = vmatprep.subr.bf16.mxu0 %v7163
  %7423 = vmatpush1.bf16.msra.mxu0 %v7162
  %7424 = vmatprep.subr.bf16.mxu0 %v7161
  %7425 = vmatpush1.bf16.msra.mxu0 %v7160
  %7426 = vmatprep.subr.bf16.mxu0 0
  %7427 = vmatpush2.bf16.msra.mxu0 0
  %7428 = vmatprep.subr.bf16.mxu0 0
  %7429 = vmatpush2.bf16.msra.mxu0 0
  %7430 = vmatprep.subr.bf16.mxu0 0
  %7431 = vmatpush2.bf16.msra.mxu0 0
  %7432 = vmatprep.subr.bf16.mxu0 0
  %7433 = vmatpush2.bf16.msra.mxu0 0
  %7434 = vmatprep.subr.bf16.mxu0 0
  %7435 = vmatpush2.bf16.msra.mxu0 0
  %7436 = vmatprep.subr.bf16.mxu0 0
  %7437 = vmatpush2.bf16.msra.mxu0 0
  %7438 = vmatprep.subr.bf16.mxu0 0
  %7439 = vmatpush2.bf16.msra.mxu0 0
  %7440 = vmatprep.subr.bf16.mxu0 0
  %7441 = vmatpush2.bf16.msra.mxu0 0
  %7442 = vmatprep.mubr.bf16.mxu0 0
  %7443 = vmatmul.mubr.bf16.gmra.mxu0 %v7408
  %v7444 = vpop.f32.mrf.mxu0
  %v7445 = vadd.f32 0.0, %v7444
  %v7446 = vpop.f32.mrf.mxu0
  %v7447 = vadd.f32 0.0, %v7446
  %v7448 = vpop.f32.mrf.mxu0
  %v7449 = vpop.f32.mrf.mxu0
  %7450 = vdwg.mxu0
  %v7451 = vadd.f32 %v7404, %v7445
  %v7452 = vadd.f32 %v7405, %v7447
  %v7453 = vsub.f32 0.0, %v7451
  %v7454 = vsub.f32 0.0, %v7452
  %v7455 = vmul.f32 %v7453, 1.442695
  %v7456 = vpow.pop %v7455
  %v7457 = vmul.f32 %v7454, 1.442695
  %v7458 = vpow.pop %v7457
  %v7459 = vadd.f32 %v7456, 1.0
  %v7460 = vadd.f32 %v7458, 1.0
  %v7461 = vrcp.pop %v7459
  %v7462 = vrcp.pop %v7460
  %v7463 = vtanh.pop %v7452
  %v7464 = vmul.f32 %v7461, %v7396
  %7466 = vrot.lane.b32.xlu0 %v7463, 64
  %v7467 = vpop.permute.xlu0 %7466
  %v7469 = vmul.f32 %v7461, %v7467
  %7471 = vrot.lane.b32.xlu0 %v7469, 64
  %v7472 = vpop.permute.xlu0 %7471
  %v7474 = vadd.f32 %v7464, %v7472
  %v7475 = vtanh.pop %v7474
  %7477 = vrot.lane.b32.xlu0 %v7475, 64
  %v7478 = vpop.permute.xlu0 %7477
  %v7480 = vmul.f32 %v7462, %v7478
  %7481 = vst.msk [vmem:[%s3049] sm:$0xff] %vm6170, %v7480
  %v7482 = vld [vmem:[%s6634] sm:$0xff]
  %v7483 = vld [vmem:[%s6634 + $0x8] sm:$0xff]
  %v7484 = vpack.c.bf16 %v7480, %v7480
  %v7486 = vsel %vm6170, %v7484, 0
  %7488 = vmatprep.subr.bf16.mxu0 0
  %7489 = vmatpush1.bf16.msra.mxu0 0
  %7490 = vmatprep.subr.bf16.mxu0 0
  %7491 = vmatpush1.bf16.msra.mxu0 0
  %7492 = vmatprep.subr.bf16.mxu0 0
  %7493 = vmatpush1.bf16.msra.mxu0 0
  %7494 = vmatprep.subr.bf16.mxu0 0
  %7495 = vmatpush1.bf16.msra.mxu0 0
  %7496 = vmatprep.subr.bf16.mxu0 %v7167
  %7497 = vmatpush1.bf16.msra.mxu0 %v7166
  %7498 = vmatprep.subr.bf16.mxu0 %v7165
  %7499 = vmatpush1.bf16.msra.mxu0 %v7164
  %7500 = vmatprep.subr.bf16.mxu0 %v7163
  %7501 = vmatpush1.bf16.msra.mxu0 %v7162
  %7502 = vmatprep.subr.bf16.mxu0 %v7161
  %7503 = vmatpush1.bf16.msra.mxu0 %v7160
  %7504 = vmatprep.subr.bf16.mxu0 0
  %7505 = vmatpush2.bf16.msra.mxu0 0
  %7506 = vmatprep.subr.bf16.mxu0 0
  %7507 = vmatpush2.bf16.msra.mxu0 0
  %7508 = vmatprep.subr.bf16.mxu0 0
  %7509 = vmatpush2.bf16.msra.mxu0 0
  %7510 = vmatprep.subr.bf16.mxu0 0
  %7511 = vmatpush2.bf16.msra.mxu0 0
  %7512 = vmatprep.subr.bf16.mxu0 0
  %7513 = vmatpush2.bf16.msra.mxu0 0
  %7514 = vmatprep.subr.bf16.mxu0 0
  %7515 = vmatpush2.bf16.msra.mxu0 0
  %7516 = vmatprep.subr.bf16.mxu0 0
  %7517 = vmatpush2.bf16.msra.mxu0 0
  %7518 = vmatprep.subr.bf16.mxu0 0
  %7519 = vmatpush2.bf16.msra.mxu0 0
  %7520 = vmatprep.mubr.bf16.mxu0 0
  %7521 = vmatmul.mubr.bf16.gmra.mxu0 %v7486
  %v7522 = vpop.f32.mrf.mxu0
  %v7523 = vadd.f32 0.0, %v7522
  %v7524 = vpop.f32.mrf.mxu0
  %v7525 = vadd.f32 0.0, %v7524
  %v7526 = vpop.f32.mrf.mxu0
  %v7527 = vpop.f32.mrf.mxu0
  %7528 = vdwg.mxu0
  %v7529 = vadd.f32 %v7482, %v7523
  %v7530 = vadd.f32 %v7483, %v7525
  %v7531 = vsub.f32 0.0, %v7529
  %v7532 = vsub.f32 0.0, %v7530
  %v7533 = vmul.f32 %v7531, 1.442695
  %v7534 = vpow.pop %v7533
  %v7535 = vmul.f32 %v7532, 1.442695
  %v7536 = vpow.pop %v7535
  %v7537 = vadd.f32 %v7534, 1.0
  %v7538 = vadd.f32 %v7536, 1.0
  %v7539 = vrcp.pop %v7537
  %v7540 = vrcp.pop %v7538
  %v7541 = vtanh.pop %v7530
  %v7542 = vmul.f32 %v7539, %v7474
  %7544 = vrot.lane.b32.xlu0 %v7541, 64
  %v7545 = vpop.permute.xlu0 %7544
  %v7547 = vmul.f32 %v7539, %v7545
  %7549 = vrot.lane.b32.xlu0 %v7547, 64
  %v7550 = vpop.permute.xlu0 %7549
  %v7552 = vadd.f32 %v7542, %v7550
  %v7553 = vtanh.pop %v7552
  %7555 = vrot.lane.b32.xlu0 %v7553, 64
  %v7556 = vpop.permute.xlu0 %7555
  %v7558 = vmul.f32 %v7540, %v7556
  %7559 = vst.msk [vmem:[%s3806] sm:$0xff] %vm6170, %v7558
  %v7560 = vld [vmem:[%s6713] sm:$0xff]
  %v7561 = vld [vmem:[%s6713 + $0x8] sm:$0xff]
  %v7562 = vpack.c.bf16 %v7558, %v7558
  %v7564 = vsel %vm6170, %v7562, 0
  %7566 = vmatprep.subr.bf16.mxu0 0
  %7567 = vmatpush1.bf16.msra.mxu0 0
  %7568 = vmatprep.subr.bf16.mxu0 0
  %7569 = vmatpush1.bf16.msra.mxu0 0
  %7570 = vmatprep.subr.bf16.mxu0 0
  %7571 = vmatpush1.bf16.msra.mxu0 0
  %7572 = vmatprep.subr.bf16.mxu0 0
  %7573 = vmatpush1.bf16.msra.mxu0 0
  %7574 = vmatprep.subr.bf16.mxu0 %v7167
  %7575 = vmatpush1.bf16.msra.mxu0 %v7166
  %7576 = vmatprep.subr.bf16.mxu0 %v7165
  %7577 = vmatpush1.bf16.msra.mxu0 %v7164
  %7578 = vmatprep.subr.bf16.mxu0 %v7163
  %7579 = vmatpush1.bf16.msra.mxu0 %v7162
  %7580 = vmatprep.subr.bf16.mxu0 %v7161
  %7581 = vmatpush1.bf16.msra.mxu0 %v7160
  %7582 = vmatprep.subr.bf16.mxu0 0
  %7583 = vmatpush2.bf16.msra.mxu0 0
  %7584 = vmatprep.subr.bf16.mxu0 0
  %7585 = vmatpush2.bf16.msra.mxu0 0
  %7586 = vmatprep.subr.bf16.mxu0 0
  %7587 = vmatpush2.bf16.msra.mxu0 0
  %7588 = vmatprep.subr.bf16.mxu0 0
  %7589 = vmatpush2.bf16.msra.mxu0 0
  %7590 = vmatprep.subr.bf16.mxu0 0
  %7591 = vmatpush2.bf16.msra.mxu0 0
  %7592 = vmatprep.subr.bf16.mxu0 0
  %7593 = vmatpush2.bf16.msra.mxu0 0
  %7594 = vmatprep.subr.bf16.mxu0 0
  %7595 = vmatpush2.bf16.msra.mxu0 0
  %7596 = vmatprep.subr.bf16.mxu0 0
  %7597 = vmatpush2.bf16.msra.mxu0 0
  %7598 = vmatprep.mubr.bf16.mxu0 0
  %7599 = vmatmul.mubr.bf16.gmra.mxu0 %v7564
  %v7600 = vpop.f32.mrf.mxu0
  %v7601 = vadd.f32 0.0, %v7600
  %v7602 = vpop.f32.mrf.mxu0
  %v7603 = vadd.f32 0.0, %v7602
  %v7604 = vpop.f32.mrf.mxu0
  %v7605 = vpop.f32.mrf.mxu0
  %7606 = vdwg.mxu0
  %v7607 = vadd.f32 %v7560, %v7601
  %v7608 = vadd.f32 %v7561, %v7603
  %v7609 = vsub.f32 0.0, %v7607
  %v7610 = vsub.f32 0.0, %v7608
  %v7611 = vmul.f32 %v7609, 1.442695
  %v7612 = vpow.pop %v7611
  %v7613 = vmul.f32 %v7610, 1.442695
  %v7614 = vpow.pop %v7613
  %v7615 = vadd.f32 %v7612, 1.0
  %v7616 = vadd.f32 %v7614, 1.0
  %v7617 = vrcp.pop %v7615
  %v7618 = vrcp.pop %v7616
  %v7619 = vtanh.pop %v7608
  %v7620 = vmul.f32 %v7617, %v7552
  %7622 = vrot.lane.b32.xlu0 %v7619, 64
  %v7623 = vpop.permute.xlu0 %7622
  %v7625 = vmul.f32 %v7617, %v7623
  %7627 = vrot.lane.b32.xlu0 %v7625, 64
  %v7628 = vpop.permute.xlu0 %7627
  %v7630 = vadd.f32 %v7620, %v7628
  %v7631 = vtanh.pop %v7630
  %7633 = vrot.lane.b32.xlu0 %v7631, 64
  %v7634 = vpop.permute.xlu0 %7633
  %v7636 = vmul.f32 %v7618, %v7634
  %7637 = vst.msk [vmem:[%s4563] sm:$0xff] %vm6170, %v7636
  %v7638 = vld [vmem:[%s6792] sm:$0xff]
  %v7639 = vld [vmem:[%s6792 + $0x8] sm:$0xff]
  %v7640 = vpack.c.bf16 %v7636, %v7636
  %v7642 = vsel %vm6170, %v7640, 0
  %7644 = vmatprep.subr.bf16.mxu0 0
  %7645 = vmatpush1.bf16.msra.mxu0 0
  %7646 = vmatprep.subr.bf16.mxu0 0
  %7647 = vmatpush1.bf16.msra.mxu0 0
  %7648 = vmatprep.subr.bf16.mxu0 0
  %7649 = vmatpush1.bf16.msra.mxu0 0
  %7650 = vmatprep.subr.bf16.mxu0 0
  %7651 = vmatpush1.bf16.msra.mxu0 0
  %7652 = vmatprep.subr.bf16.mxu0 %v7167
  %7653 = vmatpush1.bf16.msra.mxu0 %v7166
  %7654 = vmatprep.subr.bf16.mxu0 %v7165
  %7655 = vmatpush1.bf16.msra.mxu0 %v7164
  %7656 = vmatprep.subr.bf16.mxu0 %v7163
  %7657 = vmatpush1.bf16.msra.mxu0 %v7162
  %7658 = vmatprep.subr.bf16.mxu0 %v7161
  %7659 = vmatpush1.bf16.msra.mxu0 %v7160
  %7660 = vmatprep.subr.bf16.mxu0 0
  %7661 = vmatpush2.bf16.msra.mxu0 0
  %7662 = vmatprep.subr.bf16.mxu0 0
  %7663 = vmatpush2.bf16.msra.mxu0 0
  %7664 = vmatprep.subr.bf16.mxu0 0
  %7665 = vmatpush2.bf16.msra.mxu0 0
  %7666 = vmatprep.subr.bf16.mxu0 0
  %7667 = vmatpush2.bf16.msra.mxu0 0
  %7668 = vmatprep.subr.bf16.mxu0 0
  %7669 = vmatpush2.bf16.msra.mxu0 0
  %7670 = vmatprep.subr.bf16.mxu0 0
  %7671 = vmatpush2.bf16.msra.mxu0 0
  %7672 = vmatprep.subr.bf16.mxu0 0
  %7673 = vmatpush2.bf16.msra.mxu0 0
  %7674 = vmatprep.subr.bf16.mxu0 0
  %7675 = vmatpush2.bf16.msra.mxu0 0
  %7676 = vmatprep.mubr.bf16.mxu0 0
  %7677 = vmatmul.mubr.bf16.gmra.mxu0 %v7642
  %v7678 = vpop.f32.mrf.mxu0
  %v7679 = vadd.f32 0.0, %v7678
  %v7680 = vpop.f32.mrf.mxu0
  %v7681 = vadd.f32 0.0, %v7680
  %v7682 = vpop.f32.mrf.mxu0
  %v7683 = vpop.f32.mrf.mxu0
  %7684 = vdwg.mxu0
  %v7685 = vadd.f32 %v7638, %v7679
  %v7686 = vadd.f32 %v7639, %v7681
  %v7687 = vsub.f32 0.0, %v7685
  %v7688 = vsub.f32 0.0, %v7686
  %v7689 = vmul.f32 %v7687, 1.442695
  %v7690 = vpow.pop %v7689
  %v7691 = vmul.f32 %v7688, 1.442695
  %v7692 = vpow.pop %v7691
  %v7693 = vadd.f32 %v7690, 1.0
  %v7694 = vadd.f32 %v7692, 1.0
  %v7695 = vrcp.pop %v7693
  %v7696 = vrcp.pop %v7694
  %v7697 = vtanh.pop %v7686
  %v7698 = vmul.f32 %v7695, %v7630
  %7700 = vrot.lane.b32.xlu0 %v7697, 64
  %v7701 = vpop.permute.xlu0 %7700
  %v7703 = vmul.f32 %v7695, %v7701
  %7705 = vrot.lane.b32.xlu0 %v7703, 64
  %v7706 = vpop.permute.xlu0 %7705
  %v7708 = vadd.f32 %v7698, %v7706
  %v7709 = vtanh.pop %v7708
  %7711 = vrot.lane.b32.xlu0 %v7709, 64
  %v7712 = vpop.permute.xlu0 %7711
  %v7714 = vmul.f32 %v7696, %v7712
  %7715 = vst.msk [vmem:[%s5320] sm:$0xff] %vm6170, %v7714
  %v7716 = vld [vmem:[%s6871] sm:$0xff]
  %v7717 = vld [vmem:[%s6871 + $0x8] sm:$0xff]
  %v7718 = vpack.c.bf16 %v7714, %v7714
  %v7720 = vsel %vm6170, %v7718, 0
  %7722 = vmatprep.subr.bf16.mxu0 0
  %7723 = vmatpush1.bf16.msra.mxu0 0
  %7724 = vmatprep.subr.bf16.mxu0 0
  %7725 = vmatpush1.bf16.msra.mxu0 0
  %7726 = vmatprep.subr.bf16.mxu0 0
  %7727 = vmatpush1.bf16.msra.mxu0 0
  %7728 = vmatprep.subr.bf16.mxu0 0
  %7729 = vmatpush1.bf16.msra.mxu0 0
  %7730 = vmatprep.subr.bf16.mxu0 %v7167
  %7731 = vmatpush1.bf16.msra.mxu0 %v7166
  %7732 = vmatprep.subr.bf16.mxu0 %v7165
  %7733 = vmatpush1.bf16.msra.mxu0 %v7164
  %7734 = vmatprep.subr.bf16.mxu0 %v7163
  %7735 = vmatpush1.bf16.msra.mxu0 %v7162
  %7736 = vmatprep.subr.bf16.mxu0 %v7161
  %7737 = vmatpush1.bf16.msra.mxu0 %v7160
  %7738 = vmatprep.subr.bf16.mxu0 0
  %7739 = vmatpush2.bf16.msra.mxu0 0
  %7740 = vmatprep.subr.bf16.mxu0 0
  %7741 = vmatpush2.bf16.msra.mxu0 0
  %7742 = vmatprep.subr.bf16.mxu0 0
  %7743 = vmatpush2.bf16.msra.mxu0 0
  %7744 = vmatprep.subr.bf16.mxu0 0
  %7745 = vmatpush2.bf16.msra.mxu0 0
  %7746 = vmatprep.subr.bf16.mxu0 0
  %7747 = vmatpush2.bf16.msra.mxu0 0
  %7748 = vmatprep.subr.bf16.mxu0 0
  %7749 = vmatpush2.bf16.msra.mxu0 0
  %7750 = vmatprep.subr.bf16.mxu0 0
  %7751 = vmatpush2.bf16.msra.mxu0 0
  %7752 = vmatprep.subr.bf16.mxu0 0
  %7753 = vmatpush2.bf16.msra.mxu0 0
  %7754 = vmatprep.mubr.bf16.mxu0 0
  %7755 = vmatmul.mubr.bf16.gmra.mxu0 %v7720
  %v7756 = vpop.f32.mrf.mxu0
  %v7757 = vadd.f32 0.0, %v7756
  %v7758 = vpop.f32.mrf.mxu0
  %v7759 = vadd.f32 0.0, %v7758
  %v7760 = vpop.f32.mrf.mxu0
  %v7761 = vpop.f32.mrf.mxu0
  %7762 = vdwg.mxu0
  %v7763 = vadd.f32 %v7716, %v7757
  %v7764 = vadd.f32 %v7717, %v7759
  %v7765 = vsub.f32 0.0, %v7763
  %v7766 = vsub.f32 0.0, %v7764
  %v7767 = vmul.f32 %v7765, 1.442695
  %v7768 = vpow.pop %v7767
  %v7769 = vmul.f32 %v7766, 1.442695
  %v7770 = vpow.pop %v7769
  %v7771 = vadd.f32 %v7768, 1.0
  %v7772 = vadd.f32 %v7770, 1.0
  %v7773 = vrcp.pop %v7771
  %v7774 = vrcp.pop %v7772
  %v7775 = vtanh.pop %v7764
  %v7776 = vmul.f32 %v7773, %v7708
  %7778 = vrot.lane.b32.xlu0 %v7775, 64
  %v7779 = vpop.permute.xlu0 %7778
  %v7781 = vmul.f32 %v7773, %v7779
  %7783 = vrot.lane.b32.xlu0 %v7781, 64
  %v7784 = vpop.permute.xlu0 %7783
  %v7786 = vadd.f32 %v7776, %v7784
  %v7787 = vtanh.pop %v7786
  %7789 = vrot.lane.b32.xlu0 %v7787, 64
  %v7790 = vpop.permute.xlu0 %7789
  %v7792 = vmul.f32 %v7774, %v7790
  %7793 = vst.msk [vmem:[%s6077] sm:$0xff] %vm6170, %v7792
  %v7794 = vld [vmem:[#allocation2] sm:$0xff]
  %v7795 = vld [vmem:[#allocation2 + $0x8] sm:$0xff]
  %v7796 = vld [vmem:[#allocation2 + $0x10] sm:$0xff]
  %v7797 = vld [vmem:[#allocation2 + $0x18] sm:$0xff]
  %v7798 = vld [vmem:[#allocation2 + $0x20] sm:$0xff]
  %v7799 = vld [vmem:[#allocation2 + $0x28] sm:$0xff]
  %v7800 = vld [vmem:[#allocation2 + $0x30] sm:$0xff]
  %v7801 = vld [vmem:[#allocation2 + $0x38] sm:$0xff]
  %7802 = vst.msk [vmem:[%s6] sm:$0xff] %vm6170, %v7794
  %7803 = vst.msk [vmem:[%s6 + $0x8] sm:$0xff] %vm6170, %v7795
  %7804 = vst.msk [vmem:[%s6 + $0x10] sm:$0xff] %vm6170, %v7796
  %7805 = vst.msk [vmem:[%s6 + $0x18] sm:$0xff] %vm6170, %v7797
  %7806 = vst.msk [vmem:[%s6 + $0x20] sm:$0xff] %vm6170, %v7798
  %7807 = vst.msk [vmem:[%s6 + $0x28] sm:$0xff] %vm6170, %v7799
  %7808 = vst.msk [vmem:[%s6 + $0x30] sm:$0xff] %vm6170, %v7800
  %7809 = vst.msk [vmem:[%s6 + $0x38] sm:$0xff] %vm6170, %v7801
  // Predicated region
  $region26: #{dual_lstm_forward.1} parent=0 // pred_check
    _
  $region27: #{dual_lstm_forward.1} parent=0 // pred_check_branch
    %7811 = sbr.rel (0) target = $region29
  $region28: #{dual_lstm_forward.1} parent=0 // pred_region
    _
  $region29: #{dual_lstm_forward.1} parent=0 // pred_fallthru
    _
  // Predicated region
  $region30: #{dual_lstm_forward.1} parent=0 // pred_check
    _
  $region31: #{dual_lstm_forward.1} parent=0 // pred_check_branch
    %7813 = sbr.rel (0) target = $region33
  $region32: #{dual_lstm_forward.1} parent=0 // pred_region
    _
  $region33: #{dual_lstm_forward.1} parent=0 // pred_fallthru
    _

</llo_original>
